<compile_context>
chip_gen: v7x
topology: tpu7x:2x2x1
jax: 0.10.0
libtpu: 0.0.40
codegen_flags: <defaults>
</compile_context>

<pallas_src>
import functools
import math

import jax
import jax.numpy as jnp
from jax.experimental import pallas as pl
from jax.experimental.pallas import tpu as pltpu  # noqa: F401  (TPU backend)

NET = dict(nInput=300, nEmb=256, nFw=512, nAttnHead=4, nLayer=2)
LN_EPS = 1e-5


def _round_up(n, m):
    return (n + m - 1) // m * m


# ---------------------------------------------------------------------------
# Fused kernel: conv front + LN(L) + 2 transformer layers + head softmax
# ---------------------------------------------------------------------------
def fused_kernel(x_ref, wf1_ref, bf1_ref, wf2_ref, bf2_ref,
                 wqkv_ref, bqkv_ref, wo_ref, bo_ref,
                 ln1w_ref, ln1b_ref, wff1_ref, bff1_ref, wff2_ref, bff2_ref,
                 ln2w_ref, ln2b_ref, wout_ref, bout_ref,
                 o_ref, *, B, L, n_heads, n_layers):
    E = wf2_ref.shape[1]
    dh = E // n_heads
    scale = 1.0 / math.sqrt(dh)
    bf16 = jnp.bfloat16
    f32 = jnp.float32

    # ---- front: pointwise conv1 -> relu -> pointwise conv2 on the (B*L, C) slab
    x = x_ref[...]                                                    # (B*L, CinP) bf16
    h = jnp.dot(x, wf1_ref[...], preferred_element_type=f32) + bf1_ref[...]
    h = jnp.maximum(h, 0.0)
    y = jnp.dot(h.astype(bf16), wf2_ref[...], preferred_element_type=f32) + bf2_ref[...]

    # ---- F.layer_norm over L: per batch block, per channel (reduce over rows)
    blocks = []
    for b in range(B):
        yb = y[b * L:(b + 1) * L, :]                                  # (L, E) f32
        mu = jnp.mean(yb, axis=0, keepdims=True)
        var = jnp.mean((yb - mu) ** 2, axis=0, keepdims=True)
        blocks.append((yb - mu) * jax.lax.rsqrt(var + LN_EPS))
    y = jnp.concatenate(blocks, axis=0)                               # (B*L, E) f32

    # ---- transformer encoder layers (post-norm, relu FFN)
    for layer in range(n_layers):
        wqkv = wqkv_ref[layer]                                        # (E, 3E) bf16
        wo = wo_ref[layer]                                            # (E, E)  bf16
        qkv = jnp.dot(y.astype(bf16), wqkv, preferred_element_type=f32) + bqkv_ref[layer]
        q = qkv[:, :E].astype(bf16)
        k = qkv[:, E:2 * E].astype(bf16)
        v = qkv[:, 2 * E:].astype(bf16)

        attn_blocks = []
        for b in range(B):
            r0 = b * L
            acc = jnp.zeros((L, E), f32)
            for hh in range(n_heads):
                c0 = hh * dh
                qh = q[r0:r0 + L, c0:c0 + dh]
                kh = k[r0:r0 + L, c0:c0 + dh]
                vh = v[r0:r0 + L, c0:c0 + dh]
                s = jnp.einsum('qd,kd->qk', qh, kh,
                               preferred_element_type=f32) * scale    # (L, L) f32
                s = s - jnp.max(s, axis=-1, keepdims=True)
                p = jnp.exp(s)
                p = p * pl.reciprocal(jnp.sum(p, axis=-1, keepdims=True), approx=True)
                pv = jnp.dot(p.astype(bf16), vh, preferred_element_type=f32)   # (L, dh)
                # fold W_o per head: no lane-axis concat of head outputs
                acc = acc + jnp.dot(pv.astype(bf16), wo[c0:c0 + dh, :],
                                    preferred_element_type=f32)
            attn_blocks.append(acc)
        attn = jnp.concatenate(attn_blocks, axis=0) + bo_ref[layer]   # (B*L, E) f32

        # residual + LayerNorm1 (over E, affine)
        h1 = y + attn
        mu1 = jnp.mean(h1, axis=-1, keepdims=True)
        v1 = jnp.mean((h1 - mu1) ** 2, axis=-1, keepdims=True)
        h1 = (h1 - mu1) * jax.lax.rsqrt(v1 + LN_EPS) * ln1w_ref[layer] + ln1b_ref[layer]

        # FFN: linear1 -> relu -> linear2 (slab matmuls)
        f = jnp.dot(h1.astype(bf16), wff1_ref[layer], preferred_element_type=f32) + bff1_ref[layer]
        f = jnp.maximum(f, 0.0)
        f = jnp.dot(f.astype(bf16), wff2_ref[layer], preferred_element_type=f32) + bff2_ref[layer]

        # residual + LayerNorm2 (over E, affine)
        h2 = h1 + f
        mu2 = jnp.mean(h2, axis=-1, keepdims=True)
        v2 = jnp.mean((h2 - mu2) ** 2, axis=-1, keepdims=True)
        y = (h2 - mu2) * jax.lax.rsqrt(v2 + LN_EPS) * ln2w_ref[layer] + ln2b_ref[layer]

    # ---- head: Conv1d(E->1) at L-positions {0,1} of each batch, 2-way softmax (f32)
    scores = jnp.sum(y * wout_ref[...], axis=-1, keepdims=True) + bout_ref[...]  # (B*L, 1)
    row = jax.lax.broadcasted_iota(jnp.int32, (2 * B, 128), 0)
    out = jnp.zeros((2 * B, 128), f32)
    for b in range(B):
        s0 = scores[b * L:b * L + 1, :]                               # (1, 1)
        s1 = scores[b * L + 1:b * L + 2, :]                           # (1, 1)
        m = jnp.maximum(s0, s1)
        e0 = jnp.exp(s0 - m)
        e1 = jnp.exp(s1 - m)
        denom = e0 + e1
        out = jnp.where(row == 2 * b, e0 / denom, out)
        out = jnp.where(row == 2 * b + 1, e1 / denom, out)
    o_ref[...] = out                                                  # lane-dense store


# ---------------------------------------------------------------------------
# Wrapper: layout prep (NCL -> token slab, K-pad, bf16 cast) + single pallas_call
# ---------------------------------------------------------------------------
@jax.jit
def koikoi_forward(x_ncl, params):
    B, Cin, L = x_ncl.shape
    nL = len(params['layers'])
    H = NET['nAttnHead']
    CinP = _round_up(Cin, 128)                      # 300 -> 384 (128-aligned K)

    # NCL -> channels-last token slab (B*L, Cin), zero-pad reduction dim, bf16
    x = jnp.transpose(x_ncl, (0, 2, 1)).astype(jnp.float32).reshape(B * L, Cin)
    x = jnp.pad(x, ((0, 0), (0, CinP - Cin))).astype(jnp.bfloat16)

    wf1 = jnp.pad(params['w_f1'], ((0, CinP - Cin), (0, 0))).astype(jnp.bfloat16)
    wf2 = params['w_f2'].astype(jnp.bfloat16)

    def stack(name, dtype=jnp.float32):
        return jnp.stack([lp[name] for lp in params['layers']]).astype(dtype)

    out_pad = pl.pallas_call(
        functools.partial(fused_kernel, B=B, L=L, n_heads=H, n_layers=nL),
        out_shape=jax.ShapeDtypeStruct((2 * B, 128), jnp.float32),
    )(x, wf1, params['b_f1'], wf2, params['b_f2'],
      stack('w_qkv', jnp.bfloat16), stack('b_qkv'),
      stack('w_o', jnp.bfloat16), stack('b_o'),
      stack('ln1_w'), stack('ln1_b'),
      stack('w_ff1', jnp.bfloat16), stack('b_ff1'),
      stack('w_ff2', jnp.bfloat16), stack('b_ff2'),
      stack('ln2_w'), stack('ln2_b'),
      params['w_out'], params['b_out'])
    return out_pad[:, 0].reshape(B, 2)


# ---------------------------------------------------------------------------
# Deterministic parameter init (matmul weights stored as (Cin, Cout))
# ---------------------------------------------------------------------------
def init_params(key):
    nIn, E, Fw, nL = NET['nInput'], NET['nEmb'], NET['nFw'], NET['nLayer']
    keys = iter(jax.random.split(key, 6 + 8 * nL))

    def nrm(shape, scale=0.05):
        return scale * jax.random.normal(next(keys), shape, dtype=jnp.float32)

    params = {
        'w_f1': nrm((nIn, Fw)), 'b_f1': nrm((1, Fw)),
        'w_f2': nrm((Fw, E)), 'b_f2': nrm((1, E)),
        'w_out': nrm((1, E)), 'b_out': nrm((1, 1)),
        'layers': [],
    }
    for _ in range(nL):
        params['layers'].append({
            'w_qkv': nrm((E, 3 * E)), 'b_qkv': nrm((1, 3 * E)),
            'w_o': nrm((E, E)), 'b_o': nrm((1, E)),
            'ln1_w': jnp.ones((1, E), jnp.float32), 'ln1_b': jnp.zeros((1, E), jnp.float32),
            'w_ff1': nrm((E, Fw)), 'b_ff1': nrm((1, Fw)),
            'w_ff2': nrm((Fw, E)), 'b_ff2': nrm((1, E)),
            'ln2_w': jnp.ones((1, E), jnp.float32), 'ln2_b': jnp.zeros((1, E), jnp.float32),
        })
    return params


# ---------------------------------------------------------------------------
# Pure-JAX reference. bf16_dots=True mirrors the kernel's bf16-operand /
# f32-accumulate matmuls (structural check); False is the full-f32 reference.
# ---------------------------------------------------------------------------
def reference_forward(x_ncl, params, bf16_dots=False):
    cast = (lambda a: a.astype(jnp.bfloat16)) if bf16_dots else (lambda a: a)

    def mm(a, w):
        return jnp.dot(cast(a), cast(w), preferred_element_type=jnp.float32)

    x = jnp.transpose(x_ncl, (0, 2, 1)).astype(jnp.float32)           # (B, L, Cin)
    h = jax.nn.relu(mm(x, params['w_f1']) + params['b_f1'][0])
    y = mm(h, params['w_f2']) + params['b_f2'][0]
    mu = y.mean(axis=1, keepdims=True)
    var = ((y - mu) ** 2).mean(axis=1, keepdims=True)
    y = (y - mu) * jax.lax.rsqrt(var + LN_EPS)

    H, E = NET['nAttnHead'], NET['nEmb']
    dh = E // H
    B, L, _ = y.shape
    for lp in params['layers']:
        qkv = mm(y, lp['w_qkv']) + lp['b_qkv'][0]
        q, k, v = qkv[..., :E], qkv[..., E:2 * E], qkv[..., 2 * E:]
        q = q.reshape(B, L, H, dh).transpose(0, 2, 1, 3)
        k = k.reshape(B, L, H, dh).transpose(0, 2, 1, 3)
        v = v.reshape(B, L, H, dh).transpose(0, 2, 1, 3)
        s = jnp.einsum('bhqd,bhkd->bhqk', cast(q), cast(k),
                       preferred_element_type=jnp.float32) / math.sqrt(dh)
        p = jax.nn.softmax(s, axis=-1)
        a = jnp.einsum('bhqk,bhkd->bhqd', cast(p), cast(v),
                       preferred_element_type=jnp.float32)
        a = a.transpose(0, 2, 1, 3).reshape(B, L, E)
        a = mm(a, lp['w_o']) + lp['b_o'][0]

        h1 = y + a
        m1 = h1.mean(-1, keepdims=True)
        v1 = ((h1 - m1) ** 2).mean(-1, keepdims=True)
        h1 = (h1 - m1) * jax.lax.rsqrt(v1 + LN_EPS) * lp['ln1_w'][0] + lp['ln1_b'][0]

        f = jax.nn.relu(mm(h1, lp['w_ff1']) + lp['b_ff1'][0])
        f = mm(f, lp['w_ff2']) + lp['b_ff2'][0]
        h2 = h1 + f
        m2 = h2.mean(-1, keepdims=True)
        v2 = ((h2 - m2) ** 2).mean(-1, keepdims=True)
        y = (h2 - m2) * jax.lax.rsqrt(v2 + LN_EPS) * lp['ln2_w'][0] + lp['ln2_b'][0]

    # head: Conv1d(E->1) on L-positions [0, 1], softmax over those two (f32)
    s = jnp.einsum('bpe,e->bp', y[:, :2, :], params['w_out'][0]) + params['b_out'][0, 0]
    return jax.nn.softmax(s, axis=-1)


if __name__ == "__main__":
    key = jax.random.PRNGKey(0)
    pkey, xkey = jax.random.split(key)
    params = init_params(pkey)

    B, L = 2, 16                                    # small batch / sequence
    x = jax.random.normal(xkey, (B, NET['nInput'], L), dtype=jnp.float32)  # NCL input

    out = jax.block_until_ready(koikoi_forward(x, params))

    assert out.shape == (B, 2), out.shape
    assert jnp.allclose(jnp.sum(out, axis=1), 1.0, atol=1e-5)

    # structural check vs reference using the same bf16-operand / f32-acc matmuls
    ref_bf16 = reference_forward(x, params, bf16_dots=True)
    assert jnp.allclose(out, ref_bf16, atol=1e-2), float(jnp.max(jnp.abs(out - ref_bf16)))

    # end-to-end check vs full-f32 reference (bf16 operands => looser tolerance)
    ref_f32 = reference_forward(x, params, bf16_dots=False)
    assert jnp.allclose(out, ref_f32, atol=5e-2), float(jnp.max(jnp.abs(out - ref_f32)))

    print("KERNEL_OK")
</pallas_src>

<mosaic_0001>
module attributes {stable_mosaic.version = 11 : i64} {
  func.func @fused_kernel(%arg0: memref<32x384xbf16, #tpu.memory_space<vmem>>, %arg1: memref<384x512xbf16, #tpu.memory_space<vmem>>, %arg2: memref<1x512xf32, #tpu.memory_space<vmem>>, %arg3: memref<512x256xbf16, #tpu.memory_space<vmem>>, %arg4: memref<1x256xf32, #tpu.memory_space<vmem>>, %arg5: memref<2x256x768xbf16, #tpu.memory_space<vmem>>, %arg6: memref<2x1x768xf32, #tpu.memory_space<vmem>>, %arg7: memref<2x256x256xbf16, #tpu.memory_space<vmem>>, %arg8: memref<2x1x256xf32, #tpu.memory_space<vmem>>, %arg9: memref<2x1x256xf32, #tpu.memory_space<vmem>>, %arg10: memref<2x1x256xf32, #tpu.memory_space<vmem>>, %arg11: memref<2x256x512xbf16, #tpu.memory_space<vmem>>, %arg12: memref<2x1x512xf32, #tpu.memory_space<vmem>>, %arg13: memref<2x512x256xbf16, #tpu.memory_space<vmem>>, %arg14: memref<2x1x256xf32, #tpu.memory_space<vmem>>, %arg15: memref<2x1x256xf32, #tpu.memory_space<vmem>>, %arg16: memref<2x1x256xf32, #tpu.memory_space<vmem>>, %arg17: memref<1x256xf32, #tpu.memory_space<vmem>>, %arg18: memref<1x1xf32, #tpu.memory_space<vmem>>, %arg19: memref<4x128xf32, #tpu.memory_space<vmem>>) attributes {dimension_semantics = [], scalar_prefetch = 0 : i64, scratch_operands = 0 : i64, tpu.core_type = #tpu.core_type<tc>} {
    %c0 = arith.constant 0 : index
    %c0_0 = arith.constant 0 : index
    %0 = vector.load %arg0[%c0, %c0_0] : memref<32x384xbf16, #tpu.memory_space<vmem>>, vector<32x384xbf16>
    %c0_1 = arith.constant 0 : index
    %c0_2 = arith.constant 0 : index
    %1 = vector.load %arg1[%c0_1, %c0_2] : memref<384x512xbf16, #tpu.memory_space<vmem>>, vector<384x512xbf16>
    %cst = arith.constant dense<0.000000e+00> : vector<32x512xf32>
    %2 = tpu.matmul %0, %1, %cst {dimension_numbers = #tpu.dot_dimension_numbers<[1], [0], [0], [1], [0, 0, 1, 1], [], []>} : vector<32x384xbf16>, vector<384x512xbf16>, vector<32x512xf32> -> vector<32x512xf32>
    %c0_3 = arith.constant 0 : index
    %c0_4 = arith.constant 0 : index
    %3 = vector.load %arg2[%c0_3, %c0_4] : memref<1x512xf32, #tpu.memory_space<vmem>>, vector<1x512xf32>
    %4 = vector.broadcast %3 : vector<1x512xf32> to vector<32x512xf32>
    %5 = arith.addf %2, %4 : vector<32x512xf32>
    %cst_5 = arith.constant 0.000000e+00 : f32
    %6 = vector.broadcast %cst_5 : f32 to vector<32x512xf32>
    %7 = arith.maximumf %5, %6 : vector<32x512xf32>
    %8 = arith.truncf %7 : vector<32x512xf32> to vector<32x512xbf16>
    %c0_6 = arith.constant 0 : index
    %c0_7 = arith.constant 0 : index
    %9 = vector.load %arg3[%c0_6, %c0_7] : memref<512x256xbf16, #tpu.memory_space<vmem>>, vector<512x256xbf16>
    %cst_8 = arith.constant dense<0.000000e+00> : vector<32x256xf32>
    %10 = tpu.matmul %8, %9, %cst_8 {dimension_numbers = #tpu.dot_dimension_numbers<[1], [0], [0], [1], [0, 0, 1, 1], [], []>} : vector<32x512xbf16>, vector<512x256xbf16>, vector<32x256xf32> -> vector<32x256xf32>
    %c0_9 = arith.constant 0 : index
    %c0_10 = arith.constant 0 : index
    %11 = vector.load %arg4[%c0_9, %c0_10] : memref<1x256xf32, #tpu.memory_space<vmem>>, vector<1x256xf32>
    %12 = vector.broadcast %11 : vector<1x256xf32> to vector<32x256xf32>
    %13 = arith.addf %10, %12 : vector<32x256xf32>
    %14 = vector.extract_strided_slice %13 {offsets = [0, 0], sizes = [16, 256], strides = [1, 1]} : vector<32x256xf32> to vector<16x256xf32>
    %cst_11 = arith.constant dense<0.000000e+00> : vector<256xf32>
    %15 = vector.multi_reduction <add>, %14, %cst_11 [0] : vector<16x256xf32> to vector<256xf32>
    %16 = vector.shape_cast %15 : vector<256xf32> to vector<1x256xf32>
    %cst_12 = arith.constant 1.600000e+01 : f32
    %17 = vector.broadcast %cst_12 : f32 to vector<1x256xf32>
    %18 = arith.divf %16, %17 : vector<1x256xf32>
    %19 = vector.broadcast %18 : vector<1x256xf32> to vector<16x256xf32>
    %20 = arith.subf %14, %19 : vector<16x256xf32>
    %21 = arith.mulf %20, %20 : vector<16x256xf32>
    %cst_13 = arith.constant dense<0.000000e+00> : vector<256xf32>
    %22 = vector.multi_reduction <add>, %21, %cst_13 [0] : vector<16x256xf32> to vector<256xf32>
    %23 = vector.shape_cast %22 : vector<256xf32> to vector<1x256xf32>
    %cst_14 = arith.constant 1.600000e+01 : f32
    %24 = vector.broadcast %cst_14 : f32 to vector<1x256xf32>
    %25 = arith.divf %23, %24 : vector<1x256xf32>
    %26 = vector.broadcast %18 : vector<1x256xf32> to vector<16x256xf32>
    %27 = arith.subf %14, %26 : vector<16x256xf32>
    %cst_15 = arith.constant 9.99999974E-6 : f32
    %28 = vector.broadcast %cst_15 : f32 to vector<1x256xf32>
    %29 = arith.addf %25, %28 : vector<1x256xf32>
    %30 = math.rsqrt %29 : vector<1x256xf32>
    %31 = vector.broadcast %30 : vector<1x256xf32> to vector<16x256xf32>
    %32 = arith.mulf %27, %31 : vector<16x256xf32>
    %33 = vector.extract_strided_slice %13 {offsets = [16, 0], sizes = [16, 256], strides = [1, 1]} : vector<32x256xf32> to vector<16x256xf32>
    %cst_16 = arith.constant dense<0.000000e+00> : vector<256xf32>
    %34 = vector.multi_reduction <add>, %33, %cst_16 [0] : vector<16x256xf32> to vector<256xf32>
    %35 = vector.shape_cast %34 : vector<256xf32> to vector<1x256xf32>
    %cst_17 = arith.constant 1.600000e+01 : f32
    %36 = vector.broadcast %cst_17 : f32 to vector<1x256xf32>
    %37 = arith.divf %35, %36 : vector<1x256xf32>
    %38 = vector.broadcast %37 : vector<1x256xf32> to vector<16x256xf32>
    %39 = arith.subf %33, %38 : vector<16x256xf32>
    %40 = arith.mulf %39, %39 : vector<16x256xf32>
    %cst_18 = arith.constant dense<0.000000e+00> : vector<256xf32>
    %41 = vector.multi_reduction <add>, %40, %cst_18 [0] : vector<16x256xf32> to vector<256xf32>
    %42 = vector.shape_cast %41 : vector<256xf32> to vector<1x256xf32>
    %cst_19 = arith.constant 1.600000e+01 : f32
    %43 = vector.broadcast %cst_19 : f32 to vector<1x256xf32>
    %44 = arith.divf %42, %43 : vector<1x256xf32>
    %45 = vector.broadcast %37 : vector<1x256xf32> to vector<16x256xf32>
    %46 = arith.subf %33, %45 : vector<16x256xf32>
    %cst_20 = arith.constant 9.99999974E-6 : f32
    %47 = vector.broadcast %cst_20 : f32 to vector<1x256xf32>
    %48 = arith.addf %44, %47 : vector<1x256xf32>
    %49 = math.rsqrt %48 : vector<1x256xf32>
    %50 = vector.broadcast %49 : vector<1x256xf32> to vector<16x256xf32>
    %51 = arith.mulf %46, %50 : vector<16x256xf32>
    %52 = tpu.concatenate %32, %51 in 0 : vector<16x256xf32>, vector<16x256xf32> -> vector<32x256xf32>
    %c0_21 = arith.constant 0 : index
    %c0_22 = arith.constant 0 : index
    %c0_23 = arith.constant 0 : index
    %53 = vector.load %arg5[%c0_21, %c0_22, %c0_23] : memref<2x256x768xbf16, #tpu.memory_space<vmem>>, vector<1x256x768xbf16>
    %54 = vector.shape_cast %53 : vector<1x256x768xbf16> to vector<256x768xbf16>
    %c0_24 = arith.constant 0 : index
    %c0_25 = arith.constant 0 : index
    %c0_26 = arith.constant 0 : index
    %55 = vector.load %arg7[%c0_24, %c0_25, %c0_26] : memref<2x256x256xbf16, #tpu.memory_space<vmem>>, vector<1x256x256xbf16>
    %56 = vector.shape_cast %55 : vector<1x256x256xbf16> to vector<256x256xbf16>
    %57 = arith.truncf %52 : vector<32x256xf32> to vector<32x256xbf16>
    %cst_27 = arith.constant dense<0.000000e+00> : vector<32x768xf32>
    %58 = tpu.matmul %57, %54, %cst_27 {dimension_numbers = #tpu.dot_dimension_numbers<[1], [0], [0], [1], [0, 0, 1, 1], [], []>} : vector<32x256xbf16>, vector<256x768xbf16>, vector<32x768xf32> -> vector<32x768xf32>
    %c0_28 = arith.constant 0 : index
    %c0_29 = arith.constant 0 : index
    %c0_30 = arith.constant 0 : index
    %59 = vector.load %arg6[%c0_28, %c0_29, %c0_30] : memref<2x1x768xf32, #tpu.memory_space<vmem>>, vector<1x1x768xf32>
    %60 = vector.shape_cast %59 : vector<1x1x768xf32> to vector<1x768xf32>
    %61 = vector.broadcast %60 : vector<1x768xf32> to vector<32x768xf32>
    %62 = arith.addf %58, %61 : vector<32x768xf32>
    %63 = vector.extract_strided_slice %62 {offsets = [0, 0], sizes = [32, 256], strides = [1, 1]} : vector<32x768xf32> to vector<32x256xf32>
    %64 = arith.truncf %63 : vector<32x256xf32> to vector<32x256xbf16>
    %65 = vector.extract_strided_slice %62 {offsets = [0, 256], sizes = [32, 256], strides = [1, 1]} : vector<32x768xf32> to vector<32x256xf32>
    %66 = arith.truncf %65 : vector<32x256xf32> to vector<32x256xbf16>
    %67 = vector.extract_strided_slice %62 {offsets = [0, 512], sizes = [32, 256], strides = [1, 1]} : vector<32x768xf32> to vector<32x256xf32>
    %68 = arith.truncf %67 : vector<32x256xf32> to vector<32x256xbf16>
    %cst_31 = arith.constant 0.000000e+00 : f32
    %69 = vector.broadcast %cst_31 : f32 to vector<16x256xf32>
    %70 = vector.extract_strided_slice %64 {offsets = [0, 0], sizes = [16, 64], strides = [1, 1]} : vector<32x256xbf16> to vector<16x64xbf16>
    %71 = vector.extract_strided_slice %66 {offsets = [0, 0], sizes = [16, 64], strides = [1, 1]} : vector<32x256xbf16> to vector<16x64xbf16>
    %72 = vector.extract_strided_slice %68 {offsets = [0, 0], sizes = [16, 64], strides = [1, 1]} : vector<32x256xbf16> to vector<16x64xbf16>
    "tpu.trace_start"() <{level = 10 : i32, message = "qd,kd->qk"}> : () -> ()
    %cst_32 = arith.constant dense<0.000000e+00> : vector<16x16xf32>
    %73 = tpu.matmul %70, %71, %cst_32 {dimension_numbers = #tpu.dot_dimension_numbers<[1], [1], [0], [0], [0, 0, 1, 0], [], []>} : vector<16x64xbf16>, vector<16x64xbf16>, vector<16x16xf32> -> vector<16x16xf32>
    "tpu.trace_stop"() : () -> ()
    %cst_33 = arith.constant 1.250000e-01 : f32
    %74 = vector.broadcast %cst_33 : f32 to vector<16x16xf32>
    %75 = arith.mulf %73, %74 : vector<16x16xf32>
    %cst_34 = arith.constant dense<0xFF800000> : vector<16xf32>
    %76 = vector.multi_reduction <maximumf>, %75, %cst_34 [1] : vector<16x16xf32> to vector<16xf32>
    %77 = vector.shape_cast %76 : vector<16xf32> to vector<16x1xf32>
    %78 = vector.broadcast %77 : vector<16x1xf32> to vector<16x16xf32>
    %79 = arith.subf %75, %78 : vector<16x16xf32>
    %80 = math.exp %79 : vector<16x16xf32>
    %cst_35 = arith.constant dense<0.000000e+00> : vector<16xf32>
    %81 = vector.multi_reduction <add>, %80, %cst_35 [1] : vector<16x16xf32> to vector<16xf32>
    %82 = vector.shape_cast %81 : vector<16xf32> to vector<16x1xf32>
    %83 = tpu.reciprocal %82 {approx = true} : vector<16x1xf32> -> vector<16x1xf32>
    %84 = vector.broadcast %83 : vector<16x1xf32> to vector<16x16xf32>
    %85 = arith.mulf %80, %84 : vector<16x16xf32>
    %86 = arith.truncf %85 : vector<16x16xf32> to vector<16x16xbf16>
    %cst_36 = arith.constant dense<0.000000e+00> : vector<16x64xf32>
    %87 = tpu.matmul %86, %72, %cst_36 {dimension_numbers = #tpu.dot_dimension_numbers<[1], [0], [0], [1], [0, 0, 1, 1], [], []>} : vector<16x16xbf16>, vector<16x64xbf16>, vector<16x64xf32> -> vector<16x64xf32>
    %88 = arith.truncf %87 : vector<16x64xf32> to vector<16x64xbf16>
    %89 = vector.extract_strided_slice %56 {offsets = [0, 0], sizes = [64, 256], strides = [1, 1]} : vector<256x256xbf16> to vector<64x256xbf16>
    %cst_37 = arith.constant dense<0.000000e+00> : vector<16x256xf32>
    %90 = tpu.matmul %88, %89, %cst_37 {dimension_numbers = #tpu.dot_dimension_numbers<[1], [0], [0], [1], [0, 0, 1, 1], [], []>} : vector<16x64xbf16>, vector<64x256xbf16>, vector<16x256xf32> -> vector<16x256xf32>
    %91 = arith.addf %69, %90 : vector<16x256xf32>
    %92 = vector.extract_strided_slice %64 {offsets = [0, 64], sizes = [16, 64], strides = [1, 1]} : vector<32x256xbf16> to vector<16x64xbf16>
    %93 = vector.extract_strided_slice %66 {offsets = [0, 64], sizes = [16, 64], strides = [1, 1]} : vector<32x256xbf16> to vector<16x64xbf16>
    %94 = vector.extract_strided_slice %68 {offsets = [0, 64], sizes = [16, 64], strides = [1, 1]} : vector<32x256xbf16> to vector<16x64xbf16>
    "tpu.trace_start"() <{level = 10 : i32, message = "qd,kd->qk"}> : () -> ()
    %cst_38 = arith.constant dense<0.000000e+00> : vector<16x16xf32>
    %95 = tpu.matmul %92, %93, %cst_38 {dimension_numbers = #tpu.dot_dimension_numbers<[1], [1], [0], [0], [0, 0, 1, 0], [], []>} : vector<16x64xbf16>, vector<16x64xbf16>, vector<16x16xf32> -> vector<16x16xf32>
    "tpu.trace_stop"() : () -> ()
    %cst_39 = arith.constant 1.250000e-01 : f32
    %96 = vector.broadcast %cst_39 : f32 to vector<16x16xf32>
    %97 = arith.mulf %95, %96 : vector<16x16xf32>
    %cst_40 = arith.constant dense<0xFF800000> : vector<16xf32>
    %98 = vector.multi_reduction <maximumf>, %97, %cst_40 [1] : vector<16x16xf32> to vector<16xf32>
    %99 = vector.shape_cast %98 : vector<16xf32> to vector<16x1xf32>
    %100 = vector.broadcast %99 : vector<16x1xf32> to vector<16x16xf32>
    %101 = arith.subf %97, %100 : vector<16x16xf32>
    %102 = math.exp %101 : vector<16x16xf32>
    %cst_41 = arith.constant dense<0.000000e+00> : vector<16xf32>
    %103 = vector.multi_reduction <add>, %102, %cst_41 [1] : vector<16x16xf32> to vector<16xf32>
    %104 = vector.shape_cast %103 : vector<16xf32> to vector<16x1xf32>
    %105 = tpu.reciprocal %104 {approx = true} : vector<16x1xf32> -> vector<16x1xf32>
    %106 = vector.broadcast %105 : vector<16x1xf32> to vector<16x16xf32>
    %107 = arith.mulf %102, %106 : vector<16x16xf32>
    %108 = arith.truncf %107 : vector<16x16xf32> to vector<16x16xbf16>
    %cst_42 = arith.constant dense<0.000000e+00> : vector<16x64xf32>
    %109 = tpu.matmul %108, %94, %cst_42 {dimension_numbers = #tpu.dot_dimension_numbers<[1], [0], [0], [1], [0, 0, 1, 1], [], []>} : vector<16x16xbf16>, vector<16x64xbf16>, vector<16x64xf32> -> vector<16x64xf32>
    %110 = arith.truncf %109 : vector<16x64xf32> to vector<16x64xbf16>
    %111 = vector.extract_strided_slice %56 {offsets = [64, 0], sizes = [64, 256], strides = [1, 1]} : vector<256x256xbf16> to vector<64x256xbf16>
    %cst_43 = arith.constant dense<0.000000e+00> : vector<16x256xf32>
    %112 = tpu.matmul %110, %111, %cst_43 {dimension_numbers = #tpu.dot_dimension_numbers<[1], [0], [0], [1], [0, 0, 1, 1], [], []>} : vector<16x64xbf16>, vector<64x256xbf16>, vector<16x256xf32> -> vector<16x256xf32>
    %113 = arith.addf %91, %112 : vector<16x256xf32>
    %114 = vector.extract_strided_slice %64 {offsets = [0, 128], sizes = [16, 64], strides = [1, 1]} : vector<32x256xbf16> to vector<16x64xbf16>
    %115 = vector.extract_strided_slice %66 {offsets = [0, 128], sizes = [16, 64], strides = [1, 1]} : vector<32x256xbf16> to vector<16x64xbf16>
    %116 = vector.extract_strided_slice %68 {offsets = [0, 128], sizes = [16, 64], strides = [1, 1]} : vector<32x256xbf16> to vector<16x64xbf16>
    "tpu.trace_start"() <{level = 10 : i32, message = "qd,kd->qk"}> : () -> ()
    %cst_44 = arith.constant dense<0.000000e+00> : vector<16x16xf32>
    %117 = tpu.matmul %114, %115, %cst_44 {dimension_numbers = #tpu.dot_dimension_numbers<[1], [1], [0], [0], [0, 0, 1, 0], [], []>} : vector<16x64xbf16>, vector<16x64xbf16>, vector<16x16xf32> -> vector<16x16xf32>
    "tpu.trace_stop"() : () -> ()
    %cst_45 = arith.constant 1.250000e-01 : f32
    %118 = vector.broadcast %cst_45 : f32 to vector<16x16xf32>
    %119 = arith.mulf %117, %118 : vector<16x16xf32>
    %cst_46 = arith.constant dense<0xFF800000> : vector<16xf32>
    %120 = vector.multi_reduction <maximumf>, %119, %cst_46 [1] : vector<16x16xf32> to vector<16xf32>
    %121 = vector.shape_cast %120 : vector<16xf32> to vector<16x1xf32>
    %122 = vector.broadcast %121 : vector<16x1xf32> to vector<16x16xf32>
    %123 = arith.subf %119, %122 : vector<16x16xf32>
    %124 = math.exp %123 : vector<16x16xf32>
    %cst_47 = arith.constant dense<0.000000e+00> : vector<16xf32>
    %125 = vector.multi_reduction <add>, %124, %cst_47 [1] : vector<16x16xf32> to vector<16xf32>
    %126 = vector.shape_cast %125 : vector<16xf32> to vector<16x1xf32>
    %127 = tpu.reciprocal %126 {approx = true} : vector<16x1xf32> -> vector<16x1xf32>
    %128 = vector.broadcast %127 : vector<16x1xf32> to vector<16x16xf32>
    %129 = arith.mulf %124, %128 : vector<16x16xf32>
    %130 = arith.truncf %129 : vector<16x16xf32> to vector<16x16xbf16>
    %cst_48 = arith.constant dense<0.000000e+00> : vector<16x64xf32>
    %131 = tpu.matmul %130, %116, %cst_48 {dimension_numbers = #tpu.dot_dimension_numbers<[1], [0], [0], [1], [0, 0, 1, 1], [], []>} : vector<16x16xbf16>, vector<16x64xbf16>, vector<16x64xf32> -> vector<16x64xf32>
    %132 = arith.truncf %131 : vector<16x64xf32> to vector<16x64xbf16>
    %133 = vector.extract_strided_slice %56 {offsets = [128, 0], sizes = [64, 256], strides = [1, 1]} : vector<256x256xbf16> to vector<64x256xbf16>
    %cst_49 = arith.constant dense<0.000000e+00> : vector<16x256xf32>
    %134 = tpu.matmul %132, %133, %cst_49 {dimension_numbers = #tpu.dot_dimension_numbers<[1], [0], [0], [1], [0, 0, 1, 1], [], []>} : vector<16x64xbf16>, vector<64x256xbf16>, vector<16x256xf32> -> vector<16x256xf32>
    %135 = arith.addf %113, %134 : vector<16x256xf32>
    %136 = vector.extract_strided_slice %64 {offsets = [0, 192], sizes = [16, 64], strides = [1, 1]} : vector<32x256xbf16> to vector<16x64xbf16>
    %137 = vector.extract_strided_slice %66 {offsets = [0, 192], sizes = [16, 64], strides = [1, 1]} : vector<32x256xbf16> to vector<16x64xbf16>
    %138 = vector.extract_strided_slice %68 {offsets = [0, 192], sizes = [16, 64], strides = [1, 1]} : vector<32x256xbf16> to vector<16x64xbf16>
    "tpu.trace_start"() <{level = 10 : i32, message = "qd,kd->qk"}> : () -> ()
    %cst_50 = arith.constant dense<0.000000e+00> : vector<16x16xf32>
    %139 = tpu.matmul %136, %137, %cst_50 {dimension_numbers = #tpu.dot_dimension_numbers<[1], [1], [0], [0], [0, 0, 1, 0], [], []>} : vector<16x64xbf16>, vector<16x64xbf16>, vector<16x16xf32> -> vector<16x16xf32>
    "tpu.trace_stop"() : () -> ()
    %cst_51 = arith.constant 1.250000e-01 : f32
    %140 = vector.broadcast %cst_51 : f32 to vector<16x16xf32>
    %141 = arith.mulf %139, %140 : vector<16x16xf32>
    %cst_52 = arith.constant dense<0xFF800000> : vector<16xf32>
    %142 = vector.multi_reduction <maximumf>, %141, %cst_52 [1] : vector<16x16xf32> to vector<16xf32>
    %143 = vector.shape_cast %142 : vector<16xf32> to vector<16x1xf32>
    %144 = vector.broadcast %143 : vector<16x1xf32> to vector<16x16xf32>
    %145 = arith.subf %141, %144 : vector<16x16xf32>
    %146 = math.exp %145 : vector<16x16xf32>
    %cst_53 = arith.constant dense<0.000000e+00> : vector<16xf32>
    %147 = vector.multi_reduction <add>, %146, %cst_53 [1] : vector<16x16xf32> to vector<16xf32>
    %148 = vector.shape_cast %147 : vector<16xf32> to vector<16x1xf32>
    %149 = tpu.reciprocal %148 {approx = true} : vector<16x1xf32> -> vector<16x1xf32>
    %150 = vector.broadcast %149 : vector<16x1xf32> to vector<16x16xf32>
    %151 = arith.mulf %146, %150 : vector<16x16xf32>
    %152 = arith.truncf %151 : vector<16x16xf32> to vector<16x16xbf16>
    %cst_54 = arith.constant dense<0.000000e+00> : vector<16x64xf32>
    %153 = tpu.matmul %152, %138, %cst_54 {dimension_numbers = #tpu.dot_dimension_numbers<[1], [0], [0], [1], [0, 0, 1, 1], [], []>} : vector<16x16xbf16>, vector<16x64xbf16>, vector<16x64xf32> -> vector<16x64xf32>
    %154 = arith.truncf %153 : vector<16x64xf32> to vector<16x64xbf16>
    %155 = vector.extract_strided_slice %56 {offsets = [192, 0], sizes = [64, 256], strides = [1, 1]} : vector<256x256xbf16> to vector<64x256xbf16>
    %cst_55 = arith.constant dense<0.000000e+00> : vector<16x256xf32>
    %156 = tpu.matmul %154, %155, %cst_55 {dimension_numbers = #tpu.dot_dimension_numbers<[1], [0], [0], [1], [0, 0, 1, 1], [], []>} : vector<16x64xbf16>, vector<64x256xbf16>, vector<16x256xf32> -> vector<16x256xf32>
    %157 = arith.addf %135, %156 : vector<16x256xf32>
    %cst_56 = arith.constant 0.000000e+00 : f32
    %158 = vector.broadcast %cst_56 : f32 to vector<16x256xf32>
    %159 = vector.extract_strided_slice %64 {offsets = [16, 0], sizes = [16, 64], strides = [1, 1]} : vector<32x256xbf16> to vector<16x64xbf16>
    %160 = vector.extract_strided_slice %66 {offsets = [16, 0], sizes = [16, 64], strides = [1, 1]} : vector<32x256xbf16> to vector<16x64xbf16>
    %161 = vector.extract_strided_slice %68 {offsets = [16, 0], sizes = [16, 64], strides = [1, 1]} : vector<32x256xbf16> to vector<16x64xbf16>
    "tpu.trace_start"() <{level = 10 : i32, message = "qd,kd->qk"}> : () -> ()
    %cst_57 = arith.constant dense<0.000000e+00> : vector<16x16xf32>
    %162 = tpu.matmul %159, %160, %cst_57 {dimension_numbers = #tpu.dot_dimension_numbers<[1], [1], [0], [0], [0, 0, 1, 0], [], []>} : vector<16x64xbf16>, vector<16x64xbf16>, vector<16x16xf32> -> vector<16x16xf32>
    "tpu.trace_stop"() : () -> ()
    %cst_58 = arith.constant 1.250000e-01 : f32
    %163 = vector.broadcast %cst_58 : f32 to vector<16x16xf32>
    %164 = arith.mulf %162, %163 : vector<16x16xf32>
    %cst_59 = arith.constant dense<0xFF800000> : vector<16xf32>
    %165 = vector.multi_reduction <maximumf>, %164, %cst_59 [1] : vector<16x16xf32> to vector<16xf32>
    %166 = vector.shape_cast %165 : vector<16xf32> to vector<16x1xf32>
    %167 = vector.broadcast %166 : vector<16x1xf32> to vector<16x16xf32>
    %168 = arith.subf %164, %167 : vector<16x16xf32>
    %169 = math.exp %168 : vector<16x16xf32>
    %cst_60 = arith.constant dense<0.000000e+00> : vector<16xf32>
    %170 = vector.multi_reduction <add>, %169, %cst_60 [1] : vector<16x16xf32> to vector<16xf32>
    %171 = vector.shape_cast %170 : vector<16xf32> to vector<16x1xf32>
    %172 = tpu.reciprocal %171 {approx = true} : vector<16x1xf32> -> vector<16x1xf32>
    %173 = vector.broadcast %172 : vector<16x1xf32> to vector<16x16xf32>
    %174 = arith.mulf %169, %173 : vector<16x16xf32>
    %175 = arith.truncf %174 : vector<16x16xf32> to vector<16x16xbf16>
    %cst_61 = arith.constant dense<0.000000e+00> : vector<16x64xf32>
    %176 = tpu.matmul %175, %161, %cst_61 {dimension_numbers = #tpu.dot_dimension_numbers<[1], [0], [0], [1], [0, 0, 1, 1], [], []>} : vector<16x16xbf16>, vector<16x64xbf16>, vector<16x64xf32> -> vector<16x64xf32>
    %177 = arith.truncf %176 : vector<16x64xf32> to vector<16x64xbf16>
    %178 = vector.extract_strided_slice %56 {offsets = [0, 0], sizes = [64, 256], strides = [1, 1]} : vector<256x256xbf16> to vector<64x256xbf16>
    %cst_62 = arith.constant dense<0.000000e+00> : vector<16x256xf32>
    %179 = tpu.matmul %177, %178, %cst_62 {dimension_numbers = #tpu.dot_dimension_numbers<[1], [0], [0], [1], [0, 0, 1, 1], [], []>} : vector<16x64xbf16>, vector<64x256xbf16>, vector<16x256xf32> -> vector<16x256xf32>
    %180 = arith.addf %158, %179 : vector<16x256xf32>
    %181 = vector.extract_strided_slice %64 {offsets = [16, 64], sizes = [16, 64], strides = [1, 1]} : vector<32x256xbf16> to vector<16x64xbf16>
    %182 = vector.extract_strided_slice %66 {offsets = [16, 64], sizes = [16, 64], strides = [1, 1]} : vector<32x256xbf16> to vector<16x64xbf16>
    %183 = vector.extract_strided_slice %68 {offsets = [16, 64], sizes = [16, 64], strides = [1, 1]} : vector<32x256xbf16> to vector<16x64xbf16>
    "tpu.trace_start"() <{level = 10 : i32, message = "qd,kd->qk"}> : () -> ()
    %cst_63 = arith.constant dense<0.000000e+00> : vector<16x16xf32>
    %184 = tpu.matmul %181, %182, %cst_63 {dimension_numbers = #tpu.dot_dimension_numbers<[1], [1], [0], [0], [0, 0, 1, 0], [], []>} : vector<16x64xbf16>, vector<16x64xbf16>, vector<16x16xf32> -> vector<16x16xf32>
    "tpu.trace_stop"() : () -> ()
    %cst_64 = arith.constant 1.250000e-01 : f32
    %185 = vector.broadcast %cst_64 : f32 to vector<16x16xf32>
    %186 = arith.mulf %184, %185 : vector<16x16xf32>
    %cst_65 = arith.constant dense<0xFF800000> : vector<16xf32>
    %187 = vector.multi_reduction <maximumf>, %186, %cst_65 [1] : vector<16x16xf32> to vector<16xf32>
    %188 = vector.shape_cast %187 : vector<16xf32> to vector<16x1xf32>
    %189 = vector.broadcast %188 : vector<16x1xf32> to vector<16x16xf32>
    %190 = arith.subf %186, %189 : vector<16x16xf32>
    %191 = math.exp %190 : vector<16x16xf32>
    %cst_66 = arith.constant dense<0.000000e+00> : vector<16xf32>
    %192 = vector.multi_reduction <add>, %191, %cst_66 [1] : vector<16x16xf32> to vector<16xf32>
    %193 = vector.shape_cast %192 : vector<16xf32> to vector<16x1xf32>
    %194 = tpu.reciprocal %193 {approx = true} : vector<16x1xf32> -> vector<16x1xf32>
    %195 = vector.broadcast %194 : vector<16x1xf32> to vector<16x16xf32>
    %196 = arith.mulf %191, %195 : vector<16x16xf32>
    %197 = arith.truncf %196 : vector<16x16xf32> to vector<16x16xbf16>
    %cst_67 = arith.constant dense<0.000000e+00> : vector<16x64xf32>
    %198 = tpu.matmul %197, %183, %cst_67 {dimension_numbers = #tpu.dot_dimension_numbers<[1], [0], [0], [1], [0, 0, 1, 1], [], []>} : vector<16x16xbf16>, vector<16x64xbf16>, vector<16x64xf32> -> vector<16x64xf32>
    %199 = arith.truncf %198 : vector<16x64xf32> to vector<16x64xbf16>
    %200 = vector.extract_strided_slice %56 {offsets = [64, 0], sizes = [64, 256], strides = [1, 1]} : vector<256x256xbf16> to vector<64x256xbf16>
    %cst_68 = arith.constant dense<0.000000e+00> : vector<16x256xf32>
    %201 = tpu.matmul %199, %200, %cst_68 {dimension_numbers = #tpu.dot_dimension_numbers<[1], [0], [0], [1], [0, 0, 1, 1], [], []>} : vector<16x64xbf16>, vector<64x256xbf16>, vector<16x256xf32> -> vector<16x256xf32>
    %202 = arith.addf %180, %201 : vector<16x256xf32>
    %203 = vector.extract_strided_slice %64 {offsets = [16, 128], sizes = [16, 64], strides = [1, 1]} : vector<32x256xbf16> to vector<16x64xbf16>
    %204 = vector.extract_strided_slice %66 {offsets = [16, 128], sizes = [16, 64], strides = [1, 1]} : vector<32x256xbf16> to vector<16x64xbf16>
    %205 = vector.extract_strided_slice %68 {offsets = [16, 128], sizes = [16, 64], strides = [1, 1]} : vector<32x256xbf16> to vector<16x64xbf16>
    "tpu.trace_start"() <{level = 10 : i32, message = "qd,kd->qk"}> : () -> ()
    %cst_69 = arith.constant dense<0.000000e+00> : vector<16x16xf32>
    %206 = tpu.matmul %203, %204, %cst_69 {dimension_numbers = #tpu.dot_dimension_numbers<[1], [1], [0], [0], [0, 0, 1, 0], [], []>} : vector<16x64xbf16>, vector<16x64xbf16>, vector<16x16xf32> -> vector<16x16xf32>
    "tpu.trace_stop"() : () -> ()
    %cst_70 = arith.constant 1.250000e-01 : f32
    %207 = vector.broadcast %cst_70 : f32 to vector<16x16xf32>
    %208 = arith.mulf %206, %207 : vector<16x16xf32>
    %cst_71 = arith.constant dense<0xFF800000> : vector<16xf32>
    %209 = vector.multi_reduction <maximumf>, %208, %cst_71 [1] : vector<16x16xf32> to vector<16xf32>
    %210 = vector.shape_cast %209 : vector<16xf32> to vector<16x1xf32>
    %211 = vector.broadcast %210 : vector<16x1xf32> to vector<16x16xf32>
    %212 = arith.subf %208, %211 : vector<16x16xf32>
    %213 = math.exp %212 : vector<16x16xf32>
    %cst_72 = arith.constant dense<0.000000e+00> : vector<16xf32>
    %214 = vector.multi_reduction <add>, %213, %cst_72 [1] : vector<16x16xf32> to vector<16xf32>
    %215 = vector.shape_cast %214 : vector<16xf32> to vector<16x1xf32>
    %216 = tpu.reciprocal %215 {approx = true} : vector<16x1xf32> -> vector<16x1xf32>
    %217 = vector.broadcast %216 : vector<16x1xf32> to vector<16x16xf32>
    %218 = arith.mulf %213, %217 : vector<16x16xf32>
    %219 = arith.truncf %218 : vector<16x16xf32> to vector<16x16xbf16>
    %cst_73 = arith.constant dense<0.000000e+00> : vector<16x64xf32>
    %220 = tpu.matmul %219, %205, %cst_73 {dimension_numbers = #tpu.dot_dimension_numbers<[1], [0], [0], [1], [0, 0, 1, 1], [], []>} : vector<16x16xbf16>, vector<16x64xbf16>, vector<16x64xf32> -> vector<16x64xf32>
    %221 = arith.truncf %220 : vector<16x64xf32> to vector<16x64xbf16>
    %222 = vector.extract_strided_slice %56 {offsets = [128, 0], sizes = [64, 256], strides = [1, 1]} : vector<256x256xbf16> to vector<64x256xbf16>
    %cst_74 = arith.constant dense<0.000000e+00> : vector<16x256xf32>
    %223 = tpu.matmul %221, %222, %cst_74 {dimension_numbers = #tpu.dot_dimension_numbers<[1], [0], [0], [1], [0, 0, 1, 1], [], []>} : vector<16x64xbf16>, vector<64x256xbf16>, vector<16x256xf32> -> vector<16x256xf32>
    %224 = arith.addf %202, %223 : vector<16x256xf32>
    %225 = vector.extract_strided_slice %64 {offsets = [16, 192], sizes = [16, 64], strides = [1, 1]} : vector<32x256xbf16> to vector<16x64xbf16>
    %226 = vector.extract_strided_slice %66 {offsets = [16, 192], sizes = [16, 64], strides = [1, 1]} : vector<32x256xbf16> to vector<16x64xbf16>
    %227 = vector.extract_strided_slice %68 {offsets = [16, 192], sizes = [16, 64], strides = [1, 1]} : vector<32x256xbf16> to vector<16x64xbf16>
    "tpu.trace_start"() <{level = 10 : i32, message = "qd,kd->qk"}> : () -> ()
    %cst_75 = arith.constant dense<0.000000e+00> : vector<16x16xf32>
    %228 = tpu.matmul %225, %226, %cst_75 {dimension_numbers = #tpu.dot_dimension_numbers<[1], [1], [0], [0], [0, 0, 1, 0], [], []>} : vector<16x64xbf16>, vector<16x64xbf16>, vector<16x16xf32> -> vector<16x16xf32>
    "tpu.trace_stop"() : () -> ()
    %cst_76 = arith.constant 1.250000e-01 : f32
    %229 = vector.broadcast %cst_76 : f32 to vector<16x16xf32>
    %230 = arith.mulf %228, %229 : vector<16x16xf32>
    %cst_77 = arith.constant dense<0xFF800000> : vector<16xf32>
    %231 = vector.multi_reduction <maximumf>, %230, %cst_77 [1] : vector<16x16xf32> to vector<16xf32>
    %232 = vector.shape_cast %231 : vector<16xf32> to vector<16x1xf32>
    %233 = vector.broadcast %232 : vector<16x1xf32> to vector<16x16xf32>
    %234 = arith.subf %230, %233 : vector<16x16xf32>
    %235 = math.exp %234 : vector<16x16xf32>
    %cst_78 = arith.constant dense<0.000000e+00> : vector<16xf32>
    %236 = vector.multi_reduction <add>, %235, %cst_78 [1] : vector<16x16xf32> to vector<16xf32>
    %237 = vector.shape_cast %236 : vector<16xf32> to vector<16x1xf32>
    %238 = tpu.reciprocal %237 {approx = true} : vector<16x1xf32> -> vector<16x1xf32>
    %239 = vector.broadcast %238 : vector<16x1xf32> to vector<16x16xf32>
    %240 = arith.mulf %235, %239 : vector<16x16xf32>
    %241 = arith.truncf %240 : vector<16x16xf32> to vector<16x16xbf16>
    %cst_79 = arith.constant dense<0.000000e+00> : vector<16x64xf32>
    %242 = tpu.matmul %241, %227, %cst_79 {dimension_numbers = #tpu.dot_dimension_numbers<[1], [0], [0], [1], [0, 0, 1, 1], [], []>} : vector<16x16xbf16>, vector<16x64xbf16>, vector<16x64xf32> -> vector<16x64xf32>
    %243 = arith.truncf %242 : vector<16x64xf32> to vector<16x64xbf16>
    %244 = vector.extract_strided_slice %56 {offsets = [192, 0], sizes = [64, 256], strides = [1, 1]} : vector<256x256xbf16> to vector<64x256xbf16>
    %cst_80 = arith.constant dense<0.000000e+00> : vector<16x256xf32>
    %245 = tpu.matmul %243, %244, %cst_80 {dimension_numbers = #tpu.dot_dimension_numbers<[1], [0], [0], [1], [0, 0, 1, 1], [], []>} : vector<16x64xbf16>, vector<64x256xbf16>, vector<16x256xf32> -> vector<16x256xf32>
    %246 = arith.addf %224, %245 : vector<16x256xf32>
    %247 = tpu.concatenate %157, %246 in 0 : vector<16x256xf32>, vector<16x256xf32> -> vector<32x256xf32>
    %c0_81 = arith.constant 0 : index
    %c0_82 = arith.constant 0 : index
    %c0_83 = arith.constant 0 : index
    %248 = vector.load %arg8[%c0_81, %c0_82, %c0_83] : memref<2x1x256xf32, #tpu.memory_space<vmem>>, vector<1x1x256xf32>
    %249 = vector.shape_cast %248 : vector<1x1x256xf32> to vector<1x256xf32>
    %250 = vector.broadcast %249 : vector<1x256xf32> to vector<32x256xf32>
    %251 = arith.addf %247, %250 : vector<32x256xf32>
    %252 = arith.addf %52, %251 : vector<32x256xf32>
    %cst_84 = arith.constant dense<0.000000e+00> : vector<32xf32>
    %253 = vector.multi_reduction <add>, %252, %cst_84 [1] : vector<32x256xf32> to vector<32xf32>
    %254 = vector.shape_cast %253 : vector<32xf32> to vector<32x1xf32>
    %cst_85 = arith.constant 2.560000e+02 : f32
    %255 = vector.broadcast %cst_85 : f32 to vector<32x1xf32>
    %256 = arith.divf %254, %255 : vector<32x1xf32>
    %257 = vector.broadcast %256 : vector<32x1xf32> to vector<32x256xf32>
    %258 = arith.subf %252, %257 : vector<32x256xf32>
    %259 = arith.mulf %258, %258 : vector<32x256xf32>
    %cst_86 = arith.constant dense<0.000000e+00> : vector<32xf32>
    %260 = vector.multi_reduction <add>, %259, %cst_86 [1] : vector<32x256xf32> to vector<32xf32>
    %261 = vector.shape_cast %260 : vector<32xf32> to vector<32x1xf32>
    %cst_87 = arith.constant 2.560000e+02 : f32
    %262 = vector.broadcast %cst_87 : f32 to vector<32x1xf32>
    %263 = arith.divf %261, %262 : vector<32x1xf32>
    %264 = vector.broadcast %256 : vector<32x1xf32> to vector<32x256xf32>
    %265 = arith.subf %252, %264 : vector<32x256xf32>
    %cst_88 = arith.constant 9.99999974E-6 : f32
    %266 = vector.broadcast %cst_88 : f32 to vector<32x1xf32>
    %267 = arith.addf %263, %266 : vector<32x1xf32>
    %268 = math.rsqrt %267 : vector<32x1xf32>
    %269 = vector.broadcast %268 : vector<32x1xf32> to vector<32x256xf32>
    %270 = arith.mulf %265, %269 : vector<32x256xf32>
    %c0_89 = arith.constant 0 : index
    %c0_90 = arith.constant 0 : index
    %c0_91 = arith.constant 0 : index
    %271 = vector.load %arg9[%c0_89, %c0_90, %c0_91] : memref<2x1x256xf32, #tpu.memory_space<vmem>>, vector<1x1x256xf32>
    %272 = vector.shape_cast %271 : vector<1x1x256xf32> to vector<1x256xf32>
    %273 = vector.broadcast %272 : vector<1x256xf32> to vector<32x256xf32>
    %274 = arith.mulf %270, %273 : vector<32x256xf32>
    %c0_92 = arith.constant 0 : index
    %c0_93 = arith.constant 0 : index
    %c0_94 = arith.constant 0 : index
    %275 = vector.load %arg10[%c0_92, %c0_93, %c0_94] : memref<2x1x256xf32, #tpu.memory_space<vmem>>, vector<1x1x256xf32>
    %276 = vector.shape_cast %275 : vector<1x1x256xf32> to vector<1x256xf32>
    %277 = vector.broadcast %276 : vector<1x256xf32> to vector<32x256xf32>
    %278 = arith.addf %274, %277 : vector<32x256xf32>
    %279 = arith.truncf %278 : vector<32x256xf32> to vector<32x256xbf16>
    %c0_95 = arith.constant 0 : index
    %c0_96 = arith.constant 0 : index
    %c0_97 = arith.constant 0 : index
    %280 = vector.load %arg11[%c0_95, %c0_96, %c0_97] : memref<2x256x512xbf16, #tpu.memory_space<vmem>>, vector<1x256x512xbf16>
    %281 = vector.shape_cast %280 : vector<1x256x512xbf16> to vector<256x512xbf16>
    %cst_98 = arith.constant dense<0.000000e+00> : vector<32x512xf32>
    %282 = tpu.matmul %279, %281, %cst_98 {dimension_numbers = #tpu.dot_dimension_numbers<[1], [0], [0], [1], [0, 0, 1, 1], [], []>} : vector<32x256xbf16>, vector<256x512xbf16>, vector<32x512xf32> -> vector<32x512xf32>
    %c0_99 = arith.constant 0 : index
    %c0_100 = arith.constant 0 : index
    %c0_101 = arith.constant 0 : index
    %283 = vector.load %arg12[%c0_99, %c0_100, %c0_101] : memref<2x1x512xf32, #tpu.memory_space<vmem>>, vector<1x1x512xf32>
    %284 = vector.shape_cast %283 : vector<1x1x512xf32> to vector<1x512xf32>
    %285 = vector.broadcast %284 : vector<1x512xf32> to vector<32x512xf32>
    %286 = arith.addf %282, %285 : vector<32x512xf32>
    %cst_102 = arith.constant 0.000000e+00 : f32
    %287 = vector.broadcast %cst_102 : f32 to vector<32x512xf32>
    %288 = arith.maximumf %286, %287 : vector<32x512xf32>
    %289 = arith.truncf %288 : vector<32x512xf32> to vector<32x512xbf16>
    %c0_103 = arith.constant 0 : index
    %c0_104 = arith.constant 0 : index
    %c0_105 = arith.constant 0 : index
    %290 = vector.load %arg13[%c0_103, %c0_104, %c0_105] : memref<2x512x256xbf16, #tpu.memory_space<vmem>>, vector<1x512x256xbf16>
    %291 = vector.shape_cast %290 : vector<1x512x256xbf16> to vector<512x256xbf16>
    %cst_106 = arith.constant dense<0.000000e+00> : vector<32x256xf32>
    %292 = tpu.matmul %289, %291, %cst_106 {dimension_numbers = #tpu.dot_dimension_numbers<[1], [0], [0], [1], [0, 0, 1, 1], [], []>} : vector<32x512xbf16>, vector<512x256xbf16>, vector<32x256xf32> -> vector<32x256xf32>
    %c0_107 = arith.constant 0 : index
    %c0_108 = arith.constant 0 : index
    %c0_109 = arith.constant 0 : index
    %293 = vector.load %arg14[%c0_107, %c0_108, %c0_109] : memref<2x1x256xf32, #tpu.memory_space<vmem>>, vector<1x1x256xf32>
    %294 = vector.shape_cast %293 : vector<1x1x256xf32> to vector<1x256xf32>
    %295 = vector.broadcast %294 : vector<1x256xf32> to vector<32x256xf32>
    %296 = arith.addf %292, %295 : vector<32x256xf32>
    %297 = arith.addf %278, %296 : vector<32x256xf32>
    %cst_110 = arith.constant dense<0.000000e+00> : vector<32xf32>
    %298 = vector.multi_reduction <add>, %297, %cst_110 [1] : vector<32x256xf32> to vector<32xf32>
    %299 = vector.shape_cast %298 : vector<32xf32> to vector<32x1xf32>
    %cst_111 = arith.constant 2.560000e+02 : f32
    %300 = vector.broadcast %cst_111 : f32 to vector<32x1xf32>
    %301 = arith.divf %299, %300 : vector<32x1xf32>
    %302 = vector.broadcast %301 : vector<32x1xf32> to vector<32x256xf32>
    %303 = arith.subf %297, %302 : vector<32x256xf32>
    %304 = arith.mulf %303, %303 : vector<32x256xf32>
    %cst_112 = arith.constant dense<0.000000e+00> : vector<32xf32>
    %305 = vector.multi_reduction <add>, %304, %cst_112 [1] : vector<32x256xf32> to vector<32xf32>
    %306 = vector.shape_cast %305 : vector<32xf32> to vector<32x1xf32>
    %cst_113 = arith.constant 2.560000e+02 : f32
    %307 = vector.broadcast %cst_113 : f32 to vector<32x1xf32>
    %308 = arith.divf %306, %307 : vector<32x1xf32>
    %309 = vector.broadcast %301 : vector<32x1xf32> to vector<32x256xf32>
    %310 = arith.subf %297, %309 : vector<32x256xf32>
    %cst_114 = arith.constant 9.99999974E-6 : f32
    %311 = vector.broadcast %cst_114 : f32 to vector<32x1xf32>
    %312 = arith.addf %308, %311 : vector<32x1xf32>
    %313 = math.rsqrt %312 : vector<32x1xf32>
    %314 = vector.broadcast %313 : vector<32x1xf32> to vector<32x256xf32>
    %315 = arith.mulf %310, %314 : vector<32x256xf32>
    %c0_115 = arith.constant 0 : index
    %c0_116 = arith.constant 0 : index
    %c0_117 = arith.constant 0 : index
    %316 = vector.load %arg15[%c0_115, %c0_116, %c0_117] : memref<2x1x256xf32, #tpu.memory_space<vmem>>, vector<1x1x256xf32>
    %317 = vector.shape_cast %316 : vector<1x1x256xf32> to vector<1x256xf32>
    %318 = vector.broadcast %317 : vector<1x256xf32> to vector<32x256xf32>
    %319 = arith.mulf %315, %318 : vector<32x256xf32>
    %c0_118 = arith.constant 0 : index
    %c0_119 = arith.constant 0 : index
    %c0_120 = arith.constant 0 : index
    %320 = vector.load %arg16[%c0_118, %c0_119, %c0_120] : memref<2x1x256xf32, #tpu.memory_space<vmem>>, vector<1x1x256xf32>
    %321 = vector.shape_cast %320 : vector<1x1x256xf32> to vector<1x256xf32>
    %322 = vector.broadcast %321 : vector<1x256xf32> to vector<32x256xf32>
    %323 = arith.addf %319, %322 : vector<32x256xf32>
    %c1 = arith.constant 1 : index
    %c0_121 = arith.constant 0 : index
    %c0_122 = arith.constant 0 : index
    %324 = vector.load %arg5[%c1, %c0_121, %c0_122] : memref<2x256x768xbf16, #tpu.memory_space<vmem>>, vector<1x256x768xbf16>
    %325 = vector.shape_cast %324 : vector<1x256x768xbf16> to vector<256x768xbf16>
    %c1_123 = arith.constant 1 : index
    %c0_124 = arith.constant 0 : index
    %c0_125 = arith.constant 0 : index
    %326 = vector.load %arg7[%c1_123, %c0_124, %c0_125] : memref<2x256x256xbf16, #tpu.memory_space<vmem>>, vector<1x256x256xbf16>
    %327 = vector.shape_cast %326 : vector<1x256x256xbf16> to vector<256x256xbf16>
    %328 = arith.truncf %323 : vector<32x256xf32> to vector<32x256xbf16>
    %cst_126 = arith.constant dense<0.000000e+00> : vector<32x768xf32>
    %329 = tpu.matmul %328, %325, %cst_126 {dimension_numbers = #tpu.dot_dimension_numbers<[1], [0], [0], [1], [0, 0, 1, 1], [], []>} : vector<32x256xbf16>, vector<256x768xbf16>, vector<32x768xf32> -> vector<32x768xf32>
    %c1_127 = arith.constant 1 : index
    %c0_128 = arith.constant 0 : index
    %c0_129 = arith.constant 0 : index
    %330 = vector.load %arg6[%c1_127, %c0_128, %c0_129] : memref<2x1x768xf32, #tpu.memory_space<vmem>>, vector<1x1x768xf32>
    %331 = vector.shape_cast %330 : vector<1x1x768xf32> to vector<1x768xf32>
    %332 = vector.broadcast %331 : vector<1x768xf32> to vector<32x768xf32>
    %333 = arith.addf %329, %332 : vector<32x768xf32>
    %334 = vector.extract_strided_slice %333 {offsets = [0, 0], sizes = [32, 256], strides = [1, 1]} : vector<32x768xf32> to vector<32x256xf32>
    %335 = arith.truncf %334 : vector<32x256xf32> to vector<32x256xbf16>
    %336 = vector.extract_strided_slice %333 {offsets = [0, 256], sizes = [32, 256], strides = [1, 1]} : vector<32x768xf32> to vector<32x256xf32>
    %337 = arith.truncf %336 : vector<32x256xf32> to vector<32x256xbf16>
    %338 = vector.extract_strided_slice %333 {offsets = [0, 512], sizes = [32, 256], strides = [1, 1]} : vector<32x768xf32> to vector<32x256xf32>
    %339 = arith.truncf %338 : vector<32x256xf32> to vector<32x256xbf16>
    %cst_130 = arith.constant 0.000000e+00 : f32
    %340 = vector.broadcast %cst_130 : f32 to vector<16x256xf32>
    %341 = vector.extract_strided_slice %335 {offsets = [0, 0], sizes = [16, 64], strides = [1, 1]} : vector<32x256xbf16> to vector<16x64xbf16>
    %342 = vector.extract_strided_slice %337 {offsets = [0, 0], sizes = [16, 64], strides = [1, 1]} : vector<32x256xbf16> to vector<16x64xbf16>
    %343 = vector.extract_strided_slice %339 {offsets = [0, 0], sizes = [16, 64], strides = [1, 1]} : vector<32x256xbf16> to vector<16x64xbf16>
    "tpu.trace_start"() <{level = 10 : i32, message = "qd,kd->qk"}> : () -> ()
    %cst_131 = arith.constant dense<0.000000e+00> : vector<16x16xf32>
    %344 = tpu.matmul %341, %342, %cst_131 {dimension_numbers = #tpu.dot_dimension_numbers<[1], [1], [0], [0], [0, 0, 1, 0], [], []>} : vector<16x64xbf16>, vector<16x64xbf16>, vector<16x16xf32> -> vector<16x16xf32>
    "tpu.trace_stop"() : () -> ()
    %cst_132 = arith.constant 1.250000e-01 : f32
    %345 = vector.broadcast %cst_132 : f32 to vector<16x16xf32>
    %346 = arith.mulf %344, %345 : vector<16x16xf32>
    %cst_133 = arith.constant dense<0xFF800000> : vector<16xf32>
    %347 = vector.multi_reduction <maximumf>, %346, %cst_133 [1] : vector<16x16xf32> to vector<16xf32>
    %348 = vector.shape_cast %347 : vector<16xf32> to vector<16x1xf32>
    %349 = vector.broadcast %348 : vector<16x1xf32> to vector<16x16xf32>
    %350 = arith.subf %346, %349 : vector<16x16xf32>
    %351 = math.exp %350 : vector<16x16xf32>
    %cst_134 = arith.constant dense<0.000000e+00> : vector<16xf32>
    %352 = vector.multi_reduction <add>, %351, %cst_134 [1] : vector<16x16xf32> to vector<16xf32>
    %353 = vector.shape_cast %352 : vector<16xf32> to vector<16x1xf32>
    %354 = tpu.reciprocal %353 {approx = true} : vector<16x1xf32> -> vector<16x1xf32>
    %355 = vector.broadcast %354 : vector<16x1xf32> to vector<16x16xf32>
    %356 = arith.mulf %351, %355 : vector<16x16xf32>
    %357 = arith.truncf %356 : vector<16x16xf32> to vector<16x16xbf16>
    %cst_135 = arith.constant dense<0.000000e+00> : vector<16x64xf32>
    %358 = tpu.matmul %357, %343, %cst_135 {dimension_numbers = #tpu.dot_dimension_numbers<[1], [0], [0], [1], [0, 0, 1, 1], [], []>} : vector<16x16xbf16>, vector<16x64xbf16>, vector<16x64xf32> -> vector<16x64xf32>
    %359 = arith.truncf %358 : vector<16x64xf32> to vector<16x64xbf16>
    %360 = vector.extract_strided_slice %327 {offsets = [0, 0], sizes = [64, 256], strides = [1, 1]} : vector<256x256xbf16> to vector<64x256xbf16>
    %cst_136 = arith.constant dense<0.000000e+00> : vector<16x256xf32>
    %361 = tpu.matmul %359, %360, %cst_136 {dimension_numbers = #tpu.dot_dimension_numbers<[1], [0], [0], [1], [0, 0, 1, 1], [], []>} : vector<16x64xbf16>, vector<64x256xbf16>, vector<16x256xf32> -> vector<16x256xf32>
    %362 = arith.addf %340, %361 : vector<16x256xf32>
    %363 = vector.extract_strided_slice %335 {offsets = [0, 64], sizes = [16, 64], strides = [1, 1]} : vector<32x256xbf16> to vector<16x64xbf16>
    %364 = vector.extract_strided_slice %337 {offsets = [0, 64], sizes = [16, 64], strides = [1, 1]} : vector<32x256xbf16> to vector<16x64xbf16>
    %365 = vector.extract_strided_slice %339 {offsets = [0, 64], sizes = [16, 64], strides = [1, 1]} : vector<32x256xbf16> to vector<16x64xbf16>
    "tpu.trace_start"() <{level = 10 : i32, message = "qd,kd->qk"}> : () -> ()
    %cst_137 = arith.constant dense<0.000000e+00> : vector<16x16xf32>
    %366 = tpu.matmul %363, %364, %cst_137 {dimension_numbers = #tpu.dot_dimension_numbers<[1], [1], [0], [0], [0, 0, 1, 0], [], []>} : vector<16x64xbf16>, vector<16x64xbf16>, vector<16x16xf32> -> vector<16x16xf32>
    "tpu.trace_stop"() : () -> ()
    %cst_138 = arith.constant 1.250000e-01 : f32
    %367 = vector.broadcast %cst_138 : f32 to vector<16x16xf32>
    %368 = arith.mulf %366, %367 : vector<16x16xf32>
    %cst_139 = arith.constant dense<0xFF800000> : vector<16xf32>
    %369 = vector.multi_reduction <maximumf>, %368, %cst_139 [1] : vector<16x16xf32> to vector<16xf32>
    %370 = vector.shape_cast %369 : vector<16xf32> to vector<16x1xf32>
    %371 = vector.broadcast %370 : vector<16x1xf32> to vector<16x16xf32>
    %372 = arith.subf %368, %371 : vector<16x16xf32>
    %373 = math.exp %372 : vector<16x16xf32>
    %cst_140 = arith.constant dense<0.000000e+00> : vector<16xf32>
    %374 = vector.multi_reduction <add>, %373, %cst_140 [1] : vector<16x16xf32> to vector<16xf32>
    %375 = vector.shape_cast %374 : vector<16xf32> to vector<16x1xf32>
    %376 = tpu.reciprocal %375 {approx = true} : vector<16x1xf32> -> vector<16x1xf32>
    %377 = vector.broadcast %376 : vector<16x1xf32> to vector<16x16xf32>
    %378 = arith.mulf %373, %377 : vector<16x16xf32>
    %379 = arith.truncf %378 : vector<16x16xf32> to vector<16x16xbf16>
    %cst_141 = arith.constant dense<0.000000e+00> : vector<16x64xf32>
    %380 = tpu.matmul %379, %365, %cst_141 {dimension_numbers = #tpu.dot_dimension_numbers<[1], [0], [0], [1], [0, 0, 1, 1], [], []>} : vector<16x16xbf16>, vector<16x64xbf16>, vector<16x64xf32> -> vector<16x64xf32>
    %381 = arith.truncf %380 : vector<16x64xf32> to vector<16x64xbf16>
    %382 = vector.extract_strided_slice %327 {offsets = [64, 0], sizes = [64, 256], strides = [1, 1]} : vector<256x256xbf16> to vector<64x256xbf16>
    %cst_142 = arith.constant dense<0.000000e+00> : vector<16x256xf32>
    %383 = tpu.matmul %381, %382, %cst_142 {dimension_numbers = #tpu.dot_dimension_numbers<[1], [0], [0], [1], [0, 0, 1, 1], [], []>} : vector<16x64xbf16>, vector<64x256xbf16>, vector<16x256xf32> -> vector<16x256xf32>
    %384 = arith.addf %362, %383 : vector<16x256xf32>
    %385 = vector.extract_strided_slice %335 {offsets = [0, 128], sizes = [16, 64], strides = [1, 1]} : vector<32x256xbf16> to vector<16x64xbf16>
    %386 = vector.extract_strided_slice %337 {offsets = [0, 128], sizes = [16, 64], strides = [1, 1]} : vector<32x256xbf16> to vector<16x64xbf16>
    %387 = vector.extract_strided_slice %339 {offsets = [0, 128], sizes = [16, 64], strides = [1, 1]} : vector<32x256xbf16> to vector<16x64xbf16>
    "tpu.trace_start"() <{level = 10 : i32, message = "qd,kd->qk"}> : () -> ()
    %cst_143 = arith.constant dense<0.000000e+00> : vector<16x16xf32>
    %388 = tpu.matmul %385, %386, %cst_143 {dimension_numbers = #tpu.dot_dimension_numbers<[1], [1], [0], [0], [0, 0, 1, 0], [], []>} : vector<16x64xbf16>, vector<16x64xbf16>, vector<16x16xf32> -> vector<16x16xf32>
    "tpu.trace_stop"() : () -> ()
    %cst_144 = arith.constant 1.250000e-01 : f32
    %389 = vector.broadcast %cst_144 : f32 to vector<16x16xf32>
    %390 = arith.mulf %388, %389 : vector<16x16xf32>
    %cst_145 = arith.constant dense<0xFF800000> : vector<16xf32>
    %391 = vector.multi_reduction <maximumf>, %390, %cst_145 [1] : vector<16x16xf32> to vector<16xf32>
    %392 = vector.shape_cast %391 : vector<16xf32> to vector<16x1xf32>
    %393 = vector.broadcast %392 : vector<16x1xf32> to vector<16x16xf32>
    %394 = arith.subf %390, %393 : vector<16x16xf32>
    %395 = math.exp %394 : vector<16x16xf32>
    %cst_146 = arith.constant dense<0.000000e+00> : vector<16xf32>
    %396 = vector.multi_reduction <add>, %395, %cst_146 [1] : vector<16x16xf32> to vector<16xf32>
    %397 = vector.shape_cast %396 : vector<16xf32> to vector<16x1xf32>
    %398 = tpu.reciprocal %397 {approx = true} : vector<16x1xf32> -> vector<16x1xf32>
    %399 = vector.broadcast %398 : vector<16x1xf32> to vector<16x16xf32>
    %400 = arith.mulf %395, %399 : vector<16x16xf32>
    %401 = arith.truncf %400 : vector<16x16xf32> to vector<16x16xbf16>
    %cst_147 = arith.constant dense<0.000000e+00> : vector<16x64xf32>
    %402 = tpu.matmul %401, %387, %cst_147 {dimension_numbers = #tpu.dot_dimension_numbers<[1], [0], [0], [1], [0, 0, 1, 1], [], []>} : vector<16x16xbf16>, vector<16x64xbf16>, vector<16x64xf32> -> vector<16x64xf32>
    %403 = arith.truncf %402 : vector<16x64xf32> to vector<16x64xbf16>
    %404 = vector.extract_strided_slice %327 {offsets = [128, 0], sizes = [64, 256], strides = [1, 1]} : vector<256x256xbf16> to vector<64x256xbf16>
    %cst_148 = arith.constant dense<0.000000e+00> : vector<16x256xf32>
    %405 = tpu.matmul %403, %404, %cst_148 {dimension_numbers = #tpu.dot_dimension_numbers<[1], [0], [0], [1], [0, 0, 1, 1], [], []>} : vector<16x64xbf16>, vector<64x256xbf16>, vector<16x256xf32> -> vector<16x256xf32>
    %406 = arith.addf %384, %405 : vector<16x256xf32>
    %407 = vector.extract_strided_slice %335 {offsets = [0, 192], sizes = [16, 64], strides = [1, 1]} : vector<32x256xbf16> to vector<16x64xbf16>
    %408 = vector.extract_strided_slice %337 {offsets = [0, 192], sizes = [16, 64], strides = [1, 1]} : vector<32x256xbf16> to vector<16x64xbf16>
    %409 = vector.extract_strided_slice %339 {offsets = [0, 192], sizes = [16, 64], strides = [1, 1]} : vector<32x256xbf16> to vector<16x64xbf16>
    "tpu.trace_start"() <{level = 10 : i32, message = "qd,kd->qk"}> : () -> ()
    %cst_149 = arith.constant dense<0.000000e+00> : vector<16x16xf32>
    %410 = tpu.matmul %407, %408, %cst_149 {dimension_numbers = #tpu.dot_dimension_numbers<[1], [1], [0], [0], [0, 0, 1, 0], [], []>} : vector<16x64xbf16>, vector<16x64xbf16>, vector<16x16xf32> -> vector<16x16xf32>
    "tpu.trace_stop"() : () -> ()
    %cst_150 = arith.constant 1.250000e-01 : f32
    %411 = vector.broadcast %cst_150 : f32 to vector<16x16xf32>
    %412 = arith.mulf %410, %411 : vector<16x16xf32>
    %cst_151 = arith.constant dense<0xFF800000> : vector<16xf32>
    %413 = vector.multi_reduction <maximumf>, %412, %cst_151 [1] : vector<16x16xf32> to vector<16xf32>
    %414 = vector.shape_cast %413 : vector<16xf32> to vector<16x1xf32>
    %415 = vector.broadcast %414 : vector<16x1xf32> to vector<16x16xf32>
    %416 = arith.subf %412, %415 : vector<16x16xf32>
    %417 = math.exp %416 : vector<16x16xf32>
    %cst_152 = arith.constant dense<0.000000e+00> : vector<16xf32>
    %418 = vector.multi_reduction <add>, %417, %cst_152 [1] : vector<16x16xf32> to vector<16xf32>
    %419 = vector.shape_cast %418 : vector<16xf32> to vector<16x1xf32>
    %420 = tpu.reciprocal %419 {approx = true} : vector<16x1xf32> -> vector<16x1xf32>
    %421 = vector.broadcast %420 : vector<16x1xf32> to vector<16x16xf32>
    %422 = arith.mulf %417, %421 : vector<16x16xf32>
    %423 = arith.truncf %422 : vector<16x16xf32> to vector<16x16xbf16>
    %cst_153 = arith.constant dense<0.000000e+00> : vector<16x64xf32>
    %424 = tpu.matmul %423, %409, %cst_153 {dimension_numbers = #tpu.dot_dimension_numbers<[1], [0], [0], [1], [0, 0, 1, 1], [], []>} : vector<16x16xbf16>, vector<16x64xbf16>, vector<16x64xf32> -> vector<16x64xf32>
    %425 = arith.truncf %424 : vector<16x64xf32> to vector<16x64xbf16>
    %426 = vector.extract_strided_slice %327 {offsets = [192, 0], sizes = [64, 256], strides = [1, 1]} : vector<256x256xbf16> to vector<64x256xbf16>
    %cst_154 = arith.constant dense<0.000000e+00> : vector<16x256xf32>
    %427 = tpu.matmul %425, %426, %cst_154 {dimension_numbers = #tpu.dot_dimension_numbers<[1], [0], [0], [1], [0, 0, 1, 1], [], []>} : vector<16x64xbf16>, vector<64x256xbf16>, vector<16x256xf32> -> vector<16x256xf32>
    %428 = arith.addf %406, %427 : vector<16x256xf32>
    %cst_155 = arith.constant 0.000000e+00 : f32
    %429 = vector.broadcast %cst_155 : f32 to vector<16x256xf32>
    %430 = vector.extract_strided_slice %335 {offsets = [16, 0], sizes = [16, 64], strides = [1, 1]} : vector<32x256xbf16> to vector<16x64xbf16>
    %431 = vector.extract_strided_slice %337 {offsets = [16, 0], sizes = [16, 64], strides = [1, 1]} : vector<32x256xbf16> to vector<16x64xbf16>
    %432 = vector.extract_strided_slice %339 {offsets = [16, 0], sizes = [16, 64], strides = [1, 1]} : vector<32x256xbf16> to vector<16x64xbf16>
    "tpu.trace_start"() <{level = 10 : i32, message = "qd,kd->qk"}> : () -> ()
    %cst_156 = arith.constant dense<0.000000e+00> : vector<16x16xf32>
    %433 = tpu.matmul %430, %431, %cst_156 {dimension_numbers = #tpu.dot_dimension_numbers<[1], [1], [0], [0], [0, 0, 1, 0], [], []>} : vector<16x64xbf16>, vector<16x64xbf16>, vector<16x16xf32> -> vector<16x16xf32>
    "tpu.trace_stop"() : () -> ()
    %cst_157 = arith.constant 1.250000e-01 : f32
    %434 = vector.broadcast %cst_157 : f32 to vector<16x16xf32>
    %435 = arith.mulf %433, %434 : vector<16x16xf32>
    %cst_158 = arith.constant dense<0xFF800000> : vector<16xf32>
    %436 = vector.multi_reduction <maximumf>, %435, %cst_158 [1] : vector<16x16xf32> to vector<16xf32>
    %437 = vector.shape_cast %436 : vector<16xf32> to vector<16x1xf32>
    %438 = vector.broadcast %437 : vector<16x1xf32> to vector<16x16xf32>
    %439 = arith.subf %435, %438 : vector<16x16xf32>
    %440 = math.exp %439 : vector<16x16xf32>
    %cst_159 = arith.constant dense<0.000000e+00> : vector<16xf32>
    %441 = vector.multi_reduction <add>, %440, %cst_159 [1] : vector<16x16xf32> to vector<16xf32>
    %442 = vector.shape_cast %441 : vector<16xf32> to vector<16x1xf32>
    %443 = tpu.reciprocal %442 {approx = true} : vector<16x1xf32> -> vector<16x1xf32>
    %444 = vector.broadcast %443 : vector<16x1xf32> to vector<16x16xf32>
    %445 = arith.mulf %440, %444 : vector<16x16xf32>
    %446 = arith.truncf %445 : vector<16x16xf32> to vector<16x16xbf16>
    %cst_160 = arith.constant dense<0.000000e+00> : vector<16x64xf32>
    %447 = tpu.matmul %446, %432, %cst_160 {dimension_numbers = #tpu.dot_dimension_numbers<[1], [0], [0], [1], [0, 0, 1, 1], [], []>} : vector<16x16xbf16>, vector<16x64xbf16>, vector<16x64xf32> -> vector<16x64xf32>
    %448 = arith.truncf %447 : vector<16x64xf32> to vector<16x64xbf16>
    %449 = vector.extract_strided_slice %327 {offsets = [0, 0], sizes = [64, 256], strides = [1, 1]} : vector<256x256xbf16> to vector<64x256xbf16>
    %cst_161 = arith.constant dense<0.000000e+00> : vector<16x256xf32>
    %450 = tpu.matmul %448, %449, %cst_161 {dimension_numbers = #tpu.dot_dimension_numbers<[1], [0], [0], [1], [0, 0, 1, 1], [], []>} : vector<16x64xbf16>, vector<64x256xbf16>, vector<16x256xf32> -> vector<16x256xf32>
    %451 = arith.addf %429, %450 : vector<16x256xf32>
    %452 = vector.extract_strided_slice %335 {offsets = [16, 64], sizes = [16, 64], strides = [1, 1]} : vector<32x256xbf16> to vector<16x64xbf16>
    %453 = vector.extract_strided_slice %337 {offsets = [16, 64], sizes = [16, 64], strides = [1, 1]} : vector<32x256xbf16> to vector<16x64xbf16>
    %454 = vector.extract_strided_slice %339 {offsets = [16, 64], sizes = [16, 64], strides = [1, 1]} : vector<32x256xbf16> to vector<16x64xbf16>
    "tpu.trace_start"() <{level = 10 : i32, message = "qd,kd->qk"}> : () -> ()
    %cst_162 = arith.constant dense<0.000000e+00> : vector<16x16xf32>
    %455 = tpu.matmul %452, %453, %cst_162 {dimension_numbers = #tpu.dot_dimension_numbers<[1], [1], [0], [0], [0, 0, 1, 0], [], []>} : vector<16x64xbf16>, vector<16x64xbf16>, vector<16x16xf32> -> vector<16x16xf32>
    "tpu.trace_stop"() : () -> ()
    %cst_163 = arith.constant 1.250000e-01 : f32
    %456 = vector.broadcast %cst_163 : f32 to vector<16x16xf32>
    %457 = arith.mulf %455, %456 : vector<16x16xf32>
    %cst_164 = arith.constant dense<0xFF800000> : vector<16xf32>
    %458 = vector.multi_reduction <maximumf>, %457, %cst_164 [1] : vector<16x16xf32> to vector<16xf32>
    %459 = vector.shape_cast %458 : vector<16xf32> to vector<16x1xf32>
    %460 = vector.broadcast %459 : vector<16x1xf32> to vector<16x16xf32>
    %461 = arith.subf %457, %460 : vector<16x16xf32>
    %462 = math.exp %461 : vector<16x16xf32>
    %cst_165 = arith.constant dense<0.000000e+00> : vector<16xf32>
    %463 = vector.multi_reduction <add>, %462, %cst_165 [1] : vector<16x16xf32> to vector<16xf32>
    %464 = vector.shape_cast %463 : vector<16xf32> to vector<16x1xf32>
    %465 = tpu.reciprocal %464 {approx = true} : vector<16x1xf32> -> vector<16x1xf32>
    %466 = vector.broadcast %465 : vector<16x1xf32> to vector<16x16xf32>
    %467 = arith.mulf %462, %466 : vector<16x16xf32>
    %468 = arith.truncf %467 : vector<16x16xf32> to vector<16x16xbf16>
    %cst_166 = arith.constant dense<0.000000e+00> : vector<16x64xf32>
    %469 = tpu.matmul %468, %454, %cst_166 {dimension_numbers = #tpu.dot_dimension_numbers<[1], [0], [0], [1], [0, 0, 1, 1], [], []>} : vector<16x16xbf16>, vector<16x64xbf16>, vector<16x64xf32> -> vector<16x64xf32>
    %470 = arith.truncf %469 : vector<16x64xf32> to vector<16x64xbf16>
    %471 = vector.extract_strided_slice %327 {offsets = [64, 0], sizes = [64, 256], strides = [1, 1]} : vector<256x256xbf16> to vector<64x256xbf16>
    %cst_167 = arith.constant dense<0.000000e+00> : vector<16x256xf32>
    %472 = tpu.matmul %470, %471, %cst_167 {dimension_numbers = #tpu.dot_dimension_numbers<[1], [0], [0], [1], [0, 0, 1, 1], [], []>} : vector<16x64xbf16>, vector<64x256xbf16>, vector<16x256xf32> -> vector<16x256xf32>
    %473 = arith.addf %451, %472 : vector<16x256xf32>
    %474 = vector.extract_strided_slice %335 {offsets = [16, 128], sizes = [16, 64], strides = [1, 1]} : vector<32x256xbf16> to vector<16x64xbf16>
    %475 = vector.extract_strided_slice %337 {offsets = [16, 128], sizes = [16, 64], strides = [1, 1]} : vector<32x256xbf16> to vector<16x64xbf16>
    %476 = vector.extract_strided_slice %339 {offsets = [16, 128], sizes = [16, 64], strides = [1, 1]} : vector<32x256xbf16> to vector<16x64xbf16>
    "tpu.trace_start"() <{level = 10 : i32, message = "qd,kd->qk"}> : () -> ()
    %cst_168 = arith.constant dense<0.000000e+00> : vector<16x16xf32>
    %477 = tpu.matmul %474, %475, %cst_168 {dimension_numbers = #tpu.dot_dimension_numbers<[1], [1], [0], [0], [0, 0, 1, 0], [], []>} : vector<16x64xbf16>, vector<16x64xbf16>, vector<16x16xf32> -> vector<16x16xf32>
    "tpu.trace_stop"() : () -> ()
    %cst_169 = arith.constant 1.250000e-01 : f32
    %478 = vector.broadcast %cst_169 : f32 to vector<16x16xf32>
    %479 = arith.mulf %477, %478 : vector<16x16xf32>
    %cst_170 = arith.constant dense<0xFF800000> : vector<16xf32>
    %480 = vector.multi_reduction <maximumf>, %479, %cst_170 [1] : vector<16x16xf32> to vector<16xf32>
    %481 = vector.shape_cast %480 : vector<16xf32> to vector<16x1xf32>
    %482 = vector.broadcast %481 : vector<16x1xf32> to vector<16x16xf32>
    %483 = arith.subf %479, %482 : vector<16x16xf32>
    %484 = math.exp %483 : vector<16x16xf32>
    %cst_171 = arith.constant dense<0.000000e+00> : vector<16xf32>
    %485 = vector.multi_reduction <add>, %484, %cst_171 [1] : vector<16x16xf32> to vector<16xf32>
    %486 = vector.shape_cast %485 : vector<16xf32> to vector<16x1xf32>
    %487 = tpu.reciprocal %486 {approx = true} : vector<16x1xf32> -> vector<16x1xf32>
    %488 = vector.broadcast %487 : vector<16x1xf32> to vector<16x16xf32>
    %489 = arith.mulf %484, %488 : vector<16x16xf32>
    %490 = arith.truncf %489 : vector<16x16xf32> to vector<16x16xbf16>
    %cst_172 = arith.constant dense<0.000000e+00> : vector<16x64xf32>
    %491 = tpu.matmul %490, %476, %cst_172 {dimension_numbers = #tpu.dot_dimension_numbers<[1], [0], [0], [1], [0, 0, 1, 1], [], []>} : vector<16x16xbf16>, vector<16x64xbf16>, vector<16x64xf32> -> vector<16x64xf32>
    %492 = arith.truncf %491 : vector<16x64xf32> to vector<16x64xbf16>
    %493 = vector.extract_strided_slice %327 {offsets = [128, 0], sizes = [64, 256], strides = [1, 1]} : vector<256x256xbf16> to vector<64x256xbf16>
    %cst_173 = arith.constant dense<0.000000e+00> : vector<16x256xf32>
    %494 = tpu.matmul %492, %493, %cst_173 {dimension_numbers = #tpu.dot_dimension_numbers<[1], [0], [0], [1], [0, 0, 1, 1], [], []>} : vector<16x64xbf16>, vector<64x256xbf16>, vector<16x256xf32> -> vector<16x256xf32>
    %495 = arith.addf %473, %494 : vector<16x256xf32>
    %496 = vector.extract_strided_slice %335 {offsets = [16, 192], sizes = [16, 64], strides = [1, 1]} : vector<32x256xbf16> to vector<16x64xbf16>
    %497 = vector.extract_strided_slice %337 {offsets = [16, 192], sizes = [16, 64], strides = [1, 1]} : vector<32x256xbf16> to vector<16x64xbf16>
    %498 = vector.extract_strided_slice %339 {offsets = [16, 192], sizes = [16, 64], strides = [1, 1]} : vector<32x256xbf16> to vector<16x64xbf16>
    "tpu.trace_start"() <{level = 10 : i32, message = "qd,kd->qk"}> : () -> ()
    %cst_174 = arith.constant dense<0.000000e+00> : vector<16x16xf32>
    %499 = tpu.matmul %496, %497, %cst_174 {dimension_numbers = #tpu.dot_dimension_numbers<[1], [1], [0], [0], [0, 0, 1, 0], [], []>} : vector<16x64xbf16>, vector<16x64xbf16>, vector<16x16xf32> -> vector<16x16xf32>
    "tpu.trace_stop"() : () -> ()
    %cst_175 = arith.constant 1.250000e-01 : f32
    %500 = vector.broadcast %cst_175 : f32 to vector<16x16xf32>
    %501 = arith.mulf %499, %500 : vector<16x16xf32>
    %cst_176 = arith.constant dense<0xFF800000> : vector<16xf32>
    %502 = vector.multi_reduction <maximumf>, %501, %cst_176 [1] : vector<16x16xf32> to vector<16xf32>
    %503 = vector.shape_cast %502 : vector<16xf32> to vector<16x1xf32>
    %504 = vector.broadcast %503 : vector<16x1xf32> to vector<16x16xf32>
    %505 = arith.subf %501, %504 : vector<16x16xf32>
    %506 = math.exp %505 : vector<16x16xf32>
    %cst_177 = arith.constant dense<0.000000e+00> : vector<16xf32>
    %507 = vector.multi_reduction <add>, %506, %cst_177 [1] : vector<16x16xf32> to vector<16xf32>
    %508 = vector.shape_cast %507 : vector<16xf32> to vector<16x1xf32>
    %509 = tpu.reciprocal %508 {approx = true} : vector<16x1xf32> -> vector<16x1xf32>
    %510 = vector.broadcast %509 : vector<16x1xf32> to vector<16x16xf32>
    %511 = arith.mulf %506, %510 : vector<16x16xf32>
    %512 = arith.truncf %511 : vector<16x16xf32> to vector<16x16xbf16>
    %cst_178 = arith.constant dense<0.000000e+00> : vector<16x64xf32>
    %513 = tpu.matmul %512, %498, %cst_178 {dimension_numbers = #tpu.dot_dimension_numbers<[1], [0], [0], [1], [0, 0, 1, 1], [], []>} : vector<16x16xbf16>, vector<16x64xbf16>, vector<16x64xf32> -> vector<16x64xf32>
    %514 = arith.truncf %513 : vector<16x64xf32> to vector<16x64xbf16>
    %515 = vector.extract_strided_slice %327 {offsets = [192, 0], sizes = [64, 256], strides = [1, 1]} : vector<256x256xbf16> to vector<64x256xbf16>
    %cst_179 = arith.constant dense<0.000000e+00> : vector<16x256xf32>
    %516 = tpu.matmul %514, %515, %cst_179 {dimension_numbers = #tpu.dot_dimension_numbers<[1], [0], [0], [1], [0, 0, 1, 1], [], []>} : vector<16x64xbf16>, vector<64x256xbf16>, vector<16x256xf32> -> vector<16x256xf32>
    %517 = arith.addf %495, %516 : vector<16x256xf32>
    %518 = tpu.concatenate %428, %517 in 0 : vector<16x256xf32>, vector<16x256xf32> -> vector<32x256xf32>
    %c1_180 = arith.constant 1 : index
    %c0_181 = arith.constant 0 : index
    %c0_182 = arith.constant 0 : index
    %519 = vector.load %arg8[%c1_180, %c0_181, %c0_182] : memref<2x1x256xf32, #tpu.memory_space<vmem>>, vector<1x1x256xf32>
    %520 = vector.shape_cast %519 : vector<1x1x256xf32> to vector<1x256xf32>
    %521 = vector.broadcast %520 : vector<1x256xf32> to vector<32x256xf32>
    %522 = arith.addf %518, %521 : vector<32x256xf32>
    %523 = arith.addf %323, %522 : vector<32x256xf32>
    %cst_183 = arith.constant dense<0.000000e+00> : vector<32xf32>
    %524 = vector.multi_reduction <add>, %523, %cst_183 [1] : vector<32x256xf32> to vector<32xf32>
    %525 = vector.shape_cast %524 : vector<32xf32> to vector<32x1xf32>
    %cst_184 = arith.constant 2.560000e+02 : f32
    %526 = vector.broadcast %cst_184 : f32 to vector<32x1xf32>
    %527 = arith.divf %525, %526 : vector<32x1xf32>
    %528 = vector.broadcast %527 : vector<32x1xf32> to vector<32x256xf32>
    %529 = arith.subf %523, %528 : vector<32x256xf32>
    %530 = arith.mulf %529, %529 : vector<32x256xf32>
    %cst_185 = arith.constant dense<0.000000e+00> : vector<32xf32>
    %531 = vector.multi_reduction <add>, %530, %cst_185 [1] : vector<32x256xf32> to vector<32xf32>
    %532 = vector.shape_cast %531 : vector<32xf32> to vector<32x1xf32>
    %cst_186 = arith.constant 2.560000e+02 : f32
    %533 = vector.broadcast %cst_186 : f32 to vector<32x1xf32>
    %534 = arith.divf %532, %533 : vector<32x1xf32>
    %535 = vector.broadcast %527 : vector<32x1xf32> to vector<32x256xf32>
    %536 = arith.subf %523, %535 : vector<32x256xf32>
    %cst_187 = arith.constant 9.99999974E-6 : f32
    %537 = vector.broadcast %cst_187 : f32 to vector<32x1xf32>
    %538 = arith.addf %534, %537 : vector<32x1xf32>
    %539 = math.rsqrt %538 : vector<32x1xf32>
    %540 = vector.broadcast %539 : vector<32x1xf32> to vector<32x256xf32>
    %541 = arith.mulf %536, %540 : vector<32x256xf32>
    %c1_188 = arith.constant 1 : index
    %c0_189 = arith.constant 0 : index
    %c0_190 = arith.constant 0 : index
    %542 = vector.load %arg9[%c1_188, %c0_189, %c0_190] : memref<2x1x256xf32, #tpu.memory_space<vmem>>, vector<1x1x256xf32>
    %543 = vector.shape_cast %542 : vector<1x1x256xf32> to vector<1x256xf32>
    %544 = vector.broadcast %543 : vector<1x256xf32> to vector<32x256xf32>
    %545 = arith.mulf %541, %544 : vector<32x256xf32>
    %c1_191 = arith.constant 1 : index
    %c0_192 = arith.constant 0 : index
    %c0_193 = arith.constant 0 : index
    %546 = vector.load %arg10[%c1_191, %c0_192, %c0_193] : memref<2x1x256xf32, #tpu.memory_space<vmem>>, vector<1x1x256xf32>
    %547 = vector.shape_cast %546 : vector<1x1x256xf32> to vector<1x256xf32>
    %548 = vector.broadcast %547 : vector<1x256xf32> to vector<32x256xf32>
    %549 = arith.addf %545, %548 : vector<32x256xf32>
    %550 = arith.truncf %549 : vector<32x256xf32> to vector<32x256xbf16>
    %c1_194 = arith.constant 1 : index
    %c0_195 = arith.constant 0 : index
    %c0_196 = arith.constant 0 : index
    %551 = vector.load %arg11[%c1_194, %c0_195, %c0_196] : memref<2x256x512xbf16, #tpu.memory_space<vmem>>, vector<1x256x512xbf16>
    %552 = vector.shape_cast %551 : vector<1x256x512xbf16> to vector<256x512xbf16>
    %cst_197 = arith.constant dense<0.000000e+00> : vector<32x512xf32>
    %553 = tpu.matmul %550, %552, %cst_197 {dimension_numbers = #tpu.dot_dimension_numbers<[1], [0], [0], [1], [0, 0, 1, 1], [], []>} : vector<32x256xbf16>, vector<256x512xbf16>, vector<32x512xf32> -> vector<32x512xf32>
    %c1_198 = arith.constant 1 : index
    %c0_199 = arith.constant 0 : index
    %c0_200 = arith.constant 0 : index
    %554 = vector.load %arg12[%c1_198, %c0_199, %c0_200] : memref<2x1x512xf32, #tpu.memory_space<vmem>>, vector<1x1x512xf32>
    %555 = vector.shape_cast %554 : vector<1x1x512xf32> to vector<1x512xf32>
    %556 = vector.broadcast %555 : vector<1x512xf32> to vector<32x512xf32>
    %557 = arith.addf %553, %556 : vector<32x512xf32>
    %cst_201 = arith.constant 0.000000e+00 : f32
    %558 = vector.broadcast %cst_201 : f32 to vector<32x512xf32>
    %559 = arith.maximumf %557, %558 : vector<32x512xf32>
    %560 = arith.truncf %559 : vector<32x512xf32> to vector<32x512xbf16>
    %c1_202 = arith.constant 1 : index
    %c0_203 = arith.constant 0 : index
    %c0_204 = arith.constant 0 : index
    %561 = vector.load %arg13[%c1_202, %c0_203, %c0_204] : memref<2x512x256xbf16, #tpu.memory_space<vmem>>, vector<1x512x256xbf16>
    %562 = vector.shape_cast %561 : vector<1x512x256xbf16> to vector<512x256xbf16>
    %cst_205 = arith.constant dense<0.000000e+00> : vector<32x256xf32>
    %563 = tpu.matmul %560, %562, %cst_205 {dimension_numbers = #tpu.dot_dimension_numbers<[1], [0], [0], [1], [0, 0, 1, 1], [], []>} : vector<32x512xbf16>, vector<512x256xbf16>, vector<32x256xf32> -> vector<32x256xf32>
    %c1_206 = arith.constant 1 : index
    %c0_207 = arith.constant 0 : index
    %c0_208 = arith.constant 0 : index
    %564 = vector.load %arg14[%c1_206, %c0_207, %c0_208] : memref<2x1x256xf32, #tpu.memory_space<vmem>>, vector<1x1x256xf32>
    %565 = vector.shape_cast %564 : vector<1x1x256xf32> to vector<1x256xf32>
    %566 = vector.broadcast %565 : vector<1x256xf32> to vector<32x256xf32>
    %567 = arith.addf %563, %566 : vector<32x256xf32>
    %568 = arith.addf %549, %567 : vector<32x256xf32>
    %cst_209 = arith.constant dense<0.000000e+00> : vector<32xf32>
    %569 = vector.multi_reduction <add>, %568, %cst_209 [1] : vector<32x256xf32> to vector<32xf32>
    %570 = vector.shape_cast %569 : vector<32xf32> to vector<32x1xf32>
    %cst_210 = arith.constant 2.560000e+02 : f32
    %571 = vector.broadcast %cst_210 : f32 to vector<32x1xf32>
    %572 = arith.divf %570, %571 : vector<32x1xf32>
    %573 = vector.broadcast %572 : vector<32x1xf32> to vector<32x256xf32>
    %574 = arith.subf %568, %573 : vector<32x256xf32>
    %575 = arith.mulf %574, %574 : vector<32x256xf32>
    %cst_211 = arith.constant dense<0.000000e+00> : vector<32xf32>
    %576 = vector.multi_reduction <add>, %575, %cst_211 [1] : vector<32x256xf32> to vector<32xf32>
    %577 = vector.shape_cast %576 : vector<32xf32> to vector<32x1xf32>
    %cst_212 = arith.constant 2.560000e+02 : f32
    %578 = vector.broadcast %cst_212 : f32 to vector<32x1xf32>
    %579 = arith.divf %577, %578 : vector<32x1xf32>
    %580 = vector.broadcast %572 : vector<32x1xf32> to vector<32x256xf32>
    %581 = arith.subf %568, %580 : vector<32x256xf32>
    %cst_213 = arith.constant 9.99999974E-6 : f32
    %582 = vector.broadcast %cst_213 : f32 to vector<32x1xf32>
    %583 = arith.addf %579, %582 : vector<32x1xf32>
    %584 = math.rsqrt %583 : vector<32x1xf32>
    %585 = vector.broadcast %584 : vector<32x1xf32> to vector<32x256xf32>
    %586 = arith.mulf %581, %585 : vector<32x256xf32>
    %c1_214 = arith.constant 1 : index
    %c0_215 = arith.constant 0 : index
    %c0_216 = arith.constant 0 : index
    %587 = vector.load %arg15[%c1_214, %c0_215, %c0_216] : memref<2x1x256xf32, #tpu.memory_space<vmem>>, vector<1x1x256xf32>
    %588 = vector.shape_cast %587 : vector<1x1x256xf32> to vector<1x256xf32>
    %589 = vector.broadcast %588 : vector<1x256xf32> to vector<32x256xf32>
    %590 = arith.mulf %586, %589 : vector<32x256xf32>
    %c1_217 = arith.constant 1 : index
    %c0_218 = arith.constant 0 : index
    %c0_219 = arith.constant 0 : index
    %591 = vector.load %arg16[%c1_217, %c0_218, %c0_219] : memref<2x1x256xf32, #tpu.memory_space<vmem>>, vector<1x1x256xf32>
    %592 = vector.shape_cast %591 : vector<1x1x256xf32> to vector<1x256xf32>
    %593 = vector.broadcast %592 : vector<1x256xf32> to vector<32x256xf32>
    %594 = arith.addf %590, %593 : vector<32x256xf32>
    %c0_220 = arith.constant 0 : index
    %c0_221 = arith.constant 0 : index
    %595 = vector.load %arg17[%c0_220, %c0_221] : memref<1x256xf32, #tpu.memory_space<vmem>>, vector<1x256xf32>
    %596 = vector.broadcast %595 : vector<1x256xf32> to vector<32x256xf32>
    %597 = arith.mulf %594, %596 : vector<32x256xf32>
    %cst_222 = arith.constant dense<0.000000e+00> : vector<32xf32>
    %598 = vector.multi_reduction <add>, %597, %cst_222 [1] : vector<32x256xf32> to vector<32xf32>
    %599 = vector.shape_cast %598 : vector<32xf32> to vector<32x1xf32>
    %c0_223 = arith.constant 0 : index
    %c0_224 = arith.constant 0 : index
    %600 = vector.load %arg18[%c0_223, %c0_224] : memref<1x1xf32, #tpu.memory_space<vmem>>, vector<1x1xf32>
    %601 = vector.broadcast %600 : vector<1x1xf32> to vector<32x1xf32>
    %602 = arith.addf %599, %601 : vector<32x1xf32>
    %603 = tpu.iota {dimensions = array<i32: 0>} : vector<4x128xi32>
    %cst_225 = arith.constant 0.000000e+00 : f32
    %604 = vector.broadcast %cst_225 : f32 to vector<4x128xf32>
    %605 = vector.extract_strided_slice %602 {offsets = [0, 0], sizes = [1, 1], strides = [1, 1]} : vector<32x1xf32> to vector<1x1xf32>
    %606 = vector.extract_strided_slice %602 {offsets = [1, 0], sizes = [1, 1], strides = [1, 1]} : vector<32x1xf32> to vector<1x1xf32>
    %607 = arith.maximumf %605, %606 : vector<1x1xf32>
    %608 = arith.subf %605, %607 : vector<1x1xf32>
    %609 = math.exp %608 : vector<1x1xf32>
    %610 = arith.subf %606, %607 : vector<1x1xf32>
    %611 = math.exp %610 : vector<1x1xf32>
    %612 = arith.addf %609, %611 : vector<1x1xf32>
    %c0_i32 = arith.constant 0 : i32
    %613 = vector.broadcast %c0_i32 : i32 to vector<4x128xi32>
    %614 = arith.cmpi eq, %603, %613 : vector<4x128xi32>
    %615 = arith.divf %609, %612 : vector<1x1xf32>
    %616 = vector.shape_cast %615 : vector<1x1xf32> to vector<1x1xf32>
    %617 = vector.broadcast %616 : vector<1x1xf32> to vector<4x128xf32>
    %618 = arith.select %614, %617, %604 : vector<4x128xi1>, vector<4x128xf32>
    %c1_i32 = arith.constant 1 : i32
    %619 = vector.broadcast %c1_i32 : i32 to vector<4x128xi32>
    %620 = arith.cmpi eq, %603, %619 : vector<4x128xi32>
    %621 = arith.divf %611, %612 : vector<1x1xf32>
    %622 = vector.shape_cast %621 : vector<1x1xf32> to vector<1x1xf32>
    %623 = vector.broadcast %622 : vector<1x1xf32> to vector<4x128xf32>
    %624 = arith.select %620, %623, %618 : vector<4x128xi1>, vector<4x128xf32>
    %625 = vector.extract_strided_slice %602 {offsets = [16, 0], sizes = [1, 1], strides = [1, 1]} : vector<32x1xf32> to vector<1x1xf32>
    %626 = vector.extract_strided_slice %602 {offsets = [17, 0], sizes = [1, 1], strides = [1, 1]} : vector<32x1xf32> to vector<1x1xf32>
    %627 = arith.maximumf %625, %626 : vector<1x1xf32>
    %628 = arith.subf %625, %627 : vector<1x1xf32>
    %629 = math.exp %628 : vector<1x1xf32>
    %630 = arith.subf %626, %627 : vector<1x1xf32>
    %631 = math.exp %630 : vector<1x1xf32>
    %632 = arith.addf %629, %631 : vector<1x1xf32>
    %c2_i32 = arith.constant 2 : i32
    %633 = vector.broadcast %c2_i32 : i32 to vector<4x128xi32>
    %634 = arith.cmpi eq, %603, %633 : vector<4x128xi32>
    %635 = arith.divf %629, %632 : vector<1x1xf32>
    %636 = vector.shape_cast %635 : vector<1x1xf32> to vector<1x1xf32>
    %637 = vector.broadcast %636 : vector<1x1xf32> to vector<4x128xf32>
    %638 = arith.select %634, %637, %624 : vector<4x128xi1>, vector<4x128xf32>
    %c3_i32 = arith.constant 3 : i32
    %639 = vector.broadcast %c3_i32 : i32 to vector<4x128xi32>
    %640 = arith.cmpi eq, %603, %639 : vector<4x128xi32>
    %641 = arith.divf %631, %632 : vector<1x1xf32>
    %642 = vector.shape_cast %641 : vector<1x1xf32> to vector<1x1xf32>
    %643 = vector.broadcast %642 : vector<1x1xf32> to vector<4x128xf32>
    %644 = arith.select %640, %643, %638 : vector<4x128xi1>, vector<4x128xf32>
    %c0_226 = arith.constant 0 : index
    %c0_227 = arith.constant 0 : index
    %645 = vector.load %arg19[%c0_226, %c0_227] : memref<4x128xf32, #tpu.memory_space<vmem>>, vector<4x128xf32>
    tpu.vector_store %arg19[%c0_226, %c0_227], %644 {strides = array<i32>} : memref<4x128xf32, #tpu.memory_space<vmem>>, vector<4x128xf32>,
    return
  }
}

</mosaic_0001>

<llo_original>
// kernel: squeeze.1
$region0: #{squeeze.1}
  %s0 = inlined_call_operand.vmem [shape: f32[4], index: 0, kind: input, shape index: {}]
  %s1 = inlined_call_operand.hbm [shape: f32[2,2], index: 1, kind: output, shape index: {}]
  $region1: #{squeeze.1} parent=0
    #allocation0 [shape = 'u8[1024]{0}', space=vmem, size = 0x400, scoped, tag = 'operand span for operand 1']
    #allocation1 [shape = 's32[1]{0}', space=sflag, size = 0x4, scoped, tag = 'scoped memory for squeeze.1']
    #allocation2 [shape = 'u8[4096]{0}', space=vmem, size = 0x1000, scoped, tag = 'scoped mem for output reshape']
    #allocation3 [shape = 'u8[4096]{0}', space=vmem, size = 0x1000, scoped, tag = 'scoped mem for input reshape']
    %2 = vsyncpa [#allocation1], 0
    %s4 = sshllo.u32 0, 1
    %v5 = vld [vmem:[%s0] sm:%s4]
    %6 = vst [vmem:[#allocation3] sm:%s4] %v5
    %v7 = vld [vmem:[#allocation3] sm:$0x1]
    %vm8 = vcmask 15360
    %9 = vst.msk [vmem:[#allocation2] sm:$0x1] %vm8, %v7
    %v10 = vld [vmem:[#allocation3] sm:$0x1]
    %11 = vrot.lane.b32.xlu0 %v10, 126
    %v12 = vpop.permute.xlu0 %11
    %vm13 = vcmask 15360
    %s14 = scalar_lea.vmem [#allocation2], 1
    %15 = vst.msk [vmem:[%s14] sm:$0x1] %vm13, %v12
    %s17 = sshllo.u32 0, 2
    %v19 = vld [vmem:[#allocation2] sm:%s17]
    %s20 = sshllo.u32 0, 2
    %21 = vst [vmem:[#allocation0] sm:%s20] %v19
    %s23 = ssub.s32 32, 32
    %24 = vsyncadd [#allocation1], %s23
    %s26 = sshll.u32 [#allocation0], 4
    %s27 = int_to_ptr.vmem [resolvable:$true] %s26
    %29 = dma.vmem_to_hbm [thread:$0]  %s27, 32, %s1, [#allocation1]
    %30 = dma.done [#allocation1], 32
    %31 = vsyncpa [#allocation1], 1

// kernel: koikoi_forward.1
$region0: #{koikoi_forward.1}
  #allocation0 [shape = 'u32[]', space=smem, size = 0x4, offset = 0x4, fixed_abs, tag = 'smem constant byte address 0x4 - core index']
  #allocation1 [shape = 'u32[144,128]{1,0:T(1,128)}', space=vmem, size = 0x12000, scoped, tag = 'internal scratch']
  #allocation2 [shape = 'f32[1,1]{1,0:T(1,128)S(1)}', space=vmem, size = 0x200, scoped, tag = 'scoped memory for koikoi_forward.1']
  %s0 = inlined_call_operand.vmem [shape: bf16[32,384], index: 0, kind: input, shape index: {}]
  %s1 = inlined_call_operand.vmem [shape: bf16[384,512], index: 1, kind: input, shape index: {}]
  %s2 = inlined_call_operand.vmem [shape: f32[1,512], index: 2, kind: input, shape index: {}]
  %s3 = inlined_call_operand.vmem [shape: bf16[512,256], index: 3, kind: input, shape index: {}]
  %s4 = inlined_call_operand.vmem [shape: f32[1,256], index: 4, kind: input, shape index: {}]
  %s5 = inlined_call_operand.vmem [shape: bf16[2,256,768], index: 5, kind: input, shape index: {}]
  %s6 = inlined_call_operand.vmem [shape: f32[2,1,768], index: 6, kind: input, shape index: {}]
  %s7 = inlined_call_operand.vmem [shape: bf16[2,256,256], index: 7, kind: input, shape index: {}]
  %s8 = inlined_call_operand.vmem [shape: f32[2,1,256], index: 8, kind: input, shape index: {}]
  %s9 = inlined_call_operand.vmem [shape: f32[2,1,256], index: 9, kind: input, shape index: {}]
  %s10 = inlined_call_operand.vmem [shape: f32[2,1,256], index: 10, kind: input, shape index: {}]
  %s11 = inlined_call_operand.vmem [shape: bf16[2,256,512], index: 11, kind: input, shape index: {}]
  %s12 = inlined_call_operand.vmem [shape: f32[2,1,512], index: 12, kind: input, shape index: {}]
  %s13 = inlined_call_operand.vmem [shape: bf16[2,512,256], index: 13, kind: input, shape index: {}]
  %s14 = inlined_call_operand.vmem [shape: f32[2,1,256], index: 14, kind: input, shape index: {}]
  %s15 = inlined_call_operand.vmem [shape: f32[2,1,256], index: 15, kind: input, shape index: {}]
  %s16 = inlined_call_operand.vmem [shape: f32[2,1,256], index: 16, kind: input, shape index: {}]
  %s17 = inlined_call_operand.vmem [shape: f32[1,256], index: 17, kind: input, shape index: {}]
  %s18 = inlined_call_operand.<no memory space> [shape: f32[1,1], index: 18, kind: input, shape index: {}]
  %s19 = inlined_call_operand.vmem [shape: f32[4,128], index: 19, kind: output, shape index: {}]
  %s20 = sld [smem:[#allocation0]]
  $region86: #{koikoi_forward.1} parent=0
    _
  %s22 = ssub.s32 1, %s20
  %s23 = scalar_select 0, %s22, %s20
  %v24 = vstv %s18
  %25 = vst [vmem:[#allocation2] sm:$0x1] %v24
  // Predicated region
  $region2: #{koikoi_forward.1} parent=0 // pred_check
    _
  $region3: #{koikoi_forward.1} parent=0 // pred_check_branch
    %27 = sbr.rel (0) target = $region5
  $region4: #{koikoi_forward.1} parent=0 // pred_region
    _
  $region5: #{koikoi_forward.1} parent=0 // pred_fallthru
    _
  // Predicated region
  $region6: #{koikoi_forward.1} parent=0 // pred_check
    _
  $region7: #{koikoi_forward.1} parent=0 // pred_check_branch
    %29 = sbr.rel (0) target = $region9
  $region8: #{koikoi_forward.1} parent=0 // pred_region
    _
  $region9: #{koikoi_forward.1} parent=0 // pred_fallthru
    _
  // Predicated region
  $region10: #{koikoi_forward.1} parent=0 // pred_check
    _
  $region11: #{koikoi_forward.1} parent=0 // pred_check_branch
    %31 = sbr.rel (0) target = $region13
  $region12: #{koikoi_forward.1} parent=0 // pred_region
    _
  $region13: #{koikoi_forward.1} parent=0 // pred_fallthru
    _
  // Predicated region
  $region14: #{koikoi_forward.1} parent=0 // pred_check
    _
  $region15: #{koikoi_forward.1} parent=0 // pred_check_branch
    %33 = sbr.rel (0) target = $region17
  $region16: #{koikoi_forward.1} parent=0 // pred_region
    _
  $region17: #{koikoi_forward.1} parent=0 // pred_fallthru
    _
  // Predicated region
  $region18: #{koikoi_forward.1} parent=0 // pred_check
    _
  $region19: #{koikoi_forward.1} parent=0 // pred_check_branch
    %35 = sbr.rel (0) target = $region21
  $region20: #{koikoi_forward.1} parent=0 // pred_region
    _
  $region21: #{koikoi_forward.1} parent=0 // pred_fallthru
    _
  // Predicated region
  $region22: #{koikoi_forward.1} parent=0 // pred_check
    _
  $region23: #{koikoi_forward.1} parent=0 // pred_check_branch
    %37 = sbr.rel (0) target = $region25
  $region24: #{koikoi_forward.1} parent=0 // pred_region
    _
  $region25: #{koikoi_forward.1} parent=0 // pred_fallthru
    _
  // Predicated region
  $region26: #{koikoi_forward.1} parent=0 // pred_check
    _
  $region27: #{koikoi_forward.1} parent=0 // pred_check_branch
    %39 = sbr.rel (0) target = $region29
  $region28: #{koikoi_forward.1} parent=0 // pred_region
    _
  $region29: #{koikoi_forward.1} parent=0 // pred_fallthru
    _
  // Predicated region
  $region30: #{koikoi_forward.1} parent=0 // pred_check
    _
  $region31: #{koikoi_forward.1} parent=0 // pred_check_branch
    %41 = sbr.rel (0) target = $region33
  $region32: #{koikoi_forward.1} parent=0 // pred_region
    _
  $region33: #{koikoi_forward.1} parent=0 // pred_fallthru
    _
  // Predicated region
  $region34: #{koikoi_forward.1} parent=0 // pred_check
    _
  $region35: #{koikoi_forward.1} parent=0 // pred_check_branch
    %43 = sbr.rel (0) target = $region37
  $region36: #{koikoi_forward.1} parent=0 // pred_region
    _
  $region37: #{koikoi_forward.1} parent=0 // pred_fallthru
    _
  // Predicated region
  $region38: #{koikoi_forward.1} parent=0 // pred_check
    _
  $region39: #{koikoi_forward.1} parent=0 // pred_check_branch
    %45 = sbr.rel (0) target = $region41
  $region40: #{koikoi_forward.1} parent=0 // pred_region
    _
  $region41: #{koikoi_forward.1} parent=0 // pred_fallthru
    _
  // Predicated region
  $region42: #{koikoi_forward.1} parent=0 // pred_check
    _
  $region43: #{koikoi_forward.1} parent=0 // pred_check_branch
    %47 = sbr.rel (0) target = $region45
  $region44: #{koikoi_forward.1} parent=0 // pred_region
    _
  $region45: #{koikoi_forward.1} parent=0 // pred_fallthru
    _
  // Predicated region
  $region46: #{koikoi_forward.1} parent=0 // pred_check
    _
  $region47: #{koikoi_forward.1} parent=0 // pred_check_branch
    %49 = sbr.rel (0) target = $region49
  $region48: #{koikoi_forward.1} parent=0 // pred_region
    _
  $region49: #{koikoi_forward.1} parent=0 // pred_fallthru
    _
  // Predicated region
  $region50: #{koikoi_forward.1} parent=0 // pred_check
    _
  $region51: #{koikoi_forward.1} parent=0 // pred_check_branch
    %51 = sbr.rel (0) target = $region53
  $region52: #{koikoi_forward.1} parent=0 // pred_region
    _
  $region53: #{koikoi_forward.1} parent=0 // pred_fallthru
    _
  // Predicated region
  $region54: #{koikoi_forward.1} parent=0 // pred_check
    _
  $region55: #{koikoi_forward.1} parent=0 // pred_check_branch
    %53 = sbr.rel (0) target = $region57
  $region56: #{koikoi_forward.1} parent=0 // pred_region
    _
  $region57: #{koikoi_forward.1} parent=0 // pred_fallthru
    _
  // Predicated region
  $region58: #{koikoi_forward.1} parent=0 // pred_check
    _
  $region59: #{koikoi_forward.1} parent=0 // pred_check_branch
    %55 = sbr.rel (0) target = $region61
  $region60: #{koikoi_forward.1} parent=0 // pred_region
    _
  $region61: #{koikoi_forward.1} parent=0 // pred_fallthru
    _
  // Predicated region
  $region62: #{koikoi_forward.1} parent=0 // pred_check
    _
  $region63: #{koikoi_forward.1} parent=0 // pred_check_branch
    %57 = sbr.rel (0) target = $region65
  $region64: #{koikoi_forward.1} parent=0 // pred_region
    _
  $region65: #{koikoi_forward.1} parent=0 // pred_fallthru
    _
  // Predicated region
  $region66: #{koikoi_forward.1} parent=0 // pred_check
    _
  $region67: #{koikoi_forward.1} parent=0 // pred_check_branch
    %59 = sbr.rel (0) target = $region69
  $region68: #{koikoi_forward.1} parent=0 // pred_region
    _
  $region69: #{koikoi_forward.1} parent=0 // pred_fallthru
    _
  // Predicated region
  $region70: #{koikoi_forward.1} parent=0 // pred_check
    _
  $region71: #{koikoi_forward.1} parent=0 // pred_check_branch
    %61 = sbr.rel (0) target = $region73
  $region72: #{koikoi_forward.1} parent=0 // pred_region
    _
  $region73: #{koikoi_forward.1} parent=0 // pred_fallthru
    _
  // Predicated region
  $region74: #{koikoi_forward.1} parent=0 // pred_check
    _
  $region75: #{koikoi_forward.1} parent=0 // pred_check_branch
    %63 = sbr.rel (0) target = $region77
  $region76: #{koikoi_forward.1} parent=0 // pred_region
    _
  $region77: #{koikoi_forward.1} parent=0 // pred_fallthru
    _
  %v65 = vld [vmem:[%s0] sm:$0xff]
  %v66 = vld [vmem:[%s0 + $0x8] sm:$0xf]
  %v67 = vld [vmem:[%s0 + $0xc] sm:$0xff]
  %v68 = vld [vmem:[%s0 + $0x14] sm:$0xf]
  %v69 = vld [vmem:[%s0 + $0x18] sm:$0xff]
  %v70 = vld [vmem:[%s0 + $0x20] sm:$0xf]
  %v71 = vld [vmem:[%s0 + $0x24] sm:$0xff]
  %v72 = vld [vmem:[%s0 + $0x2c] sm:$0xf]
  %v73 = vld [vmem:[%s1] sm:$0xff]
  %v74 = vld [vmem:[%s1 + $0x8] sm:$0xff]
  %v75 = vld [vmem:[%s1 + $0x10] sm:$0xff]
  %v76 = vld [vmem:[%s1 + $0x18] sm:$0xff]
  %v77 = vld [vmem:[%s1 + $0x20] sm:$0xff]
  %v78 = vld [vmem:[%s1 + $0x28] sm:$0xff]
  %v79 = vld [vmem:[%s1 + $0x30] sm:$0xff]
  %v80 = vld [vmem:[%s1 + $0x38] sm:$0xff]
  %v81 = vld [vmem:[%s1 + $0x40] sm:$0xff]
  %v82 = vld [vmem:[%s1 + $0x48] sm:$0xff]
  %v83 = vld [vmem:[%s1 + $0x50] sm:$0xff]
  %v84 = vld [vmem:[%s1 + $0x58] sm:$0xff]
  %v85 = vld [vmem:[%s1 + $0x60] sm:$0xff]
  %v86 = vld [vmem:[%s1 + $0x68] sm:$0xff]
  %v87 = vld [vmem:[%s1 + $0x70] sm:$0xff]
  %v88 = vld [vmem:[%s1 + $0x78] sm:$0xff]
  %v89 = vld [vmem:[%s1 + $0x80] sm:$0xff]
  %v90 = vld [vmem:[%s1 + $0x88] sm:$0xff]
  %v91 = vld [vmem:[%s1 + $0x90] sm:$0xff]
  %v92 = vld [vmem:[%s1 + $0x98] sm:$0xff]
  %v93 = vld [vmem:[%s1 + $0xa0] sm:$0xff]
  %v94 = vld [vmem:[%s1 + $0xa8] sm:$0xff]
  %v95 = vld [vmem:[%s1 + $0xb0] sm:$0xff]
  %v96 = vld [vmem:[%s1 + $0xb8] sm:$0xff]
  %v97 = vld [vmem:[%s1 + $0xc0] sm:$0xff]
  %v98 = vld [vmem:[%s1 + $0xc8] sm:$0xff]
  %v99 = vld [vmem:[%s1 + $0xd0] sm:$0xff]
  %v100 = vld [vmem:[%s1 + $0xd8] sm:$0xff]
  %v101 = vld [vmem:[%s1 + $0xe0] sm:$0xff]
  %v102 = vld [vmem:[%s1 + $0xe8] sm:$0xff]
  %v103 = vld [vmem:[%s1 + $0xf0] sm:$0xff]
  %v104 = vld [vmem:[%s1 + $0xf8] sm:$0xff]
  %v105 = vld [vmem:[%s1 + $0x100] sm:$0xff]
  %v106 = vld [vmem:[%s1 + $0x108] sm:$0xff]
  %v107 = vld [vmem:[%s1 + $0x110] sm:$0xff]
  %v108 = vld [vmem:[%s1 + $0x118] sm:$0xff]
  %v109 = vld [vmem:[%s1 + $0x120] sm:$0xff]
  %v110 = vld [vmem:[%s1 + $0x128] sm:$0xff]
  %v111 = vld [vmem:[%s1 + $0x130] sm:$0xff]
  %v112 = vld [vmem:[%s1 + $0x138] sm:$0xff]
  %v113 = vld [vmem:[%s1 + $0x140] sm:$0xff]
  %v114 = vld [vmem:[%s1 + $0x148] sm:$0xff]
  %v115 = vld [vmem:[%s1 + $0x150] sm:$0xff]
  %v116 = vld [vmem:[%s1 + $0x158] sm:$0xff]
  %v117 = vld [vmem:[%s1 + $0x160] sm:$0xff]
  %v118 = vld [vmem:[%s1 + $0x168] sm:$0xff]
  %v119 = vld [vmem:[%s1 + $0x170] sm:$0xff]
  %v120 = vld [vmem:[%s1 + $0x178] sm:$0xff]
  %v121 = vld [vmem:[%s1 + $0x180] sm:$0xff]
  %v122 = vld [vmem:[%s1 + $0x188] sm:$0xff]
  %v123 = vld [vmem:[%s1 + $0x190] sm:$0xff]
  %v124 = vld [vmem:[%s1 + $0x198] sm:$0xff]
  %v125 = vld [vmem:[%s1 + $0x1a0] sm:$0xff]
  %v126 = vld [vmem:[%s1 + $0x1a8] sm:$0xff]
  %v127 = vld [vmem:[%s1 + $0x1b0] sm:$0xff]
  %v128 = vld [vmem:[%s1 + $0x1b8] sm:$0xff]
  %v129 = vld [vmem:[%s1 + $0x1c0] sm:$0xff]
  %v130 = vld [vmem:[%s1 + $0x1c8] sm:$0xff]
  %v131 = vld [vmem:[%s1 + $0x1d0] sm:$0xff]
  %v132 = vld [vmem:[%s1 + $0x1d8] sm:$0xff]
  %v133 = vld [vmem:[%s1 + $0x1e0] sm:$0xff]
  %v134 = vld [vmem:[%s1 + $0x1e8] sm:$0xff]
  %v135 = vld [vmem:[%s1 + $0x1f0] sm:$0xff]
  %v136 = vld [vmem:[%s1 + $0x1f8] sm:$0xff]
  %v137 = vld [vmem:[%s1 + $0x200] sm:$0xff]
  %v138 = vld [vmem:[%s1 + $0x208] sm:$0xff]
  %v139 = vld [vmem:[%s1 + $0x210] sm:$0xff]
  %v140 = vld [vmem:[%s1 + $0x218] sm:$0xff]
  %v141 = vld [vmem:[%s1 + $0x220] sm:$0xff]
  %v142 = vld [vmem:[%s1 + $0x228] sm:$0xff]
  %v143 = vld [vmem:[%s1 + $0x230] sm:$0xff]
  %v144 = vld [vmem:[%s1 + $0x238] sm:$0xff]
  %v145 = vld [vmem:[%s1 + $0x240] sm:$0xff]
  %v146 = vld [vmem:[%s1 + $0x248] sm:$0xff]
  %v147 = vld [vmem:[%s1 + $0x250] sm:$0xff]
  %v148 = vld [vmem:[%s1 + $0x258] sm:$0xff]
  %v149 = vld [vmem:[%s1 + $0x260] sm:$0xff]
  %v150 = vld [vmem:[%s1 + $0x268] sm:$0xff]
  %v151 = vld [vmem:[%s1 + $0x270] sm:$0xff]
  %v152 = vld [vmem:[%s1 + $0x278] sm:$0xff]
  %v153 = vld [vmem:[%s1 + $0x280] sm:$0xff]
  %v154 = vld [vmem:[%s1 + $0x288] sm:$0xff]
  %v155 = vld [vmem:[%s1 + $0x290] sm:$0xff]
  %v156 = vld [vmem:[%s1 + $0x298] sm:$0xff]
  %v157 = vld [vmem:[%s1 + $0x2a0] sm:$0xff]
  %v158 = vld [vmem:[%s1 + $0x2a8] sm:$0xff]
  %v159 = vld [vmem:[%s1 + $0x2b0] sm:$0xff]
  %v160 = vld [vmem:[%s1 + $0x2b8] sm:$0xff]
  %v161 = vld [vmem:[%s1 + $0x2c0] sm:$0xff]
  %v162 = vld [vmem:[%s1 + $0x2c8] sm:$0xff]
  %v163 = vld [vmem:[%s1 + $0x2d0] sm:$0xff]
  %v164 = vld [vmem:[%s1 + $0x2d8] sm:$0xff]
  %v165 = vld [vmem:[%s1 + $0x2e0] sm:$0xff]
  %v166 = vld [vmem:[%s1 + $0x2e8] sm:$0xff]
  %v167 = vld [vmem:[%s1 + $0x2f0] sm:$0xff]
  %v168 = vld [vmem:[%s1 + $0x2f8] sm:$0xff]
  %v169 = vld [vmem:[%s2] sm:$0xf]
  %v171 = vlaneseq
  %v172 = vshrl.u32 %v171, 7
  %v173 = vsub.s32 0, %v172
  %v174 = vrot.slane %v169, %v173
  %v175 = vlaneseq
  %v176 = vshrl.u32 %v175, 7
  %v177 = vsub.s32 1, %v176
  %v178 = vrot.slane %v169, %v177
  %v179 = vlaneseq
  %v180 = vshrl.u32 %v179, 7
  %v181 = vsub.s32 2, %v180
  %v182 = vrot.slane %v169, %v181
  %v183 = vlaneseq
  %v184 = vshrl.u32 %v183, 7
  %v185 = vsub.s32 3, %v184
  %v186 = vrot.slane %v169, %v185
  %v199 = vunpack.c.l.b16 %v65
  %v200 = vunpack.c.h.b16 %v65
  %v201 = vunpack.c.l.b16 %v66
  %v202 = vunpack.c.l.b16 %v67
  %v203 = vunpack.c.h.b16 %v67
  %v204 = vunpack.c.l.b16 %v68
  %v205 = vunpack.c.l.b16 %v69
  %v206 = vunpack.c.h.b16 %v69
  %v207 = vunpack.c.l.b16 %v70
  %v208 = vunpack.c.l.b16 %v71
  %v209 = vunpack.c.h.b16 %v71
  %v210 = vunpack.c.l.b16 %v72
  %v211 = vpack.c.b16 %v202, %v199
  %v212 = vpack.c.b16 %v203, %v200
  %v213 = vpack.c.b16 %v204, %v201
  %v214 = vpack.c.b16 %v208, %v205
  %v215 = vpack.c.b16 %v209, %v206
  %v216 = vpack.c.b16 %v210, %v207
  %v319 = vunpack.c.l.b16 %v73
  %v320 = vunpack.c.h.b16 %v73
  %v321 = vunpack.c.l.b16 %v74
  %v322 = vunpack.c.h.b16 %v74
  %v323 = vunpack.c.l.b16 %v75
  %v324 = vunpack.c.h.b16 %v75
  %v325 = vunpack.c.l.b16 %v76
  %v326 = vunpack.c.h.b16 %v76
  %v327 = vunpack.c.l.b16 %v77
  %v328 = vunpack.c.h.b16 %v77
  %v329 = vunpack.c.l.b16 %v78
  %v330 = vunpack.c.h.b16 %v78
  %v331 = vunpack.c.l.b16 %v79
  %v332 = vunpack.c.h.b16 %v79
  %v333 = vunpack.c.l.b16 %v80
  %v334 = vunpack.c.h.b16 %v80
  %v335 = vunpack.c.l.b16 %v81
  %v336 = vunpack.c.h.b16 %v81
  %v337 = vunpack.c.l.b16 %v82
  %v338 = vunpack.c.h.b16 %v82
  %v339 = vunpack.c.l.b16 %v83
  %v340 = vunpack.c.h.b16 %v83
  %v341 = vunpack.c.l.b16 %v84
  %v342 = vunpack.c.h.b16 %v84
  %v343 = vunpack.c.l.b16 %v85
  %v344 = vunpack.c.h.b16 %v85
  %v345 = vunpack.c.l.b16 %v86
  %v346 = vunpack.c.h.b16 %v86
  %v347 = vunpack.c.l.b16 %v87
  %v348 = vunpack.c.h.b16 %v87
  %v349 = vunpack.c.l.b16 %v88
  %v350 = vunpack.c.h.b16 %v88
  %v351 = vunpack.c.l.b16 %v89
  %v352 = vunpack.c.h.b16 %v89
  %v353 = vunpack.c.l.b16 %v90
  %v354 = vunpack.c.h.b16 %v90
  %v355 = vunpack.c.l.b16 %v91
  %v356 = vunpack.c.h.b16 %v91
  %v357 = vunpack.c.l.b16 %v92
  %v358 = vunpack.c.h.b16 %v92
  %v359 = vunpack.c.l.b16 %v93
  %v360 = vunpack.c.h.b16 %v93
  %v361 = vunpack.c.l.b16 %v94
  %v362 = vunpack.c.h.b16 %v94
  %v363 = vunpack.c.l.b16 %v95
  %v364 = vunpack.c.h.b16 %v95
  %v365 = vunpack.c.l.b16 %v96
  %v366 = vunpack.c.h.b16 %v96
  %v367 = vunpack.c.l.b16 %v97
  %v368 = vunpack.c.h.b16 %v97
  %v369 = vunpack.c.l.b16 %v98
  %v370 = vunpack.c.h.b16 %v98
  %v371 = vunpack.c.l.b16 %v99
  %v372 = vunpack.c.h.b16 %v99
  %v373 = vunpack.c.l.b16 %v100
  %v374 = vunpack.c.h.b16 %v100
  %v375 = vunpack.c.l.b16 %v101
  %v376 = vunpack.c.h.b16 %v101
  %v377 = vunpack.c.l.b16 %v102
  %v378 = vunpack.c.h.b16 %v102
  %v379 = vunpack.c.l.b16 %v103
  %v380 = vunpack.c.h.b16 %v103
  %v381 = vunpack.c.l.b16 %v104
  %v382 = vunpack.c.h.b16 %v104
  %v383 = vunpack.c.l.b16 %v105
  %v384 = vunpack.c.h.b16 %v105
  %v385 = vunpack.c.l.b16 %v106
  %v386 = vunpack.c.h.b16 %v106
  %v387 = vunpack.c.l.b16 %v107
  %v388 = vunpack.c.h.b16 %v107
  %v389 = vunpack.c.l.b16 %v108
  %v390 = vunpack.c.h.b16 %v108
  %v391 = vunpack.c.l.b16 %v109
  %v392 = vunpack.c.h.b16 %v109
  %v393 = vunpack.c.l.b16 %v110
  %v394 = vunpack.c.h.b16 %v110
  %v395 = vunpack.c.l.b16 %v111
  %v396 = vunpack.c.h.b16 %v111
  %v397 = vunpack.c.l.b16 %v112
  %v398 = vunpack.c.h.b16 %v112
  %v399 = vunpack.c.l.b16 %v113
  %v400 = vunpack.c.h.b16 %v113
  %v401 = vunpack.c.l.b16 %v114
  %v402 = vunpack.c.h.b16 %v114
  %v403 = vunpack.c.l.b16 %v115
  %v404 = vunpack.c.h.b16 %v115
  %v405 = vunpack.c.l.b16 %v116
  %v406 = vunpack.c.h.b16 %v116
  %v407 = vunpack.c.l.b16 %v117
  %v408 = vunpack.c.h.b16 %v117
  %v409 = vunpack.c.l.b16 %v118
  %v410 = vunpack.c.h.b16 %v118
  %v411 = vunpack.c.l.b16 %v119
  %v412 = vunpack.c.h.b16 %v119
  %v413 = vunpack.c.l.b16 %v120
  %v414 = vunpack.c.h.b16 %v120
  %v415 = vunpack.c.l.b16 %v121
  %v416 = vunpack.c.h.b16 %v121
  %v417 = vunpack.c.l.b16 %v122
  %v418 = vunpack.c.h.b16 %v122
  %v419 = vunpack.c.l.b16 %v123
  %v420 = vunpack.c.h.b16 %v123
  %v421 = vunpack.c.l.b16 %v124
  %v422 = vunpack.c.h.b16 %v124
  %v423 = vunpack.c.l.b16 %v125
  %v424 = vunpack.c.h.b16 %v125
  %v425 = vunpack.c.l.b16 %v126
  %v426 = vunpack.c.h.b16 %v126
  %v427 = vunpack.c.l.b16 %v127
  %v428 = vunpack.c.h.b16 %v127
  %v429 = vunpack.c.l.b16 %v128
  %v430 = vunpack.c.h.b16 %v128
  %v431 = vunpack.c.l.b16 %v129
  %v432 = vunpack.c.h.b16 %v129
  %v433 = vunpack.c.l.b16 %v130
  %v434 = vunpack.c.h.b16 %v130
  %v435 = vunpack.c.l.b16 %v131
  %v436 = vunpack.c.h.b16 %v131
  %v437 = vunpack.c.l.b16 %v132
  %v438 = vunpack.c.h.b16 %v132
  %v439 = vunpack.c.l.b16 %v133
  %v440 = vunpack.c.h.b16 %v133
  %v441 = vunpack.c.l.b16 %v134
  %v442 = vunpack.c.h.b16 %v134
  %v443 = vunpack.c.l.b16 %v135
  %v444 = vunpack.c.h.b16 %v135
  %v445 = vunpack.c.l.b16 %v136
  %v446 = vunpack.c.h.b16 %v136
  %v447 = vunpack.c.l.b16 %v137
  %v448 = vunpack.c.h.b16 %v137
  %v449 = vunpack.c.l.b16 %v138
  %v450 = vunpack.c.h.b16 %v138
  %v451 = vunpack.c.l.b16 %v139
  %v452 = vunpack.c.h.b16 %v139
  %v453 = vunpack.c.l.b16 %v140
  %v454 = vunpack.c.h.b16 %v140
  %v455 = vunpack.c.l.b16 %v141
  %v456 = vunpack.c.h.b16 %v141
  %v457 = vunpack.c.l.b16 %v142
  %v458 = vunpack.c.h.b16 %v142
  %v459 = vunpack.c.l.b16 %v143
  %v460 = vunpack.c.h.b16 %v143
  %v461 = vunpack.c.l.b16 %v144
  %v462 = vunpack.c.h.b16 %v144
  %v463 = vunpack.c.l.b16 %v145
  %v464 = vunpack.c.h.b16 %v145
  %v465 = vunpack.c.l.b16 %v146
  %v466 = vunpack.c.h.b16 %v146
  %v467 = vunpack.c.l.b16 %v147
  %v468 = vunpack.c.h.b16 %v147
  %v469 = vunpack.c.l.b16 %v148
  %v470 = vunpack.c.h.b16 %v148
  %v471 = vunpack.c.l.b16 %v149
  %v472 = vunpack.c.h.b16 %v149
  %v473 = vunpack.c.l.b16 %v150
  %v474 = vunpack.c.h.b16 %v150
  %v475 = vunpack.c.l.b16 %v151
  %v476 = vunpack.c.h.b16 %v151
  %v477 = vunpack.c.l.b16 %v152
  %v478 = vunpack.c.h.b16 %v152
  %v479 = vunpack.c.l.b16 %v153
  %v480 = vunpack.c.h.b16 %v153
  %v481 = vunpack.c.l.b16 %v154
  %v482 = vunpack.c.h.b16 %v154
  %v483 = vunpack.c.l.b16 %v155
  %v484 = vunpack.c.h.b16 %v155
  %v485 = vunpack.c.l.b16 %v156
  %v486 = vunpack.c.h.b16 %v156
  %v487 = vunpack.c.l.b16 %v157
  %v488 = vunpack.c.h.b16 %v157
  %v489 = vunpack.c.l.b16 %v158
  %v490 = vunpack.c.h.b16 %v158
  %v491 = vunpack.c.l.b16 %v159
  %v492 = vunpack.c.h.b16 %v159
  %v493 = vunpack.c.l.b16 %v160
  %v494 = vunpack.c.h.b16 %v160
  %v495 = vunpack.c.l.b16 %v161
  %v496 = vunpack.c.h.b16 %v161
  %v497 = vunpack.c.l.b16 %v162
  %v498 = vunpack.c.h.b16 %v162
  %v499 = vunpack.c.l.b16 %v163
  %v500 = vunpack.c.h.b16 %v163
  %v501 = vunpack.c.l.b16 %v164
  %v502 = vunpack.c.h.b16 %v164
  %v503 = vunpack.c.l.b16 %v165
  %v504 = vunpack.c.h.b16 %v165
  %v505 = vunpack.c.l.b16 %v166
  %v506 = vunpack.c.h.b16 %v166
  %v507 = vunpack.c.l.b16 %v167
  %v508 = vunpack.c.h.b16 %v167
  %v509 = vunpack.c.l.b16 %v168
  %v510 = vunpack.c.h.b16 %v168
  %v511 = vpack.c.b16 %v323, %v319
  %v512 = vpack.c.b16 %v324, %v320
  %v513 = vpack.c.b16 %v325, %v321
  %v514 = vpack.c.b16 %v326, %v322
  %v515 = vpack.c.b16 %v331, %v327
  %v516 = vpack.c.b16 %v332, %v328
  %v517 = vpack.c.b16 %v333, %v329
  %v518 = vpack.c.b16 %v334, %v330
  %v519 = vpack.c.b16 %v339, %v335
  %v520 = vpack.c.b16 %v340, %v336
  %v521 = vpack.c.b16 %v341, %v337
  %v522 = vpack.c.b16 %v342, %v338
  %v523 = vpack.c.b16 %v347, %v343
  %v524 = vpack.c.b16 %v348, %v344
  %v525 = vpack.c.b16 %v349, %v345
  %v526 = vpack.c.b16 %v350, %v346
  %v527 = vpack.c.b16 %v355, %v351
  %v528 = vpack.c.b16 %v356, %v352
  %v529 = vpack.c.b16 %v357, %v353
  %v530 = vpack.c.b16 %v358, %v354
  %v531 = vpack.c.b16 %v363, %v359
  %v532 = vpack.c.b16 %v364, %v360
  %v533 = vpack.c.b16 %v365, %v361
  %v534 = vpack.c.b16 %v366, %v362
  %v535 = vpack.c.b16 %v371, %v367
  %v536 = vpack.c.b16 %v372, %v368
  %v537 = vpack.c.b16 %v373, %v369
  %v538 = vpack.c.b16 %v374, %v370
  %v539 = vpack.c.b16 %v379, %v375
  %v540 = vpack.c.b16 %v380, %v376
  %v541 = vpack.c.b16 %v381, %v377
  %v542 = vpack.c.b16 %v382, %v378
  %v543 = vpack.c.b16 %v387, %v383
  %v544 = vpack.c.b16 %v388, %v384
  %v545 = vpack.c.b16 %v389, %v385
  %v546 = vpack.c.b16 %v390, %v386
  %v547 = vpack.c.b16 %v395, %v391
  %v548 = vpack.c.b16 %v396, %v392
  %v549 = vpack.c.b16 %v397, %v393
  %v550 = vpack.c.b16 %v398, %v394
  %v551 = vpack.c.b16 %v403, %v399
  %v552 = vpack.c.b16 %v404, %v400
  %v553 = vpack.c.b16 %v405, %v401
  %v554 = vpack.c.b16 %v406, %v402
  %v555 = vpack.c.b16 %v411, %v407
  %v556 = vpack.c.b16 %v412, %v408
  %v557 = vpack.c.b16 %v413, %v409
  %v558 = vpack.c.b16 %v414, %v410
  %v559 = vpack.c.b16 %v419, %v415
  %v560 = vpack.c.b16 %v420, %v416
  %v561 = vpack.c.b16 %v421, %v417
  %v562 = vpack.c.b16 %v422, %v418
  %v563 = vpack.c.b16 %v427, %v423
  %v564 = vpack.c.b16 %v428, %v424
  %v565 = vpack.c.b16 %v429, %v425
  %v566 = vpack.c.b16 %v430, %v426
  %v567 = vpack.c.b16 %v435, %v431
  %v568 = vpack.c.b16 %v436, %v432
  %v569 = vpack.c.b16 %v437, %v433
  %v570 = vpack.c.b16 %v438, %v434
  %v571 = vpack.c.b16 %v443, %v439
  %v572 = vpack.c.b16 %v444, %v440
  %v573 = vpack.c.b16 %v445, %v441
  %v574 = vpack.c.b16 %v446, %v442
  %v575 = vpack.c.b16 %v451, %v447
  %v576 = vpack.c.b16 %v452, %v448
  %v577 = vpack.c.b16 %v453, %v449
  %v578 = vpack.c.b16 %v454, %v450
  %v579 = vpack.c.b16 %v459, %v455
  %v580 = vpack.c.b16 %v460, %v456
  %v581 = vpack.c.b16 %v461, %v457
  %v582 = vpack.c.b16 %v462, %v458
  %v583 = vpack.c.b16 %v467, %v463
  %v584 = vpack.c.b16 %v468, %v464
  %v585 = vpack.c.b16 %v469, %v465
  %v586 = vpack.c.b16 %v470, %v466
  %v587 = vpack.c.b16 %v475, %v471
  %v588 = vpack.c.b16 %v476, %v472
  %v589 = vpack.c.b16 %v477, %v473
  %v590 = vpack.c.b16 %v478, %v474
  %v591 = vpack.c.b16 %v483, %v479
  %v592 = vpack.c.b16 %v484, %v480
  %v593 = vpack.c.b16 %v485, %v481
  %v594 = vpack.c.b16 %v486, %v482
  %v595 = vpack.c.b16 %v491, %v487
  %v596 = vpack.c.b16 %v492, %v488
  %v597 = vpack.c.b16 %v493, %v489
  %v598 = vpack.c.b16 %v494, %v490
  %v599 = vpack.c.b16 %v499, %v495
  %v600 = vpack.c.b16 %v500, %v496
  %v601 = vpack.c.b16 %v501, %v497
  %v602 = vpack.c.b16 %v502, %v498
  %v603 = vpack.c.b16 %v507, %v503
  %v604 = vpack.c.b16 %v508, %v504
  %v605 = vpack.c.b16 %v509, %v505
  %v606 = vpack.c.b16 %v510, %v506
  %703 = vmatprep.subr.bf16.mxu0 %v512
  %704 = vmatpush1.bf16.msra.mxu0 %v511
  %705 = vmatprep.subr.bf16.mxu0 %v516
  %706 = vmatpush1.bf16.msra.mxu0 %v515
  %707 = vmatprep.subr.bf16.mxu0 %v520
  %708 = vmatpush1.bf16.msra.mxu0 %v519
  %709 = vmatprep.subr.bf16.mxu0 %v524
  %710 = vmatpush1.bf16.msra.mxu0 %v523
  %711 = vmatprep.subr.bf16.mxu0 %v528
  %712 = vmatpush1.bf16.msra.mxu0 %v527
  %713 = vmatprep.subr.bf16.mxu0 %v532
  %714 = vmatpush1.bf16.msra.mxu0 %v531
  %715 = vmatprep.subr.bf16.mxu0 %v536
  %716 = vmatpush1.bf16.msra.mxu0 %v535
  %717 = vmatprep.subr.bf16.mxu0 %v540
  %718 = vmatpush1.bf16.msra.mxu0 %v539
  %719 = vmatprep.subr.bf16.mxu0 %v544
  %720 = vmatpush1.bf16.msra.mxu0 %v543
  %721 = vmatprep.subr.bf16.mxu0 %v548
  %722 = vmatpush1.bf16.msra.mxu0 %v547
  %723 = vmatprep.subr.bf16.mxu0 %v552
  %724 = vmatpush1.bf16.msra.mxu0 %v551
  %725 = vmatprep.subr.bf16.mxu0 %v556
  %726 = vmatpush1.bf16.msra.mxu0 %v555
  %727 = vmatprep.subr.bf16.mxu0 %v560
  %728 = vmatpush1.bf16.msra.mxu0 %v559
  %729 = vmatprep.subr.bf16.mxu0 %v564
  %730 = vmatpush1.bf16.msra.mxu0 %v563
  %731 = vmatprep.subr.bf16.mxu0 %v568
  %732 = vmatpush1.bf16.msra.mxu0 %v567
  %733 = vmatprep.subr.bf16.mxu0 %v572
  %734 = vmatpush1.bf16.msra.mxu0 %v571
  %735 = vmatprep.mubr.bf16.mxu0 %v212
  %736 = vmatmul.mubr.bf16.gmra.mrb[0].mxu0 %v211
  %v737 = vpop.f32.mrb[0].mxu0
  %v738 = vadd.f32 %v174, %v737
  %v739 = vpop.f32.mrb[0].mxu0
  %v740 = vadd.f32 %v178, %v739
  %v741 = vpop.f32.mrb[0].mxu0
  %v742 = vadd.f32 %v174, %v741
  %v743 = vpop.f32.mrb[0].mxu0
  %v744 = vadd.f32 %v178, %v743
  %745 = vmatprep.mubr.bf16.mxu0 %v215
  %746 = vmatmul.mubr.bf16.gmra.mrb[0].mxu0 %v214
  %v747 = vpop.f32.mrb[0].mxu0
  %v748 = vadd.f32 %v174, %v747
  %v749 = vpop.f32.mrb[0].mxu0
  %v750 = vadd.f32 %v178, %v749
  %v751 = vpop.f32.mrb[0].mxu0
  %v752 = vadd.f32 %v174, %v751
  %v753 = vpop.f32.mrb[0].mxu0
  %v754 = vadd.f32 %v178, %v753
  %755 = vdwg.mxu0
  %756 = vmatprep.subr.bf16.mxu0 %v576
  %757 = vmatpush1.bf16.msra.mxu0 %v575
  %758 = vmatprep.subr.bf16.mxu0 %v580
  %759 = vmatpush1.bf16.msra.mxu0 %v579
  %760 = vmatprep.subr.bf16.mxu0 %v584
  %761 = vmatpush1.bf16.msra.mxu0 %v583
  %762 = vmatprep.subr.bf16.mxu0 %v588
  %763 = vmatpush1.bf16.msra.mxu0 %v587
  %764 = vmatprep.subr.bf16.mxu0 %v592
  %765 = vmatpush1.bf16.msra.mxu0 %v591
  %766 = vmatprep.subr.bf16.mxu0 %v596
  %767 = vmatpush1.bf16.msra.mxu0 %v595
  %768 = vmatprep.subr.bf16.mxu0 %v600
  %769 = vmatpush1.bf16.msra.mxu0 %v599
  %770 = vmatprep.subr.bf16.mxu0 %v604
  %771 = vmatpush1.bf16.msra.mxu0 %v603
  %772 = vmatprep.subr.bf16.mxu0 0
  %773 = vmatpush1.bf16.msra.mxu0 0
  %774 = vmatprep.subr.bf16.mxu0 0
  %775 = vmatpush1.bf16.msra.mxu0 0
  %776 = vmatprep.subr.bf16.mxu0 0
  %777 = vmatpush1.bf16.msra.mxu0 0
  %778 = vmatprep.subr.bf16.mxu0 0
  %779 = vmatpush1.bf16.msra.mxu0 0
  %780 = vmatprep.subr.bf16.mxu0 0
  %781 = vmatpush1.bf16.msra.mxu0 0
  %782 = vmatprep.subr.bf16.mxu0 0
  %783 = vmatpush1.bf16.msra.mxu0 0
  %784 = vmatprep.subr.bf16.mxu0 0
  %785 = vmatpush1.bf16.msra.mxu0 0
  %786 = vmatprep.subr.bf16.mxu0 0
  %787 = vmatpush1.bf16.msra.mxu0 0
  %788 = vmatprep.mubr.bf16.mxu0 0
  %789 = vmatmul.mubr.bf16.gmra.mrb[0].mxu0 %v213
  %v790 = vpop.f32.mrb[0].mxu0
  %v791 = vadd.f32 %v738, %v790
  %v792 = vpop.f32.mrb[0].mxu0
  %v793 = vadd.f32 %v740, %v792
  %v794 = vpop.f32.mrb[0].mxu0
  %v795 = vadd.f32 %v742, %v794
  %v796 = vpop.f32.mrb[0].mxu0
  %v797 = vadd.f32 %v744, %v796
  %798 = vmatprep.mubr.bf16.mxu0 0
  %799 = vmatmul.mubr.bf16.gmra.mrb[0].mxu0 %v216
  %v800 = vpop.f32.mrb[0].mxu0
  %v801 = vadd.f32 %v748, %v800
  %v802 = vpop.f32.mrb[0].mxu0
  %v803 = vadd.f32 %v750, %v802
  %v804 = vpop.f32.mrb[0].mxu0
  %v805 = vadd.f32 %v752, %v804
  %v806 = vpop.f32.mrb[0].mxu0
  %v807 = vadd.f32 %v754, %v806
  %808 = vdwg.mxu0
  %809 = vmatprep.subr.bf16.mxu0 %v514
  %810 = vmatpush1.bf16.msra.mxu0 %v513
  %811 = vmatprep.subr.bf16.mxu0 %v518
  %812 = vmatpush1.bf16.msra.mxu0 %v517
  %813 = vmatprep.subr.bf16.mxu0 %v522
  %814 = vmatpush1.bf16.msra.mxu0 %v521
  %815 = vmatprep.subr.bf16.mxu0 %v526
  %816 = vmatpush1.bf16.msra.mxu0 %v525
  %817 = vmatprep.subr.bf16.mxu0 %v530
  %818 = vmatpush1.bf16.msra.mxu0 %v529
  %819 = vmatprep.subr.bf16.mxu0 %v534
  %820 = vmatpush1.bf16.msra.mxu0 %v533
  %821 = vmatprep.subr.bf16.mxu0 %v538
  %822 = vmatpush1.bf16.msra.mxu0 %v537
  %823 = vmatprep.subr.bf16.mxu0 %v542
  %824 = vmatpush1.bf16.msra.mxu0 %v541
  %825 = vmatprep.subr.bf16.mxu0 %v546
  %826 = vmatpush1.bf16.msra.mxu0 %v545
  %827 = vmatprep.subr.bf16.mxu0 %v550
  %828 = vmatpush1.bf16.msra.mxu0 %v549
  %829 = vmatprep.subr.bf16.mxu0 %v554
  %830 = vmatpush1.bf16.msra.mxu0 %v553
  %831 = vmatprep.subr.bf16.mxu0 %v558
  %832 = vmatpush1.bf16.msra.mxu0 %v557
  %833 = vmatprep.subr.bf16.mxu0 %v562
  %834 = vmatpush1.bf16.msra.mxu0 %v561
  %835 = vmatprep.subr.bf16.mxu0 %v566
  %836 = vmatpush1.bf16.msra.mxu0 %v565
  %837 = vmatprep.subr.bf16.mxu0 %v570
  %838 = vmatpush1.bf16.msra.mxu0 %v569
  %839 = vmatprep.subr.bf16.mxu0 %v574
  %840 = vmatpush1.bf16.msra.mxu0 %v573
  %841 = vmatprep.mubr.bf16.mxu0 %v212
  %842 = vmatmul.mubr.bf16.gmra.mrb[0].mxu0 %v211
  %v843 = vpop.f32.mrb[0].mxu0
  %v844 = vadd.f32 %v182, %v843
  %v845 = vpop.f32.mrb[0].mxu0
  %v846 = vadd.f32 %v186, %v845
  %v847 = vpop.f32.mrb[0].mxu0
  %v848 = vadd.f32 %v182, %v847
  %v849 = vpop.f32.mrb[0].mxu0
  %v850 = vadd.f32 %v186, %v849
  %851 = vmatprep.mubr.bf16.mxu0 %v215
  %852 = vmatmul.mubr.bf16.gmra.mrb[0].mxu0 %v214
  %v853 = vpop.f32.mrb[0].mxu0
  %v854 = vadd.f32 %v182, %v853
  %v855 = vpop.f32.mrb[0].mxu0
  %v856 = vadd.f32 %v186, %v855
  %v857 = vpop.f32.mrb[0].mxu0
  %v858 = vadd.f32 %v182, %v857
  %v859 = vpop.f32.mrb[0].mxu0
  %v860 = vadd.f32 %v186, %v859
  %861 = vdwg.mxu0
  %862 = vmatprep.subr.bf16.mxu0 %v578
  %863 = vmatpush1.bf16.msra.mxu0 %v577
  %864 = vmatprep.subr.bf16.mxu0 %v582
  %865 = vmatpush1.bf16.msra.mxu0 %v581
  %866 = vmatprep.subr.bf16.mxu0 %v586
  %867 = vmatpush1.bf16.msra.mxu0 %v585
  %868 = vmatprep.subr.bf16.mxu0 %v590
  %869 = vmatpush1.bf16.msra.mxu0 %v589
  %870 = vmatprep.subr.bf16.mxu0 %v594
  %871 = vmatpush1.bf16.msra.mxu0 %v593
  %872 = vmatprep.subr.bf16.mxu0 %v598
  %873 = vmatpush1.bf16.msra.mxu0 %v597
  %874 = vmatprep.subr.bf16.mxu0 %v602
  %875 = vmatpush1.bf16.msra.mxu0 %v601
  %876 = vmatprep.subr.bf16.mxu0 %v606
  %877 = vmatpush1.bf16.msra.mxu0 %v605
  %878 = vmatprep.subr.bf16.mxu0 0
  %879 = vmatpush1.bf16.msra.mxu0 0
  %880 = vmatprep.subr.bf16.mxu0 0
  %881 = vmatpush1.bf16.msra.mxu0 0
  %882 = vmatprep.subr.bf16.mxu0 0
  %883 = vmatpush1.bf16.msra.mxu0 0
  %884 = vmatprep.subr.bf16.mxu0 0
  %885 = vmatpush1.bf16.msra.mxu0 0
  %886 = vmatprep.subr.bf16.mxu0 0
  %887 = vmatpush1.bf16.msra.mxu0 0
  %888 = vmatprep.subr.bf16.mxu0 0
  %889 = vmatpush1.bf16.msra.mxu0 0
  %890 = vmatprep.subr.bf16.mxu0 0
  %891 = vmatpush1.bf16.msra.mxu0 0
  %892 = vmatprep.subr.bf16.mxu0 0
  %893 = vmatpush1.bf16.msra.mxu0 0
  %894 = vmatprep.mubr.bf16.mxu0 0
  %895 = vmatmul.mubr.bf16.gmra.mrb[0].mxu0 %v213
  %v896 = vpop.f32.mrb[0].mxu0
  %v897 = vadd.f32 %v844, %v896
  %v898 = vpop.f32.mrb[0].mxu0
  %v899 = vadd.f32 %v846, %v898
  %v900 = vpop.f32.mrb[0].mxu0
  %v901 = vadd.f32 %v848, %v900
  %v902 = vpop.f32.mrb[0].mxu0
  %v903 = vadd.f32 %v850, %v902
  %904 = vmatprep.mubr.bf16.mxu0 0
  %905 = vmatmul.mubr.bf16.gmra.mrb[0].mxu0 %v216
  %v906 = vpop.f32.mrb[0].mxu0
  %v907 = vadd.f32 %v854, %v906
  %v908 = vpop.f32.mrb[0].mxu0
  %v909 = vadd.f32 %v856, %v908
  %v910 = vpop.f32.mrb[0].mxu0
  %v911 = vadd.f32 %v858, %v910
  %v912 = vpop.f32.mrb[0].mxu0
  %v913 = vadd.f32 %v860, %v912
  %914 = vdwg.mxu0
  %v915 = vmax.f32 %v791, 0.0
  %v916 = vmax.f32 %v793, 0.0
  %v917 = vmax.f32 %v897, 0.0
  %v918 = vmax.f32 %v899, 0.0
  %v919 = vmax.f32 %v795, 0.0
  %v920 = vmax.f32 %v797, 0.0
  %v921 = vmax.f32 %v901, 0.0
  %v922 = vmax.f32 %v903, 0.0
  %v923 = vmax.f32 %v801, 0.0
  %v924 = vmax.f32 %v803, 0.0
  %v925 = vmax.f32 %v907, 0.0
  %v926 = vmax.f32 %v909, 0.0
  %v927 = vmax.f32 %v805, 0.0
  %v928 = vmax.f32 %v807, 0.0
  %v929 = vmax.f32 %v911, 0.0
  %v930 = vmax.f32 %v913, 0.0
  %v931 = vpack.c.bf16 %v919, %v915
  %v932 = vpack.c.bf16 %v920, %v916
  %v933 = vpack.c.bf16 %v921, %v917
  %v934 = vpack.c.bf16 %v922, %v918
  %v935 = vpack.c.bf16 %v927, %v923
  %v936 = vpack.c.bf16 %v928, %v924
  %v937 = vpack.c.bf16 %v929, %v925
  %v938 = vpack.c.bf16 %v930, %v926
  %v939 = vld [vmem:[%s3] sm:$0xff]
  %v940 = vld [vmem:[%s3 + $0x8] sm:$0xff]
  %v941 = vld [vmem:[%s3 + $0x10] sm:$0xff]
  %v942 = vld [vmem:[%s3 + $0x18] sm:$0xff]
  %v943 = vld [vmem:[%s3 + $0x20] sm:$0xff]
  %v944 = vld [vmem:[%s3 + $0x28] sm:$0xff]
  %v945 = vld [vmem:[%s3 + $0x30] sm:$0xff]
  %v946 = vld [vmem:[%s3 + $0x38] sm:$0xff]
  %v947 = vld [vmem:[%s3 + $0x40] sm:$0xff]
  %v948 = vld [vmem:[%s3 + $0x48] sm:$0xff]
  %v949 = vld [vmem:[%s3 + $0x50] sm:$0xff]
  %v950 = vld [vmem:[%s3 + $0x58] sm:$0xff]
  %v951 = vld [vmem:[%s3 + $0x60] sm:$0xff]
  %v952 = vld [vmem:[%s3 + $0x68] sm:$0xff]
  %v953 = vld [vmem:[%s3 + $0x70] sm:$0xff]
  %v954 = vld [vmem:[%s3 + $0x78] sm:$0xff]
  %v955 = vld [vmem:[%s3 + $0x80] sm:$0xff]
  %v956 = vld [vmem:[%s3 + $0x88] sm:$0xff]
  %v957 = vld [vmem:[%s3 + $0x90] sm:$0xff]
  %v958 = vld [vmem:[%s3 + $0x98] sm:$0xff]
  %v959 = vld [vmem:[%s3 + $0xa0] sm:$0xff]
  %v960 = vld [vmem:[%s3 + $0xa8] sm:$0xff]
  %v961 = vld [vmem:[%s3 + $0xb0] sm:$0xff]
  %v962 = vld [vmem:[%s3 + $0xb8] sm:$0xff]
  %v963 = vld [vmem:[%s3 + $0xc0] sm:$0xff]
  %v964 = vld [vmem:[%s3 + $0xc8] sm:$0xff]
  %v965 = vld [vmem:[%s3 + $0xd0] sm:$0xff]
  %v966 = vld [vmem:[%s3 + $0xd8] sm:$0xff]
  %v967 = vld [vmem:[%s3 + $0xe0] sm:$0xff]
  %v968 = vld [vmem:[%s3 + $0xe8] sm:$0xff]
  %v969 = vld [vmem:[%s3 + $0xf0] sm:$0xff]
  %v970 = vld [vmem:[%s3 + $0xf8] sm:$0xff]
  %v971 = vld [vmem:[%s3 + $0x100] sm:$0xff]
  %v972 = vld [vmem:[%s3 + $0x108] sm:$0xff]
  %v973 = vld [vmem:[%s3 + $0x110] sm:$0xff]
  %v974 = vld [vmem:[%s3 + $0x118] sm:$0xff]
  %v975 = vld [vmem:[%s3 + $0x120] sm:$0xff]
  %v976 = vld [vmem:[%s3 + $0x128] sm:$0xff]
  %v977 = vld [vmem:[%s3 + $0x130] sm:$0xff]
  %v978 = vld [vmem:[%s3 + $0x138] sm:$0xff]
  %v979 = vld [vmem:[%s3 + $0x140] sm:$0xff]
  %v980 = vld [vmem:[%s3 + $0x148] sm:$0xff]
  %v981 = vld [vmem:[%s3 + $0x150] sm:$0xff]
  %v982 = vld [vmem:[%s3 + $0x158] sm:$0xff]
  %v983 = vld [vmem:[%s3 + $0x160] sm:$0xff]
  %v984 = vld [vmem:[%s3 + $0x168] sm:$0xff]
  %v985 = vld [vmem:[%s3 + $0x170] sm:$0xff]
  %v986 = vld [vmem:[%s3 + $0x178] sm:$0xff]
  %v987 = vld [vmem:[%s3 + $0x180] sm:$0xff]
  %v988 = vld [vmem:[%s3 + $0x188] sm:$0xff]
  %v989 = vld [vmem:[%s3 + $0x190] sm:$0xff]
  %v990 = vld [vmem:[%s3 + $0x198] sm:$0xff]
  %v991 = vld [vmem:[%s3 + $0x1a0] sm:$0xff]
  %v992 = vld [vmem:[%s3 + $0x1a8] sm:$0xff]
  %v993 = vld [vmem:[%s3 + $0x1b0] sm:$0xff]
  %v994 = vld [vmem:[%s3 + $0x1b8] sm:$0xff]
  %v995 = vld [vmem:[%s3 + $0x1c0] sm:$0xff]
  %v996 = vld [vmem:[%s3 + $0x1c8] sm:$0xff]
  %v997 = vld [vmem:[%s3 + $0x1d0] sm:$0xff]
  %v998 = vld [vmem:[%s3 + $0x1d8] sm:$0xff]
  %v999 = vld [vmem:[%s3 + $0x1e0] sm:$0xff]
  %v1000 = vld [vmem:[%s3 + $0x1e8] sm:$0xff]
  %v1001 = vld [vmem:[%s3 + $0x1f0] sm:$0xff]
  %v1002 = vld [vmem:[%s3 + $0x1f8] sm:$0xff]
  %v1003 = vld [vmem:[%s4] sm:$0x3]
  %v1005 = vlaneseq
  %v1006 = vshrl.u32 %v1005, 7
  %v1007 = vsub.s32 0, %v1006
  %v1008 = vrot.slane %v1003, %v1007
  %v1009 = vlaneseq
  %v1010 = vshrl.u32 %v1009, 7
  %v1011 = vsub.s32 1, %v1010
  %v1012 = vrot.slane %v1003, %v1011
  %v1079 = vunpack.c.l.b16 %v939
  %v1080 = vunpack.c.h.b16 %v939
  %v1081 = vunpack.c.l.b16 %v940
  %v1082 = vunpack.c.h.b16 %v940
  %v1083 = vunpack.c.l.b16 %v941
  %v1084 = vunpack.c.h.b16 %v941
  %v1085 = vunpack.c.l.b16 %v942
  %v1086 = vunpack.c.h.b16 %v942
  %v1087 = vunpack.c.l.b16 %v943
  %v1088 = vunpack.c.h.b16 %v943
  %v1089 = vunpack.c.l.b16 %v944
  %v1090 = vunpack.c.h.b16 %v944
  %v1091 = vunpack.c.l.b16 %v945
  %v1092 = vunpack.c.h.b16 %v945
  %v1093 = vunpack.c.l.b16 %v946
  %v1094 = vunpack.c.h.b16 %v946
  %v1095 = vunpack.c.l.b16 %v947
  %v1096 = vunpack.c.h.b16 %v947
  %v1097 = vunpack.c.l.b16 %v948
  %v1098 = vunpack.c.h.b16 %v948
  %v1099 = vunpack.c.l.b16 %v949
  %v1100 = vunpack.c.h.b16 %v949
  %v1101 = vunpack.c.l.b16 %v950
  %v1102 = vunpack.c.h.b16 %v950
  %v1103 = vunpack.c.l.b16 %v951
  %v1104 = vunpack.c.h.b16 %v951
  %v1105 = vunpack.c.l.b16 %v952
  %v1106 = vunpack.c.h.b16 %v952
  %v1107 = vunpack.c.l.b16 %v953
  %v1108 = vunpack.c.h.b16 %v953
  %v1109 = vunpack.c.l.b16 %v954
  %v1110 = vunpack.c.h.b16 %v954
  %v1111 = vunpack.c.l.b16 %v955
  %v1112 = vunpack.c.h.b16 %v955
  %v1113 = vunpack.c.l.b16 %v956
  %v1114 = vunpack.c.h.b16 %v956
  %v1115 = vunpack.c.l.b16 %v957
  %v1116 = vunpack.c.h.b16 %v957
  %v1117 = vunpack.c.l.b16 %v958
  %v1118 = vunpack.c.h.b16 %v958
  %v1119 = vunpack.c.l.b16 %v959
  %v1120 = vunpack.c.h.b16 %v959
  %v1121 = vunpack.c.l.b16 %v960
  %v1122 = vunpack.c.h.b16 %v960
  %v1123 = vunpack.c.l.b16 %v961
  %v1124 = vunpack.c.h.b16 %v961
  %v1125 = vunpack.c.l.b16 %v962
  %v1126 = vunpack.c.h.b16 %v962
  %v1127 = vunpack.c.l.b16 %v963
  %v1128 = vunpack.c.h.b16 %v963
  %v1129 = vunpack.c.l.b16 %v964
  %v1130 = vunpack.c.h.b16 %v964
  %v1131 = vunpack.c.l.b16 %v965
  %v1132 = vunpack.c.h.b16 %v965
  %v1133 = vunpack.c.l.b16 %v966
  %v1134 = vunpack.c.h.b16 %v966
  %v1135 = vunpack.c.l.b16 %v967
  %v1136 = vunpack.c.h.b16 %v967
  %v1137 = vunpack.c.l.b16 %v968
  %v1138 = vunpack.c.h.b16 %v968
  %v1139 = vunpack.c.l.b16 %v969
  %v1140 = vunpack.c.h.b16 %v969
  %v1141 = vunpack.c.l.b16 %v970
  %v1142 = vunpack.c.h.b16 %v970
  %v1143 = vunpack.c.l.b16 %v971
  %v1144 = vunpack.c.h.b16 %v971
  %v1145 = vunpack.c.l.b16 %v972
  %v1146 = vunpack.c.h.b16 %v972
  %v1147 = vunpack.c.l.b16 %v973
  %v1148 = vunpack.c.h.b16 %v973
  %v1149 = vunpack.c.l.b16 %v974
  %v1150 = vunpack.c.h.b16 %v974
  %v1151 = vunpack.c.l.b16 %v975
  %v1152 = vunpack.c.h.b16 %v975
  %v1153 = vunpack.c.l.b16 %v976
  %v1154 = vunpack.c.h.b16 %v976
  %v1155 = vunpack.c.l.b16 %v977
  %v1156 = vunpack.c.h.b16 %v977
  %v1157 = vunpack.c.l.b16 %v978
  %v1158 = vunpack.c.h.b16 %v978
  %v1159 = vunpack.c.l.b16 %v979
  %v1160 = vunpack.c.h.b16 %v979
  %v1161 = vunpack.c.l.b16 %v980
  %v1162 = vunpack.c.h.b16 %v980
  %v1163 = vunpack.c.l.b16 %v981
  %v1164 = vunpack.c.h.b16 %v981
  %v1165 = vunpack.c.l.b16 %v982
  %v1166 = vunpack.c.h.b16 %v982
  %v1167 = vunpack.c.l.b16 %v983
  %v1168 = vunpack.c.h.b16 %v983
  %v1169 = vunpack.c.l.b16 %v984
  %v1170 = vunpack.c.h.b16 %v984
  %v1171 = vunpack.c.l.b16 %v985
  %v1172 = vunpack.c.h.b16 %v985
  %v1173 = vunpack.c.l.b16 %v986
  %v1174 = vunpack.c.h.b16 %v986
  %v1175 = vunpack.c.l.b16 %v987
  %v1176 = vunpack.c.h.b16 %v987
  %v1177 = vunpack.c.l.b16 %v988
  %v1178 = vunpack.c.h.b16 %v988
  %v1179 = vunpack.c.l.b16 %v989
  %v1180 = vunpack.c.h.b16 %v989
  %v1181 = vunpack.c.l.b16 %v990
  %v1182 = vunpack.c.h.b16 %v990
  %v1183 = vunpack.c.l.b16 %v991
  %v1184 = vunpack.c.h.b16 %v991
  %v1185 = vunpack.c.l.b16 %v992
  %v1186 = vunpack.c.h.b16 %v992
  %v1187 = vunpack.c.l.b16 %v993
  %v1188 = vunpack.c.h.b16 %v993
  %v1189 = vunpack.c.l.b16 %v994
  %v1190 = vunpack.c.h.b16 %v994
  %v1191 = vunpack.c.l.b16 %v995
  %v1192 = vunpack.c.h.b16 %v995
  %v1193 = vunpack.c.l.b16 %v996
  %v1194 = vunpack.c.h.b16 %v996
  %v1195 = vunpack.c.l.b16 %v997
  %v1196 = vunpack.c.h.b16 %v997
  %v1197 = vunpack.c.l.b16 %v998
  %v1198 = vunpack.c.h.b16 %v998
  %v1199 = vunpack.c.l.b16 %v999
  %v1200 = vunpack.c.h.b16 %v999
  %v1201 = vunpack.c.l.b16 %v1000
  %v1202 = vunpack.c.h.b16 %v1000
  %v1203 = vunpack.c.l.b16 %v1001
  %v1204 = vunpack.c.h.b16 %v1001
  %v1205 = vunpack.c.l.b16 %v1002
  %v1206 = vunpack.c.h.b16 %v1002
  %v1207 = vpack.c.b16 %v1081, %v1079
  %v1208 = vpack.c.b16 %v1082, %v1080
  %v1209 = vpack.c.b16 %v1085, %v1083
  %v1210 = vpack.c.b16 %v1086, %v1084
  %v1211 = vpack.c.b16 %v1089, %v1087
  %v1212 = vpack.c.b16 %v1090, %v1088
  %v1213 = vpack.c.b16 %v1093, %v1091
  %v1214 = vpack.c.b16 %v1094, %v1092
  %v1215 = vpack.c.b16 %v1097, %v1095
  %v1216 = vpack.c.b16 %v1098, %v1096
  %v1217 = vpack.c.b16 %v1101, %v1099
  %v1218 = vpack.c.b16 %v1102, %v1100
  %v1219 = vpack.c.b16 %v1105, %v1103
  %v1220 = vpack.c.b16 %v1106, %v1104
  %v1221 = vpack.c.b16 %v1109, %v1107
  %v1222 = vpack.c.b16 %v1110, %v1108
  %v1223 = vpack.c.b16 %v1113, %v1111
  %v1224 = vpack.c.b16 %v1114, %v1112
  %v1225 = vpack.c.b16 %v1117, %v1115
  %v1226 = vpack.c.b16 %v1118, %v1116
  %v1227 = vpack.c.b16 %v1121, %v1119
  %v1228 = vpack.c.b16 %v1122, %v1120
  %v1229 = vpack.c.b16 %v1125, %v1123
  %v1230 = vpack.c.b16 %v1126, %v1124
  %v1231 = vpack.c.b16 %v1129, %v1127
  %v1232 = vpack.c.b16 %v1130, %v1128
  %v1233 = vpack.c.b16 %v1133, %v1131
  %v1234 = vpack.c.b16 %v1134, %v1132
  %v1235 = vpack.c.b16 %v1137, %v1135
  %v1236 = vpack.c.b16 %v1138, %v1136
  %v1237 = vpack.c.b16 %v1141, %v1139
  %v1238 = vpack.c.b16 %v1142, %v1140
  %v1239 = vpack.c.b16 %v1145, %v1143
  %v1240 = vpack.c.b16 %v1146, %v1144
  %v1241 = vpack.c.b16 %v1149, %v1147
  %v1242 = vpack.c.b16 %v1150, %v1148
  %v1243 = vpack.c.b16 %v1153, %v1151
  %v1244 = vpack.c.b16 %v1154, %v1152
  %v1245 = vpack.c.b16 %v1157, %v1155
  %v1246 = vpack.c.b16 %v1158, %v1156
  %v1247 = vpack.c.b16 %v1161, %v1159
  %v1248 = vpack.c.b16 %v1162, %v1160
  %v1249 = vpack.c.b16 %v1165, %v1163
  %v1250 = vpack.c.b16 %v1166, %v1164
  %v1251 = vpack.c.b16 %v1169, %v1167
  %v1252 = vpack.c.b16 %v1170, %v1168
  %v1253 = vpack.c.b16 %v1173, %v1171
  %v1254 = vpack.c.b16 %v1174, %v1172
  %v1255 = vpack.c.b16 %v1177, %v1175
  %v1256 = vpack.c.b16 %v1178, %v1176
  %v1257 = vpack.c.b16 %v1181, %v1179
  %v1258 = vpack.c.b16 %v1182, %v1180
  %v1259 = vpack.c.b16 %v1185, %v1183
  %v1260 = vpack.c.b16 %v1186, %v1184
  %v1261 = vpack.c.b16 %v1189, %v1187
  %v1262 = vpack.c.b16 %v1190, %v1188
  %v1263 = vpack.c.b16 %v1193, %v1191
  %v1264 = vpack.c.b16 %v1194, %v1192
  %v1265 = vpack.c.b16 %v1197, %v1195
  %v1266 = vpack.c.b16 %v1198, %v1196
  %v1267 = vpack.c.b16 %v1201, %v1199
  %v1268 = vpack.c.b16 %v1202, %v1200
  %v1269 = vpack.c.b16 %v1205, %v1203
  %v1270 = vpack.c.b16 %v1206, %v1204
  %1335 = vmatprep.subr.bf16.mxu0 %v1208
  %1336 = vmatpush1.bf16.msra.mxu0 %v1207
  %1337 = vmatprep.subr.bf16.mxu0 %v1210
  %1338 = vmatpush1.bf16.msra.mxu0 %v1209
  %1339 = vmatprep.subr.bf16.mxu0 %v1212
  %1340 = vmatpush1.bf16.msra.mxu0 %v1211
  %1341 = vmatprep.subr.bf16.mxu0 %v1214
  %1342 = vmatpush1.bf16.msra.mxu0 %v1213
  %1343 = vmatprep.subr.bf16.mxu0 %v1216
  %1344 = vmatpush1.bf16.msra.mxu0 %v1215
  %1345 = vmatprep.subr.bf16.mxu0 %v1218
  %1346 = vmatpush1.bf16.msra.mxu0 %v1217
  %1347 = vmatprep.subr.bf16.mxu0 %v1220
  %1348 = vmatpush1.bf16.msra.mxu0 %v1219
  %1349 = vmatprep.subr.bf16.mxu0 %v1222
  %1350 = vmatpush1.bf16.msra.mxu0 %v1221
  %1351 = vmatprep.subr.bf16.mxu0 %v1224
  %1352 = vmatpush1.bf16.msra.mxu0 %v1223
  %1353 = vmatprep.subr.bf16.mxu0 %v1226
  %1354 = vmatpush1.bf16.msra.mxu0 %v1225
  %1355 = vmatprep.subr.bf16.mxu0 %v1228
  %1356 = vmatpush1.bf16.msra.mxu0 %v1227
  %1357 = vmatprep.subr.bf16.mxu0 %v1230
  %1358 = vmatpush1.bf16.msra.mxu0 %v1229
  %1359 = vmatprep.subr.bf16.mxu0 %v1232
  %1360 = vmatpush1.bf16.msra.mxu0 %v1231
  %1361 = vmatprep.subr.bf16.mxu0 %v1234
  %1362 = vmatpush1.bf16.msra.mxu0 %v1233
  %1363 = vmatprep.subr.bf16.mxu0 %v1236
  %1364 = vmatpush1.bf16.msra.mxu0 %v1235
  %1365 = vmatprep.subr.bf16.mxu0 %v1238
  %1366 = vmatpush1.bf16.msra.mxu0 %v1237
  %1367 = vmatprep.mubr.bf16.mxu0 %v932
  %1368 = vmatmul.mubr.bf16.gmra.mrb[0].mxu0 %v931
  %v1369 = vpop.f32.mrb[0].mxu0
  %v1370 = vadd.f32 %v1008, %v1369
  %v1371 = vpop.f32.mrb[0].mxu0
  %v1372 = vadd.f32 %v1012, %v1371
  %v1373 = vpop.f32.mrb[0].mxu0
  %v1374 = vadd.f32 %v1008, %v1373
  %v1375 = vpop.f32.mrb[0].mxu0
  %v1376 = vadd.f32 %v1012, %v1375
  %1377 = vmatprep.mubr.bf16.mxu0 %v936
  %1378 = vmatmul.mubr.bf16.gmra.mrb[0].mxu0 %v935
  %v1379 = vpop.f32.mrb[0].mxu0
  %v1380 = vadd.f32 %v1008, %v1379
  %v1381 = vpop.f32.mrb[0].mxu0
  %v1382 = vadd.f32 %v1012, %v1381
  %v1383 = vpop.f32.mrb[0].mxu0
  %v1384 = vadd.f32 %v1008, %v1383
  %v1385 = vpop.f32.mrb[0].mxu0
  %v1386 = vadd.f32 %v1012, %v1385
  %1387 = vdwg.mxu0
  %1388 = vmatprep.subr.bf16.mxu0 %v1240
  %1389 = vmatpush1.bf16.msra.mxu0 %v1239
  %1390 = vmatprep.subr.bf16.mxu0 %v1242
  %1391 = vmatpush1.bf16.msra.mxu0 %v1241
  %1392 = vmatprep.subr.bf16.mxu0 %v1244
  %1393 = vmatpush1.bf16.msra.mxu0 %v1243
  %1394 = vmatprep.subr.bf16.mxu0 %v1246
  %1395 = vmatpush1.bf16.msra.mxu0 %v1245
  %1396 = vmatprep.subr.bf16.mxu0 %v1248
  %1397 = vmatpush1.bf16.msra.mxu0 %v1247
  %1398 = vmatprep.subr.bf16.mxu0 %v1250
  %1399 = vmatpush1.bf16.msra.mxu0 %v1249
  %1400 = vmatprep.subr.bf16.mxu0 %v1252
  %1401 = vmatpush1.bf16.msra.mxu0 %v1251
  %1402 = vmatprep.subr.bf16.mxu0 %v1254
  %1403 = vmatpush1.bf16.msra.mxu0 %v1253
  %1404 = vmatprep.subr.bf16.mxu0 %v1256
  %1405 = vmatpush1.bf16.msra.mxu0 %v1255
  %1406 = vmatprep.subr.bf16.mxu0 %v1258
  %1407 = vmatpush1.bf16.msra.mxu0 %v1257
  %1408 = vmatprep.subr.bf16.mxu0 %v1260
  %1409 = vmatpush1.bf16.msra.mxu0 %v1259
  %1410 = vmatprep.subr.bf16.mxu0 %v1262
  %1411 = vmatpush1.bf16.msra.mxu0 %v1261
  %1412 = vmatprep.subr.bf16.mxu0 %v1264
  %1413 = vmatpush1.bf16.msra.mxu0 %v1263
  %1414 = vmatprep.subr.bf16.mxu0 %v1266
  %1415 = vmatpush1.bf16.msra.mxu0 %v1265
  %1416 = vmatprep.subr.bf16.mxu0 %v1268
  %1417 = vmatpush1.bf16.msra.mxu0 %v1267
  %1418 = vmatprep.subr.bf16.mxu0 %v1270
  %1419 = vmatpush1.bf16.msra.mxu0 %v1269
  %1420 = vmatprep.mubr.bf16.mxu0 %v934
  %1421 = vmatmul.mubr.bf16.gmra.mrb[0].mxu0 %v933
  %v1422 = vpop.f32.mrb[0].mxu0
  %v1423 = vadd.f32 %v1370, %v1422
  %v1424 = vpop.f32.mrb[0].mxu0
  %v1425 = vadd.f32 %v1372, %v1424
  %v1426 = vpop.f32.mrb[0].mxu0
  %v1427 = vadd.f32 %v1374, %v1426
  %v1428 = vpop.f32.mrb[0].mxu0
  %v1429 = vadd.f32 %v1376, %v1428
  %1430 = vmatprep.mubr.bf16.mxu0 %v938
  %1431 = vmatmul.mubr.bf16.gmra.mrb[0].mxu0 %v937
  %v1432 = vpop.f32.mrb[0].mxu0
  %v1433 = vadd.f32 %v1380, %v1432
  %v1434 = vpop.f32.mrb[0].mxu0
  %v1435 = vadd.f32 %v1382, %v1434
  %v1436 = vpop.f32.mrb[0].mxu0
  %v1437 = vadd.f32 %v1384, %v1436
  %v1438 = vpop.f32.mrb[0].mxu0
  %v1439 = vadd.f32 %v1386, %v1438
  %1440 = vdwg.mxu0
  %v1441 = vadd.f32 %v1423, %v1427
  %v1442 = vrot.slane %v1441, 4
  %v1443 = vadd.f32 %v1441, %v1442
  %v1444 = vrot.slane %v1443, 2
  %v1445 = vadd.f32 %v1443, %v1444
  %v1446 = vrot.slane %v1445, 1
  %v1447 = vadd.f32 %v1445, %v1446
  %v1448 = vadd.f32 %v1425, %v1429
  %v1449 = vrot.slane %v1448, 4
  %v1450 = vadd.f32 %v1448, %v1449
  %v1451 = vrot.slane %v1450, 2
  %v1452 = vadd.f32 %v1450, %v1451
  %v1453 = vrot.slane %v1452, 1
  %v1454 = vadd.f32 %v1452, %v1453
  %v1455 = vrcp.pop 16.0
  %v1456 = vmul.f32 %v1447, %v1455
  %v1457 = vmul.f32 %v1454, %v1455
  %v1458 = vsub.f32 %v1423, %v1456
  %v1459 = vsub.f32 %v1425, %v1457
  %v1460 = vsub.f32 %v1427, %v1456
  %v1461 = vsub.f32 %v1429, %v1457
  %v1462 = vmul.f32 %v1458, %v1458
  %v1463 = vmul.f32 %v1459, %v1459
  %v1464 = vmul.f32 %v1460, %v1460
  %v1465 = vmul.f32 %v1461, %v1461
  %v1466 = vadd.f32 %v1462, %v1464
  %v1467 = vrot.slane %v1466, 4
  %v1468 = vadd.f32 %v1466, %v1467
  %v1469 = vrot.slane %v1468, 2
  %v1470 = vadd.f32 %v1468, %v1469
  %v1471 = vrot.slane %v1470, 1
  %v1472 = vadd.f32 %v1470, %v1471
  %v1473 = vadd.f32 %v1463, %v1465
  %v1474 = vrot.slane %v1473, 4
  %v1475 = vadd.f32 %v1473, %v1474
  %v1476 = vrot.slane %v1475, 2
  %v1477 = vadd.f32 %v1475, %v1476
  %v1478 = vrot.slane %v1477, 1
  %v1479 = vadd.f32 %v1477, %v1478
  %v1480 = vmul.f32 %v1472, %v1455
  %v1481 = vmul.f32 %v1479, %v1455
  %v1482 = vadd.f32 %v1480, 1e-05
  %v1483 = vadd.f32 %v1481, 1e-05
  %v1484 = vrsqrt.pop %v1482
  %v1485 = vrsqrt.pop %v1483
  %v1486 = vmul.f32 %v1458, %v1484
  %v1487 = vmul.f32 %v1459, %v1485
  %v1488 = vmul.f32 %v1460, %v1484
  %v1489 = vmul.f32 %v1461, %v1485
  %v1490 = vadd.f32 %v1433, %v1437
  %v1491 = vrot.slane %v1490, 4
  %v1492 = vadd.f32 %v1490, %v1491
  %v1493 = vrot.slane %v1492, 2
  %v1494 = vadd.f32 %v1492, %v1493
  %v1495 = vrot.slane %v1494, 1
  %v1496 = vadd.f32 %v1494, %v1495
  %v1497 = vadd.f32 %v1435, %v1439
  %v1498 = vrot.slane %v1497, 4
  %v1499 = vadd.f32 %v1497, %v1498
  %v1500 = vrot.slane %v1499, 2
  %v1501 = vadd.f32 %v1499, %v1500
  %v1502 = vrot.slane %v1501, 1
  %v1503 = vadd.f32 %v1501, %v1502
  %v1504 = vmul.f32 %v1496, %v1455
  %v1505 = vmul.f32 %v1503, %v1455
  %v1506 = vsub.f32 %v1433, %v1504
  %v1507 = vsub.f32 %v1435, %v1505
  %v1508 = vsub.f32 %v1437, %v1504
  %v1509 = vsub.f32 %v1439, %v1505
  %v1510 = vmul.f32 %v1506, %v1506
  %v1511 = vmul.f32 %v1507, %v1507
  %v1512 = vmul.f32 %v1508, %v1508
  %v1513 = vmul.f32 %v1509, %v1509
  %v1514 = vadd.f32 %v1510, %v1512
  %v1515 = vrot.slane %v1514, 4
  %v1516 = vadd.f32 %v1514, %v1515
  %v1517 = vrot.slane %v1516, 2
  %v1518 = vadd.f32 %v1516, %v1517
  %v1519 = vrot.slane %v1518, 1
  %v1520 = vadd.f32 %v1518, %v1519
  %v1521 = vadd.f32 %v1511, %v1513
  %v1522 = vrot.slane %v1521, 4
  %v1523 = vadd.f32 %v1521, %v1522
  %v1524 = vrot.slane %v1523, 2
  %v1525 = vadd.f32 %v1523, %v1524
  %v1526 = vrot.slane %v1525, 1
  %v1527 = vadd.f32 %v1525, %v1526
  %v1528 = vmul.f32 %v1520, %v1455
  %v1529 = vmul.f32 %v1527, %v1455
  %v1530 = vadd.f32 %v1528, 1e-05
  %v1531 = vadd.f32 %v1529, 1e-05
  %v1532 = vrsqrt.pop %v1530
  %v1533 = vrsqrt.pop %v1531
  %v1534 = vmul.f32 %v1506, %v1532
  %v1535 = vmul.f32 %v1507, %v1533
  %v1536 = vmul.f32 %v1508, %v1532
  %v1537 = vmul.f32 %v1509, %v1533
  %v1538 = vld [vmem:[%s5] sm:$0xff]
  %v1539 = vld [vmem:[%s5 + $0x8] sm:$0xff]
  %v1540 = vld [vmem:[%s5 + $0x10] sm:$0xff]
  %v1541 = vld [vmem:[%s5 + $0x18] sm:$0xff]
  %v1542 = vld [vmem:[%s5 + $0x20] sm:$0xff]
  %v1543 = vld [vmem:[%s5 + $0x28] sm:$0xff]
  %v1544 = vld [vmem:[%s5 + $0x30] sm:$0xff]
  %v1545 = vld [vmem:[%s5 + $0x38] sm:$0xff]
  %v1546 = vld [vmem:[%s5 + $0x40] sm:$0xff]
  %v1547 = vld [vmem:[%s5 + $0x48] sm:$0xff]
  %v1548 = vld [vmem:[%s5 + $0x50] sm:$0xff]
  %v1549 = vld [vmem:[%s5 + $0x58] sm:$0xff]
  %v1550 = vld [vmem:[%s5 + $0x60] sm:$0xff]
  %v1551 = vld [vmem:[%s5 + $0x68] sm:$0xff]
  %v1552 = vld [vmem:[%s5 + $0x70] sm:$0xff]
  %v1553 = vld [vmem:[%s5 + $0x78] sm:$0xff]
  %v1554 = vld [vmem:[%s5 + $0x80] sm:$0xff]
  %v1555 = vld [vmem:[%s5 + $0x88] sm:$0xff]
  %v1556 = vld [vmem:[%s5 + $0x90] sm:$0xff]
  %v1557 = vld [vmem:[%s5 + $0x98] sm:$0xff]
  %v1558 = vld [vmem:[%s5 + $0xa0] sm:$0xff]
  %v1559 = vld [vmem:[%s5 + $0xa8] sm:$0xff]
  %v1560 = vld [vmem:[%s5 + $0xb0] sm:$0xff]
  %v1561 = vld [vmem:[%s5 + $0xb8] sm:$0xff]
  %v1562 = vld [vmem:[%s5 + $0xc0] sm:$0xff]
  %v1563 = vld [vmem:[%s5 + $0xc8] sm:$0xff]
  %v1564 = vld [vmem:[%s5 + $0xd0] sm:$0xff]
  %v1565 = vld [vmem:[%s5 + $0xd8] sm:$0xff]
  %v1566 = vld [vmem:[%s5 + $0xe0] sm:$0xff]
  %v1567 = vld [vmem:[%s5 + $0xe8] sm:$0xff]
  %v1568 = vld [vmem:[%s5 + $0xf0] sm:$0xff]
  %v1569 = vld [vmem:[%s5 + $0xf8] sm:$0xff]
  %v1570 = vld [vmem:[%s5 + $0x100] sm:$0xff]
  %v1571 = vld [vmem:[%s5 + $0x108] sm:$0xff]
  %v1572 = vld [vmem:[%s5 + $0x110] sm:$0xff]
  %v1573 = vld [vmem:[%s5 + $0x118] sm:$0xff]
  %v1574 = vld [vmem:[%s5 + $0x120] sm:$0xff]
  %v1575 = vld [vmem:[%s5 + $0x128] sm:$0xff]
  %v1576 = vld [vmem:[%s5 + $0x130] sm:$0xff]
  %v1577 = vld [vmem:[%s5 + $0x138] sm:$0xff]
  %v1578 = vld [vmem:[%s5 + $0x140] sm:$0xff]
  %v1579 = vld [vmem:[%s5 + $0x148] sm:$0xff]
  %v1580 = vld [vmem:[%s5 + $0x150] sm:$0xff]
  %v1581 = vld [vmem:[%s5 + $0x158] sm:$0xff]
  %v1582 = vld [vmem:[%s5 + $0x160] sm:$0xff]
  %v1583 = vld [vmem:[%s5 + $0x168] sm:$0xff]
  %v1584 = vld [vmem:[%s5 + $0x170] sm:$0xff]
  %v1585 = vld [vmem:[%s5 + $0x178] sm:$0xff]
  %v1586 = vld [vmem:[%s5 + $0x180] sm:$0xff]
  %v1587 = vld [vmem:[%s5 + $0x188] sm:$0xff]
  %v1588 = vld [vmem:[%s5 + $0x190] sm:$0xff]
  %v1589 = vld [vmem:[%s5 + $0x198] sm:$0xff]
  %v1590 = vld [vmem:[%s5 + $0x1a0] sm:$0xff]
  %v1591 = vld [vmem:[%s5 + $0x1a8] sm:$0xff]
  %v1592 = vld [vmem:[%s5 + $0x1b0] sm:$0xff]
  %v1593 = vld [vmem:[%s5 + $0x1b8] sm:$0xff]
  %v1594 = vld [vmem:[%s5 + $0x1c0] sm:$0xff]
  %v1595 = vld [vmem:[%s5 + $0x1c8] sm:$0xff]
  %v1596 = vld [vmem:[%s5 + $0x1d0] sm:$0xff]
  %v1597 = vld [vmem:[%s5 + $0x1d8] sm:$0xff]
  %v1598 = vld [vmem:[%s5 + $0x1e0] sm:$0xff]
  %v1599 = vld [vmem:[%s5 + $0x1e8] sm:$0xff]
  %v1600 = vld [vmem:[%s5 + $0x1f0] sm:$0xff]
  %v1601 = vld [vmem:[%s5 + $0x1f8] sm:$0xff]
  %v1602 = vld [vmem:[%s5 + $0x200] sm:$0xff]
  %v1603 = vld [vmem:[%s5 + $0x208] sm:$0xff]
  %v1604 = vld [vmem:[%s5 + $0x210] sm:$0xff]
  %v1605 = vld [vmem:[%s5 + $0x218] sm:$0xff]
  %v1606 = vld [vmem:[%s5 + $0x220] sm:$0xff]
  %v1607 = vld [vmem:[%s5 + $0x228] sm:$0xff]
  %v1608 = vld [vmem:[%s5 + $0x230] sm:$0xff]
  %v1609 = vld [vmem:[%s5 + $0x238] sm:$0xff]
  %v1610 = vld [vmem:[%s5 + $0x240] sm:$0xff]
  %v1611 = vld [vmem:[%s5 + $0x248] sm:$0xff]
  %v1612 = vld [vmem:[%s5 + $0x250] sm:$0xff]
  %v1613 = vld [vmem:[%s5 + $0x258] sm:$0xff]
  %v1614 = vld [vmem:[%s5 + $0x260] sm:$0xff]
  %v1615 = vld [vmem:[%s5 + $0x268] sm:$0xff]
  %v1616 = vld [vmem:[%s5 + $0x270] sm:$0xff]
  %v1617 = vld [vmem:[%s5 + $0x278] sm:$0xff]
  %v1618 = vld [vmem:[%s5 + $0x280] sm:$0xff]
  %v1619 = vld [vmem:[%s5 + $0x288] sm:$0xff]
  %v1620 = vld [vmem:[%s5 + $0x290] sm:$0xff]
  %v1621 = vld [vmem:[%s5 + $0x298] sm:$0xff]
  %v1622 = vld [vmem:[%s5 + $0x2a0] sm:$0xff]
  %v1623 = vld [vmem:[%s5 + $0x2a8] sm:$0xff]
  %v1624 = vld [vmem:[%s5 + $0x2b0] sm:$0xff]
  %v1625 = vld [vmem:[%s5 + $0x2b8] sm:$0xff]
  %v1626 = vld [vmem:[%s5 + $0x2c0] sm:$0xff]
  %v1627 = vld [vmem:[%s5 + $0x2c8] sm:$0xff]
  %v1628 = vld [vmem:[%s5 + $0x2d0] sm:$0xff]
  %v1629 = vld [vmem:[%s5 + $0x2d8] sm:$0xff]
  %v1630 = vld [vmem:[%s5 + $0x2e0] sm:$0xff]
  %v1631 = vld [vmem:[%s5 + $0x2e8] sm:$0xff]
  %v1632 = vld [vmem:[%s5 + $0x2f0] sm:$0xff]
  %v1633 = vld [vmem:[%s5 + $0x2f8] sm:$0xff]
  %v1634 = vld [vmem:[%s7] sm:$0xff]
  %v1635 = vld [vmem:[%s7 + $0x8] sm:$0xff]
  %v1636 = vld [vmem:[%s7 + $0x10] sm:$0xff]
  %v1637 = vld [vmem:[%s7 + $0x18] sm:$0xff]
  %v1638 = vld [vmem:[%s7 + $0x20] sm:$0xff]
  %v1639 = vld [vmem:[%s7 + $0x28] sm:$0xff]
  %v1640 = vld [vmem:[%s7 + $0x30] sm:$0xff]
  %v1641 = vld [vmem:[%s7 + $0x38] sm:$0xff]
  %v1642 = vld [vmem:[%s7 + $0x40] sm:$0xff]
  %v1643 = vld [vmem:[%s7 + $0x48] sm:$0xff]
  %v1644 = vld [vmem:[%s7 + $0x50] sm:$0xff]
  %v1645 = vld [vmem:[%s7 + $0x58] sm:$0xff]
  %v1646 = vld [vmem:[%s7 + $0x60] sm:$0xff]
  %v1647 = vld [vmem:[%s7 + $0x68] sm:$0xff]
  %v1648 = vld [vmem:[%s7 + $0x70] sm:$0xff]
  %v1649 = vld [vmem:[%s7 + $0x78] sm:$0xff]
  %v1650 = vld [vmem:[%s7 + $0x80] sm:$0xff]
  %v1651 = vld [vmem:[%s7 + $0x88] sm:$0xff]
  %v1652 = vld [vmem:[%s7 + $0x90] sm:$0xff]
  %v1653 = vld [vmem:[%s7 + $0x98] sm:$0xff]
  %v1654 = vld [vmem:[%s7 + $0xa0] sm:$0xff]
  %v1655 = vld [vmem:[%s7 + $0xa8] sm:$0xff]
  %v1656 = vld [vmem:[%s7 + $0xb0] sm:$0xff]
  %v1657 = vld [vmem:[%s7 + $0xb8] sm:$0xff]
  %v1658 = vld [vmem:[%s7 + $0xc0] sm:$0xff]
  %v1659 = vld [vmem:[%s7 + $0xc8] sm:$0xff]
  %v1660 = vld [vmem:[%s7 + $0xd0] sm:$0xff]
  %v1661 = vld [vmem:[%s7 + $0xd8] sm:$0xff]
  %v1662 = vld [vmem:[%s7 + $0xe0] sm:$0xff]
  %v1663 = vld [vmem:[%s7 + $0xe8] sm:$0xff]
  %v1664 = vld [vmem:[%s7 + $0xf0] sm:$0xff]
  %v1665 = vld [vmem:[%s7 + $0xf8] sm:$0xff]
  %v1666 = vpack.c.bf16 %v1488, %v1486
  %v1667 = vpack.c.bf16 %v1489, %v1487
  %v1668 = vpack.c.bf16 %v1536, %v1534
  %v1669 = vpack.c.bf16 %v1537, %v1535
  %v1670 = vld [vmem:[%s6] sm:$0x3f]
  %v1672 = vlaneseq
  %v1673 = vshrl.u32 %v1672, 7
  %v1674 = vsub.s32 0, %v1673
  %v1675 = vrot.slane %v1670, %v1674
  %v1676 = vlaneseq
  %v1677 = vshrl.u32 %v1676, 7
  %v1678 = vsub.s32 1, %v1677
  %v1679 = vrot.slane %v1670, %v1678
  %v1680 = vlaneseq
  %v1681 = vshrl.u32 %v1680, 7
  %v1682 = vsub.s32 2, %v1681
  %v1683 = vrot.slane %v1670, %v1682
  %v1684 = vlaneseq
  %v1685 = vshrl.u32 %v1684, 7
  %v1686 = vsub.s32 3, %v1685
  %v1687 = vrot.slane %v1670, %v1686
  %v1688 = vlaneseq
  %v1689 = vshrl.u32 %v1688, 7
  %v1690 = vsub.s32 4, %v1689
  %v1691 = vrot.slane %v1670, %v1690
  %v1692 = vlaneseq
  %v1693 = vshrl.u32 %v1692, 7
  %v1694 = vsub.s32 5, %v1693
  %v1695 = vrot.slane %v1670, %v1694
  %v1798 = vunpack.c.l.b16 %v1538
  %v1799 = vunpack.c.h.b16 %v1538
  %v1800 = vunpack.c.l.b16 %v1539
  %v1801 = vunpack.c.h.b16 %v1539
  %v1802 = vunpack.c.l.b16 %v1540
  %v1803 = vunpack.c.h.b16 %v1540
  %v1804 = vunpack.c.l.b16 %v1541
  %v1805 = vunpack.c.h.b16 %v1541
  %v1806 = vunpack.c.l.b16 %v1542
  %v1807 = vunpack.c.h.b16 %v1542
  %v1808 = vunpack.c.l.b16 %v1543
  %v1809 = vunpack.c.h.b16 %v1543
  %v1810 = vunpack.c.l.b16 %v1544
  %v1811 = vunpack.c.h.b16 %v1544
  %v1812 = vunpack.c.l.b16 %v1545
  %v1813 = vunpack.c.h.b16 %v1545
  %v1814 = vunpack.c.l.b16 %v1546
  %v1815 = vunpack.c.h.b16 %v1546
  %v1816 = vunpack.c.l.b16 %v1547
  %v1817 = vunpack.c.h.b16 %v1547
  %v1818 = vunpack.c.l.b16 %v1548
  %v1819 = vunpack.c.h.b16 %v1548
  %v1820 = vunpack.c.l.b16 %v1549
  %v1821 = vunpack.c.h.b16 %v1549
  %v1822 = vunpack.c.l.b16 %v1550
  %v1823 = vunpack.c.h.b16 %v1550
  %v1824 = vunpack.c.l.b16 %v1551
  %v1825 = vunpack.c.h.b16 %v1551
  %v1826 = vunpack.c.l.b16 %v1552
  %v1827 = vunpack.c.h.b16 %v1552
  %v1828 = vunpack.c.l.b16 %v1553
  %v1829 = vunpack.c.h.b16 %v1553
  %v1830 = vunpack.c.l.b16 %v1554
  %v1831 = vunpack.c.h.b16 %v1554
  %v1832 = vunpack.c.l.b16 %v1555
  %v1833 = vunpack.c.h.b16 %v1555
  %v1834 = vunpack.c.l.b16 %v1556
  %v1835 = vunpack.c.h.b16 %v1556
  %v1836 = vunpack.c.l.b16 %v1557
  %v1837 = vunpack.c.h.b16 %v1557
  %v1838 = vunpack.c.l.b16 %v1558
  %v1839 = vunpack.c.h.b16 %v1558
  %v1840 = vunpack.c.l.b16 %v1559
  %v1841 = vunpack.c.h.b16 %v1559
  %v1842 = vunpack.c.l.b16 %v1560
  %v1843 = vunpack.c.h.b16 %v1560
  %v1844 = vunpack.c.l.b16 %v1561
  %v1845 = vunpack.c.h.b16 %v1561
  %v1846 = vunpack.c.l.b16 %v1562
  %v1847 = vunpack.c.h.b16 %v1562
  %v1848 = vunpack.c.l.b16 %v1563
  %v1849 = vunpack.c.h.b16 %v1563
  %v1850 = vunpack.c.l.b16 %v1564
  %v1851 = vunpack.c.h.b16 %v1564
  %v1852 = vunpack.c.l.b16 %v1565
  %v1853 = vunpack.c.h.b16 %v1565
  %v1854 = vunpack.c.l.b16 %v1566
  %v1855 = vunpack.c.h.b16 %v1566
  %v1856 = vunpack.c.l.b16 %v1567
  %v1857 = vunpack.c.h.b16 %v1567
  %v1858 = vunpack.c.l.b16 %v1568
  %v1859 = vunpack.c.h.b16 %v1568
  %v1860 = vunpack.c.l.b16 %v1569
  %v1861 = vunpack.c.h.b16 %v1569
  %v1862 = vunpack.c.l.b16 %v1570
  %v1863 = vunpack.c.h.b16 %v1570
  %v1864 = vunpack.c.l.b16 %v1571
  %v1865 = vunpack.c.h.b16 %v1571
  %v1866 = vunpack.c.l.b16 %v1572
  %v1867 = vunpack.c.h.b16 %v1572
  %v1868 = vunpack.c.l.b16 %v1573
  %v1869 = vunpack.c.h.b16 %v1573
  %v1870 = vunpack.c.l.b16 %v1574
  %v1871 = vunpack.c.h.b16 %v1574
  %v1872 = vunpack.c.l.b16 %v1575
  %v1873 = vunpack.c.h.b16 %v1575
  %v1874 = vunpack.c.l.b16 %v1576
  %v1875 = vunpack.c.h.b16 %v1576
  %v1876 = vunpack.c.l.b16 %v1577
  %v1877 = vunpack.c.h.b16 %v1577
  %v1878 = vunpack.c.l.b16 %v1578
  %v1879 = vunpack.c.h.b16 %v1578
  %v1880 = vunpack.c.l.b16 %v1579
  %v1881 = vunpack.c.h.b16 %v1579
  %v1882 = vunpack.c.l.b16 %v1580
  %v1883 = vunpack.c.h.b16 %v1580
  %v1884 = vunpack.c.l.b16 %v1581
  %v1885 = vunpack.c.h.b16 %v1581
  %v1886 = vunpack.c.l.b16 %v1582
  %v1887 = vunpack.c.h.b16 %v1582
  %v1888 = vunpack.c.l.b16 %v1583
  %v1889 = vunpack.c.h.b16 %v1583
  %v1890 = vunpack.c.l.b16 %v1584
  %v1891 = vunpack.c.h.b16 %v1584
  %v1892 = vunpack.c.l.b16 %v1585
  %v1893 = vunpack.c.h.b16 %v1585
  %v1894 = vunpack.c.l.b16 %v1586
  %v1895 = vunpack.c.h.b16 %v1586
  %v1896 = vunpack.c.l.b16 %v1587
  %v1897 = vunpack.c.h.b16 %v1587
  %v1898 = vunpack.c.l.b16 %v1588
  %v1899 = vunpack.c.h.b16 %v1588
  %v1900 = vunpack.c.l.b16 %v1589
  %v1901 = vunpack.c.h.b16 %v1589
  %v1902 = vunpack.c.l.b16 %v1590
  %v1903 = vunpack.c.h.b16 %v1590
  %v1904 = vunpack.c.l.b16 %v1591
  %v1905 = vunpack.c.h.b16 %v1591
  %v1906 = vunpack.c.l.b16 %v1592
  %v1907 = vunpack.c.h.b16 %v1592
  %v1908 = vunpack.c.l.b16 %v1593
  %v1909 = vunpack.c.h.b16 %v1593
  %v1910 = vunpack.c.l.b16 %v1594
  %v1911 = vunpack.c.h.b16 %v1594
  %v1912 = vunpack.c.l.b16 %v1595
  %v1913 = vunpack.c.h.b16 %v1595
  %v1914 = vunpack.c.l.b16 %v1596
  %v1915 = vunpack.c.h.b16 %v1596
  %v1916 = vunpack.c.l.b16 %v1597
  %v1917 = vunpack.c.h.b16 %v1597
  %v1918 = vunpack.c.l.b16 %v1598
  %v1919 = vunpack.c.h.b16 %v1598
  %v1920 = vunpack.c.l.b16 %v1599
  %v1921 = vunpack.c.h.b16 %v1599
  %v1922 = vunpack.c.l.b16 %v1600
  %v1923 = vunpack.c.h.b16 %v1600
  %v1924 = vunpack.c.l.b16 %v1601
  %v1925 = vunpack.c.h.b16 %v1601
  %v1926 = vunpack.c.l.b16 %v1602
  %v1927 = vunpack.c.h.b16 %v1602
  %v1928 = vunpack.c.l.b16 %v1603
  %v1929 = vunpack.c.h.b16 %v1603
  %v1930 = vunpack.c.l.b16 %v1604
  %v1931 = vunpack.c.h.b16 %v1604
  %v1932 = vunpack.c.l.b16 %v1605
  %v1933 = vunpack.c.h.b16 %v1605
  %v1934 = vunpack.c.l.b16 %v1606
  %v1935 = vunpack.c.h.b16 %v1606
  %v1936 = vunpack.c.l.b16 %v1607
  %v1937 = vunpack.c.h.b16 %v1607
  %v1938 = vunpack.c.l.b16 %v1608
  %v1939 = vunpack.c.h.b16 %v1608
  %v1940 = vunpack.c.l.b16 %v1609
  %v1941 = vunpack.c.h.b16 %v1609
  %v1942 = vunpack.c.l.b16 %v1610
  %v1943 = vunpack.c.h.b16 %v1610
  %v1944 = vunpack.c.l.b16 %v1611
  %v1945 = vunpack.c.h.b16 %v1611
  %v1946 = vunpack.c.l.b16 %v1612
  %v1947 = vunpack.c.h.b16 %v1612
  %v1948 = vunpack.c.l.b16 %v1613
  %v1949 = vunpack.c.h.b16 %v1613
  %v1950 = vunpack.c.l.b16 %v1614
  %v1951 = vunpack.c.h.b16 %v1614
  %v1952 = vunpack.c.l.b16 %v1615
  %v1953 = vunpack.c.h.b16 %v1615
  %v1954 = vunpack.c.l.b16 %v1616
  %v1955 = vunpack.c.h.b16 %v1616
  %v1956 = vunpack.c.l.b16 %v1617
  %v1957 = vunpack.c.h.b16 %v1617
  %v1958 = vunpack.c.l.b16 %v1618
  %v1959 = vunpack.c.h.b16 %v1618
  %v1960 = vunpack.c.l.b16 %v1619
  %v1961 = vunpack.c.h.b16 %v1619
  %v1962 = vunpack.c.l.b16 %v1620
  %v1963 = vunpack.c.h.b16 %v1620
  %v1964 = vunpack.c.l.b16 %v1621
  %v1965 = vunpack.c.h.b16 %v1621
  %v1966 = vunpack.c.l.b16 %v1622
  %v1967 = vunpack.c.h.b16 %v1622
  %v1968 = vunpack.c.l.b16 %v1623
  %v1969 = vunpack.c.h.b16 %v1623
  %v1970 = vunpack.c.l.b16 %v1624
  %v1971 = vunpack.c.h.b16 %v1624
  %v1972 = vunpack.c.l.b16 %v1625
  %v1973 = vunpack.c.h.b16 %v1625
  %v1974 = vunpack.c.l.b16 %v1626
  %v1975 = vunpack.c.h.b16 %v1626
  %v1976 = vunpack.c.l.b16 %v1627
  %v1977 = vunpack.c.h.b16 %v1627
  %v1978 = vunpack.c.l.b16 %v1628
  %v1979 = vunpack.c.h.b16 %v1628
  %v1980 = vunpack.c.l.b16 %v1629
  %v1981 = vunpack.c.h.b16 %v1629
  %v1982 = vunpack.c.l.b16 %v1630
  %v1983 = vunpack.c.h.b16 %v1630
  %v1984 = vunpack.c.l.b16 %v1631
  %v1985 = vunpack.c.h.b16 %v1631
  %v1986 = vunpack.c.l.b16 %v1632
  %v1987 = vunpack.c.h.b16 %v1632
  %v1988 = vunpack.c.l.b16 %v1633
  %v1989 = vunpack.c.h.b16 %v1633
  %v1990 = vpack.c.b16 %v1804, %v1798
  %v1991 = vpack.c.b16 %v1805, %v1799
  %v1992 = vpack.c.b16 %v1806, %v1800
  %v1993 = vpack.c.b16 %v1807, %v1801
  %v1994 = vpack.c.b16 %v1808, %v1802
  %v1995 = vpack.c.b16 %v1809, %v1803
  %v1996 = vpack.c.b16 %v1816, %v1810
  %v1997 = vpack.c.b16 %v1817, %v1811
  %v1998 = vpack.c.b16 %v1818, %v1812
  %v1999 = vpack.c.b16 %v1819, %v1813
  %v2000 = vpack.c.b16 %v1820, %v1814
  %v2001 = vpack.c.b16 %v1821, %v1815
  %v2002 = vpack.c.b16 %v1828, %v1822
  %v2003 = vpack.c.b16 %v1829, %v1823
  %v2004 = vpack.c.b16 %v1830, %v1824
  %v2005 = vpack.c.b16 %v1831, %v1825
  %v2006 = vpack.c.b16 %v1832, %v1826
  %v2007 = vpack.c.b16 %v1833, %v1827
  %v2008 = vpack.c.b16 %v1840, %v1834
  %v2009 = vpack.c.b16 %v1841, %v1835
  %v2010 = vpack.c.b16 %v1842, %v1836
  %v2011 = vpack.c.b16 %v1843, %v1837
  %v2012 = vpack.c.b16 %v1844, %v1838
  %v2013 = vpack.c.b16 %v1845, %v1839
  %v2014 = vpack.c.b16 %v1852, %v1846
  %v2015 = vpack.c.b16 %v1853, %v1847
  %v2016 = vpack.c.b16 %v1854, %v1848
  %v2017 = vpack.c.b16 %v1855, %v1849
  %v2018 = vpack.c.b16 %v1856, %v1850
  %v2019 = vpack.c.b16 %v1857, %v1851
  %v2020 = vpack.c.b16 %v1864, %v1858
  %v2021 = vpack.c.b16 %v1865, %v1859
  %v2022 = vpack.c.b16 %v1866, %v1860
  %v2023 = vpack.c.b16 %v1867, %v1861
  %v2024 = vpack.c.b16 %v1868, %v1862
  %v2025 = vpack.c.b16 %v1869, %v1863
  %v2026 = vpack.c.b16 %v1876, %v1870
  %v2027 = vpack.c.b16 %v1877, %v1871
  %v2028 = vpack.c.b16 %v1878, %v1872
  %v2029 = vpack.c.b16 %v1879, %v1873
  %v2030 = vpack.c.b16 %v1880, %v1874
  %v2031 = vpack.c.b16 %v1881, %v1875
  %v2032 = vpack.c.b16 %v1888, %v1882
  %v2033 = vpack.c.b16 %v1889, %v1883
  %v2034 = vpack.c.b16 %v1890, %v1884
  %v2035 = vpack.c.b16 %v1891, %v1885
  %v2036 = vpack.c.b16 %v1892, %v1886
  %v2037 = vpack.c.b16 %v1893, %v1887
  %v2038 = vpack.c.b16 %v1900, %v1894
  %v2039 = vpack.c.b16 %v1901, %v1895
  %v2040 = vpack.c.b16 %v1902, %v1896
  %v2041 = vpack.c.b16 %v1903, %v1897
  %v2042 = vpack.c.b16 %v1904, %v1898
  %v2043 = vpack.c.b16 %v1905, %v1899
  %v2044 = vpack.c.b16 %v1912, %v1906
  %v2045 = vpack.c.b16 %v1913, %v1907
  %v2046 = vpack.c.b16 %v1914, %v1908
  %v2047 = vpack.c.b16 %v1915, %v1909
  %v2048 = vpack.c.b16 %v1916, %v1910
  %v2049 = vpack.c.b16 %v1917, %v1911
  %v2050 = vpack.c.b16 %v1924, %v1918
  %v2051 = vpack.c.b16 %v1925, %v1919
  %v2052 = vpack.c.b16 %v1926, %v1920
  %v2053 = vpack.c.b16 %v1927, %v1921
  %v2054 = vpack.c.b16 %v1928, %v1922
  %v2055 = vpack.c.b16 %v1929, %v1923
  %v2056 = vpack.c.b16 %v1936, %v1930
  %v2057 = vpack.c.b16 %v1937, %v1931
  %v2058 = vpack.c.b16 %v1938, %v1932
  %v2059 = vpack.c.b16 %v1939, %v1933
  %v2060 = vpack.c.b16 %v1940, %v1934
  %v2061 = vpack.c.b16 %v1941, %v1935
  %v2062 = vpack.c.b16 %v1948, %v1942
  %v2063 = vpack.c.b16 %v1949, %v1943
  %v2064 = vpack.c.b16 %v1950, %v1944
  %v2065 = vpack.c.b16 %v1951, %v1945
  %v2066 = vpack.c.b16 %v1952, %v1946
  %v2067 = vpack.c.b16 %v1953, %v1947
  %v2068 = vpack.c.b16 %v1960, %v1954
  %v2069 = vpack.c.b16 %v1961, %v1955
  %v2070 = vpack.c.b16 %v1962, %v1956
  %v2071 = vpack.c.b16 %v1963, %v1957
  %v2072 = vpack.c.b16 %v1964, %v1958
  %v2073 = vpack.c.b16 %v1965, %v1959
  %v2074 = vpack.c.b16 %v1972, %v1966
  %v2075 = vpack.c.b16 %v1973, %v1967
  %v2076 = vpack.c.b16 %v1974, %v1968
  %v2077 = vpack.c.b16 %v1975, %v1969
  %v2078 = vpack.c.b16 %v1976, %v1970
  %v2079 = vpack.c.b16 %v1977, %v1971
  %v2080 = vpack.c.b16 %v1984, %v1978
  %v2081 = vpack.c.b16 %v1985, %v1979
  %v2082 = vpack.c.b16 %v1986, %v1980
  %v2083 = vpack.c.b16 %v1987, %v1981
  %v2084 = vpack.c.b16 %v1988, %v1982
  %v2085 = vpack.c.b16 %v1989, %v1983
  %2182 = vmatprep.subr.bf16.mxu0 %v1991
  %2183 = vmatpush1.bf16.msra.mxu0 %v1990
  %2184 = vmatprep.subr.bf16.mxu0 %v1997
  %2185 = vmatpush1.bf16.msra.mxu0 %v1996
  %2186 = vmatprep.subr.bf16.mxu0 %v2003
  %2187 = vmatpush1.bf16.msra.mxu0 %v2002
  %2188 = vmatprep.subr.bf16.mxu0 %v2009
  %2189 = vmatpush1.bf16.msra.mxu0 %v2008
  %2190 = vmatprep.subr.bf16.mxu0 %v2015
  %2191 = vmatpush1.bf16.msra.mxu0 %v2014
  %2192 = vmatprep.subr.bf16.mxu0 %v2021
  %2193 = vmatpush1.bf16.msra.mxu0 %v2020
  %2194 = vmatprep.subr.bf16.mxu0 %v2027
  %2195 = vmatpush1.bf16.msra.mxu0 %v2026
  %2196 = vmatprep.subr.bf16.mxu0 %v2033
  %2197 = vmatpush1.bf16.msra.mxu0 %v2032
  %2198 = vmatprep.subr.bf16.mxu0 %v2039
  %2199 = vmatpush1.bf16.msra.mxu0 %v2038
  %2200 = vmatprep.subr.bf16.mxu0 %v2045
  %2201 = vmatpush1.bf16.msra.mxu0 %v2044
  %2202 = vmatprep.subr.bf16.mxu0 %v2051
  %2203 = vmatpush1.bf16.msra.mxu0 %v2050
  %2204 = vmatprep.subr.bf16.mxu0 %v2057
  %2205 = vmatpush1.bf16.msra.mxu0 %v2056
  %2206 = vmatprep.subr.bf16.mxu0 %v2063
  %2207 = vmatpush1.bf16.msra.mxu0 %v2062
  %2208 = vmatprep.subr.bf16.mxu0 %v2069
  %2209 = vmatpush1.bf16.msra.mxu0 %v2068
  %2210 = vmatprep.subr.bf16.mxu0 %v2075
  %2211 = vmatpush1.bf16.msra.mxu0 %v2074
  %2212 = vmatprep.subr.bf16.mxu0 %v2081
  %2213 = vmatpush1.bf16.msra.mxu0 %v2080
  %2214 = vmatprep.mubr.bf16.mxu0 %v1667
  %2215 = vmatmul.mubr.bf16.gmra.mrb[0].mxu0 %v1666
  %v2216 = vpop.f32.mrb[0].mxu0
  %v2217 = vadd.f32 %v1675, %v2216
  %v2218 = vpop.f32.mrb[0].mxu0
  %v2219 = vadd.f32 %v1679, %v2218
  %v2220 = vpop.f32.mrb[0].mxu0
  %v2221 = vadd.f32 %v1675, %v2220
  %v2222 = vpop.f32.mrb[0].mxu0
  %v2223 = vadd.f32 %v1679, %v2222
  %2224 = vmatprep.mubr.bf16.mxu0 %v1669
  %2225 = vmatmul.mubr.bf16.gmra.mrb[0].mxu0 %v1668
  %v2226 = vpop.f32.mrb[0].mxu0
  %v2227 = vadd.f32 %v1675, %v2226
  %v2228 = vpop.f32.mrb[0].mxu0
  %v2229 = vadd.f32 %v1679, %v2228
  %v2230 = vpop.f32.mrb[0].mxu0
  %v2231 = vadd.f32 %v1675, %v2230
  %v2232 = vpop.f32.mrb[0].mxu0
  %v2233 = vadd.f32 %v1679, %v2232
  %2234 = vdwg.mxu0
  %2235 = vmatprep.subr.bf16.mxu0 %v1993
  %2236 = vmatpush1.bf16.msra.mxu0 %v1992
  %2237 = vmatprep.subr.bf16.mxu0 %v1999
  %2238 = vmatpush1.bf16.msra.mxu0 %v1998
  %2239 = vmatprep.subr.bf16.mxu0 %v2005
  %2240 = vmatpush1.bf16.msra.mxu0 %v2004
  %2241 = vmatprep.subr.bf16.mxu0 %v2011
  %2242 = vmatpush1.bf16.msra.mxu0 %v2010
  %2243 = vmatprep.subr.bf16.mxu0 %v2017
  %2244 = vmatpush1.bf16.msra.mxu0 %v2016
  %2245 = vmatprep.subr.bf16.mxu0 %v2023
  %2246 = vmatpush1.bf16.msra.mxu0 %v2022
  %2247 = vmatprep.subr.bf16.mxu0 %v2029
  %2248 = vmatpush1.bf16.msra.mxu0 %v2028
  %2249 = vmatprep.subr.bf16.mxu0 %v2035
  %2250 = vmatpush1.bf16.msra.mxu0 %v2034
  %2251 = vmatprep.subr.bf16.mxu0 %v2041
  %2252 = vmatpush1.bf16.msra.mxu0 %v2040
  %2253 = vmatprep.subr.bf16.mxu0 %v2047
  %2254 = vmatpush1.bf16.msra.mxu0 %v2046
  %2255 = vmatprep.subr.bf16.mxu0 %v2053
  %2256 = vmatpush1.bf16.msra.mxu0 %v2052
  %2257 = vmatprep.subr.bf16.mxu0 %v2059
  %2258 = vmatpush1.bf16.msra.mxu0 %v2058
  %2259 = vmatprep.subr.bf16.mxu0 %v2065
  %2260 = vmatpush1.bf16.msra.mxu0 %v2064
  %2261 = vmatprep.subr.bf16.mxu0 %v2071
  %2262 = vmatpush1.bf16.msra.mxu0 %v2070
  %2263 = vmatprep.subr.bf16.mxu0 %v2077
  %2264 = vmatpush1.bf16.msra.mxu0 %v2076
  %2265 = vmatprep.subr.bf16.mxu0 %v2083
  %2266 = vmatpush1.bf16.msra.mxu0 %v2082
  %2267 = vmatprep.mubr.bf16.mxu0 %v1667
  %2268 = vmatmul.mubr.bf16.gmra.mrb[0].mxu0 %v1666
  %v2269 = vpop.f32.mrb[0].mxu0
  %v2270 = vadd.f32 %v1683, %v2269
  %v2271 = vpop.f32.mrb[0].mxu0
  %v2272 = vadd.f32 %v1687, %v2271
  %v2273 = vpop.f32.mrb[0].mxu0
  %v2274 = vadd.f32 %v1683, %v2273
  %v2275 = vpop.f32.mrb[0].mxu0
  %v2276 = vadd.f32 %v1687, %v2275
  %2277 = vmatprep.mubr.bf16.mxu0 %v1669
  %2278 = vmatmul.mubr.bf16.gmra.mrb[0].mxu0 %v1668
  %v2279 = vpop.f32.mrb[0].mxu0
  %v2280 = vadd.f32 %v1683, %v2279
  %v2281 = vpop.f32.mrb[0].mxu0
  %v2282 = vadd.f32 %v1687, %v2281
  %v2283 = vpop.f32.mrb[0].mxu0
  %v2284 = vadd.f32 %v1683, %v2283
  %v2285 = vpop.f32.mrb[0].mxu0
  %v2286 = vadd.f32 %v1687, %v2285
  %2287 = vdwg.mxu0
  %2288 = vmatprep.subr.bf16.mxu0 %v1995
  %2289 = vmatpush1.bf16.msra.mxu0 %v1994
  %2290 = vmatprep.subr.bf16.mxu0 %v2001
  %2291 = vmatpush1.bf16.msra.mxu0 %v2000
  %2292 = vmatprep.subr.bf16.mxu0 %v2007
  %2293 = vmatpush1.bf16.msra.mxu0 %v2006
  %2294 = vmatprep.subr.bf16.mxu0 %v2013
  %2295 = vmatpush1.bf16.msra.mxu0 %v2012
  %2296 = vmatprep.subr.bf16.mxu0 %v2019
  %2297 = vmatpush1.bf16.msra.mxu0 %v2018
  %2298 = vmatprep.subr.bf16.mxu0 %v2025
  %2299 = vmatpush1.bf16.msra.mxu0 %v2024
  %2300 = vmatprep.subr.bf16.mxu0 %v2031
  %2301 = vmatpush1.bf16.msra.mxu0 %v2030
  %2302 = vmatprep.subr.bf16.mxu0 %v2037
  %2303 = vmatpush1.bf16.msra.mxu0 %v2036
  %2304 = vmatprep.subr.bf16.mxu0 %v2043
  %2305 = vmatpush1.bf16.msra.mxu0 %v2042
  %2306 = vmatprep.subr.bf16.mxu0 %v2049
  %2307 = vmatpush1.bf16.msra.mxu0 %v2048
  %2308 = vmatprep.subr.bf16.mxu0 %v2055
  %2309 = vmatpush1.bf16.msra.mxu0 %v2054
  %2310 = vmatprep.subr.bf16.mxu0 %v2061
  %2311 = vmatpush1.bf16.msra.mxu0 %v2060
  %2312 = vmatprep.subr.bf16.mxu0 %v2067
  %2313 = vmatpush1.bf16.msra.mxu0 %v2066
  %2314 = vmatprep.subr.bf16.mxu0 %v2073
  %2315 = vmatpush1.bf16.msra.mxu0 %v2072
  %2316 = vmatprep.subr.bf16.mxu0 %v2079
  %2317 = vmatpush1.bf16.msra.mxu0 %v2078
  %2318 = vmatprep.subr.bf16.mxu0 %v2085
  %2319 = vmatpush1.bf16.msra.mxu0 %v2084
  %2320 = vmatprep.mubr.bf16.mxu0 %v1667
  %2321 = vmatmul.mubr.bf16.gmra.mrb[0].mxu0 %v1666
  %v2322 = vpop.f32.mrb[0].mxu0
  %v2323 = vadd.f32 %v1691, %v2322
  %v2324 = vpop.f32.mrb[0].mxu0
  %v2325 = vadd.f32 %v1695, %v2324
  %v2326 = vpop.f32.mrb[0].mxu0
  %v2327 = vadd.f32 %v1691, %v2326
  %v2328 = vpop.f32.mrb[0].mxu0
  %v2329 = vadd.f32 %v1695, %v2328
  %2330 = vmatprep.mubr.bf16.mxu0 %v1669
  %2331 = vmatmul.mubr.bf16.gmra.mrb[0].mxu0 %v1668
  %v2332 = vpop.f32.mrb[0].mxu0
  %v2333 = vadd.f32 %v1691, %v2332
  %v2334 = vpop.f32.mrb[0].mxu0
  %v2335 = vadd.f32 %v1695, %v2334
  %v2336 = vpop.f32.mrb[0].mxu0
  %v2337 = vadd.f32 %v1691, %v2336
  %v2338 = vpop.f32.mrb[0].mxu0
  %v2339 = vadd.f32 %v1695, %v2338
  %2340 = vdwg.mxu0
  %v2341 = vpack.c.bf16 %v2221, %v2217
  %v2342 = vpack.c.bf16 %v2223, %v2219
  %v2343 = vpack.c.bf16 %v2231, %v2227
  %v2344 = vpack.c.bf16 %v2233, %v2229
  %v2345 = vpack.c.bf16 %v2274, %v2270
  %v2346 = vpack.c.bf16 %v2276, %v2272
  %v2347 = vpack.c.bf16 %v2284, %v2280
  %v2348 = vpack.c.bf16 %v2286, %v2282
  %v2349 = vpack.c.bf16 %v2327, %v2323
  %v2350 = vpack.c.bf16 %v2329, %v2325
  %v2351 = vpack.c.bf16 %v2337, %v2333
  %v2352 = vpack.c.bf16 %v2339, %v2335
  %vm2353 = vcmask 523264
  %v2355 = vsel %vm2353, %v2341, 0
  %v2358 = vsel %vm2353, %v2345, 0
  %2360 = vmatprep.subr.bf16.mxu0 0
  %2361 = vmatpush1.bf16.xpose.msra.mxu0 %v2358
  %2362 = vmatprep.subr.bf16.mxu0 0
  %2363 = vmatpush1.bf16.xpose.msra.mxu0 0
  %2364 = vmatprep.subr.bf16.mxu0 0
  %2365 = vmatpush1.bf16.xpose.msra.mxu0 0
  %2366 = vmatprep.subr.bf16.mxu0 0
  %2367 = vmatpush1.bf16.xpose.msra.mxu0 0
  %2368 = vmatprep.subr.bf16.mxu0 0
  %2369 = vmatpush1.bf16.xpose.msra.mxu0 0
  %2370 = vmatprep.subr.bf16.mxu0 0
  %2371 = vmatpush1.bf16.xpose.msra.mxu0 0
  %2372 = vmatprep.subr.bf16.mxu0 0
  %2373 = vmatpush1.bf16.xpose.msra.mxu0 0
  %2374 = vmatprep.subr.bf16.mxu0 0
  %2375 = vmatpush1.bf16.xpose.msra.mxu0 0
  %2376 = vmatprep.subr.bf16.mxu0 0
  %2377 = vmatpush1.bf16.xpose.msra.mxu0 0
  %2378 = vmatprep.subr.bf16.mxu0 0
  %2379 = vmatpush1.bf16.xpose.msra.mxu0 0
  %2380 = vmatprep.subr.bf16.mxu0 0
  %2381 = vmatpush1.bf16.xpose.msra.mxu0 0
  %2382 = vmatprep.subr.bf16.mxu0 0
  %2383 = vmatpush1.bf16.xpose.msra.mxu0 0
  %2384 = vmatprep.subr.bf16.mxu0 0
  %2385 = vmatpush1.bf16.xpose.msra.mxu0 0
  %2386 = vmatprep.subr.bf16.mxu0 0
  %2387 = vmatpush1.bf16.xpose.msra.mxu0 0
  %2388 = vmatprep.subr.bf16.mxu0 0
  %2389 = vmatpush1.bf16.xpose.msra.mxu0 0
  %2390 = vmatprep.subr.bf16.mxu0 0
  %2391 = vmatpush1.bf16.xpose.msra.mxu0 0
  %2392 = vmatprep.mubr.bf16.mxu0 0
  %2393 = vmatmul.mubr.bf16.gmra.mrb[0].mxu0 %v2355
  %v2394 = vpop.f32.mrb[0].mxu0
  %v2395 = vadd.f32 0.0, %v2394
  %v2396 = vpop.f32.mrb[0].mxu0
  %v2397 = vpop.f32.mrb[0].mxu0
  %v2398 = vadd.f32 0.0, %v2397
  %v2399 = vpop.f32.mrb[0].mxu0
  %2400 = vdwg.mxu0
  %v2401 = vmul.f32 %v2395, 0.125
  %v2402 = vmul.f32 %v2398, 0.125
  %vm2403 = vcmask 130048
  %v2404 = vsel %vm2403, %v2401, -inf
  %2405 = vmax.xlane.f32.xlu0 %v2404
  %v2406 = vpop.xlane.xlu0 %2405
  %v2407 = vsel %vm2403, %v2402, -inf
  %2408 = vmax.xlane.f32.xlu0 %v2407
  %v2409 = vpop.xlane.xlu0 %2408
  %v2410 = vsub.f32 %v2401, %v2406
  %v2411 = vsub.f32 %v2402, %v2409
  %v2412 = vmul.f32 %v2410, 1.442695
  %v2413 = vpow.pop %v2412
  %v2414 = vmul.f32 %v2411, 1.442695
  %v2415 = vpow.pop %v2414
  %v2416 = vsel %vm2403, %v2413, 0.0
  %2417 = vadd.xlane.f32.xlu0 %v2416
  %v2418 = vpop.xlane.xlu0 %2417
  %v2419 = vsel %vm2403, %v2415, 0.0
  %2420 = vadd.xlane.f32.xlu0 %v2419
  %v2421 = vpop.xlane.xlu0 %2420
  %v2422 = vrcp.pop %v2418
  %v2423 = vrcp.pop %v2421
  %v2424 = vmul.f32 %v2413, %v2422
  %v2425 = vmul.f32 %v2415, %v2423
  %v2426 = vpack.c.bf16 %v2425, %v2424
  %v2428 = vsel %vm2403, %v2426, 0
  %2430 = vmatprep.subr.bf16.mxu0 0
  %2431 = vmatpush1.bf16.msra.mxu0 %v2349
  %2432 = vmatprep.subr.bf16.mxu0 0
  %2433 = vmatpush1.bf16.msra.mxu0 0
  %2434 = vmatprep.subr.bf16.mxu0 0
  %2435 = vmatpush1.bf16.msra.mxu0 0
  %2436 = vmatprep.subr.bf16.mxu0 0
  %2437 = vmatpush1.bf16.msra.mxu0 0
  %2438 = vmatprep.subr.bf16.mxu0 0
  %2439 = vmatpush1.bf16.msra.mxu0 0
  %2440 = vmatprep.subr.bf16.mxu0 0
  %2441 = vmatpush1.bf16.msra.mxu0 0
  %2442 = vmatprep.subr.bf16.mxu0 0
  %2443 = vmatpush1.bf16.msra.mxu0 0
  %2444 = vmatprep.subr.bf16.mxu0 0
  %2445 = vmatpush1.bf16.msra.mxu0 0
  %2446 = vmatprep.subr.bf16.mxu0 0
  %2447 = vmatpush1.bf16.msra.mxu0 0
  %2448 = vmatprep.subr.bf16.mxu0 0
  %2449 = vmatpush1.bf16.msra.mxu0 0
  %2450 = vmatprep.subr.bf16.mxu0 0
  %2451 = vmatpush1.bf16.msra.mxu0 0
  %2452 = vmatprep.subr.bf16.mxu0 0
  %2453 = vmatpush1.bf16.msra.mxu0 0
  %2454 = vmatprep.subr.bf16.mxu0 0
  %2455 = vmatpush1.bf16.msra.mxu0 0
  %2456 = vmatprep.subr.bf16.mxu0 0
  %2457 = vmatpush1.bf16.msra.mxu0 0
  %2458 = vmatprep.subr.bf16.mxu0 0
  %2459 = vmatpush1.bf16.msra.mxu0 0
  %2460 = vmatprep.subr.bf16.mxu0 0
  %2461 = vmatpush1.bf16.msra.mxu0 0
  %2462 = vmatprep.mubr.bf16.mxu0 0
  %2463 = vmatmul.mubr.bf16.gmra.mrb[0].mxu0 %v2428
  %v2464 = vpop.f32.mrb[0].mxu0
  %v2465 = vadd.f32 0.0, %v2464
  %v2466 = vpop.f32.mrb[0].mxu0
  %v2467 = vpop.f32.mrb[0].mxu0
  %v2468 = vadd.f32 0.0, %v2467
  %v2469 = vpop.f32.mrb[0].mxu0
  %2470 = vdwg.mxu0
  %v2471 = vpack.c.bf16 %v2468, %v2465
  %2473 = vrot.lane.b32.xlu0 %v2341, 64
  %v2474 = vpop.permute.xlu0 %2473
  %2476 = vrot.lane.b32.xlu0 %v2345, 64
  %v2477 = vpop.permute.xlu0 %2476
  %v2479 = vsel %vm2353, %v2474, 0
  %v2482 = vsel %vm2353, %v2477, 0
  %2484 = vmatprep.subr.bf16.mxu0 0
  %2485 = vmatpush1.bf16.xpose.msra.mxu0 %v2482
  %2486 = vmatprep.subr.bf16.mxu0 0
  %2487 = vmatpush1.bf16.xpose.msra.mxu0 0
  %2488 = vmatprep.subr.bf16.mxu0 0
  %2489 = vmatpush1.bf16.xpose.msra.mxu0 0
  %2490 = vmatprep.subr.bf16.mxu0 0
  %2491 = vmatpush1.bf16.xpose.msra.mxu0 0
  %2492 = vmatprep.subr.bf16.mxu0 0
  %2493 = vmatpush1.bf16.xpose.msra.mxu0 0
  %2494 = vmatprep.subr.bf16.mxu0 0
  %2495 = vmatpush1.bf16.xpose.msra.mxu0 0
  %2496 = vmatprep.subr.bf16.mxu0 0
  %2497 = vmatpush1.bf16.xpose.msra.mxu0 0
  %2498 = vmatprep.subr.bf16.mxu0 0
  %2499 = vmatpush1.bf16.xpose.msra.mxu0 0
  %2500 = vmatprep.subr.bf16.mxu0 0
  %2501 = vmatpush1.bf16.xpose.msra.mxu0 0
  %2502 = vmatprep.subr.bf16.mxu0 0
  %2503 = vmatpush1.bf16.xpose.msra.mxu0 0
  %2504 = vmatprep.subr.bf16.mxu0 0
  %2505 = vmatpush1.bf16.xpose.msra.mxu0 0
  %2506 = vmatprep.subr.bf16.mxu0 0
  %2507 = vmatpush1.bf16.xpose.msra.mxu0 0
  %2508 = vmatprep.subr.bf16.mxu0 0
  %2509 = vmatpush1.bf16.xpose.msra.mxu0 0
  %2510 = vmatprep.subr.bf16.mxu0 0
  %2511 = vmatpush1.bf16.xpose.msra.mxu0 0
  %2512 = vmatprep.subr.bf16.mxu0 0
  %2513 = vmatpush1.bf16.xpose.msra.mxu0 0
  %2514 = vmatprep.subr.bf16.mxu0 0
  %2515 = vmatpush1.bf16.xpose.msra.mxu0 0
  %2516 = vmatprep.mubr.bf16.mxu0 0
  %2517 = vmatmul.mubr.bf16.gmra.mrb[0].mxu0 %v2479
  %v2518 = vpop.f32.mrb[0].mxu0
  %v2519 = vadd.f32 0.0, %v2518
  %v2520 = vpop.f32.mrb[0].mxu0
  %v2521 = vpop.f32.mrb[0].mxu0
  %v2522 = vadd.f32 0.0, %v2521
  %v2523 = vpop.f32.mrb[0].mxu0
  %2524 = vdwg.mxu0
  %v2525 = vmul.f32 %v2519, 0.125
  %v2526 = vmul.f32 %v2522, 0.125
  %v2527 = vsel %vm2403, %v2525, -inf
  %2528 = vmax.xlane.f32.xlu0 %v2527
  %v2529 = vpop.xlane.xlu0 %2528
  %v2530 = vsel %vm2403, %v2526, -inf
  %2531 = vmax.xlane.f32.xlu0 %v2530
  %v2532 = vpop.xlane.xlu0 %2531
  %v2533 = vsub.f32 %v2525, %v2529
  %v2534 = vsub.f32 %v2526, %v2532
  %v2535 = vmul.f32 %v2533, 1.442695
  %v2536 = vpow.pop %v2535
  %v2537 = vmul.f32 %v2534, 1.442695
  %v2538 = vpow.pop %v2537
  %v2539 = vsel %vm2403, %v2536, 0.0
  %2540 = vadd.xlane.f32.xlu0 %v2539
  %v2541 = vpop.xlane.xlu0 %2540
  %v2542 = vsel %vm2403, %v2538, 0.0
  %2543 = vadd.xlane.f32.xlu0 %v2542
  %v2544 = vpop.xlane.xlu0 %2543
  %v2545 = vrcp.pop %v2541
  %v2546 = vrcp.pop %v2544
  %v2547 = vmul.f32 %v2536, %v2545
  %v2548 = vmul.f32 %v2538, %v2546
  %v2549 = vpack.c.bf16 %v2548, %v2547
  %2551 = vrot.lane.b32.xlu0 %v2349, 64
  %v2552 = vpop.permute.xlu0 %2551
  %v2555 = vsel %vm2403, %v2549, 0
  %2557 = vmatprep.subr.bf16.mxu0 0
  %2558 = vmatpush1.bf16.msra.mxu0 %v2552
  %2559 = vmatprep.subr.bf16.mxu0 0
  %2560 = vmatpush1.bf16.msra.mxu0 0
  %2561 = vmatprep.subr.bf16.mxu0 0
  %2562 = vmatpush1.bf16.msra.mxu0 0
  %2563 = vmatprep.subr.bf16.mxu0 0
  %2564 = vmatpush1.bf16.msra.mxu0 0
  %2565 = vmatprep.subr.bf16.mxu0 0
  %2566 = vmatpush1.bf16.msra.mxu0 0
  %2567 = vmatprep.subr.bf16.mxu0 0
  %2568 = vmatpush1.bf16.msra.mxu0 0
  %2569 = vmatprep.subr.bf16.mxu0 0
  %2570 = vmatpush1.bf16.msra.mxu0 0
  %2571 = vmatprep.subr.bf16.mxu0 0
  %2572 = vmatpush1.bf16.msra.mxu0 0
  %2573 = vmatprep.subr.bf16.mxu0 0
  %2574 = vmatpush1.bf16.msra.mxu0 0
  %2575 = vmatprep.subr.bf16.mxu0 0
  %2576 = vmatpush1.bf16.msra.mxu0 0
  %2577 = vmatprep.subr.bf16.mxu0 0
  %2578 = vmatpush1.bf16.msra.mxu0 0
  %2579 = vmatprep.subr.bf16.mxu0 0
  %2580 = vmatpush1.bf16.msra.mxu0 0
  %2581 = vmatprep.subr.bf16.mxu0 0
  %2582 = vmatpush1.bf16.msra.mxu0 0
  %2583 = vmatprep.subr.bf16.mxu0 0
  %2584 = vmatpush1.bf16.msra.mxu0 0
  %2585 = vmatprep.subr.bf16.mxu0 0
  %2586 = vmatpush1.bf16.msra.mxu0 0
  %2587 = vmatprep.subr.bf16.mxu0 0
  %2588 = vmatpush1.bf16.msra.mxu0 0
  %2589 = vmatprep.mubr.bf16.mxu0 0
  %2590 = vmatmul.mubr.bf16.gmra.mrb[0].mxu0 %v2555
  %v2591 = vpop.f32.mrb[0].mxu0
  %v2592 = vadd.f32 0.0, %v2591
  %v2593 = vpop.f32.mrb[0].mxu0
  %v2594 = vpop.f32.mrb[0].mxu0
  %v2595 = vadd.f32 0.0, %v2594
  %v2596 = vpop.f32.mrb[0].mxu0
  %2597 = vdwg.mxu0
  %v2598 = vpack.c.bf16 %v2595, %v2592
  %v2607 = vunpack.c.l.b16 %v1642
  %v2608 = vunpack.c.h.b16 %v1642
  %v2609 = vunpack.c.l.b16 %v1643
  %v2610 = vunpack.c.h.b16 %v1643
  %v2611 = vunpack.c.l.b16 %v1644
  %v2612 = vunpack.c.h.b16 %v1644
  %v2613 = vunpack.c.l.b16 %v1645
  %v2614 = vunpack.c.h.b16 %v1645
  %v2615 = vunpack.c.l.b16 %v1646
  %v2616 = vunpack.c.h.b16 %v1646
  %v2617 = vunpack.c.l.b16 %v1647
  %v2618 = vunpack.c.h.b16 %v1647
  %v2619 = vunpack.c.l.b16 %v1648
  %v2620 = vunpack.c.h.b16 %v1648
  %v2621 = vunpack.c.l.b16 %v1649
  %v2622 = vunpack.c.h.b16 %v1649
  %v2623 = vpack.c.b16 %v2609, %v2607
  %v2624 = vpack.c.b16 %v2610, %v2608
  %v2625 = vpack.c.b16 %v2613, %v2611
  %v2626 = vpack.c.b16 %v2614, %v2612
  %v2627 = vpack.c.b16 %v2617, %v2615
  %v2628 = vpack.c.b16 %v2618, %v2616
  %v2629 = vpack.c.b16 %v2621, %v2619
  %v2630 = vpack.c.b16 %v2622, %v2620
  %v2640 = vsel %vm2353, %v2598, 0
  %2642 = vmatprep.subr.bf16.mxu0 %v2624
  %2643 = vmatpush1.bf16.msra.mxu0 %v2623
  %2644 = vmatprep.subr.bf16.mxu0 %v2626
  %2645 = vmatpush1.bf16.msra.mxu0 %v2625
  %2646 = vmatprep.subr.bf16.mxu0 %v2628
  %2647 = vmatpush1.bf16.msra.mxu0 %v2627
  %2648 = vmatprep.subr.bf16.mxu0 %v2630
  %2649 = vmatpush1.bf16.msra.mxu0 %v2629
  %2650 = vmatprep.subr.bf16.mxu0 0
  %2651 = vmatpush1.bf16.msra.mxu0 0
  %2652 = vmatprep.subr.bf16.mxu0 0
  %2653 = vmatpush1.bf16.msra.mxu0 0
  %2654 = vmatprep.subr.bf16.mxu0 0
  %2655 = vmatpush1.bf16.msra.mxu0 0
  %2656 = vmatprep.subr.bf16.mxu0 0
  %2657 = vmatpush1.bf16.msra.mxu0 0
  %2658 = vmatprep.subr.bf16.mxu0 0
  %2659 = vmatpush1.bf16.msra.mxu0 0
  %2660 = vmatprep.subr.bf16.mxu0 0
  %2661 = vmatpush1.bf16.msra.mxu0 0
  %2662 = vmatprep.subr.bf16.mxu0 0
  %2663 = vmatpush1.bf16.msra.mxu0 0
  %2664 = vmatprep.subr.bf16.mxu0 0
  %2665 = vmatpush1.bf16.msra.mxu0 0
  %2666 = vmatprep.subr.bf16.mxu0 0
  %2667 = vmatpush1.bf16.msra.mxu0 0
  %2668 = vmatprep.subr.bf16.mxu0 0
  %2669 = vmatpush1.bf16.msra.mxu0 0
  %2670 = vmatprep.subr.bf16.mxu0 0
  %2671 = vmatpush1.bf16.msra.mxu0 0
  %2672 = vmatprep.subr.bf16.mxu0 0
  %2673 = vmatpush1.bf16.msra.mxu0 0
  %2674 = vmatprep.mubr.bf16.mxu0 0
  %2675 = vmatmul.mubr.bf16.gmra.mrb[0].mxu0 %v2640
  %v2676 = vpop.f32.mrb[0].mxu0
  %v2677 = vadd.f32 0.0, %v2676
  %v2678 = vpop.f32.mrb[0].mxu0
  %v2679 = vadd.f32 0.0, %v2678
  %v2680 = vpop.f32.mrb[0].mxu0
  %v2681 = vadd.f32 0.0, %v2680
  %v2682 = vpop.f32.mrb[0].mxu0
  %v2683 = vadd.f32 0.0, %v2682
  %2684 = vdwg.mxu0
  %v2693 = vunpack.c.l.b16 %v1634
  %v2694 = vunpack.c.h.b16 %v1634
  %v2695 = vunpack.c.l.b16 %v1635
  %v2696 = vunpack.c.h.b16 %v1635
  %v2697 = vunpack.c.l.b16 %v1636
  %v2698 = vunpack.c.h.b16 %v1636
  %v2699 = vunpack.c.l.b16 %v1637
  %v2700 = vunpack.c.h.b16 %v1637
  %v2701 = vunpack.c.l.b16 %v1638
  %v2702 = vunpack.c.h.b16 %v1638
  %v2703 = vunpack.c.l.b16 %v1639
  %v2704 = vunpack.c.h.b16 %v1639
  %v2705 = vunpack.c.l.b16 %v1640
  %v2706 = vunpack.c.h.b16 %v1640
  %v2707 = vunpack.c.l.b16 %v1641
  %v2708 = vunpack.c.h.b16 %v1641
  %v2709 = vpack.c.b16 %v2695, %v2693
  %v2710 = vpack.c.b16 %v2696, %v2694
  %v2711 = vpack.c.b16 %v2699, %v2697
  %v2712 = vpack.c.b16 %v2700, %v2698
  %v2713 = vpack.c.b16 %v2703, %v2701
  %v2714 = vpack.c.b16 %v2704, %v2702
  %v2715 = vpack.c.b16 %v2707, %v2705
  %v2716 = vpack.c.b16 %v2708, %v2706
  %v2726 = vsel %vm2353, %v2471, 0
  %2728 = vmatprep.subr.bf16.mxu0 %v2710
  %2729 = vmatpush1.bf16.msra.mxu0 %v2709
  %2730 = vmatprep.subr.bf16.mxu0 %v2712
  %2731 = vmatpush1.bf16.msra.mxu0 %v2711
  %2732 = vmatprep.subr.bf16.mxu0 %v2714
  %2733 = vmatpush1.bf16.msra.mxu0 %v2713
  %2734 = vmatprep.subr.bf16.mxu0 %v2716
  %2735 = vmatpush1.bf16.msra.mxu0 %v2715
  %2736 = vmatprep.subr.bf16.mxu0 0
  %2737 = vmatpush1.bf16.msra.mxu0 0
  %2738 = vmatprep.subr.bf16.mxu0 0
  %2739 = vmatpush1.bf16.msra.mxu0 0
  %2740 = vmatprep.subr.bf16.mxu0 0
  %2741 = vmatpush1.bf16.msra.mxu0 0
  %2742 = vmatprep.subr.bf16.mxu0 0
  %2743 = vmatpush1.bf16.msra.mxu0 0
  %2744 = vmatprep.subr.bf16.mxu0 0
  %2745 = vmatpush1.bf16.msra.mxu0 0
  %2746 = vmatprep.subr.bf16.mxu0 0
  %2747 = vmatpush1.bf16.msra.mxu0 0
  %2748 = vmatprep.subr.bf16.mxu0 0
  %2749 = vmatpush1.bf16.msra.mxu0 0
  %2750 = vmatprep.subr.bf16.mxu0 0
  %2751 = vmatpush1.bf16.msra.mxu0 0
  %2752 = vmatprep.subr.bf16.mxu0 0
  %2753 = vmatpush1.bf16.msra.mxu0 0
  %2754 = vmatprep.subr.bf16.mxu0 0
  %2755 = vmatpush1.bf16.msra.mxu0 0
  %2756 = vmatprep.subr.bf16.mxu0 0
  %2757 = vmatpush1.bf16.msra.mxu0 0
  %2758 = vmatprep.subr.bf16.mxu0 0
  %2759 = vmatpush1.bf16.msra.mxu0 0
  %2760 = vmatprep.mubr.bf16.mxu0 0
  %2761 = vmatmul.mubr.bf16.gmra.mrb[0].mxu0 %v2726
  %v2762 = vpop.f32.mrb[0].mxu0
  %v2763 = vadd.f32 %v2677, %v2762
  %v2764 = vpop.f32.mrb[0].mxu0
  %v2765 = vadd.f32 %v2679, %v2764
  %v2766 = vpop.f32.mrb[0].mxu0
  %v2767 = vadd.f32 %v2681, %v2766
  %v2768 = vpop.f32.mrb[0].mxu0
  %v2769 = vadd.f32 %v2683, %v2768
  %2770 = vdwg.mxu0
  %v2772 = vsel %vm2353, %v2342, 0
  %v2775 = vsel %vm2353, %v2346, 0
  %2777 = vmatprep.subr.bf16.mxu0 0
  %2778 = vmatpush1.bf16.xpose.msra.mxu0 %v2775
  %2779 = vmatprep.subr.bf16.mxu0 0
  %2780 = vmatpush1.bf16.xpose.msra.mxu0 0
  %2781 = vmatprep.subr.bf16.mxu0 0
  %2782 = vmatpush1.bf16.xpose.msra.mxu0 0
  %2783 = vmatprep.subr.bf16.mxu0 0
  %2784 = vmatpush1.bf16.xpose.msra.mxu0 0
  %2785 = vmatprep.subr.bf16.mxu0 0
  %2786 = vmatpush1.bf16.xpose.msra.mxu0 0
  %2787 = vmatprep.subr.bf16.mxu0 0
  %2788 = vmatpush1.bf16.xpose.msra.mxu0 0
  %2789 = vmatprep.subr.bf16.mxu0 0
  %2790 = vmatpush1.bf16.xpose.msra.mxu0 0
  %2791 = vmatprep.subr.bf16.mxu0 0
  %2792 = vmatpush1.bf16.xpose.msra.mxu0 0
  %2793 = vmatprep.subr.bf16.mxu0 0
  %2794 = vmatpush1.bf16.xpose.msra.mxu0 0
  %2795 = vmatprep.subr.bf16.mxu0 0
  %2796 = vmatpush1.bf16.xpose.msra.mxu0 0
  %2797 = vmatprep.subr.bf16.mxu0 0
  %2798 = vmatpush1.bf16.xpose.msra.mxu0 0
  %2799 = vmatprep.subr.bf16.mxu0 0
  %2800 = vmatpush1.bf16.xpose.msra.mxu0 0
  %2801 = vmatprep.subr.bf16.mxu0 0
  %2802 = vmatpush1.bf16.xpose.msra.mxu0 0
  %2803 = vmatprep.subr.bf16.mxu0 0
  %2804 = vmatpush1.bf16.xpose.msra.mxu0 0
  %2805 = vmatprep.subr.bf16.mxu0 0
  %2806 = vmatpush1.bf16.xpose.msra.mxu0 0
  %2807 = vmatprep.subr.bf16.mxu0 0
  %2808 = vmatpush1.bf16.xpose.msra.mxu0 0
  %2809 = vmatprep.mubr.bf16.mxu0 0
  %2810 = vmatmul.mubr.bf16.gmra.mrb[0].mxu0 %v2772
  %v2811 = vpop.f32.mrb[0].mxu0
  %v2812 = vadd.f32 0.0, %v2811
  %v2813 = vpop.f32.mrb[0].mxu0
  %v2814 = vpop.f32.mrb[0].mxu0
  %v2815 = vadd.f32 0.0, %v2814
  %v2816 = vpop.f32.mrb[0].mxu0
  %2817 = vdwg.mxu0
  %v2818 = vmul.f32 %v2812, 0.125
  %v2819 = vmul.f32 %v2815, 0.125
  %v2820 = vsel %vm2403, %v2818, -inf
  %2821 = vmax.xlane.f32.xlu0 %v2820
  %v2822 = vpop.xlane.xlu0 %2821
  %v2823 = vsel %vm2403, %v2819, -inf
  %2824 = vmax.xlane.f32.xlu0 %v2823
  %v2825 = vpop.xlane.xlu0 %2824
  %v2826 = vsub.f32 %v2818, %v2822
  %v2827 = vsub.f32 %v2819, %v2825
  %v2828 = vmul.f32 %v2826, 1.442695
  %v2829 = vpow.pop %v2828
  %v2830 = vmul.f32 %v2827, 1.442695
  %v2831 = vpow.pop %v2830
  %v2832 = vsel %vm2403, %v2829, 0.0
  %2833 = vadd.xlane.f32.xlu0 %v2832
  %v2834 = vpop.xlane.xlu0 %2833
  %v2835 = vsel %vm2403, %v2831, 0.0
  %2836 = vadd.xlane.f32.xlu0 %v2835
  %v2837 = vpop.xlane.xlu0 %2836
  %v2838 = vrcp.pop %v2834
  %v2839 = vrcp.pop %v2837
  %v2840 = vmul.f32 %v2829, %v2838
  %v2841 = vmul.f32 %v2831, %v2839
  %v2842 = vpack.c.bf16 %v2841, %v2840
  %v2844 = vsel %vm2403, %v2842, 0
  %2846 = vmatprep.subr.bf16.mxu0 0
  %2847 = vmatpush1.bf16.msra.mxu0 %v2350
  %2848 = vmatprep.subr.bf16.mxu0 0
  %2849 = vmatpush1.bf16.msra.mxu0 0
  %2850 = vmatprep.subr.bf16.mxu0 0
  %2851 = vmatpush1.bf16.msra.mxu0 0
  %2852 = vmatprep.subr.bf16.mxu0 0
  %2853 = vmatpush1.bf16.msra.mxu0 0
  %2854 = vmatprep.subr.bf16.mxu0 0
  %2855 = vmatpush1.bf16.msra.mxu0 0
  %2856 = vmatprep.subr.bf16.mxu0 0
  %2857 = vmatpush1.bf16.msra.mxu0 0
  %2858 = vmatprep.subr.bf16.mxu0 0
  %2859 = vmatpush1.bf16.msra.mxu0 0
  %2860 = vmatprep.subr.bf16.mxu0 0
  %2861 = vmatpush1.bf16.msra.mxu0 0
  %2862 = vmatprep.subr.bf16.mxu0 0
  %2863 = vmatpush1.bf16.msra.mxu0 0
  %2864 = vmatprep.subr.bf16.mxu0 0
  %2865 = vmatpush1.bf16.msra.mxu0 0
  %2866 = vmatprep.subr.bf16.mxu0 0
  %2867 = vmatpush1.bf16.msra.mxu0 0
  %2868 = vmatprep.subr.bf16.mxu0 0
  %2869 = vmatpush1.bf16.msra.mxu0 0
  %2870 = vmatprep.subr.bf16.mxu0 0
  %2871 = vmatpush1.bf16.msra.mxu0 0
  %2872 = vmatprep.subr.bf16.mxu0 0
  %2873 = vmatpush1.bf16.msra.mxu0 0
  %2874 = vmatprep.subr.bf16.mxu0 0
  %2875 = vmatpush1.bf16.msra.mxu0 0
  %2876 = vmatprep.subr.bf16.mxu0 0
  %2877 = vmatpush1.bf16.msra.mxu0 0
  %2878 = vmatprep.mubr.bf16.mxu0 0
  %2879 = vmatmul.mubr.bf16.gmra.mrb[0].mxu0 %v2844
  %v2880 = vpop.f32.mrb[0].mxu0
  %v2881 = vadd.f32 0.0, %v2880
  %v2882 = vpop.f32.mrb[0].mxu0
  %v2883 = vpop.f32.mrb[0].mxu0
  %v2884 = vadd.f32 0.0, %v2883
  %v2885 = vpop.f32.mrb[0].mxu0
  %2886 = vdwg.mxu0
  %v2887 = vpack.c.bf16 %v2884, %v2881
  %v2896 = vunpack.c.l.b16 %v1650
  %v2897 = vunpack.c.h.b16 %v1650
  %v2898 = vunpack.c.l.b16 %v1651
  %v2899 = vunpack.c.h.b16 %v1651
  %v2900 = vunpack.c.l.b16 %v1652
  %v2901 = vunpack.c.h.b16 %v1652
  %v2902 = vunpack.c.l.b16 %v1653
  %v2903 = vunpack.c.h.b16 %v1653
  %v2904 = vunpack.c.l.b16 %v1654
  %v2905 = vunpack.c.h.b16 %v1654
  %v2906 = vunpack.c.l.b16 %v1655
  %v2907 = vunpack.c.h.b16 %v1655
  %v2908 = vunpack.c.l.b16 %v1656
  %v2909 = vunpack.c.h.b16 %v1656
  %v2910 = vunpack.c.l.b16 %v1657
  %v2911 = vunpack.c.h.b16 %v1657
  %v2912 = vpack.c.b16 %v2898, %v2896
  %v2913 = vpack.c.b16 %v2899, %v2897
  %v2914 = vpack.c.b16 %v2902, %v2900
  %v2915 = vpack.c.b16 %v2903, %v2901
  %v2916 = vpack.c.b16 %v2906, %v2904
  %v2917 = vpack.c.b16 %v2907, %v2905
  %v2918 = vpack.c.b16 %v2910, %v2908
  %v2919 = vpack.c.b16 %v2911, %v2909
  %v2929 = vsel %vm2353, %v2887, 0
  %2931 = vmatprep.subr.bf16.mxu0 %v2913
  %2932 = vmatpush1.bf16.msra.mxu0 %v2912
  %2933 = vmatprep.subr.bf16.mxu0 %v2915
  %2934 = vmatpush1.bf16.msra.mxu0 %v2914
  %2935 = vmatprep.subr.bf16.mxu0 %v2917
  %2936 = vmatpush1.bf16.msra.mxu0 %v2916
  %2937 = vmatprep.subr.bf16.mxu0 %v2919
  %2938 = vmatpush1.bf16.msra.mxu0 %v2918
  %2939 = vmatprep.subr.bf16.mxu0 0
  %2940 = vmatpush1.bf16.msra.mxu0 0
  %2941 = vmatprep.subr.bf16.mxu0 0
  %2942 = vmatpush1.bf16.msra.mxu0 0
  %2943 = vmatprep.subr.bf16.mxu0 0
  %2944 = vmatpush1.bf16.msra.mxu0 0
  %2945 = vmatprep.subr.bf16.mxu0 0
  %2946 = vmatpush1.bf16.msra.mxu0 0
  %2947 = vmatprep.subr.bf16.mxu0 0
  %2948 = vmatpush1.bf16.msra.mxu0 0
  %2949 = vmatprep.subr.bf16.mxu0 0
  %2950 = vmatpush1.bf16.msra.mxu0 0
  %2951 = vmatprep.subr.bf16.mxu0 0
  %2952 = vmatpush1.bf16.msra.mxu0 0
  %2953 = vmatprep.subr.bf16.mxu0 0
  %2954 = vmatpush1.bf16.msra.mxu0 0
  %2955 = vmatprep.subr.bf16.mxu0 0
  %2956 = vmatpush1.bf16.msra.mxu0 0
  %2957 = vmatprep.subr.bf16.mxu0 0
  %2958 = vmatpush1.bf16.msra.mxu0 0
  %2959 = vmatprep.subr.bf16.mxu0 0
  %2960 = vmatpush1.bf16.msra.mxu0 0
  %2961 = vmatprep.subr.bf16.mxu0 0
  %2962 = vmatpush1.bf16.msra.mxu0 0
  %2963 = vmatprep.mubr.bf16.mxu0 0
  %2964 = vmatmul.mubr.bf16.gmra.mrb[0].mxu0 %v2929
  %v2965 = vpop.f32.mrb[0].mxu0
  %v2966 = vadd.f32 0.0, %v2965
  %v2967 = vpop.f32.mrb[0].mxu0
  %v2968 = vadd.f32 0.0, %v2967
  %v2969 = vpop.f32.mrb[0].mxu0
  %v2970 = vadd.f32 0.0, %v2969
  %v2971 = vpop.f32.mrb[0].mxu0
  %v2972 = vadd.f32 0.0, %v2971
  %2973 = vdwg.mxu0
  %v2974 = vadd.f32 %v2763, %v2966
  %v2975 = vadd.f32 %v2765, %v2968
  %v2976 = vadd.f32 %v2767, %v2970
  %v2977 = vadd.f32 %v2769, %v2972
  %2979 = vrot.lane.b32.xlu0 %v2342, 64
  %v2980 = vpop.permute.xlu0 %2979
  %2982 = vrot.lane.b32.xlu0 %v2346, 64
  %v2983 = vpop.permute.xlu0 %2982
  %v2985 = vsel %vm2353, %v2980, 0
  %v2988 = vsel %vm2353, %v2983, 0
  %2990 = vmatprep.subr.bf16.mxu0 0
  %2991 = vmatpush1.bf16.xpose.msra.mxu0 %v2988
  %2992 = vmatprep.subr.bf16.mxu0 0
  %2993 = vmatpush1.bf16.xpose.msra.mxu0 0
  %2994 = vmatprep.subr.bf16.mxu0 0
  %2995 = vmatpush1.bf16.xpose.msra.mxu0 0
  %2996 = vmatprep.subr.bf16.mxu0 0
  %2997 = vmatpush1.bf16.xpose.msra.mxu0 0
  %2998 = vmatprep.subr.bf16.mxu0 0
  %2999 = vmatpush1.bf16.xpose.msra.mxu0 0
  %3000 = vmatprep.subr.bf16.mxu0 0
  %3001 = vmatpush1.bf16.xpose.msra.mxu0 0
  %3002 = vmatprep.subr.bf16.mxu0 0
  %3003 = vmatpush1.bf16.xpose.msra.mxu0 0
  %3004 = vmatprep.subr.bf16.mxu0 0
  %3005 = vmatpush1.bf16.xpose.msra.mxu0 0
  %3006 = vmatprep.subr.bf16.mxu0 0
  %3007 = vmatpush1.bf16.xpose.msra.mxu0 0
  %3008 = vmatprep.subr.bf16.mxu0 0
  %3009 = vmatpush1.bf16.xpose.msra.mxu0 0
  %3010 = vmatprep.subr.bf16.mxu0 0
  %3011 = vmatpush1.bf16.xpose.msra.mxu0 0
  %3012 = vmatprep.subr.bf16.mxu0 0
  %3013 = vmatpush1.bf16.xpose.msra.mxu0 0
  %3014 = vmatprep.subr.bf16.mxu0 0
  %3015 = vmatpush1.bf16.xpose.msra.mxu0 0
  %3016 = vmatprep.subr.bf16.mxu0 0
  %3017 = vmatpush1.bf16.xpose.msra.mxu0 0
  %3018 = vmatprep.subr.bf16.mxu0 0
  %3019 = vmatpush1.bf16.xpose.msra.mxu0 0
  %3020 = vmatprep.subr.bf16.mxu0 0
  %3021 = vmatpush1.bf16.xpose.msra.mxu0 0
  %3022 = vmatprep.mubr.bf16.mxu0 0
  %3023 = vmatmul.mubr.bf16.gmra.mrb[0].mxu0 %v2985
  %v3024 = vpop.f32.mrb[0].mxu0
  %v3025 = vadd.f32 0.0, %v3024
  %v3026 = vpop.f32.mrb[0].mxu0
  %v3027 = vpop.f32.mrb[0].mxu0
  %v3028 = vadd.f32 0.0, %v3027
  %v3029 = vpop.f32.mrb[0].mxu0
  %3030 = vdwg.mxu0
  %v3031 = vmul.f32 %v3025, 0.125
  %v3032 = vmul.f32 %v3028, 0.125
  %v3033 = vsel %vm2403, %v3031, -inf
  %3034 = vmax.xlane.f32.xlu0 %v3033
  %v3035 = vpop.xlane.xlu0 %3034
  %v3036 = vsel %vm2403, %v3032, -inf
  %3037 = vmax.xlane.f32.xlu0 %v3036
  %v3038 = vpop.xlane.xlu0 %3037
  %v3039 = vsub.f32 %v3031, %v3035
  %v3040 = vsub.f32 %v3032, %v3038
  %v3041 = vmul.f32 %v3039, 1.442695
  %v3042 = vpow.pop %v3041
  %v3043 = vmul.f32 %v3040, 1.442695
  %v3044 = vpow.pop %v3043
  %v3045 = vsel %vm2403, %v3042, 0.0
  %3046 = vadd.xlane.f32.xlu0 %v3045
  %v3047 = vpop.xlane.xlu0 %3046
  %v3048 = vsel %vm2403, %v3044, 0.0
  %3049 = vadd.xlane.f32.xlu0 %v3048
  %v3050 = vpop.xlane.xlu0 %3049
  %v3051 = vrcp.pop %v3047
  %v3052 = vrcp.pop %v3050
  %v3053 = vmul.f32 %v3042, %v3051
  %v3054 = vmul.f32 %v3044, %v3052
  %v3055 = vpack.c.bf16 %v3054, %v3053
  %3057 = vrot.lane.b32.xlu0 %v2350, 64
  %v3058 = vpop.permute.xlu0 %3057
  %v3061 = vsel %vm2403, %v3055, 0
  %3063 = vmatprep.subr.bf16.mxu0 0
  %3064 = vmatpush1.bf16.msra.mxu0 %v3058
  %3065 = vmatprep.subr.bf16.mxu0 0
  %3066 = vmatpush1.bf16.msra.mxu0 0
  %3067 = vmatprep.subr.bf16.mxu0 0
  %3068 = vmatpush1.bf16.msra.mxu0 0
  %3069 = vmatprep.subr.bf16.mxu0 0
  %3070 = vmatpush1.bf16.msra.mxu0 0
  %3071 = vmatprep.subr.bf16.mxu0 0
  %3072 = vmatpush1.bf16.msra.mxu0 0
  %3073 = vmatprep.subr.bf16.mxu0 0
  %3074 = vmatpush1.bf16.msra.mxu0 0
  %3075 = vmatprep.subr.bf16.mxu0 0
  %3076 = vmatpush1.bf16.msra.mxu0 0
  %3077 = vmatprep.subr.bf16.mxu0 0
  %3078 = vmatpush1.bf16.msra.mxu0 0
  %3079 = vmatprep.subr.bf16.mxu0 0
  %3080 = vmatpush1.bf16.msra.mxu0 0
  %3081 = vmatprep.subr.bf16.mxu0 0
  %3082 = vmatpush1.bf16.msra.mxu0 0
  %3083 = vmatprep.subr.bf16.mxu0 0
  %3084 = vmatpush1.bf16.msra.mxu0 0
  %3085 = vmatprep.subr.bf16.mxu0 0
  %3086 = vmatpush1.bf16.msra.mxu0 0
  %3087 = vmatprep.subr.bf16.mxu0 0
  %3088 = vmatpush1.bf16.msra.mxu0 0
  %3089 = vmatprep.subr.bf16.mxu0 0
  %3090 = vmatpush1.bf16.msra.mxu0 0
  %3091 = vmatprep.subr.bf16.mxu0 0
  %3092 = vmatpush1.bf16.msra.mxu0 0
  %3093 = vmatprep.subr.bf16.mxu0 0
  %3094 = vmatpush1.bf16.msra.mxu0 0
  %3095 = vmatprep.mubr.bf16.mxu0 0
  %3096 = vmatmul.mubr.bf16.gmra.mrb[0].mxu0 %v3061
  %v3097 = vpop.f32.mrb[0].mxu0
  %v3098 = vadd.f32 0.0, %v3097
  %v3099 = vpop.f32.mrb[0].mxu0
  %v3100 = vpop.f32.mrb[0].mxu0
  %v3101 = vadd.f32 0.0, %v3100
  %v3102 = vpop.f32.mrb[0].mxu0
  %3103 = vdwg.mxu0
  %v3104 = vpack.c.bf16 %v3101, %v3098
  %v3113 = vunpack.c.l.b16 %v1658
  %v3114 = vunpack.c.h.b16 %v1658
  %v3115 = vunpack.c.l.b16 %v1659
  %v3116 = vunpack.c.h.b16 %v1659
  %v3117 = vunpack.c.l.b16 %v1660
  %v3118 = vunpack.c.h.b16 %v1660
  %v3119 = vunpack.c.l.b16 %v1661
  %v3120 = vunpack.c.h.b16 %v1661
  %v3121 = vunpack.c.l.b16 %v1662
  %v3122 = vunpack.c.h.b16 %v1662
  %v3123 = vunpack.c.l.b16 %v1663
  %v3124 = vunpack.c.h.b16 %v1663
  %v3125 = vunpack.c.l.b16 %v1664
  %v3126 = vunpack.c.h.b16 %v1664
  %v3127 = vunpack.c.l.b16 %v1665
  %v3128 = vunpack.c.h.b16 %v1665
  %v3129 = vpack.c.b16 %v3115, %v3113
  %v3130 = vpack.c.b16 %v3116, %v3114
  %v3131 = vpack.c.b16 %v3119, %v3117
  %v3132 = vpack.c.b16 %v3120, %v3118
  %v3133 = vpack.c.b16 %v3123, %v3121
  %v3134 = vpack.c.b16 %v3124, %v3122
  %v3135 = vpack.c.b16 %v3127, %v3125
  %v3136 = vpack.c.b16 %v3128, %v3126
  %v3146 = vsel %vm2353, %v3104, 0
  %3148 = vmatprep.subr.bf16.mxu0 %v3130
  %3149 = vmatpush1.bf16.msra.mxu0 %v3129
  %3150 = vmatprep.subr.bf16.mxu0 %v3132
  %3151 = vmatpush1.bf16.msra.mxu0 %v3131
  %3152 = vmatprep.subr.bf16.mxu0 %v3134
  %3153 = vmatpush1.bf16.msra.mxu0 %v3133
  %3154 = vmatprep.subr.bf16.mxu0 %v3136
  %3155 = vmatpush1.bf16.msra.mxu0 %v3135
  %3156 = vmatprep.subr.bf16.mxu0 0
  %3157 = vmatpush1.bf16.msra.mxu0 0
  %3158 = vmatprep.subr.bf16.mxu0 0
  %3159 = vmatpush1.bf16.msra.mxu0 0
  %3160 = vmatprep.subr.bf16.mxu0 0
  %3161 = vmatpush1.bf16.msra.mxu0 0
  %3162 = vmatprep.subr.bf16.mxu0 0
  %3163 = vmatpush1.bf16.msra.mxu0 0
  %3164 = vmatprep.subr.bf16.mxu0 0
  %3165 = vmatpush1.bf16.msra.mxu0 0
  %3166 = vmatprep.subr.bf16.mxu0 0
  %3167 = vmatpush1.bf16.msra.mxu0 0
  %3168 = vmatprep.subr.bf16.mxu0 0
  %3169 = vmatpush1.bf16.msra.mxu0 0
  %3170 = vmatprep.subr.bf16.mxu0 0
  %3171 = vmatpush1.bf16.msra.mxu0 0
  %3172 = vmatprep.subr.bf16.mxu0 0
  %3173 = vmatpush1.bf16.msra.mxu0 0
  %3174 = vmatprep.subr.bf16.mxu0 0
  %3175 = vmatpush1.bf16.msra.mxu0 0
  %3176 = vmatprep.subr.bf16.mxu0 0
  %3177 = vmatpush1.bf16.msra.mxu0 0
  %3178 = vmatprep.subr.bf16.mxu0 0
  %3179 = vmatpush1.bf16.msra.mxu0 0
  %3180 = vmatprep.mubr.bf16.mxu0 0
  %3181 = vmatmul.mubr.bf16.gmra.mrb[0].mxu0 %v3146
  %v3182 = vpop.f32.mrb[0].mxu0
  %v3183 = vadd.f32 0.0, %v3182
  %v3184 = vpop.f32.mrb[0].mxu0
  %v3185 = vadd.f32 0.0, %v3184
  %v3186 = vpop.f32.mrb[0].mxu0
  %v3187 = vadd.f32 0.0, %v3186
  %v3188 = vpop.f32.mrb[0].mxu0
  %v3189 = vadd.f32 0.0, %v3188
  %3190 = vdwg.mxu0
  %v3191 = vadd.f32 %v2974, %v3183
  %v3192 = vadd.f32 %v2975, %v3185
  %v3193 = vadd.f32 %v2976, %v3187
  %v3194 = vadd.f32 %v2977, %v3189
  %v3196 = vsel %vm2353, %v2343, 0
  %v3199 = vsel %vm2353, %v2347, 0
  %3201 = vmatprep.subr.bf16.mxu0 0
  %3202 = vmatpush1.bf16.xpose.msra.mxu0 %v3199
  %3203 = vmatprep.subr.bf16.mxu0 0
  %3204 = vmatpush1.bf16.xpose.msra.mxu0 0
  %3205 = vmatprep.subr.bf16.mxu0 0
  %3206 = vmatpush1.bf16.xpose.msra.mxu0 0
  %3207 = vmatprep.subr.bf16.mxu0 0
  %3208 = vmatpush1.bf16.xpose.msra.mxu0 0
  %3209 = vmatprep.subr.bf16.mxu0 0
  %3210 = vmatpush1.bf16.xpose.msra.mxu0 0
  %3211 = vmatprep.subr.bf16.mxu0 0
  %3212 = vmatpush1.bf16.xpose.msra.mxu0 0
  %3213 = vmatprep.subr.bf16.mxu0 0
  %3214 = vmatpush1.bf16.xpose.msra.mxu0 0
  %3215 = vmatprep.subr.bf16.mxu0 0
  %3216 = vmatpush1.bf16.xpose.msra.mxu0 0
  %3217 = vmatprep.subr.bf16.mxu0 0
  %3218 = vmatpush1.bf16.xpose.msra.mxu0 0
  %3219 = vmatprep.subr.bf16.mxu0 0
  %3220 = vmatpush1.bf16.xpose.msra.mxu0 0
  %3221 = vmatprep.subr.bf16.mxu0 0
  %3222 = vmatpush1.bf16.xpose.msra.mxu0 0
  %3223 = vmatprep.subr.bf16.mxu0 0
  %3224 = vmatpush1.bf16.xpose.msra.mxu0 0
  %3225 = vmatprep.subr.bf16.mxu0 0
  %3226 = vmatpush1.bf16.xpose.msra.mxu0 0
  %3227 = vmatprep.subr.bf16.mxu0 0
  %3228 = vmatpush1.bf16.xpose.msra.mxu0 0
  %3229 = vmatprep.subr.bf16.mxu0 0
  %3230 = vmatpush1.bf16.xpose.msra.mxu0 0
  %3231 = vmatprep.subr.bf16.mxu0 0
  %3232 = vmatpush1.bf16.xpose.msra.mxu0 0
  %3233 = vmatprep.mubr.bf16.mxu0 0
  %3234 = vmatmul.mubr.bf16.gmra.mrb[0].mxu0 %v3196
  %v3235 = vpop.f32.mrb[0].mxu0
  %v3236 = vadd.f32 0.0, %v3235
  %v3237 = vpop.f32.mrb[0].mxu0
  %v3238 = vpop.f32.mrb[0].mxu0
  %v3239 = vadd.f32 0.0, %v3238
  %v3240 = vpop.f32.mrb[0].mxu0
  %3241 = vdwg.mxu0
  %v3242 = vmul.f32 %v3236, 0.125
  %v3243 = vmul.f32 %v3239, 0.125
  %v3244 = vsel %vm2403, %v3242, -inf
  %3245 = vmax.xlane.f32.xlu0 %v3244
  %v3246 = vpop.xlane.xlu0 %3245
  %v3247 = vsel %vm2403, %v3243, -inf
  %3248 = vmax.xlane.f32.xlu0 %v3247
  %v3249 = vpop.xlane.xlu0 %3248
  %v3250 = vsub.f32 %v3242, %v3246
  %v3251 = vsub.f32 %v3243, %v3249
  %v3252 = vmul.f32 %v3250, 1.442695
  %v3253 = vpow.pop %v3252
  %v3254 = vmul.f32 %v3251, 1.442695
  %v3255 = vpow.pop %v3254
  %v3256 = vsel %vm2403, %v3253, 0.0
  %3257 = vadd.xlane.f32.xlu0 %v3256
  %v3258 = vpop.xlane.xlu0 %3257
  %v3259 = vsel %vm2403, %v3255, 0.0
  %3260 = vadd.xlane.f32.xlu0 %v3259
  %v3261 = vpop.xlane.xlu0 %3260
  %v3262 = vrcp.pop %v3258
  %v3263 = vrcp.pop %v3261
  %v3264 = vmul.f32 %v3253, %v3262
  %v3265 = vmul.f32 %v3255, %v3263
  %v3266 = vpack.c.bf16 %v3265, %v3264
  %v3268 = vsel %vm2403, %v3266, 0
  %3270 = vmatprep.subr.bf16.mxu0 0
  %3271 = vmatpush1.bf16.msra.mxu0 %v2351
  %3272 = vmatprep.subr.bf16.mxu0 0
  %3273 = vmatpush1.bf16.msra.mxu0 0
  %3274 = vmatprep.subr.bf16.mxu0 0
  %3275 = vmatpush1.bf16.msra.mxu0 0
  %3276 = vmatprep.subr.bf16.mxu0 0
  %3277 = vmatpush1.bf16.msra.mxu0 0
  %3278 = vmatprep.subr.bf16.mxu0 0
  %3279 = vmatpush1.bf16.msra.mxu0 0
  %3280 = vmatprep.subr.bf16.mxu0 0
  %3281 = vmatpush1.bf16.msra.mxu0 0
  %3282 = vmatprep.subr.bf16.mxu0 0
  %3283 = vmatpush1.bf16.msra.mxu0 0
  %3284 = vmatprep.subr.bf16.mxu0 0
  %3285 = vmatpush1.bf16.msra.mxu0 0
  %3286 = vmatprep.subr.bf16.mxu0 0
  %3287 = vmatpush1.bf16.msra.mxu0 0
  %3288 = vmatprep.subr.bf16.mxu0 0
  %3289 = vmatpush1.bf16.msra.mxu0 0
  %3290 = vmatprep.subr.bf16.mxu0 0
  %3291 = vmatpush1.bf16.msra.mxu0 0
  %3292 = vmatprep.subr.bf16.mxu0 0
  %3293 = vmatpush1.bf16.msra.mxu0 0
  %3294 = vmatprep.subr.bf16.mxu0 0
  %3295 = vmatpush1.bf16.msra.mxu0 0
  %3296 = vmatprep.subr.bf16.mxu0 0
  %3297 = vmatpush1.bf16.msra.mxu0 0
  %3298 = vmatprep.subr.bf16.mxu0 0
  %3299 = vmatpush1.bf16.msra.mxu0 0
  %3300 = vmatprep.subr.bf16.mxu0 0
  %3301 = vmatpush1.bf16.msra.mxu0 0
  %3302 = vmatprep.mubr.bf16.mxu0 0
  %3303 = vmatmul.mubr.bf16.gmra.mrb[0].mxu0 %v3268
  %v3304 = vpop.f32.mrb[0].mxu0
  %v3305 = vadd.f32 0.0, %v3304
  %v3306 = vpop.f32.mrb[0].mxu0
  %v3307 = vpop.f32.mrb[0].mxu0
  %v3308 = vadd.f32 0.0, %v3307
  %v3309 = vpop.f32.mrb[0].mxu0
  %3310 = vdwg.mxu0
  %v3311 = vpack.c.bf16 %v3308, %v3305
  %3313 = vrot.lane.b32.xlu0 %v2343, 64
  %v3314 = vpop.permute.xlu0 %3313
  %3316 = vrot.lane.b32.xlu0 %v2347, 64
  %v3317 = vpop.permute.xlu0 %3316
  %v3319 = vsel %vm2353, %v3314, 0
  %v3322 = vsel %vm2353, %v3317, 0
  %3324 = vmatprep.subr.bf16.mxu0 0
  %3325 = vmatpush1.bf16.xpose.msra.mxu0 %v3322
  %3326 = vmatprep.subr.bf16.mxu0 0
  %3327 = vmatpush1.bf16.xpose.msra.mxu0 0
  %3328 = vmatprep.subr.bf16.mxu0 0
  %3329 = vmatpush1.bf16.xpose.msra.mxu0 0
  %3330 = vmatprep.subr.bf16.mxu0 0
  %3331 = vmatpush1.bf16.xpose.msra.mxu0 0
  %3332 = vmatprep.subr.bf16.mxu0 0
  %3333 = vmatpush1.bf16.xpose.msra.mxu0 0
  %3334 = vmatprep.subr.bf16.mxu0 0
  %3335 = vmatpush1.bf16.xpose.msra.mxu0 0
  %3336 = vmatprep.subr.bf16.mxu0 0
  %3337 = vmatpush1.bf16.xpose.msra.mxu0 0
  %3338 = vmatprep.subr.bf16.mxu0 0
  %3339 = vmatpush1.bf16.xpose.msra.mxu0 0
  %3340 = vmatprep.subr.bf16.mxu0 0
  %3341 = vmatpush1.bf16.xpose.msra.mxu0 0
  %3342 = vmatprep.subr.bf16.mxu0 0
  %3343 = vmatpush1.bf16.xpose.msra.mxu0 0
  %3344 = vmatprep.subr.bf16.mxu0 0
  %3345 = vmatpush1.bf16.xpose.msra.mxu0 0
  %3346 = vmatprep.subr.bf16.mxu0 0
  %3347 = vmatpush1.bf16.xpose.msra.mxu0 0
  %3348 = vmatprep.subr.bf16.mxu0 0
  %3349 = vmatpush1.bf16.xpose.msra.mxu0 0
  %3350 = vmatprep.subr.bf16.mxu0 0
  %3351 = vmatpush1.bf16.xpose.msra.mxu0 0
  %3352 = vmatprep.subr.bf16.mxu0 0
  %3353 = vmatpush1.bf16.xpose.msra.mxu0 0
  %3354 = vmatprep.subr.bf16.mxu0 0
  %3355 = vmatpush1.bf16.xpose.msra.mxu0 0
  %3356 = vmatprep.mubr.bf16.mxu0 0
  %3357 = vmatmul.mubr.bf16.gmra.mrb[0].mxu0 %v3319
  %v3358 = vpop.f32.mrb[0].mxu0
  %v3359 = vadd.f32 0.0, %v3358
  %v3360 = vpop.f32.mrb[0].mxu0
  %v3361 = vpop.f32.mrb[0].mxu0
  %v3362 = vadd.f32 0.0, %v3361
  %v3363 = vpop.f32.mrb[0].mxu0
  %3364 = vdwg.mxu0
  %v3365 = vmul.f32 %v3359, 0.125
  %v3366 = vmul.f32 %v3362, 0.125
  %v3367 = vsel %vm2403, %v3365, -inf
  %3368 = vmax.xlane.f32.xlu0 %v3367
  %v3369 = vpop.xlane.xlu0 %3368
  %v3370 = vsel %vm2403, %v3366, -inf
  %3371 = vmax.xlane.f32.xlu0 %v3370
  %v3372 = vpop.xlane.xlu0 %3371
  %v3373 = vsub.f32 %v3365, %v3369
  %v3374 = vsub.f32 %v3366, %v3372
  %v3375 = vmul.f32 %v3373, 1.442695
  %v3376 = vpow.pop %v3375
  %v3377 = vmul.f32 %v3374, 1.442695
  %v3378 = vpow.pop %v3377
  %v3379 = vsel %vm2403, %v3376, 0.0
  %3380 = vadd.xlane.f32.xlu0 %v3379
  %v3381 = vpop.xlane.xlu0 %3380
  %v3382 = vsel %vm2403, %v3378, 0.0
  %3383 = vadd.xlane.f32.xlu0 %v3382
  %v3384 = vpop.xlane.xlu0 %3383
  %v3385 = vrcp.pop %v3381
  %v3386 = vrcp.pop %v3384
  %v3387 = vmul.f32 %v3376, %v3385
  %v3388 = vmul.f32 %v3378, %v3386
  %v3389 = vpack.c.bf16 %v3388, %v3387
  %3391 = vrot.lane.b32.xlu0 %v2351, 64
  %v3392 = vpop.permute.xlu0 %3391
  %v3395 = vsel %vm2403, %v3389, 0
  %3397 = vmatprep.subr.bf16.mxu0 0
  %3398 = vmatpush1.bf16.msra.mxu0 %v3392
  %3399 = vmatprep.subr.bf16.mxu0 0
  %3400 = vmatpush1.bf16.msra.mxu0 0
  %3401 = vmatprep.subr.bf16.mxu0 0
  %3402 = vmatpush1.bf16.msra.mxu0 0
  %3403 = vmatprep.subr.bf16.mxu0 0
  %3404 = vmatpush1.bf16.msra.mxu0 0
  %3405 = vmatprep.subr.bf16.mxu0 0
  %3406 = vmatpush1.bf16.msra.mxu0 0
  %3407 = vmatprep.subr.bf16.mxu0 0
  %3408 = vmatpush1.bf16.msra.mxu0 0
  %3409 = vmatprep.subr.bf16.mxu0 0
  %3410 = vmatpush1.bf16.msra.mxu0 0
  %3411 = vmatprep.subr.bf16.mxu0 0
  %3412 = vmatpush1.bf16.msra.mxu0 0
  %3413 = vmatprep.subr.bf16.mxu0 0
  %3414 = vmatpush1.bf16.msra.mxu0 0
  %3415 = vmatprep.subr.bf16.mxu0 0
  %3416 = vmatpush1.bf16.msra.mxu0 0
  %3417 = vmatprep.subr.bf16.mxu0 0
  %3418 = vmatpush1.bf16.msra.mxu0 0
  %3419 = vmatprep.subr.bf16.mxu0 0
  %3420 = vmatpush1.bf16.msra.mxu0 0
  %3421 = vmatprep.subr.bf16.mxu0 0
  %3422 = vmatpush1.bf16.msra.mxu0 0
  %3423 = vmatprep.subr.bf16.mxu0 0
  %3424 = vmatpush1.bf16.msra.mxu0 0
  %3425 = vmatprep.subr.bf16.mxu0 0
  %3426 = vmatpush1.bf16.msra.mxu0 0
  %3427 = vmatprep.subr.bf16.mxu0 0
  %3428 = vmatpush1.bf16.msra.mxu0 0
  %3429 = vmatprep.mubr.bf16.mxu0 0
  %3430 = vmatmul.mubr.bf16.gmra.mrb[0].mxu0 %v3395
  %v3431 = vpop.f32.mrb[0].mxu0
  %v3432 = vadd.f32 0.0, %v3431
  %v3433 = vpop.f32.mrb[0].mxu0
  %v3434 = vpop.f32.mrb[0].mxu0
  %v3435 = vadd.f32 0.0, %v3434
  %v3436 = vpop.f32.mrb[0].mxu0
  %3437 = vdwg.mxu0
  %v3438 = vpack.c.bf16 %v3435, %v3432
  %v3440 = vsel %vm2353, %v3438, 0
  %3442 = vmatprep.subr.bf16.mxu0 %v2624
  %3443 = vmatpush1.bf16.msra.mxu0 %v2623
  %3444 = vmatprep.subr.bf16.mxu0 %v2626
  %3445 = vmatpush1.bf16.msra.mxu0 %v2625
  %3446 = vmatprep.subr.bf16.mxu0 %v2628
  %3447 = vmatpush1.bf16.msra.mxu0 %v2627
  %3448 = vmatprep.subr.bf16.mxu0 %v2630
  %3449 = vmatpush1.bf16.msra.mxu0 %v2629
  %3450 = vmatprep.subr.bf16.mxu0 0
  %3451 = vmatpush1.bf16.msra.mxu0 0
  %3452 = vmatprep.subr.bf16.mxu0 0
  %3453 = vmatpush1.bf16.msra.mxu0 0
  %3454 = vmatprep.subr.bf16.mxu0 0
  %3455 = vmatpush1.bf16.msra.mxu0 0
  %3456 = vmatprep.subr.bf16.mxu0 0
  %3457 = vmatpush1.bf16.msra.mxu0 0
  %3458 = vmatprep.subr.bf16.mxu0 0
  %3459 = vmatpush1.bf16.msra.mxu0 0
  %3460 = vmatprep.subr.bf16.mxu0 0
  %3461 = vmatpush1.bf16.msra.mxu0 0
  %3462 = vmatprep.subr.bf16.mxu0 0
  %3463 = vmatpush1.bf16.msra.mxu0 0
  %3464 = vmatprep.subr.bf16.mxu0 0
  %3465 = vmatpush1.bf16.msra.mxu0 0
  %3466 = vmatprep.subr.bf16.mxu0 0
  %3467 = vmatpush1.bf16.msra.mxu0 0
  %3468 = vmatprep.subr.bf16.mxu0 0
  %3469 = vmatpush1.bf16.msra.mxu0 0
  %3470 = vmatprep.subr.bf16.mxu0 0
  %3471 = vmatpush1.bf16.msra.mxu0 0
  %3472 = vmatprep.subr.bf16.mxu0 0
  %3473 = vmatpush1.bf16.msra.mxu0 0
  %3474 = vmatprep.mubr.bf16.mxu0 0
  %3475 = vmatmul.mubr.bf16.gmra.mrb[0].mxu0 %v3440
  %v3476 = vpop.f32.mrb[0].mxu0
  %v3477 = vadd.f32 0.0, %v3476
  %v3478 = vpop.f32.mrb[0].mxu0
  %v3479 = vadd.f32 0.0, %v3478
  %v3480 = vpop.f32.mrb[0].mxu0
  %v3481 = vadd.f32 0.0, %v3480
  %v3482 = vpop.f32.mrb[0].mxu0
  %v3483 = vadd.f32 0.0, %v3482
  %3484 = vdwg.mxu0
  %v3486 = vsel %vm2353, %v3311, 0
  %3488 = vmatprep.subr.bf16.mxu0 %v2710
  %3489 = vmatpush1.bf16.msra.mxu0 %v2709
  %3490 = vmatprep.subr.bf16.mxu0 %v2712
  %3491 = vmatpush1.bf16.msra.mxu0 %v2711
  %3492 = vmatprep.subr.bf16.mxu0 %v2714
  %3493 = vmatpush1.bf16.msra.mxu0 %v2713
  %3494 = vmatprep.subr.bf16.mxu0 %v2716
  %3495 = vmatpush1.bf16.msra.mxu0 %v2715
  %3496 = vmatprep.subr.bf16.mxu0 0
  %3497 = vmatpush1.bf16.msra.mxu0 0
  %3498 = vmatprep.subr.bf16.mxu0 0
  %3499 = vmatpush1.bf16.msra.mxu0 0
  %3500 = vmatprep.subr.bf16.mxu0 0
  %3501 = vmatpush1.bf16.msra.mxu0 0
  %3502 = vmatprep.subr.bf16.mxu0 0
  %3503 = vmatpush1.bf16.msra.mxu0 0
  %3504 = vmatprep.subr.bf16.mxu0 0
  %3505 = vmatpush1.bf16.msra.mxu0 0
  %3506 = vmatprep.subr.bf16.mxu0 0
  %3507 = vmatpush1.bf16.msra.mxu0 0
  %3508 = vmatprep.subr.bf16.mxu0 0
  %3509 = vmatpush1.bf16.msra.mxu0 0
  %3510 = vmatprep.subr.bf16.mxu0 0
  %3511 = vmatpush1.bf16.msra.mxu0 0
  %3512 = vmatprep.subr.bf16.mxu0 0
  %3513 = vmatpush1.bf16.msra.mxu0 0
  %3514 = vmatprep.subr.bf16.mxu0 0
  %3515 = vmatpush1.bf16.msra.mxu0 0
  %3516 = vmatprep.subr.bf16.mxu0 0
  %3517 = vmatpush1.bf16.msra.mxu0 0
  %3518 = vmatprep.subr.bf16.mxu0 0
  %3519 = vmatpush1.bf16.msra.mxu0 0
  %3520 = vmatprep.mubr.bf16.mxu0 0
  %3521 = vmatmul.mubr.bf16.gmra.mrb[0].mxu0 %v3486
  %v3522 = vpop.f32.mrb[0].mxu0
  %v3523 = vadd.f32 %v3477, %v3522
  %v3524 = vpop.f32.mrb[0].mxu0
  %v3525 = vadd.f32 %v3479, %v3524
  %v3526 = vpop.f32.mrb[0].mxu0
  %v3527 = vadd.f32 %v3481, %v3526
  %v3528 = vpop.f32.mrb[0].mxu0
  %v3529 = vadd.f32 %v3483, %v3528
  %3530 = vdwg.mxu0
  %v3532 = vsel %vm2353, %v2344, 0
  %v3535 = vsel %vm2353, %v2348, 0
  %3537 = vmatprep.subr.bf16.mxu0 0
  %3538 = vmatpush1.bf16.xpose.msra.mxu0 %v3535
  %3539 = vmatprep.subr.bf16.mxu0 0
  %3540 = vmatpush1.bf16.xpose.msra.mxu0 0
  %3541 = vmatprep.subr.bf16.mxu0 0
  %3542 = vmatpush1.bf16.xpose.msra.mxu0 0
  %3543 = vmatprep.subr.bf16.mxu0 0
  %3544 = vmatpush1.bf16.xpose.msra.mxu0 0
  %3545 = vmatprep.subr.bf16.mxu0 0
  %3546 = vmatpush1.bf16.xpose.msra.mxu0 0
  %3547 = vmatprep.subr.bf16.mxu0 0
  %3548 = vmatpush1.bf16.xpose.msra.mxu0 0
  %3549 = vmatprep.subr.bf16.mxu0 0
  %3550 = vmatpush1.bf16.xpose.msra.mxu0 0
  %3551 = vmatprep.subr.bf16.mxu0 0
  %3552 = vmatpush1.bf16.xpose.msra.mxu0 0
  %3553 = vmatprep.subr.bf16.mxu0 0
  %3554 = vmatpush1.bf16.xpose.msra.mxu0 0
  %3555 = vmatprep.subr.bf16.mxu0 0
  %3556 = vmatpush1.bf16.xpose.msra.mxu0 0
  %3557 = vmatprep.subr.bf16.mxu0 0
  %3558 = vmatpush1.bf16.xpose.msra.mxu0 0
  %3559 = vmatprep.subr.bf16.mxu0 0
  %3560 = vmatpush1.bf16.xpose.msra.mxu0 0
  %3561 = vmatprep.subr.bf16.mxu0 0
  %3562 = vmatpush1.bf16.xpose.msra.mxu0 0
  %3563 = vmatprep.subr.bf16.mxu0 0
  %3564 = vmatpush1.bf16.xpose.msra.mxu0 0
  %3565 = vmatprep.subr.bf16.mxu0 0
  %3566 = vmatpush1.bf16.xpose.msra.mxu0 0
  %3567 = vmatprep.subr.bf16.mxu0 0
  %3568 = vmatpush1.bf16.xpose.msra.mxu0 0
  %3569 = vmatprep.mubr.bf16.mxu0 0
  %3570 = vmatmul.mubr.bf16.gmra.mrb[0].mxu0 %v3532
  %v3571 = vpop.f32.mrb[0].mxu0
  %v3572 = vadd.f32 0.0, %v3571
  %v3573 = vpop.f32.mrb[0].mxu0
  %v3574 = vpop.f32.mrb[0].mxu0
  %v3575 = vadd.f32 0.0, %v3574
  %v3576 = vpop.f32.mrb[0].mxu0
  %3577 = vdwg.mxu0
  %v3578 = vmul.f32 %v3572, 0.125
  %v3579 = vmul.f32 %v3575, 0.125
  %v3580 = vsel %vm2403, %v3578, -inf
  %3581 = vmax.xlane.f32.xlu0 %v3580
  %v3582 = vpop.xlane.xlu0 %3581
  %v3583 = vsel %vm2403, %v3579, -inf
  %3584 = vmax.xlane.f32.xlu0 %v3583
  %v3585 = vpop.xlane.xlu0 %3584
  %v3586 = vsub.f32 %v3578, %v3582
  %v3587 = vsub.f32 %v3579, %v3585
  %v3588 = vmul.f32 %v3586, 1.442695
  %v3589 = vpow.pop %v3588
  %v3590 = vmul.f32 %v3587, 1.442695
  %v3591 = vpow.pop %v3590
  %v3592 = vsel %vm2403, %v3589, 0.0
  %3593 = vadd.xlane.f32.xlu0 %v3592
  %v3594 = vpop.xlane.xlu0 %3593
  %v3595 = vsel %vm2403, %v3591, 0.0
  %3596 = vadd.xlane.f32.xlu0 %v3595
  %v3597 = vpop.xlane.xlu0 %3596
  %v3598 = vrcp.pop %v3594
  %v3599 = vrcp.pop %v3597
  %v3600 = vmul.f32 %v3589, %v3598
  %v3601 = vmul.f32 %v3591, %v3599
  %v3602 = vpack.c.bf16 %v3601, %v3600
  %v3604 = vsel %vm2403, %v3602, 0
  %3606 = vmatprep.subr.bf16.mxu0 0
  %3607 = vmatpush1.bf16.msra.mxu0 %v2352
  %3608 = vmatprep.subr.bf16.mxu0 0
  %3609 = vmatpush1.bf16.msra.mxu0 0
  %3610 = vmatprep.subr.bf16.mxu0 0
  %3611 = vmatpush1.bf16.msra.mxu0 0
  %3612 = vmatprep.subr.bf16.mxu0 0
  %3613 = vmatpush1.bf16.msra.mxu0 0
  %3614 = vmatprep.subr.bf16.mxu0 0
  %3615 = vmatpush1.bf16.msra.mxu0 0
  %3616 = vmatprep.subr.bf16.mxu0 0
  %3617 = vmatpush1.bf16.msra.mxu0 0
  %3618 = vmatprep.subr.bf16.mxu0 0
  %3619 = vmatpush1.bf16.msra.mxu0 0
  %3620 = vmatprep.subr.bf16.mxu0 0
  %3621 = vmatpush1.bf16.msra.mxu0 0
  %3622 = vmatprep.subr.bf16.mxu0 0
  %3623 = vmatpush1.bf16.msra.mxu0 0
  %3624 = vmatprep.subr.bf16.mxu0 0
  %3625 = vmatpush1.bf16.msra.mxu0 0
  %3626 = vmatprep.subr.bf16.mxu0 0
  %3627 = vmatpush1.bf16.msra.mxu0 0
  %3628 = vmatprep.subr.bf16.mxu0 0
  %3629 = vmatpush1.bf16.msra.mxu0 0
  %3630 = vmatprep.subr.bf16.mxu0 0
  %3631 = vmatpush1.bf16.msra.mxu0 0
  %3632 = vmatprep.subr.bf16.mxu0 0
  %3633 = vmatpush1.bf16.msra.mxu0 0
  %3634 = vmatprep.subr.bf16.mxu0 0
  %3635 = vmatpush1.bf16.msra.mxu0 0
  %3636 = vmatprep.subr.bf16.mxu0 0
  %3637 = vmatpush1.bf16.msra.mxu0 0
  %3638 = vmatprep.mubr.bf16.mxu0 0
  %3639 = vmatmul.mubr.bf16.gmra.mrb[0].mxu0 %v3604
  %v3640 = vpop.f32.mrb[0].mxu0
  %v3641 = vadd.f32 0.0, %v3640
  %v3642 = vpop.f32.mrb[0].mxu0
  %v3643 = vpop.f32.mrb[0].mxu0
  %v3644 = vadd.f32 0.0, %v3643
  %v3645 = vpop.f32.mrb[0].mxu0
  %3646 = vdwg.mxu0
  %v3647 = vpack.c.bf16 %v3644, %v3641
  %v3649 = vsel %vm2353, %v3647, 0
  %3651 = vmatprep.subr.bf16.mxu0 %v2913
  %3652 = vmatpush1.bf16.msra.mxu0 %v2912
  %3653 = vmatprep.subr.bf16.mxu0 %v2915
  %3654 = vmatpush1.bf16.msra.mxu0 %v2914
  %3655 = vmatprep.subr.bf16.mxu0 %v2917
  %3656 = vmatpush1.bf16.msra.mxu0 %v2916
  %3657 = vmatprep.subr.bf16.mxu0 %v2919
  %3658 = vmatpush1.bf16.msra.mxu0 %v2918
  %3659 = vmatprep.subr.bf16.mxu0 0
  %3660 = vmatpush1.bf16.msra.mxu0 0
  %3661 = vmatprep.subr.bf16.mxu0 0
  %3662 = vmatpush1.bf16.msra.mxu0 0
  %3663 = vmatprep.subr.bf16.mxu0 0
  %3664 = vmatpush1.bf16.msra.mxu0 0
  %3665 = vmatprep.subr.bf16.mxu0 0
  %3666 = vmatpush1.bf16.msra.mxu0 0
  %3667 = vmatprep.subr.bf16.mxu0 0
  %3668 = vmatpush1.bf16.msra.mxu0 0
  %3669 = vmatprep.subr.bf16.mxu0 0
  %3670 = vmatpush1.bf16.msra.mxu0 0
  %3671 = vmatprep.subr.bf16.mxu0 0
  %3672 = vmatpush1.bf16.msra.mxu0 0
  %3673 = vmatprep.subr.bf16.mxu0 0
  %3674 = vmatpush1.bf16.msra.mxu0 0
  %3675 = vmatprep.subr.bf16.mxu0 0
  %3676 = vmatpush1.bf16.msra.mxu0 0
  %3677 = vmatprep.subr.bf16.mxu0 0
  %3678 = vmatpush1.bf16.msra.mxu0 0
  %3679 = vmatprep.subr.bf16.mxu0 0
  %3680 = vmatpush1.bf16.msra.mxu0 0
  %3681 = vmatprep.subr.bf16.mxu0 0
  %3682 = vmatpush1.bf16.msra.mxu0 0
  %3683 = vmatprep.mubr.bf16.mxu0 0
  %3684 = vmatmul.mubr.bf16.gmra.mrb[0].mxu0 %v3649
  %v3685 = vpop.f32.mrb[0].mxu0
  %v3686 = vadd.f32 0.0, %v3685
  %v3687 = vpop.f32.mrb[0].mxu0
  %v3688 = vadd.f32 0.0, %v3687
  %v3689 = vpop.f32.mrb[0].mxu0
  %v3690 = vadd.f32 0.0, %v3689
  %v3691 = vpop.f32.mrb[0].mxu0
  %v3692 = vadd.f32 0.0, %v3691
  %3693 = vdwg.mxu0
  %v3694 = vadd.f32 %v3523, %v3686
  %v3695 = vadd.f32 %v3525, %v3688
  %v3696 = vadd.f32 %v3527, %v3690
  %v3697 = vadd.f32 %v3529, %v3692
  %3699 = vrot.lane.b32.xlu0 %v2344, 64
  %v3700 = vpop.permute.xlu0 %3699
  %3702 = vrot.lane.b32.xlu0 %v2348, 64
  %v3703 = vpop.permute.xlu0 %3702
  %v3705 = vsel %vm2353, %v3700, 0
  %v3708 = vsel %vm2353, %v3703, 0
  %3710 = vmatprep.subr.bf16.mxu0 0
  %3711 = vmatpush1.bf16.xpose.msra.mxu0 %v3708
  %3712 = vmatprep.subr.bf16.mxu0 0
  %3713 = vmatpush1.bf16.xpose.msra.mxu0 0
  %3714 = vmatprep.subr.bf16.mxu0 0
  %3715 = vmatpush1.bf16.xpose.msra.mxu0 0
  %3716 = vmatprep.subr.bf16.mxu0 0
  %3717 = vmatpush1.bf16.xpose.msra.mxu0 0
  %3718 = vmatprep.subr.bf16.mxu0 0
  %3719 = vmatpush1.bf16.xpose.msra.mxu0 0
  %3720 = vmatprep.subr.bf16.mxu0 0
  %3721 = vmatpush1.bf16.xpose.msra.mxu0 0
  %3722 = vmatprep.subr.bf16.mxu0 0
  %3723 = vmatpush1.bf16.xpose.msra.mxu0 0
  %3724 = vmatprep.subr.bf16.mxu0 0
  %3725 = vmatpush1.bf16.xpose.msra.mxu0 0
  %3726 = vmatprep.subr.bf16.mxu0 0
  %3727 = vmatpush1.bf16.xpose.msra.mxu0 0
  %3728 = vmatprep.subr.bf16.mxu0 0
  %3729 = vmatpush1.bf16.xpose.msra.mxu0 0
  %3730 = vmatprep.subr.bf16.mxu0 0
  %3731 = vmatpush1.bf16.xpose.msra.mxu0 0
  %3732 = vmatprep.subr.bf16.mxu0 0
  %3733 = vmatpush1.bf16.xpose.msra.mxu0 0
  %3734 = vmatprep.subr.bf16.mxu0 0
  %3735 = vmatpush1.bf16.xpose.msra.mxu0 0
  %3736 = vmatprep.subr.bf16.mxu0 0
  %3737 = vmatpush1.bf16.xpose.msra.mxu0 0
  %3738 = vmatprep.subr.bf16.mxu0 0
  %3739 = vmatpush1.bf16.xpose.msra.mxu0 0
  %3740 = vmatprep.subr.bf16.mxu0 0
  %3741 = vmatpush1.bf16.xpose.msra.mxu0 0
  %3742 = vmatprep.mubr.bf16.mxu0 0
  %3743 = vmatmul.mubr.bf16.gmra.mrb[0].mxu0 %v3705
  %v3744 = vpop.f32.mrb[0].mxu0
  %v3745 = vadd.f32 0.0, %v3744
  %v3746 = vpop.f32.mrb[0].mxu0
  %v3747 = vpop.f32.mrb[0].mxu0
  %v3748 = vadd.f32 0.0, %v3747
  %v3749 = vpop.f32.mrb[0].mxu0
  %3750 = vdwg.mxu0
  %v3751 = vmul.f32 %v3745, 0.125
  %v3752 = vmul.f32 %v3748, 0.125
  %v3753 = vsel %vm2403, %v3751, -inf
  %3754 = vmax.xlane.f32.xlu0 %v3753
  %v3755 = vpop.xlane.xlu0 %3754
  %v3756 = vsel %vm2403, %v3752, -inf
  %3757 = vmax.xlane.f32.xlu0 %v3756
  %v3758 = vpop.xlane.xlu0 %3757
  %v3759 = vsub.f32 %v3751, %v3755
  %v3760 = vsub.f32 %v3752, %v3758
  %v3761 = vmul.f32 %v3759, 1.442695
  %v3762 = vpow.pop %v3761
  %v3763 = vmul.f32 %v3760, 1.442695
  %v3764 = vpow.pop %v3763
  %v3765 = vsel %vm2403, %v3762, 0.0
  %3766 = vadd.xlane.f32.xlu0 %v3765
  %v3767 = vpop.xlane.xlu0 %3766
  %v3768 = vsel %vm2403, %v3764, 0.0
  %3769 = vadd.xlane.f32.xlu0 %v3768
  %v3770 = vpop.xlane.xlu0 %3769
  %v3771 = vrcp.pop %v3767
  %v3772 = vrcp.pop %v3770
  %v3773 = vmul.f32 %v3762, %v3771
  %v3774 = vmul.f32 %v3764, %v3772
  %v3775 = vpack.c.bf16 %v3774, %v3773
  %3777 = vrot.lane.b32.xlu0 %v2352, 64
  %v3778 = vpop.permute.xlu0 %3777
  %v3781 = vsel %vm2403, %v3775, 0
  %3783 = vmatprep.subr.bf16.mxu0 0
  %3784 = vmatpush1.bf16.msra.mxu0 %v3778
  %3785 = vmatprep.subr.bf16.mxu0 0
  %3786 = vmatpush1.bf16.msra.mxu0 0
  %3787 = vmatprep.subr.bf16.mxu0 0
  %3788 = vmatpush1.bf16.msra.mxu0 0
  %3789 = vmatprep.subr.bf16.mxu0 0
  %3790 = vmatpush1.bf16.msra.mxu0 0
  %3791 = vmatprep.subr.bf16.mxu0 0
  %3792 = vmatpush1.bf16.msra.mxu0 0
  %3793 = vmatprep.subr.bf16.mxu0 0
  %3794 = vmatpush1.bf16.msra.mxu0 0
  %3795 = vmatprep.subr.bf16.mxu0 0
  %3796 = vmatpush1.bf16.msra.mxu0 0
  %3797 = vmatprep.subr.bf16.mxu0 0
  %3798 = vmatpush1.bf16.msra.mxu0 0
  %3799 = vmatprep.subr.bf16.mxu0 0
  %3800 = vmatpush1.bf16.msra.mxu0 0
  %3801 = vmatprep.subr.bf16.mxu0 0
  %3802 = vmatpush1.bf16.msra.mxu0 0
  %3803 = vmatprep.subr.bf16.mxu0 0
  %3804 = vmatpush1.bf16.msra.mxu0 0
  %3805 = vmatprep.subr.bf16.mxu0 0
  %3806 = vmatpush1.bf16.msra.mxu0 0
  %3807 = vmatprep.subr.bf16.mxu0 0
  %3808 = vmatpush1.bf16.msra.mxu0 0
  %3809 = vmatprep.subr.bf16.mxu0 0
  %3810 = vmatpush1.bf16.msra.mxu0 0
  %3811 = vmatprep.subr.bf16.mxu0 0
  %3812 = vmatpush1.bf16.msra.mxu0 0
  %3813 = vmatprep.subr.bf16.mxu0 0
  %3814 = vmatpush1.bf16.msra.mxu0 0
  %3815 = vmatprep.mubr.bf16.mxu0 0
  %3816 = vmatmul.mubr.bf16.gmra.mrb[0].mxu0 %v3781
  %v3817 = vpop.f32.mrb[0].mxu0
  %v3818 = vadd.f32 0.0, %v3817
  %v3819 = vpop.f32.mrb[0].mxu0
  %v3820 = vpop.f32.mrb[0].mxu0
  %v3821 = vadd.f32 0.0, %v3820
  %v3822 = vpop.f32.mrb[0].mxu0
  %3823 = vdwg.mxu0
  %v3824 = vpack.c.bf16 %v3821, %v3818
  %v3826 = vsel %vm2353, %v3824, 0
  %3828 = vmatprep.subr.bf16.mxu0 %v3130
  %3829 = vmatpush1.bf16.msra.mxu0 %v3129
  %3830 = vmatprep.subr.bf16.mxu0 %v3132
  %3831 = vmatpush1.bf16.msra.mxu0 %v3131
  %3832 = vmatprep.subr.bf16.mxu0 %v3134
  %3833 = vmatpush1.bf16.msra.mxu0 %v3133
  %3834 = vmatprep.subr.bf16.mxu0 %v3136
  %3835 = vmatpush1.bf16.msra.mxu0 %v3135
  %3836 = vmatprep.subr.bf16.mxu0 0
  %3837 = vmatpush1.bf16.msra.mxu0 0
  %3838 = vmatprep.subr.bf16.mxu0 0
  %3839 = vmatpush1.bf16.msra.mxu0 0
  %3840 = vmatprep.subr.bf16.mxu0 0
  %3841 = vmatpush1.bf16.msra.mxu0 0
  %3842 = vmatprep.subr.bf16.mxu0 0
  %3843 = vmatpush1.bf16.msra.mxu0 0
  %3844 = vmatprep.subr.bf16.mxu0 0
  %3845 = vmatpush1.bf16.msra.mxu0 0
  %3846 = vmatprep.subr.bf16.mxu0 0
  %3847 = vmatpush1.bf16.msra.mxu0 0
  %3848 = vmatprep.subr.bf16.mxu0 0
  %3849 = vmatpush1.bf16.msra.mxu0 0
  %3850 = vmatprep.subr.bf16.mxu0 0
  %3851 = vmatpush1.bf16.msra.mxu0 0
  %3852 = vmatprep.subr.bf16.mxu0 0
  %3853 = vmatpush1.bf16.msra.mxu0 0
  %3854 = vmatprep.subr.bf16.mxu0 0
  %3855 = vmatpush1.bf16.msra.mxu0 0
  %3856 = vmatprep.subr.bf16.mxu0 0
  %3857 = vmatpush1.bf16.msra.mxu0 0
  %3858 = vmatprep.subr.bf16.mxu0 0
  %3859 = vmatpush1.bf16.msra.mxu0 0
  %3860 = vmatprep.mubr.bf16.mxu0 0
  %3861 = vmatmul.mubr.bf16.gmra.mrb[0].mxu0 %v3826
  %v3862 = vpop.f32.mrb[0].mxu0
  %v3863 = vadd.f32 0.0, %v3862
  %v3864 = vpop.f32.mrb[0].mxu0
  %v3865 = vadd.f32 0.0, %v3864
  %v3866 = vpop.f32.mrb[0].mxu0
  %v3867 = vadd.f32 0.0, %v3866
  %v3868 = vpop.f32.mrb[0].mxu0
  %v3869 = vadd.f32 0.0, %v3868
  %3870 = vdwg.mxu0
  %v3871 = vadd.f32 %v3694, %v3863
  %v3872 = vadd.f32 %v3695, %v3865
  %v3873 = vadd.f32 %v3696, %v3867
  %v3874 = vadd.f32 %v3697, %v3869
  %v3875 = vld [vmem:[%s8] sm:$0x3]
  %v3877 = vlaneseq
  %v3878 = vshrl.u32 %v3877, 7
  %v3879 = vsub.s32 0, %v3878
  %v3880 = vrot.slane %v3875, %v3879
  %v3881 = vlaneseq
  %v3882 = vshrl.u32 %v3881, 7
  %v3883 = vsub.s32 1, %v3882
  %v3884 = vrot.slane %v3875, %v3883
  %v3887 = vadd.f32 %v3191, %v3880
  %v3888 = vadd.f32 %v3192, %v3884
  %v3889 = vadd.f32 %v3193, %v3880
  %v3890 = vadd.f32 %v3194, %v3884
  %v3891 = vadd.f32 %v3871, %v3880
  %v3892 = vadd.f32 %v3872, %v3884
  %v3893 = vadd.f32 %v3873, %v3880
  %v3894 = vadd.f32 %v3874, %v3884
  %v3895 = vadd.f32 %v1486, %v3887
  %v3896 = vadd.f32 %v1487, %v3888
  %v3897 = vadd.f32 %v1488, %v3889
  %v3898 = vadd.f32 %v1489, %v3890
  %v3899 = vadd.f32 %v1534, %v3891
  %v3900 = vadd.f32 %v1535, %v3892
  %v3901 = vadd.f32 %v1536, %v3893
  %v3902 = vadd.f32 %v1537, %v3894
  %v3903 = vadd.f32 %v3895, %v3896
  %3904 = vadd.xlane.f32.xlu0 %v3903
  %v3905 = vpop.xlane.xlu0 %3904
  %v3906 = vadd.f32 %v3897, %v3898
  %3907 = vadd.xlane.f32.xlu0 %v3906
  %v3908 = vpop.xlane.xlu0 %3907
  %v3909 = vadd.f32 %v3899, %v3900
  %3910 = vadd.xlane.f32.xlu0 %v3909
  %v3911 = vpop.xlane.xlu0 %3910
  %v3912 = vadd.f32 %v3901, %v3902
  %3913 = vadd.xlane.f32.xlu0 %v3912
  %v3914 = vpop.xlane.xlu0 %3913
  %v3915 = vrcp.pop 256.0
  %v3916 = vmul.f32 %v3905, %v3915
  %v3917 = vmul.f32 %v3908, %v3915
  %v3918 = vmul.f32 %v3911, %v3915
  %v3919 = vmul.f32 %v3914, %v3915
  %v3920 = vsub.f32 %v3895, %v3916
  %v3921 = vsub.f32 %v3896, %v3916
  %v3922 = vsub.f32 %v3897, %v3917
  %v3923 = vsub.f32 %v3898, %v3917
  %v3924 = vsub.f32 %v3899, %v3918
  %v3925 = vsub.f32 %v3900, %v3918
  %v3926 = vsub.f32 %v3901, %v3919
  %v3927 = vsub.f32 %v3902, %v3919
  %v3928 = vmul.f32 %v3920, %v3920
  %v3929 = vmul.f32 %v3921, %v3921
  %v3930 = vmul.f32 %v3922, %v3922
  %v3931 = vmul.f32 %v3923, %v3923
  %v3932 = vmul.f32 %v3924, %v3924
  %v3933 = vmul.f32 %v3925, %v3925
  %v3934 = vmul.f32 %v3926, %v3926
  %v3935 = vmul.f32 %v3927, %v3927
  %v3936 = vadd.f32 %v3928, %v3929
  %3937 = vadd.xlane.f32.xlu0 %v3936
  %v3938 = vpop.xlane.xlu0 %3937
  %v3939 = vadd.f32 %v3930, %v3931
  %3940 = vadd.xlane.f32.xlu0 %v3939
  %v3941 = vpop.xlane.xlu0 %3940
  %v3942 = vadd.f32 %v3932, %v3933
  %3943 = vadd.xlane.f32.xlu0 %v3942
  %v3944 = vpop.xlane.xlu0 %3943
  %v3945 = vadd.f32 %v3934, %v3935
  %3946 = vadd.xlane.f32.xlu0 %v3945
  %v3947 = vpop.xlane.xlu0 %3946
  %v3948 = vmul.f32 %v3938, %v3915
  %v3949 = vmul.f32 %v3941, %v3915
  %v3950 = vmul.f32 %v3944, %v3915
  %v3951 = vmul.f32 %v3947, %v3915
  %v3952 = vadd.f32 %v3948, 1e-05
  %v3953 = vadd.f32 %v3949, 1e-05
  %v3954 = vadd.f32 %v3950, 1e-05
  %v3955 = vadd.f32 %v3951, 1e-05
  %v3956 = vrsqrt.pop %v3952
  %v3957 = vrsqrt.pop %v3953
  %v3958 = vrsqrt.pop %v3954
  %v3959 = vrsqrt.pop %v3955
  %v3960 = vmul.f32 %v3920, %v3956
  %v3961 = vmul.f32 %v3921, %v3956
  %v3962 = vmul.f32 %v3922, %v3957
  %v3963 = vmul.f32 %v3923, %v3957
  %v3964 = vmul.f32 %v3924, %v3958
  %v3965 = vmul.f32 %v3925, %v3958
  %v3966 = vmul.f32 %v3926, %v3959
  %v3967 = vmul.f32 %v3927, %v3959
  %v3968 = vld [vmem:[%s9] sm:$0x3]
  %v3970 = vlaneseq
  %v3971 = vshrl.u32 %v3970, 7
  %v3972 = vsub.s32 0, %v3971
  %v3973 = vrot.slane %v3968, %v3972
  %v3974 = vlaneseq
  %v3975 = vshrl.u32 %v3974, 7
  %v3976 = vsub.s32 1, %v3975
  %v3977 = vrot.slane %v3968, %v3976
  %v3980 = vmul.f32 %v3960, %v3973
  %v3981 = vmul.f32 %v3961, %v3977
  %v3982 = vmul.f32 %v3962, %v3973
  %v3983 = vmul.f32 %v3963, %v3977
  %v3984 = vmul.f32 %v3964, %v3973
  %v3985 = vmul.f32 %v3965, %v3977
  %v3986 = vmul.f32 %v3966, %v3973
  %v3987 = vmul.f32 %v3967, %v3977
  %v3988 = vld [vmem:[%s10] sm:$0x3]
  %v3990 = vlaneseq
  %v3991 = vshrl.u32 %v3990, 7
  %v3992 = vsub.s32 0, %v3991
  %v3993 = vrot.slane %v3988, %v3992
  %v3994 = vlaneseq
  %v3995 = vshrl.u32 %v3994, 7
  %v3996 = vsub.s32 1, %v3995
  %v3997 = vrot.slane %v3988, %v3996
  %v4000 = vadd.f32 %v3980, %v3993
  %v4001 = vadd.f32 %v3981, %v3997
  %v4002 = vadd.f32 %v3982, %v3993
  %v4003 = vadd.f32 %v3983, %v3997
  %v4004 = vadd.f32 %v3984, %v3993
  %v4005 = vadd.f32 %v3985, %v3997
  %v4006 = vadd.f32 %v3986, %v3993
  %v4007 = vadd.f32 %v3987, %v3997
  %v4008 = vpack.c.bf16 %v4002, %v4000
  %v4009 = vpack.c.bf16 %v4003, %v4001
  %v4010 = vpack.c.bf16 %v4006, %v4004
  %v4011 = vpack.c.bf16 %v4007, %v4005
  %v4012 = vld [vmem:[%s11] sm:$0xff]
  %v4013 = vld [vmem:[%s11 + $0x8] sm:$0xff]
  %v4014 = vld [vmem:[%s11 + $0x10] sm:$0xff]
  %v4015 = vld [vmem:[%s11 + $0x18] sm:$0xff]
  %v4016 = vld [vmem:[%s11 + $0x20] sm:$0xff]
  %v4017 = vld [vmem:[%s11 + $0x28] sm:$0xff]
  %v4018 = vld [vmem:[%s11 + $0x30] sm:$0xff]
  %v4019 = vld [vmem:[%s11 + $0x38] sm:$0xff]
  %v4020 = vld [vmem:[%s11 + $0x40] sm:$0xff]
  %v4021 = vld [vmem:[%s11 + $0x48] sm:$0xff]
  %v4022 = vld [vmem:[%s11 + $0x50] sm:$0xff]
  %v4023 = vld [vmem:[%s11 + $0x58] sm:$0xff]
  %v4024 = vld [vmem:[%s11 + $0x60] sm:$0xff]
  %v4025 = vld [vmem:[%s11 + $0x68] sm:$0xff]
  %v4026 = vld [vmem:[%s11 + $0x70] sm:$0xff]
  %v4027 = vld [vmem:[%s11 + $0x78] sm:$0xff]
  %v4028 = vld [vmem:[%s11 + $0x80] sm:$0xff]
  %v4029 = vld [vmem:[%s11 + $0x88] sm:$0xff]
  %v4030 = vld [vmem:[%s11 + $0x90] sm:$0xff]
  %v4031 = vld [vmem:[%s11 + $0x98] sm:$0xff]
  %v4032 = vld [vmem:[%s11 + $0xa0] sm:$0xff]
  %v4033 = vld [vmem:[%s11 + $0xa8] sm:$0xff]
  %v4034 = vld [vmem:[%s11 + $0xb0] sm:$0xff]
  %v4035 = vld [vmem:[%s11 + $0xb8] sm:$0xff]
  %v4036 = vld [vmem:[%s11 + $0xc0] sm:$0xff]
  %v4037 = vld [vmem:[%s11 + $0xc8] sm:$0xff]
  %v4038 = vld [vmem:[%s11 + $0xd0] sm:$0xff]
  %v4039 = vld [vmem:[%s11 + $0xd8] sm:$0xff]
  %v4040 = vld [vmem:[%s11 + $0xe0] sm:$0xff]
  %v4041 = vld [vmem:[%s11 + $0xe8] sm:$0xff]
  %v4042 = vld [vmem:[%s11 + $0xf0] sm:$0xff]
  %v4043 = vld [vmem:[%s11 + $0xf8] sm:$0xff]
  %v4044 = vld [vmem:[%s11 + $0x100] sm:$0xff]
  %v4045 = vld [vmem:[%s11 + $0x108] sm:$0xff]
  %v4046 = vld [vmem:[%s11 + $0x110] sm:$0xff]
  %v4047 = vld [vmem:[%s11 + $0x118] sm:$0xff]
  %v4048 = vld [vmem:[%s11 + $0x120] sm:$0xff]
  %v4049 = vld [vmem:[%s11 + $0x128] sm:$0xff]
  %v4050 = vld [vmem:[%s11 + $0x130] sm:$0xff]
  %v4051 = vld [vmem:[%s11 + $0x138] sm:$0xff]
  %v4052 = vld [vmem:[%s11 + $0x140] sm:$0xff]
  %v4053 = vld [vmem:[%s11 + $0x148] sm:$0xff]
  %v4054 = vld [vmem:[%s11 + $0x150] sm:$0xff]
  %v4055 = vld [vmem:[%s11 + $0x158] sm:$0xff]
  %v4056 = vld [vmem:[%s11 + $0x160] sm:$0xff]
  %v4057 = vld [vmem:[%s11 + $0x168] sm:$0xff]
  %v4058 = vld [vmem:[%s11 + $0x170] sm:$0xff]
  %v4059 = vld [vmem:[%s11 + $0x178] sm:$0xff]
  %v4060 = vld [vmem:[%s11 + $0x180] sm:$0xff]
  %v4061 = vld [vmem:[%s11 + $0x188] sm:$0xff]
  %v4062 = vld [vmem:[%s11 + $0x190] sm:$0xff]
  %v4063 = vld [vmem:[%s11 + $0x198] sm:$0xff]
  %v4064 = vld [vmem:[%s11 + $0x1a0] sm:$0xff]
  %v4065 = vld [vmem:[%s11 + $0x1a8] sm:$0xff]
  %v4066 = vld [vmem:[%s11 + $0x1b0] sm:$0xff]
  %v4067 = vld [vmem:[%s11 + $0x1b8] sm:$0xff]
  %v4068 = vld [vmem:[%s11 + $0x1c0] sm:$0xff]
  %v4069 = vld [vmem:[%s11 + $0x1c8] sm:$0xff]
  %v4070 = vld [vmem:[%s11 + $0x1d0] sm:$0xff]
  %v4071 = vld [vmem:[%s11 + $0x1d8] sm:$0xff]
  %v4072 = vld [vmem:[%s11 + $0x1e0] sm:$0xff]
  %v4073 = vld [vmem:[%s11 + $0x1e8] sm:$0xff]
  %v4074 = vld [vmem:[%s11 + $0x1f0] sm:$0xff]
  %v4075 = vld [vmem:[%s11 + $0x1f8] sm:$0xff]
  %v4076 = vld [vmem:[%s12] sm:$0xf]
  %v4078 = vlaneseq
  %v4079 = vshrl.u32 %v4078, 7
  %v4080 = vsub.s32 0, %v4079
  %v4081 = vrot.slane %v4076, %v4080
  %v4082 = vlaneseq
  %v4083 = vshrl.u32 %v4082, 7
  %v4084 = vsub.s32 1, %v4083
  %v4085 = vrot.slane %v4076, %v4084
  %v4086 = vlaneseq
  %v4087 = vshrl.u32 %v4086, 7
  %v4088 = vsub.s32 2, %v4087
  %v4089 = vrot.slane %v4076, %v4088
  %v4090 = vlaneseq
  %v4091 = vshrl.u32 %v4090, 7
  %v4092 = vsub.s32 3, %v4091
  %v4093 = vrot.slane %v4076, %v4092
  %v4162 = vunpack.c.l.b16 %v4012
  %v4163 = vunpack.c.h.b16 %v4012
  %v4164 = vunpack.c.l.b16 %v4013
  %v4165 = vunpack.c.h.b16 %v4013
  %v4166 = vunpack.c.l.b16 %v4014
  %v4167 = vunpack.c.h.b16 %v4014
  %v4168 = vunpack.c.l.b16 %v4015
  %v4169 = vunpack.c.h.b16 %v4015
  %v4170 = vunpack.c.l.b16 %v4016
  %v4171 = vunpack.c.h.b16 %v4016
  %v4172 = vunpack.c.l.b16 %v4017
  %v4173 = vunpack.c.h.b16 %v4017
  %v4174 = vunpack.c.l.b16 %v4018
  %v4175 = vunpack.c.h.b16 %v4018
  %v4176 = vunpack.c.l.b16 %v4019
  %v4177 = vunpack.c.h.b16 %v4019
  %v4178 = vunpack.c.l.b16 %v4020
  %v4179 = vunpack.c.h.b16 %v4020
  %v4180 = vunpack.c.l.b16 %v4021
  %v4181 = vunpack.c.h.b16 %v4021
  %v4182 = vunpack.c.l.b16 %v4022
  %v4183 = vunpack.c.h.b16 %v4022
  %v4184 = vunpack.c.l.b16 %v4023
  %v4185 = vunpack.c.h.b16 %v4023
  %v4186 = vunpack.c.l.b16 %v4024
  %v4187 = vunpack.c.h.b16 %v4024
  %v4188 = vunpack.c.l.b16 %v4025
  %v4189 = vunpack.c.h.b16 %v4025
  %v4190 = vunpack.c.l.b16 %v4026
  %v4191 = vunpack.c.h.b16 %v4026
  %v4192 = vunpack.c.l.b16 %v4027
  %v4193 = vunpack.c.h.b16 %v4027
  %v4194 = vunpack.c.l.b16 %v4028
  %v4195 = vunpack.c.h.b16 %v4028
  %v4196 = vunpack.c.l.b16 %v4029
  %v4197 = vunpack.c.h.b16 %v4029
  %v4198 = vunpack.c.l.b16 %v4030
  %v4199 = vunpack.c.h.b16 %v4030
  %v4200 = vunpack.c.l.b16 %v4031
  %v4201 = vunpack.c.h.b16 %v4031
  %v4202 = vunpack.c.l.b16 %v4032
  %v4203 = vunpack.c.h.b16 %v4032
  %v4204 = vunpack.c.l.b16 %v4033
  %v4205 = vunpack.c.h.b16 %v4033
  %v4206 = vunpack.c.l.b16 %v4034
  %v4207 = vunpack.c.h.b16 %v4034
  %v4208 = vunpack.c.l.b16 %v4035
  %v4209 = vunpack.c.h.b16 %v4035
  %v4210 = vunpack.c.l.b16 %v4036
  %v4211 = vunpack.c.h.b16 %v4036
  %v4212 = vunpack.c.l.b16 %v4037
  %v4213 = vunpack.c.h.b16 %v4037
  %v4214 = vunpack.c.l.b16 %v4038
  %v4215 = vunpack.c.h.b16 %v4038
  %v4216 = vunpack.c.l.b16 %v4039
  %v4217 = vunpack.c.h.b16 %v4039
  %v4218 = vunpack.c.l.b16 %v4040
  %v4219 = vunpack.c.h.b16 %v4040
  %v4220 = vunpack.c.l.b16 %v4041
  %v4221 = vunpack.c.h.b16 %v4041
  %v4222 = vunpack.c.l.b16 %v4042
  %v4223 = vunpack.c.h.b16 %v4042
  %v4224 = vunpack.c.l.b16 %v4043
  %v4225 = vunpack.c.h.b16 %v4043
  %v4226 = vunpack.c.l.b16 %v4044
  %v4227 = vunpack.c.h.b16 %v4044
  %v4228 = vunpack.c.l.b16 %v4045
  %v4229 = vunpack.c.h.b16 %v4045
  %v4230 = vunpack.c.l.b16 %v4046
  %v4231 = vunpack.c.h.b16 %v4046
  %v4232 = vunpack.c.l.b16 %v4047
  %v4233 = vunpack.c.h.b16 %v4047
  %v4234 = vunpack.c.l.b16 %v4048
  %v4235 = vunpack.c.h.b16 %v4048
  %v4236 = vunpack.c.l.b16 %v4049
  %v4237 = vunpack.c.h.b16 %v4049
  %v4238 = vunpack.c.l.b16 %v4050
  %v4239 = vunpack.c.h.b16 %v4050
  %v4240 = vunpack.c.l.b16 %v4051
  %v4241 = vunpack.c.h.b16 %v4051
  %v4242 = vunpack.c.l.b16 %v4052
  %v4243 = vunpack.c.h.b16 %v4052
  %v4244 = vunpack.c.l.b16 %v4053
  %v4245 = vunpack.c.h.b16 %v4053
  %v4246 = vunpack.c.l.b16 %v4054
  %v4247 = vunpack.c.h.b16 %v4054
  %v4248 = vunpack.c.l.b16 %v4055
  %v4249 = vunpack.c.h.b16 %v4055
  %v4250 = vunpack.c.l.b16 %v4056
  %v4251 = vunpack.c.h.b16 %v4056
  %v4252 = vunpack.c.l.b16 %v4057
  %v4253 = vunpack.c.h.b16 %v4057
  %v4254 = vunpack.c.l.b16 %v4058
  %v4255 = vunpack.c.h.b16 %v4058
  %v4256 = vunpack.c.l.b16 %v4059
  %v4257 = vunpack.c.h.b16 %v4059
  %v4258 = vunpack.c.l.b16 %v4060
  %v4259 = vunpack.c.h.b16 %v4060
  %v4260 = vunpack.c.l.b16 %v4061
  %v4261 = vunpack.c.h.b16 %v4061
  %v4262 = vunpack.c.l.b16 %v4062
  %v4263 = vunpack.c.h.b16 %v4062
  %v4264 = vunpack.c.l.b16 %v4063
  %v4265 = vunpack.c.h.b16 %v4063
  %v4266 = vunpack.c.l.b16 %v4064
  %v4267 = vunpack.c.h.b16 %v4064
  %v4268 = vunpack.c.l.b16 %v4065
  %v4269 = vunpack.c.h.b16 %v4065
  %v4270 = vunpack.c.l.b16 %v4066
  %v4271 = vunpack.c.h.b16 %v4066
  %v4272 = vunpack.c.l.b16 %v4067
  %v4273 = vunpack.c.h.b16 %v4067
  %v4274 = vunpack.c.l.b16 %v4068
  %v4275 = vunpack.c.h.b16 %v4068
  %v4276 = vunpack.c.l.b16 %v4069
  %v4277 = vunpack.c.h.b16 %v4069
  %v4278 = vunpack.c.l.b16 %v4070
  %v4279 = vunpack.c.h.b16 %v4070
  %v4280 = vunpack.c.l.b16 %v4071
  %v4281 = vunpack.c.h.b16 %v4071
  %v4282 = vunpack.c.l.b16 %v4072
  %v4283 = vunpack.c.h.b16 %v4072
  %v4284 = vunpack.c.l.b16 %v4073
  %v4285 = vunpack.c.h.b16 %v4073
  %v4286 = vunpack.c.l.b16 %v4074
  %v4287 = vunpack.c.h.b16 %v4074
  %v4288 = vunpack.c.l.b16 %v4075
  %v4289 = vunpack.c.h.b16 %v4075
  %v4290 = vpack.c.b16 %v4166, %v4162
  %v4291 = vpack.c.b16 %v4167, %v4163
  %v4292 = vpack.c.b16 %v4168, %v4164
  %v4293 = vpack.c.b16 %v4169, %v4165
  %v4294 = vpack.c.b16 %v4174, %v4170
  %v4295 = vpack.c.b16 %v4175, %v4171
  %v4296 = vpack.c.b16 %v4176, %v4172
  %v4297 = vpack.c.b16 %v4177, %v4173
  %v4298 = vpack.c.b16 %v4182, %v4178
  %v4299 = vpack.c.b16 %v4183, %v4179
  %v4300 = vpack.c.b16 %v4184, %v4180
  %v4301 = vpack.c.b16 %v4185, %v4181
  %v4302 = vpack.c.b16 %v4190, %v4186
  %v4303 = vpack.c.b16 %v4191, %v4187
  %v4304 = vpack.c.b16 %v4192, %v4188
  %v4305 = vpack.c.b16 %v4193, %v4189
  %v4306 = vpack.c.b16 %v4198, %v4194
  %v4307 = vpack.c.b16 %v4199, %v4195
  %v4308 = vpack.c.b16 %v4200, %v4196
  %v4309 = vpack.c.b16 %v4201, %v4197
  %v4310 = vpack.c.b16 %v4206, %v4202
  %v4311 = vpack.c.b16 %v4207, %v4203
  %v4312 = vpack.c.b16 %v4208, %v4204
  %v4313 = vpack.c.b16 %v4209, %v4205
  %v4314 = vpack.c.b16 %v4214, %v4210
  %v4315 = vpack.c.b16 %v4215, %v4211
  %v4316 = vpack.c.b16 %v4216, %v4212
  %v4317 = vpack.c.b16 %v4217, %v4213
  %v4318 = vpack.c.b16 %v4222, %v4218
  %v4319 = vpack.c.b16 %v4223, %v4219
  %v4320 = vpack.c.b16 %v4224, %v4220
  %v4321 = vpack.c.b16 %v4225, %v4221
  %v4322 = vpack.c.b16 %v4230, %v4226
  %v4323 = vpack.c.b16 %v4231, %v4227
  %v4324 = vpack.c.b16 %v4232, %v4228
  %v4325 = vpack.c.b16 %v4233, %v4229
  %v4326 = vpack.c.b16 %v4238, %v4234
  %v4327 = vpack.c.b16 %v4239, %v4235
  %v4328 = vpack.c.b16 %v4240, %v4236
  %v4329 = vpack.c.b16 %v4241, %v4237
  %v4330 = vpack.c.b16 %v4246, %v4242
  %v4331 = vpack.c.b16 %v4247, %v4243
  %v4332 = vpack.c.b16 %v4248, %v4244
  %v4333 = vpack.c.b16 %v4249, %v4245
  %v4334 = vpack.c.b16 %v4254, %v4250
  %v4335 = vpack.c.b16 %v4255, %v4251
  %v4336 = vpack.c.b16 %v4256, %v4252
  %v4337 = vpack.c.b16 %v4257, %v4253
  %v4338 = vpack.c.b16 %v4262, %v4258
  %v4339 = vpack.c.b16 %v4263, %v4259
  %v4340 = vpack.c.b16 %v4264, %v4260
  %v4341 = vpack.c.b16 %v4265, %v4261
  %v4342 = vpack.c.b16 %v4270, %v4266
  %v4343 = vpack.c.b16 %v4271, %v4267
  %v4344 = vpack.c.b16 %v4272, %v4268
  %v4345 = vpack.c.b16 %v4273, %v4269
  %v4346 = vpack.c.b16 %v4278, %v4274
  %v4347 = vpack.c.b16 %v4279, %v4275
  %v4348 = vpack.c.b16 %v4280, %v4276
  %v4349 = vpack.c.b16 %v4281, %v4277
  %v4350 = vpack.c.b16 %v4286, %v4282
  %v4351 = vpack.c.b16 %v4287, %v4283
  %v4352 = vpack.c.b16 %v4288, %v4284
  %v4353 = vpack.c.b16 %v4289, %v4285
  %4418 = vmatprep.subr.bf16.mxu0 %v4291
  %4419 = vmatpush1.bf16.msra.mxu0 %v4290
  %4420 = vmatprep.subr.bf16.mxu0 %v4295
  %4421 = vmatpush1.bf16.msra.mxu0 %v4294
  %4422 = vmatprep.subr.bf16.mxu0 %v4299
  %4423 = vmatpush1.bf16.msra.mxu0 %v4298
  %4424 = vmatprep.subr.bf16.mxu0 %v4303
  %4425 = vmatpush1.bf16.msra.mxu0 %v4302
  %4426 = vmatprep.subr.bf16.mxu0 %v4307
  %4427 = vmatpush1.bf16.msra.mxu0 %v4306
  %4428 = vmatprep.subr.bf16.mxu0 %v4311
  %4429 = vmatpush1.bf16.msra.mxu0 %v4310
  %4430 = vmatprep.subr.bf16.mxu0 %v4315
  %4431 = vmatpush1.bf16.msra.mxu0 %v4314
  %4432 = vmatprep.subr.bf16.mxu0 %v4319
  %4433 = vmatpush1.bf16.msra.mxu0 %v4318
  %4434 = vmatprep.subr.bf16.mxu0 %v4323
  %4435 = vmatpush1.bf16.msra.mxu0 %v4322
  %4436 = vmatprep.subr.bf16.mxu0 %v4327
  %4437 = vmatpush1.bf16.msra.mxu0 %v4326
  %4438 = vmatprep.subr.bf16.mxu0 %v4331
  %4439 = vmatpush1.bf16.msra.mxu0 %v4330
  %4440 = vmatprep.subr.bf16.mxu0 %v4335
  %4441 = vmatpush1.bf16.msra.mxu0 %v4334
  %4442 = vmatprep.subr.bf16.mxu0 %v4339
  %4443 = vmatpush1.bf16.msra.mxu0 %v4338
  %4444 = vmatprep.subr.bf16.mxu0 %v4343
  %4445 = vmatpush1.bf16.msra.mxu0 %v4342
  %4446 = vmatprep.subr.bf16.mxu0 %v4347
  %4447 = vmatpush1.bf16.msra.mxu0 %v4346
  %4448 = vmatprep.subr.bf16.mxu0 %v4351
  %4449 = vmatpush1.bf16.msra.mxu0 %v4350
  %4450 = vmatprep.mubr.bf16.mxu0 %v4009
  %4451 = vmatmul.mubr.bf16.gmra.mrb[0].mxu0 %v4008
  %v4452 = vpop.f32.mrb[0].mxu0
  %v4453 = vadd.f32 %v4081, %v4452
  %v4454 = vpop.f32.mrb[0].mxu0
  %v4455 = vadd.f32 %v4085, %v4454
  %v4456 = vpop.f32.mrb[0].mxu0
  %v4457 = vadd.f32 %v4081, %v4456
  %v4458 = vpop.f32.mrb[0].mxu0
  %v4459 = vadd.f32 %v4085, %v4458
  %4460 = vmatprep.mubr.bf16.mxu0 %v4011
  %4461 = vmatmul.mubr.bf16.gmra.mrb[0].mxu0 %v4010
  %v4462 = vpop.f32.mrb[0].mxu0
  %v4463 = vadd.f32 %v4081, %v4462
  %v4464 = vpop.f32.mrb[0].mxu0
  %v4465 = vadd.f32 %v4085, %v4464
  %v4466 = vpop.f32.mrb[0].mxu0
  %v4467 = vadd.f32 %v4081, %v4466
  %v4468 = vpop.f32.mrb[0].mxu0
  %v4469 = vadd.f32 %v4085, %v4468
  %4470 = vdwg.mxu0
  %4471 = vmatprep.subr.bf16.mxu0 %v4293
  %4472 = vmatpush1.bf16.msra.mxu0 %v4292
  %4473 = vmatprep.subr.bf16.mxu0 %v4297
  %4474 = vmatpush1.bf16.msra.mxu0 %v4296
  %4475 = vmatprep.subr.bf16.mxu0 %v4301
  %4476 = vmatpush1.bf16.msra.mxu0 %v4300
  %4477 = vmatprep.subr.bf16.mxu0 %v4305
  %4478 = vmatpush1.bf16.msra.mxu0 %v4304
  %4479 = vmatprep.subr.bf16.mxu0 %v4309
  %4480 = vmatpush1.bf16.msra.mxu0 %v4308
  %4481 = vmatprep.subr.bf16.mxu0 %v4313
  %4482 = vmatpush1.bf16.msra.mxu0 %v4312
  %4483 = vmatprep.subr.bf16.mxu0 %v4317
  %4484 = vmatpush1.bf16.msra.mxu0 %v4316
  %4485 = vmatprep.subr.bf16.mxu0 %v4321
  %4486 = vmatpush1.bf16.msra.mxu0 %v4320
  %4487 = vmatprep.subr.bf16.mxu0 %v4325
  %4488 = vmatpush1.bf16.msra.mxu0 %v4324
  %4489 = vmatprep.subr.bf16.mxu0 %v4329
  %4490 = vmatpush1.bf16.msra.mxu0 %v4328
  %4491 = vmatprep.subr.bf16.mxu0 %v4333
  %4492 = vmatpush1.bf16.msra.mxu0 %v4332
  %4493 = vmatprep.subr.bf16.mxu0 %v4337
  %4494 = vmatpush1.bf16.msra.mxu0 %v4336
  %4495 = vmatprep.subr.bf16.mxu0 %v4341
  %4496 = vmatpush1.bf16.msra.mxu0 %v4340
  %4497 = vmatprep.subr.bf16.mxu0 %v4345
  %4498 = vmatpush1.bf16.msra.mxu0 %v4344
  %4499 = vmatprep.subr.bf16.mxu0 %v4349
  %4500 = vmatpush1.bf16.msra.mxu0 %v4348
  %4501 = vmatprep.subr.bf16.mxu0 %v4353
  %4502 = vmatpush1.bf16.msra.mxu0 %v4352
  %4503 = vmatprep.mubr.bf16.mxu0 %v4009
  %4504 = vmatmul.mubr.bf16.gmra.mrb[0].mxu0 %v4008
  %v4505 = vpop.f32.mrb[0].mxu0
  %v4506 = vadd.f32 %v4089, %v4505
  %v4507 = vpop.f32.mrb[0].mxu0
  %v4508 = vadd.f32 %v4093, %v4507
  %v4509 = vpop.f32.mrb[0].mxu0
  %v4510 = vadd.f32 %v4089, %v4509
  %v4511 = vpop.f32.mrb[0].mxu0
  %v4512 = vadd.f32 %v4093, %v4511
  %4513 = vmatprep.mubr.bf16.mxu0 %v4011
  %4514 = vmatmul.mubr.bf16.gmra.mrb[0].mxu0 %v4010
  %v4515 = vpop.f32.mrb[0].mxu0
  %v4516 = vadd.f32 %v4089, %v4515
  %v4517 = vpop.f32.mrb[0].mxu0
  %v4518 = vadd.f32 %v4093, %v4517
  %v4519 = vpop.f32.mrb[0].mxu0
  %v4520 = vadd.f32 %v4089, %v4519
  %v4521 = vpop.f32.mrb[0].mxu0
  %v4522 = vadd.f32 %v4093, %v4521
  %4523 = vdwg.mxu0
  %v4524 = vmax.f32 %v4453, 0.0
  %v4525 = vmax.f32 %v4455, 0.0
  %v4526 = vmax.f32 %v4506, 0.0
  %v4527 = vmax.f32 %v4508, 0.0
  %v4528 = vmax.f32 %v4457, 0.0
  %v4529 = vmax.f32 %v4459, 0.0
  %v4530 = vmax.f32 %v4510, 0.0
  %v4531 = vmax.f32 %v4512, 0.0
  %v4532 = vmax.f32 %v4463, 0.0
  %v4533 = vmax.f32 %v4465, 0.0
  %v4534 = vmax.f32 %v4516, 0.0
  %v4535 = vmax.f32 %v4518, 0.0
  %v4536 = vmax.f32 %v4467, 0.0
  %v4537 = vmax.f32 %v4469, 0.0
  %v4538 = vmax.f32 %v4520, 0.0
  %v4539 = vmax.f32 %v4522, 0.0
  %v4540 = vpack.c.bf16 %v4528, %v4524
  %v4541 = vpack.c.bf16 %v4529, %v4525
  %v4542 = vpack.c.bf16 %v4530, %v4526
  %v4543 = vpack.c.bf16 %v4531, %v4527
  %v4544 = vpack.c.bf16 %v4536, %v4532
  %v4545 = vpack.c.bf16 %v4537, %v4533
  %v4546 = vpack.c.bf16 %v4538, %v4534
  %v4547 = vpack.c.bf16 %v4539, %v4535
  %v4548 = vld [vmem:[%s13] sm:$0xff]
  %v4549 = vld [vmem:[%s13 + $0x8] sm:$0xff]
  %v4550 = vld [vmem:[%s13 + $0x10] sm:$0xff]
  %v4551 = vld [vmem:[%s13 + $0x18] sm:$0xff]
  %v4552 = vld [vmem:[%s13 + $0x20] sm:$0xff]
  %v4553 = vld [vmem:[%s13 + $0x28] sm:$0xff]
  %v4554 = vld [vmem:[%s13 + $0x30] sm:$0xff]
  %v4555 = vld [vmem:[%s13 + $0x38] sm:$0xff]
  %v4556 = vld [vmem:[%s13 + $0x40] sm:$0xff]
  %v4557 = vld [vmem:[%s13 + $0x48] sm:$0xff]
  %v4558 = vld [vmem:[%s13 + $0x50] sm:$0xff]
  %v4559 = vld [vmem:[%s13 + $0x58] sm:$0xff]
  %v4560 = vld [vmem:[%s13 + $0x60] sm:$0xff]
  %v4561 = vld [vmem:[%s13 + $0x68] sm:$0xff]
  %v4562 = vld [vmem:[%s13 + $0x70] sm:$0xff]
  %v4563 = vld [vmem:[%s13 + $0x78] sm:$0xff]
  %v4564 = vld [vmem:[%s13 + $0x80] sm:$0xff]
  %v4565 = vld [vmem:[%s13 + $0x88] sm:$0xff]
  %v4566 = vld [vmem:[%s13 + $0x90] sm:$0xff]
  %v4567 = vld [vmem:[%s13 + $0x98] sm:$0xff]
  %v4568 = vld [vmem:[%s13 + $0xa0] sm:$0xff]
  %v4569 = vld [vmem:[%s13 + $0xa8] sm:$0xff]
  %v4570 = vld [vmem:[%s13 + $0xb0] sm:$0xff]
  %v4571 = vld [vmem:[%s13 + $0xb8] sm:$0xff]
  %v4572 = vld [vmem:[%s13 + $0xc0] sm:$0xff]
  %v4573 = vld [vmem:[%s13 + $0xc8] sm:$0xff]
  %v4574 = vld [vmem:[%s13 + $0xd0] sm:$0xff]
  %v4575 = vld [vmem:[%s13 + $0xd8] sm:$0xff]
  %v4576 = vld [vmem:[%s13 + $0xe0] sm:$0xff]
  %v4577 = vld [vmem:[%s13 + $0xe8] sm:$0xff]
  %v4578 = vld [vmem:[%s13 + $0xf0] sm:$0xff]
  %v4579 = vld [vmem:[%s13 + $0xf8] sm:$0xff]
  %v4580 = vld [vmem:[%s13 + $0x100] sm:$0xff]
  %v4581 = vld [vmem:[%s13 + $0x108] sm:$0xff]
  %v4582 = vld [vmem:[%s13 + $0x110] sm:$0xff]
  %v4583 = vld [vmem:[%s13 + $0x118] sm:$0xff]
  %v4584 = vld [vmem:[%s13 + $0x120] sm:$0xff]
  %v4585 = vld [vmem:[%s13 + $0x128] sm:$0xff]
  %v4586 = vld [vmem:[%s13 + $0x130] sm:$0xff]
  %v4587 = vld [vmem:[%s13 + $0x138] sm:$0xff]
  %v4588 = vld [vmem:[%s13 + $0x140] sm:$0xff]
  %v4589 = vld [vmem:[%s13 + $0x148] sm:$0xff]
  %v4590 = vld [vmem:[%s13 + $0x150] sm:$0xff]
  %v4591 = vld [vmem:[%s13 + $0x158] sm:$0xff]
  %v4592 = vld [vmem:[%s13 + $0x160] sm:$0xff]
  %v4593 = vld [vmem:[%s13 + $0x168] sm:$0xff]
  %v4594 = vld [vmem:[%s13 + $0x170] sm:$0xff]
  %v4595 = vld [vmem:[%s13 + $0x178] sm:$0xff]
  %v4596 = vld [vmem:[%s13 + $0x180] sm:$0xff]
  %v4597 = vld [vmem:[%s13 + $0x188] sm:$0xff]
  %v4598 = vld [vmem:[%s13 + $0x190] sm:$0xff]
  %v4599 = vld [vmem:[%s13 + $0x198] sm:$0xff]
  %v4600 = vld [vmem:[%s13 + $0x1a0] sm:$0xff]
  %v4601 = vld [vmem:[%s13 + $0x1a8] sm:$0xff]
  %v4602 = vld [vmem:[%s13 + $0x1b0] sm:$0xff]
  %v4603 = vld [vmem:[%s13 + $0x1b8] sm:$0xff]
  %v4604 = vld [vmem:[%s13 + $0x1c0] sm:$0xff]
  %v4605 = vld [vmem:[%s13 + $0x1c8] sm:$0xff]
  %v4606 = vld [vmem:[%s13 + $0x1d0] sm:$0xff]
  %v4607 = vld [vmem:[%s13 + $0x1d8] sm:$0xff]
  %v4608 = vld [vmem:[%s13 + $0x1e0] sm:$0xff]
  %v4609 = vld [vmem:[%s13 + $0x1e8] sm:$0xff]
  %v4610 = vld [vmem:[%s13 + $0x1f0] sm:$0xff]
  %v4611 = vld [vmem:[%s13 + $0x1f8] sm:$0xff]
  %v4612 = vld [vmem:[%s14] sm:$0x3]
  %v4614 = vlaneseq
  %v4615 = vshrl.u32 %v4614, 7
  %v4616 = vsub.s32 0, %v4615
  %v4617 = vrot.slane %v4612, %v4616
  %v4618 = vlaneseq
  %v4619 = vshrl.u32 %v4618, 7
  %v4620 = vsub.s32 1, %v4619
  %v4621 = vrot.slane %v4612, %v4620
  %v4688 = vunpack.c.l.b16 %v4548
  %v4689 = vunpack.c.h.b16 %v4548
  %v4690 = vunpack.c.l.b16 %v4549
  %v4691 = vunpack.c.h.b16 %v4549
  %v4692 = vunpack.c.l.b16 %v4550
  %v4693 = vunpack.c.h.b16 %v4550
  %v4694 = vunpack.c.l.b16 %v4551
  %v4695 = vunpack.c.h.b16 %v4551
  %v4696 = vunpack.c.l.b16 %v4552
  %v4697 = vunpack.c.h.b16 %v4552
  %v4698 = vunpack.c.l.b16 %v4553
  %v4699 = vunpack.c.h.b16 %v4553
  %v4700 = vunpack.c.l.b16 %v4554
  %v4701 = vunpack.c.h.b16 %v4554
  %v4702 = vunpack.c.l.b16 %v4555
  %v4703 = vunpack.c.h.b16 %v4555
  %v4704 = vunpack.c.l.b16 %v4556
  %v4705 = vunpack.c.h.b16 %v4556
  %v4706 = vunpack.c.l.b16 %v4557
  %v4707 = vunpack.c.h.b16 %v4557
  %v4708 = vunpack.c.l.b16 %v4558
  %v4709 = vunpack.c.h.b16 %v4558
  %v4710 = vunpack.c.l.b16 %v4559
  %v4711 = vunpack.c.h.b16 %v4559
  %v4712 = vunpack.c.l.b16 %v4560
  %v4713 = vunpack.c.h.b16 %v4560
  %v4714 = vunpack.c.l.b16 %v4561
  %v4715 = vunpack.c.h.b16 %v4561
  %v4716 = vunpack.c.l.b16 %v4562
  %v4717 = vunpack.c.h.b16 %v4562
  %v4718 = vunpack.c.l.b16 %v4563
  %v4719 = vunpack.c.h.b16 %v4563
  %v4720 = vunpack.c.l.b16 %v4564
  %v4721 = vunpack.c.h.b16 %v4564
  %v4722 = vunpack.c.l.b16 %v4565
  %v4723 = vunpack.c.h.b16 %v4565
  %v4724 = vunpack.c.l.b16 %v4566
  %v4725 = vunpack.c.h.b16 %v4566
  %v4726 = vunpack.c.l.b16 %v4567
  %v4727 = vunpack.c.h.b16 %v4567
  %v4728 = vunpack.c.l.b16 %v4568
  %v4729 = vunpack.c.h.b16 %v4568
  %v4730 = vunpack.c.l.b16 %v4569
  %v4731 = vunpack.c.h.b16 %v4569
  %v4732 = vunpack.c.l.b16 %v4570
  %v4733 = vunpack.c.h.b16 %v4570
  %v4734 = vunpack.c.l.b16 %v4571
  %v4735 = vunpack.c.h.b16 %v4571
  %v4736 = vunpack.c.l.b16 %v4572
  %v4737 = vunpack.c.h.b16 %v4572
  %v4738 = vunpack.c.l.b16 %v4573
  %v4739 = vunpack.c.h.b16 %v4573
  %v4740 = vunpack.c.l.b16 %v4574
  %v4741 = vunpack.c.h.b16 %v4574
  %v4742 = vunpack.c.l.b16 %v4575
  %v4743 = vunpack.c.h.b16 %v4575
  %v4744 = vunpack.c.l.b16 %v4576
  %v4745 = vunpack.c.h.b16 %v4576
  %v4746 = vunpack.c.l.b16 %v4577
  %v4747 = vunpack.c.h.b16 %v4577
  %v4748 = vunpack.c.l.b16 %v4578
  %v4749 = vunpack.c.h.b16 %v4578
  %v4750 = vunpack.c.l.b16 %v4579
  %v4751 = vunpack.c.h.b16 %v4579
  %v4752 = vunpack.c.l.b16 %v4580
  %v4753 = vunpack.c.h.b16 %v4580
  %v4754 = vunpack.c.l.b16 %v4581
  %v4755 = vunpack.c.h.b16 %v4581
  %v4756 = vunpack.c.l.b16 %v4582
  %v4757 = vunpack.c.h.b16 %v4582
  %v4758 = vunpack.c.l.b16 %v4583
  %v4759 = vunpack.c.h.b16 %v4583
  %v4760 = vunpack.c.l.b16 %v4584
  %v4761 = vunpack.c.h.b16 %v4584
  %v4762 = vunpack.c.l.b16 %v4585
  %v4763 = vunpack.c.h.b16 %v4585
  %v4764 = vunpack.c.l.b16 %v4586
  %v4765 = vunpack.c.h.b16 %v4586
  %v4766 = vunpack.c.l.b16 %v4587
  %v4767 = vunpack.c.h.b16 %v4587
  %v4768 = vunpack.c.l.b16 %v4588
  %v4769 = vunpack.c.h.b16 %v4588
  %v4770 = vunpack.c.l.b16 %v4589
  %v4771 = vunpack.c.h.b16 %v4589
  %v4772 = vunpack.c.l.b16 %v4590
  %v4773 = vunpack.c.h.b16 %v4590
  %v4774 = vunpack.c.l.b16 %v4591
  %v4775 = vunpack.c.h.b16 %v4591
  %v4776 = vunpack.c.l.b16 %v4592
  %v4777 = vunpack.c.h.b16 %v4592
  %v4778 = vunpack.c.l.b16 %v4593
  %v4779 = vunpack.c.h.b16 %v4593
  %v4780 = vunpack.c.l.b16 %v4594
  %v4781 = vunpack.c.h.b16 %v4594
  %v4782 = vunpack.c.l.b16 %v4595
  %v4783 = vunpack.c.h.b16 %v4595
  %v4784 = vunpack.c.l.b16 %v4596
  %v4785 = vunpack.c.h.b16 %v4596
  %v4786 = vunpack.c.l.b16 %v4597
  %v4787 = vunpack.c.h.b16 %v4597
  %v4788 = vunpack.c.l.b16 %v4598
  %v4789 = vunpack.c.h.b16 %v4598
  %v4790 = vunpack.c.l.b16 %v4599
  %v4791 = vunpack.c.h.b16 %v4599
  %v4792 = vunpack.c.l.b16 %v4600
  %v4793 = vunpack.c.h.b16 %v4600
  %v4794 = vunpack.c.l.b16 %v4601
  %v4795 = vunpack.c.h.b16 %v4601
  %v4796 = vunpack.c.l.b16 %v4602
  %v4797 = vunpack.c.h.b16 %v4602
  %v4798 = vunpack.c.l.b16 %v4603
  %v4799 = vunpack.c.h.b16 %v4603
  %v4800 = vunpack.c.l.b16 %v4604
  %v4801 = vunpack.c.h.b16 %v4604
  %v4802 = vunpack.c.l.b16 %v4605
  %v4803 = vunpack.c.h.b16 %v4605
  %v4804 = vunpack.c.l.b16 %v4606
  %v4805 = vunpack.c.h.b16 %v4606
  %v4806 = vunpack.c.l.b16 %v4607
  %v4807 = vunpack.c.h.b16 %v4607
  %v4808 = vunpack.c.l.b16 %v4608
  %v4809 = vunpack.c.h.b16 %v4608
  %v4810 = vunpack.c.l.b16 %v4609
  %v4811 = vunpack.c.h.b16 %v4609
  %v4812 = vunpack.c.l.b16 %v4610
  %v4813 = vunpack.c.h.b16 %v4610
  %v4814 = vunpack.c.l.b16 %v4611
  %v4815 = vunpack.c.h.b16 %v4611
  %v4816 = vpack.c.b16 %v4690, %v4688
  %v4817 = vpack.c.b16 %v4691, %v4689
  %v4818 = vpack.c.b16 %v4694, %v4692
  %v4819 = vpack.c.b16 %v4695, %v4693
  %v4820 = vpack.c.b16 %v4698, %v4696
  %v4821 = vpack.c.b16 %v4699, %v4697
  %v4822 = vpack.c.b16 %v4702, %v4700
  %v4823 = vpack.c.b16 %v4703, %v4701
  %v4824 = vpack.c.b16 %v4706, %v4704
  %v4825 = vpack.c.b16 %v4707, %v4705
  %v4826 = vpack.c.b16 %v4710, %v4708
  %v4827 = vpack.c.b16 %v4711, %v4709
  %v4828 = vpack.c.b16 %v4714, %v4712
  %v4829 = vpack.c.b16 %v4715, %v4713
  %v4830 = vpack.c.b16 %v4718, %v4716
  %v4831 = vpack.c.b16 %v4719, %v4717
  %v4832 = vpack.c.b16 %v4722, %v4720
  %v4833 = vpack.c.b16 %v4723, %v4721
  %v4834 = vpack.c.b16 %v4726, %v4724
  %v4835 = vpack.c.b16 %v4727, %v4725
  %v4836 = vpack.c.b16 %v4730, %v4728
  %v4837 = vpack.c.b16 %v4731, %v4729
  %v4838 = vpack.c.b16 %v4734, %v4732
  %v4839 = vpack.c.b16 %v4735, %v4733
  %v4840 = vpack.c.b16 %v4738, %v4736
  %v4841 = vpack.c.b16 %v4739, %v4737
  %v4842 = vpack.c.b16 %v4742, %v4740
  %v4843 = vpack.c.b16 %v4743, %v4741
  %v4844 = vpack.c.b16 %v4746, %v4744
  %v4845 = vpack.c.b16 %v4747, %v4745
  %v4846 = vpack.c.b16 %v4750, %v4748
  %v4847 = vpack.c.b16 %v4751, %v4749
  %v4848 = vpack.c.b16 %v4754, %v4752
  %v4849 = vpack.c.b16 %v4755, %v4753
  %v4850 = vpack.c.b16 %v4758, %v4756
  %v4851 = vpack.c.b16 %v4759, %v4757
  %v4852 = vpack.c.b16 %v4762, %v4760
  %v4853 = vpack.c.b16 %v4763, %v4761
  %v4854 = vpack.c.b16 %v4766, %v4764
  %v4855 = vpack.c.b16 %v4767, %v4765
  %v4856 = vpack.c.b16 %v4770, %v4768
  %v4857 = vpack.c.b16 %v4771, %v4769
  %v4858 = vpack.c.b16 %v4774, %v4772
  %v4859 = vpack.c.b16 %v4775, %v4773
  %v4860 = vpack.c.b16 %v4778, %v4776
  %v4861 = vpack.c.b16 %v4779, %v4777
  %v4862 = vpack.c.b16 %v4782, %v4780
  %v4863 = vpack.c.b16 %v4783, %v4781
  %v4864 = vpack.c.b16 %v4786, %v4784
  %v4865 = vpack.c.b16 %v4787, %v4785
  %v4866 = vpack.c.b16 %v4790, %v4788
  %v4867 = vpack.c.b16 %v4791, %v4789
  %v4868 = vpack.c.b16 %v4794, %v4792
  %v4869 = vpack.c.b16 %v4795, %v4793
  %v4870 = vpack.c.b16 %v4798, %v4796
  %v4871 = vpack.c.b16 %v4799, %v4797
  %v4872 = vpack.c.b16 %v4802, %v4800
  %v4873 = vpack.c.b16 %v4803, %v4801
  %v4874 = vpack.c.b16 %v4806, %v4804
  %v4875 = vpack.c.b16 %v4807, %v4805
  %v4876 = vpack.c.b16 %v4810, %v4808
  %v4877 = vpack.c.b16 %v4811, %v4809
  %v4878 = vpack.c.b16 %v4814, %v4812
  %v4879 = vpack.c.b16 %v4815, %v4813
  %4944 = vmatprep.subr.bf16.mxu0 %v4817
  %4945 = vmatpush1.bf16.msra.mxu0 %v4816
  %4946 = vmatprep.subr.bf16.mxu0 %v4819
  %4947 = vmatpush1.bf16.msra.mxu0 %v4818
  %4948 = vmatprep.subr.bf16.mxu0 %v4821
  %4949 = vmatpush1.bf16.msra.mxu0 %v4820
  %4950 = vmatprep.subr.bf16.mxu0 %v4823
  %4951 = vmatpush1.bf16.msra.mxu0 %v4822
  %4952 = vmatprep.subr.bf16.mxu0 %v4825
  %4953 = vmatpush1.bf16.msra.mxu0 %v4824
  %4954 = vmatprep.subr.bf16.mxu0 %v4827
  %4955 = vmatpush1.bf16.msra.mxu0 %v4826
  %4956 = vmatprep.subr.bf16.mxu0 %v4829
  %4957 = vmatpush1.bf16.msra.mxu0 %v4828
  %4958 = vmatprep.subr.bf16.mxu0 %v4831
  %4959 = vmatpush1.bf16.msra.mxu0 %v4830
  %4960 = vmatprep.subr.bf16.mxu0 %v4833
  %4961 = vmatpush1.bf16.msra.mxu0 %v4832
  %4962 = vmatprep.subr.bf16.mxu0 %v4835
  %4963 = vmatpush1.bf16.msra.mxu0 %v4834
  %4964 = vmatprep.subr.bf16.mxu0 %v4837
  %4965 = vmatpush1.bf16.msra.mxu0 %v4836
  %4966 = vmatprep.subr.bf16.mxu0 %v4839
  %4967 = vmatpush1.bf16.msra.mxu0 %v4838
  %4968 = vmatprep.subr.bf16.mxu0 %v4841
  %4969 = vmatpush1.bf16.msra.mxu0 %v4840
  %4970 = vmatprep.subr.bf16.mxu0 %v4843
  %4971 = vmatpush1.bf16.msra.mxu0 %v4842
  %4972 = vmatprep.subr.bf16.mxu0 %v4845
  %4973 = vmatpush1.bf16.msra.mxu0 %v4844
  %4974 = vmatprep.subr.bf16.mxu0 %v4847
  %4975 = vmatpush1.bf16.msra.mxu0 %v4846
  %4976 = vmatprep.mubr.bf16.mxu0 %v4541
  %4977 = vmatmul.mubr.bf16.gmra.mrb[0].mxu0 %v4540
  %v4978 = vpop.f32.mrb[0].mxu0
  %v4979 = vadd.f32 %v4617, %v4978
  %v4980 = vpop.f32.mrb[0].mxu0
  %v4981 = vadd.f32 %v4621, %v4980
  %v4982 = vpop.f32.mrb[0].mxu0
  %v4983 = vadd.f32 %v4617, %v4982
  %v4984 = vpop.f32.mrb[0].mxu0
  %v4985 = vadd.f32 %v4621, %v4984
  %4986 = vmatprep.mubr.bf16.mxu0 %v4545
  %4987 = vmatmul.mubr.bf16.gmra.mrb[0].mxu0 %v4544
  %v4988 = vpop.f32.mrb[0].mxu0
  %v4989 = vadd.f32 %v4617, %v4988
  %v4990 = vpop.f32.mrb[0].mxu0
  %v4991 = vadd.f32 %v4621, %v4990
  %v4992 = vpop.f32.mrb[0].mxu0
  %v4993 = vadd.f32 %v4617, %v4992
  %v4994 = vpop.f32.mrb[0].mxu0
  %v4995 = vadd.f32 %v4621, %v4994
  %4996 = vdwg.mxu0
  %4997 = vmatprep.subr.bf16.mxu0 %v4849
  %4998 = vmatpush1.bf16.msra.mxu0 %v4848
  %4999 = vmatprep.subr.bf16.mxu0 %v4851
  %5000 = vmatpush1.bf16.msra.mxu0 %v4850
  %5001 = vmatprep.subr.bf16.mxu0 %v4853
  %5002 = vmatpush1.bf16.msra.mxu0 %v4852
  %5003 = vmatprep.subr.bf16.mxu0 %v4855
  %5004 = vmatpush1.bf16.msra.mxu0 %v4854
  %5005 = vmatprep.subr.bf16.mxu0 %v4857
  %5006 = vmatpush1.bf16.msra.mxu0 %v4856
  %5007 = vmatprep.subr.bf16.mxu0 %v4859
  %5008 = vmatpush1.bf16.msra.mxu0 %v4858
  %5009 = vmatprep.subr.bf16.mxu0 %v4861
  %5010 = vmatpush1.bf16.msra.mxu0 %v4860
  %5011 = vmatprep.subr.bf16.mxu0 %v4863
  %5012 = vmatpush1.bf16.msra.mxu0 %v4862
  %5013 = vmatprep.subr.bf16.mxu0 %v4865
  %5014 = vmatpush1.bf16.msra.mxu0 %v4864
  %5015 = vmatprep.subr.bf16.mxu0 %v4867
  %5016 = vmatpush1.bf16.msra.mxu0 %v4866
  %5017 = vmatprep.subr.bf16.mxu0 %v4869
  %5018 = vmatpush1.bf16.msra.mxu0 %v4868
  %5019 = vmatprep.subr.bf16.mxu0 %v4871
  %5020 = vmatpush1.bf16.msra.mxu0 %v4870
  %5021 = vmatprep.subr.bf16.mxu0 %v4873
  %5022 = vmatpush1.bf16.msra.mxu0 %v4872
  %5023 = vmatprep.subr.bf16.mxu0 %v4875
  %5024 = vmatpush1.bf16.msra.mxu0 %v4874
  %5025 = vmatprep.subr.bf16.mxu0 %v4877
  %5026 = vmatpush1.bf16.msra.mxu0 %v4876
  %5027 = vmatprep.subr.bf16.mxu0 %v4879
  %5028 = vmatpush1.bf16.msra.mxu0 %v4878
  %5029 = vmatprep.mubr.bf16.mxu0 %v4543
  %5030 = vmatmul.mubr.bf16.gmra.mrb[0].mxu0 %v4542
  %v5031 = vpop.f32.mrb[0].mxu0
  %v5032 = vadd.f32 %v4979, %v5031
  %v5033 = vpop.f32.mrb[0].mxu0
  %v5034 = vadd.f32 %v4981, %v5033
  %v5035 = vpop.f32.mrb[0].mxu0
  %v5036 = vadd.f32 %v4983, %v5035
  %v5037 = vpop.f32.mrb[0].mxu0
  %v5038 = vadd.f32 %v4985, %v5037
  %5039 = vmatprep.mubr.bf16.mxu0 %v4547
  %5040 = vmatmul.mubr.bf16.gmra.mrb[0].mxu0 %v4546
  %v5041 = vpop.f32.mrb[0].mxu0
  %v5042 = vadd.f32 %v4989, %v5041
  %v5043 = vpop.f32.mrb[0].mxu0
  %v5044 = vadd.f32 %v4991, %v5043
  %v5045 = vpop.f32.mrb[0].mxu0
  %v5046 = vadd.f32 %v4993, %v5045
  %v5047 = vpop.f32.mrb[0].mxu0
  %v5048 = vadd.f32 %v4995, %v5047
  %5049 = vdwg.mxu0
  %v5050 = vadd.f32 %v4000, %v5032
  %v5051 = vadd.f32 %v4001, %v5034
  %v5052 = vadd.f32 %v4002, %v5036
  %v5053 = vadd.f32 %v4003, %v5038
  %v5054 = vadd.f32 %v4004, %v5042
  %v5055 = vadd.f32 %v4005, %v5044
  %v5056 = vadd.f32 %v4006, %v5046
  %v5057 = vadd.f32 %v4007, %v5048
  %v5058 = vadd.f32 %v5050, %v5051
  %5059 = vadd.xlane.f32.xlu0 %v5058
  %v5060 = vpop.xlane.xlu0 %5059
  %v5061 = vadd.f32 %v5052, %v5053
  %5062 = vadd.xlane.f32.xlu0 %v5061
  %v5063 = vpop.xlane.xlu0 %5062
  %v5064 = vadd.f32 %v5054, %v5055
  %5065 = vadd.xlane.f32.xlu0 %v5064
  %v5066 = vpop.xlane.xlu0 %5065
  %v5067 = vadd.f32 %v5056, %v5057
  %5068 = vadd.xlane.f32.xlu0 %v5067
  %v5069 = vpop.xlane.xlu0 %5068
  %v5070 = vmul.f32 %v5060, %v3915
  %v5071 = vmul.f32 %v5063, %v3915
  %v5072 = vmul.f32 %v5066, %v3915
  %v5073 = vmul.f32 %v5069, %v3915
  %v5074 = vsub.f32 %v5050, %v5070
  %v5075 = vsub.f32 %v5051, %v5070
  %v5076 = vsub.f32 %v5052, %v5071
  %v5077 = vsub.f32 %v5053, %v5071
  %v5078 = vsub.f32 %v5054, %v5072
  %v5079 = vsub.f32 %v5055, %v5072
  %v5080 = vsub.f32 %v5056, %v5073
  %v5081 = vsub.f32 %v5057, %v5073
  %v5082 = vmul.f32 %v5074, %v5074
  %v5083 = vmul.f32 %v5075, %v5075
  %v5084 = vmul.f32 %v5076, %v5076
  %v5085 = vmul.f32 %v5077, %v5077
  %v5086 = vmul.f32 %v5078, %v5078
  %v5087 = vmul.f32 %v5079, %v5079
  %v5088 = vmul.f32 %v5080, %v5080
  %v5089 = vmul.f32 %v5081, %v5081
  %v5090 = vadd.f32 %v5082, %v5083
  %5091 = vadd.xlane.f32.xlu0 %v5090
  %v5092 = vpop.xlane.xlu0 %5091
  %v5093 = vadd.f32 %v5084, %v5085
  %5094 = vadd.xlane.f32.xlu0 %v5093
  %v5095 = vpop.xlane.xlu0 %5094
  %v5096 = vadd.f32 %v5086, %v5087
  %5097 = vadd.xlane.f32.xlu0 %v5096
  %v5098 = vpop.xlane.xlu0 %5097
  %v5099 = vadd.f32 %v5088, %v5089
  %5100 = vadd.xlane.f32.xlu0 %v5099
  %v5101 = vpop.xlane.xlu0 %5100
  %v5102 = vmul.f32 %v5092, %v3915
  %v5103 = vmul.f32 %v5095, %v3915
  %v5104 = vmul.f32 %v5098, %v3915
  %v5105 = vmul.f32 %v5101, %v3915
  %v5106 = vadd.f32 %v5102, 1e-05
  %v5107 = vadd.f32 %v5103, 1e-05
  %v5108 = vadd.f32 %v5104, 1e-05
  %v5109 = vadd.f32 %v5105, 1e-05
  %v5110 = vrsqrt.pop %v5106
  %v5111 = vrsqrt.pop %v5107
  %v5112 = vrsqrt.pop %v5108
  %v5113 = vrsqrt.pop %v5109
  %v5114 = vmul.f32 %v5074, %v5110
  %v5115 = vmul.f32 %v5075, %v5110
  %v5116 = vmul.f32 %v5076, %v5111
  %v5117 = vmul.f32 %v5077, %v5111
  %v5118 = vmul.f32 %v5078, %v5112
  %v5119 = vmul.f32 %v5079, %v5112
  %v5120 = vmul.f32 %v5080, %v5113
  %v5121 = vmul.f32 %v5081, %v5113
  %v5122 = vld [vmem:[%s15] sm:$0x3]
  %v5124 = vlaneseq
  %v5125 = vshrl.u32 %v5124, 7
  %v5126 = vsub.s32 0, %v5125
  %v5127 = vrot.slane %v5122, %v5126
  %v5128 = vlaneseq
  %v5129 = vshrl.u32 %v5128, 7
  %v5130 = vsub.s32 1, %v5129
  %v5131 = vrot.slane %v5122, %v5130
  %v5134 = vmul.f32 %v5114, %v5127
  %v5135 = vmul.f32 %v5115, %v5131
  %v5136 = vmul.f32 %v5116, %v5127
  %v5137 = vmul.f32 %v5117, %v5131
  %v5138 = vmul.f32 %v5118, %v5127
  %v5139 = vmul.f32 %v5119, %v5131
  %v5140 = vmul.f32 %v5120, %v5127
  %v5141 = vmul.f32 %v5121, %v5131
  %v5142 = vld [vmem:[%s16] sm:$0x3]
  %v5144 = vlaneseq
  %v5145 = vshrl.u32 %v5144, 7
  %v5146 = vsub.s32 0, %v5145
  %v5147 = vrot.slane %v5142, %v5146
  %v5148 = vlaneseq
  %v5149 = vshrl.u32 %v5148, 7
  %v5150 = vsub.s32 1, %v5149
  %v5151 = vrot.slane %v5142, %v5150
  %v5154 = vadd.f32 %v5134, %v5147
  %v5155 = vadd.f32 %v5135, %v5151
  %v5156 = vadd.f32 %v5136, %v5147
  %v5157 = vadd.f32 %v5137, %v5151
  %v5158 = vadd.f32 %v5138, %v5147
  %v5159 = vadd.f32 %v5139, %v5151
  %v5160 = vadd.f32 %v5140, %v5147
  %v5161 = vadd.f32 %v5141, %v5151
  %s5162 = scalar_lea.vmem %s5, 768
  %v5163 = vld [vmem:[%s5162] sm:$0xff]
  %v5164 = vld [vmem:[%s5162 + $0x8] sm:$0xff]
  %v5165 = vld [vmem:[%s5162 + $0x10] sm:$0xff]
  %v5166 = vld [vmem:[%s5162 + $0x18] sm:$0xff]
  %v5167 = vld [vmem:[%s5162 + $0x20] sm:$0xff]
  %v5168 = vld [vmem:[%s5162 + $0x28] sm:$0xff]
  %v5169 = vld [vmem:[%s5162 + $0x30] sm:$0xff]
  %v5170 = vld [vmem:[%s5162 + $0x38] sm:$0xff]
  %v5171 = vld [vmem:[%s5162 + $0x40] sm:$0xff]
  %v5172 = vld [vmem:[%s5162 + $0x48] sm:$0xff]
  %v5173 = vld [vmem:[%s5162 + $0x50] sm:$0xff]
  %v5174 = vld [vmem:[%s5162 + $0x58] sm:$0xff]
  %v5175 = vld [vmem:[%s5162 + $0x60] sm:$0xff]
  %v5176 = vld [vmem:[%s5162 + $0x68] sm:$0xff]
  %v5177 = vld [vmem:[%s5162 + $0x70] sm:$0xff]
  %v5178 = vld [vmem:[%s5162 + $0x78] sm:$0xff]
  %v5179 = vld [vmem:[%s5162 + $0x80] sm:$0xff]
  %v5180 = vld [vmem:[%s5162 + $0x88] sm:$0xff]
  %v5181 = vld [vmem:[%s5162 + $0x90] sm:$0xff]
  %v5182 = vld [vmem:[%s5162 + $0x98] sm:$0xff]
  %v5183 = vld [vmem:[%s5162 + $0xa0] sm:$0xff]
  %v5184 = vld [vmem:[%s5162 + $0xa8] sm:$0xff]
  %v5185 = vld [vmem:[%s5162 + $0xb0] sm:$0xff]
  %v5186 = vld [vmem:[%s5162 + $0xb8] sm:$0xff]
  %v5187 = vld [vmem:[%s5162 + $0xc0] sm:$0xff]
  %v5188 = vld [vmem:[%s5162 + $0xc8] sm:$0xff]
  %v5189 = vld [vmem:[%s5162 + $0xd0] sm:$0xff]
  %v5190 = vld [vmem:[%s5162 + $0xd8] sm:$0xff]
  %v5191 = vld [vmem:[%s5162 + $0xe0] sm:$0xff]
  %v5192 = vld [vmem:[%s5162 + $0xe8] sm:$0xff]
  %v5193 = vld [vmem:[%s5162 + $0xf0] sm:$0xff]
  %v5194 = vld [vmem:[%s5162 + $0xf8] sm:$0xff]
  %v5195 = vld [vmem:[%s5162 + $0x100] sm:$0xff]
  %v5196 = vld [vmem:[%s5162 + $0x108] sm:$0xff]
  %v5197 = vld [vmem:[%s5162 + $0x110] sm:$0xff]
  %v5198 = vld [vmem:[%s5162 + $0x118] sm:$0xff]
  %v5199 = vld [vmem:[%s5162 + $0x120] sm:$0xff]
  %v5200 = vld [vmem:[%s5162 + $0x128] sm:$0xff]
  %v5201 = vld [vmem:[%s5162 + $0x130] sm:$0xff]
  %v5202 = vld [vmem:[%s5162 + $0x138] sm:$0xff]
  %v5203 = vld [vmem:[%s5162 + $0x140] sm:$0xff]
  %v5204 = vld [vmem:[%s5162 + $0x148] sm:$0xff]
  %v5205 = vld [vmem:[%s5162 + $0x150] sm:$0xff]
  %v5206 = vld [vmem:[%s5162 + $0x158] sm:$0xff]
  %v5207 = vld [vmem:[%s5162 + $0x160] sm:$0xff]
  %v5208 = vld [vmem:[%s5162 + $0x168] sm:$0xff]
  %v5209 = vld [vmem:[%s5162 + $0x170] sm:$0xff]
  %v5210 = vld [vmem:[%s5162 + $0x178] sm:$0xff]
  %v5211 = vld [vmem:[%s5162 + $0x180] sm:$0xff]
  %v5212 = vld [vmem:[%s5162 + $0x188] sm:$0xff]
  %v5213 = vld [vmem:[%s5162 + $0x190] sm:$0xff]
  %v5214 = vld [vmem:[%s5162 + $0x198] sm:$0xff]
  %v5215 = vld [vmem:[%s5162 + $0x1a0] sm:$0xff]
  %v5216 = vld [vmem:[%s5162 + $0x1a8] sm:$0xff]
  %v5217 = vld [vmem:[%s5162 + $0x1b0] sm:$0xff]
  %v5218 = vld [vmem:[%s5162 + $0x1b8] sm:$0xff]
  %v5219 = vld [vmem:[%s5162 + $0x1c0] sm:$0xff]
  %v5220 = vld [vmem:[%s5162 + $0x1c8] sm:$0xff]
  %v5221 = vld [vmem:[%s5162 + $0x1d0] sm:$0xff]
  %v5222 = vld [vmem:[%s5162 + $0x1d8] sm:$0xff]
  %v5223 = vld [vmem:[%s5162 + $0x1e0] sm:$0xff]
  %v5224 = vld [vmem:[%s5162 + $0x1e8] sm:$0xff]
  %v5225 = vld [vmem:[%s5162 + $0x1f0] sm:$0xff]
  %v5226 = vld [vmem:[%s5162 + $0x1f8] sm:$0xff]
  %v5227 = vld [vmem:[%s5162 + $0x200] sm:$0xff]
  %v5228 = vld [vmem:[%s5162 + $0x208] sm:$0xff]
  %v5229 = vld [vmem:[%s5162 + $0x210] sm:$0xff]
  %v5230 = vld [vmem:[%s5162 + $0x218] sm:$0xff]
  %v5231 = vld [vmem:[%s5162 + $0x220] sm:$0xff]
  %v5232 = vld [vmem:[%s5162 + $0x228] sm:$0xff]
  %v5233 = vld [vmem:[%s5162 + $0x230] sm:$0xff]
  %v5234 = vld [vmem:[%s5162 + $0x238] sm:$0xff]
  %v5235 = vld [vmem:[%s5162 + $0x240] sm:$0xff]
  %v5236 = vld [vmem:[%s5162 + $0x248] sm:$0xff]
  %v5237 = vld [vmem:[%s5162 + $0x250] sm:$0xff]
  %v5238 = vld [vmem:[%s5162 + $0x258] sm:$0xff]
  %v5239 = vld [vmem:[%s5162 + $0x260] sm:$0xff]
  %v5240 = vld [vmem:[%s5162 + $0x268] sm:$0xff]
  %v5241 = vld [vmem:[%s5162 + $0x270] sm:$0xff]
  %v5242 = vld [vmem:[%s5162 + $0x278] sm:$0xff]
  %v5243 = vld [vmem:[%s5162 + $0x280] sm:$0xff]
  %v5244 = vld [vmem:[%s5162 + $0x288] sm:$0xff]
  %v5245 = vld [vmem:[%s5162 + $0x290] sm:$0xff]
  %v5246 = vld [vmem:[%s5162 + $0x298] sm:$0xff]
  %v5247 = vld [vmem:[%s5162 + $0x2a0] sm:$0xff]
  %v5248 = vld [vmem:[%s5162 + $0x2a8] sm:$0xff]
  %v5249 = vld [vmem:[%s5162 + $0x2b0] sm:$0xff]
  %v5250 = vld [vmem:[%s5162 + $0x2b8] sm:$0xff]
  %v5251 = vld [vmem:[%s5162 + $0x2c0] sm:$0xff]
  %v5252 = vld [vmem:[%s5162 + $0x2c8] sm:$0xff]
  %v5253 = vld [vmem:[%s5162 + $0x2d0] sm:$0xff]
  %v5254 = vld [vmem:[%s5162 + $0x2d8] sm:$0xff]
  %v5255 = vld [vmem:[%s5162 + $0x2e0] sm:$0xff]
  %v5256 = vld [vmem:[%s5162 + $0x2e8] sm:$0xff]
  %v5257 = vld [vmem:[%s5162 + $0x2f0] sm:$0xff]
  %v5258 = vld [vmem:[%s5162 + $0x2f8] sm:$0xff]
  %s5259 = scalar_lea.vmem %s7, 256
  %v5260 = vld [vmem:[%s5259] sm:$0xff]
  %v5261 = vld [vmem:[%s5259 + $0x8] sm:$0xff]
  %v5262 = vld [vmem:[%s5259 + $0x10] sm:$0xff]
  %v5263 = vld [vmem:[%s5259 + $0x18] sm:$0xff]
  %v5264 = vld [vmem:[%s5259 + $0x20] sm:$0xff]
  %v5265 = vld [vmem:[%s5259 + $0x28] sm:$0xff]
  %v5266 = vld [vmem:[%s5259 + $0x30] sm:$0xff]
  %v5267 = vld [vmem:[%s5259 + $0x38] sm:$0xff]
  %v5268 = vld [vmem:[%s5259 + $0x40] sm:$0xff]
  %v5269 = vld [vmem:[%s5259 + $0x48] sm:$0xff]
  %v5270 = vld [vmem:[%s5259 + $0x50] sm:$0xff]
  %v5271 = vld [vmem:[%s5259 + $0x58] sm:$0xff]
  %v5272 = vld [vmem:[%s5259 + $0x60] sm:$0xff]
  %v5273 = vld [vmem:[%s5259 + $0x68] sm:$0xff]
  %v5274 = vld [vmem:[%s5259 + $0x70] sm:$0xff]
  %v5275 = vld [vmem:[%s5259 + $0x78] sm:$0xff]
  %v5276 = vld [vmem:[%s5259 + $0x80] sm:$0xff]
  %v5277 = vld [vmem:[%s5259 + $0x88] sm:$0xff]
  %v5278 = vld [vmem:[%s5259 + $0x90] sm:$0xff]
  %v5279 = vld [vmem:[%s5259 + $0x98] sm:$0xff]
  %v5280 = vld [vmem:[%s5259 + $0xa0] sm:$0xff]
  %v5281 = vld [vmem:[%s5259 + $0xa8] sm:$0xff]
  %v5282 = vld [vmem:[%s5259 + $0xb0] sm:$0xff]
  %v5283 = vld [vmem:[%s5259 + $0xb8] sm:$0xff]
  %v5284 = vld [vmem:[%s5259 + $0xc0] sm:$0xff]
  %v5285 = vld [vmem:[%s5259 + $0xc8] sm:$0xff]
  %v5286 = vld [vmem:[%s5259 + $0xd0] sm:$0xff]
  %v5287 = vld [vmem:[%s5259 + $0xd8] sm:$0xff]
  %v5288 = vld [vmem:[%s5259 + $0xe0] sm:$0xff]
  %v5289 = vld [vmem:[%s5259 + $0xe8] sm:$0xff]
  %v5290 = vld [vmem:[%s5259 + $0xf0] sm:$0xff]
  %v5291 = vld [vmem:[%s5259 + $0xf8] sm:$0xff]
  %v5292 = vpack.c.bf16 %v5156, %v5154
  %v5293 = vpack.c.bf16 %v5157, %v5155
  %v5294 = vpack.c.bf16 %v5160, %v5158
  %v5295 = vpack.c.bf16 %v5161, %v5159
  %s5296 = scalar_lea.vmem %s6, 6
  %v5297 = vld [vmem:[%s5296] sm:$0x3f]
  %v5299 = vlaneseq
  %v5300 = vshrl.u32 %v5299, 7
  %v5301 = vsub.s32 0, %v5300
  %v5302 = vrot.slane %v5297, %v5301
  %v5303 = vlaneseq
  %v5304 = vshrl.u32 %v5303, 7
  %v5305 = vsub.s32 1, %v5304
  %v5306 = vrot.slane %v5297, %v5305
  %v5307 = vlaneseq
  %v5308 = vshrl.u32 %v5307, 7
  %v5309 = vsub.s32 2, %v5308
  %v5310 = vrot.slane %v5297, %v5309
  %v5311 = vlaneseq
  %v5312 = vshrl.u32 %v5311, 7
  %v5313 = vsub.s32 3, %v5312
  %v5314 = vrot.slane %v5297, %v5313
  %v5315 = vlaneseq
  %v5316 = vshrl.u32 %v5315, 7
  %v5317 = vsub.s32 4, %v5316
  %v5318 = vrot.slane %v5297, %v5317
  %v5319 = vlaneseq
  %v5320 = vshrl.u32 %v5319, 7
  %v5321 = vsub.s32 5, %v5320
  %v5322 = vrot.slane %v5297, %v5321
  %v5425 = vunpack.c.l.b16 %v5163
  %v5426 = vunpack.c.h.b16 %v5163
  %v5427 = vunpack.c.l.b16 %v5164
  %v5428 = vunpack.c.h.b16 %v5164
  %v5429 = vunpack.c.l.b16 %v5165
  %v5430 = vunpack.c.h.b16 %v5165
  %v5431 = vunpack.c.l.b16 %v5166
  %v5432 = vunpack.c.h.b16 %v5166
  %v5433 = vunpack.c.l.b16 %v5167
  %v5434 = vunpack.c.h.b16 %v5167
  %v5435 = vunpack.c.l.b16 %v5168
  %v5436 = vunpack.c.h.b16 %v5168
  %v5437 = vunpack.c.l.b16 %v5169
  %v5438 = vunpack.c.h.b16 %v5169
  %v5439 = vunpack.c.l.b16 %v5170
  %v5440 = vunpack.c.h.b16 %v5170
  %v5441 = vunpack.c.l.b16 %v5171
  %v5442 = vunpack.c.h.b16 %v5171
  %v5443 = vunpack.c.l.b16 %v5172
  %v5444 = vunpack.c.h.b16 %v5172
  %v5445 = vunpack.c.l.b16 %v5173
  %v5446 = vunpack.c.h.b16 %v5173
  %v5447 = vunpack.c.l.b16 %v5174
  %v5448 = vunpack.c.h.b16 %v5174
  %v5449 = vunpack.c.l.b16 %v5175
  %v5450 = vunpack.c.h.b16 %v5175
  %v5451 = vunpack.c.l.b16 %v5176
  %v5452 = vunpack.c.h.b16 %v5176
  %v5453 = vunpack.c.l.b16 %v5177
  %v5454 = vunpack.c.h.b16 %v5177
  %v5455 = vunpack.c.l.b16 %v5178
  %v5456 = vunpack.c.h.b16 %v5178
  %v5457 = vunpack.c.l.b16 %v5179
  %v5458 = vunpack.c.h.b16 %v5179
  %v5459 = vunpack.c.l.b16 %v5180
  %v5460 = vunpack.c.h.b16 %v5180
  %v5461 = vunpack.c.l.b16 %v5181
  %v5462 = vunpack.c.h.b16 %v5181
  %v5463 = vunpack.c.l.b16 %v5182
  %v5464 = vunpack.c.h.b16 %v5182
  %v5465 = vunpack.c.l.b16 %v5183
  %v5466 = vunpack.c.h.b16 %v5183
  %v5467 = vunpack.c.l.b16 %v5184
  %v5468 = vunpack.c.h.b16 %v5184
  %v5469 = vunpack.c.l.b16 %v5185
  %v5470 = vunpack.c.h.b16 %v5185
  %v5471 = vunpack.c.l.b16 %v5186
  %v5472 = vunpack.c.h.b16 %v5186
  %v5473 = vunpack.c.l.b16 %v5187
  %v5474 = vunpack.c.h.b16 %v5187
  %v5475 = vunpack.c.l.b16 %v5188
  %v5476 = vunpack.c.h.b16 %v5188
  %v5477 = vunpack.c.l.b16 %v5189
  %v5478 = vunpack.c.h.b16 %v5189
  %v5479 = vunpack.c.l.b16 %v5190
  %v5480 = vunpack.c.h.b16 %v5190
  %v5481 = vunpack.c.l.b16 %v5191
  %v5482 = vunpack.c.h.b16 %v5191
  %v5483 = vunpack.c.l.b16 %v5192
  %v5484 = vunpack.c.h.b16 %v5192
  %v5485 = vunpack.c.l.b16 %v5193
  %v5486 = vunpack.c.h.b16 %v5193
  %v5487 = vunpack.c.l.b16 %v5194
  %v5488 = vunpack.c.h.b16 %v5194
  %v5489 = vunpack.c.l.b16 %v5195
  %v5490 = vunpack.c.h.b16 %v5195
  %v5491 = vunpack.c.l.b16 %v5196
  %v5492 = vunpack.c.h.b16 %v5196
  %v5493 = vunpack.c.l.b16 %v5197
  %v5494 = vunpack.c.h.b16 %v5197
  %v5495 = vunpack.c.l.b16 %v5198
  %v5496 = vunpack.c.h.b16 %v5198
  %v5497 = vunpack.c.l.b16 %v5199
  %v5498 = vunpack.c.h.b16 %v5199
  %v5499 = vunpack.c.l.b16 %v5200
  %v5500 = vunpack.c.h.b16 %v5200
  %v5501 = vunpack.c.l.b16 %v5201
  %v5502 = vunpack.c.h.b16 %v5201
  %v5503 = vunpack.c.l.b16 %v5202
  %v5504 = vunpack.c.h.b16 %v5202
  %v5505 = vunpack.c.l.b16 %v5203
  %v5506 = vunpack.c.h.b16 %v5203
  %v5507 = vunpack.c.l.b16 %v5204
  %v5508 = vunpack.c.h.b16 %v5204
  %v5509 = vunpack.c.l.b16 %v5205
  %v5510 = vunpack.c.h.b16 %v5205
  %v5511 = vunpack.c.l.b16 %v5206
  %v5512 = vunpack.c.h.b16 %v5206
  %v5513 = vunpack.c.l.b16 %v5207
  %v5514 = vunpack.c.h.b16 %v5207
  %v5515 = vunpack.c.l.b16 %v5208
  %v5516 = vunpack.c.h.b16 %v5208
  %v5517 = vunpack.c.l.b16 %v5209
  %v5518 = vunpack.c.h.b16 %v5209
  %v5519 = vunpack.c.l.b16 %v5210
  %v5520 = vunpack.c.h.b16 %v5210
  %v5521 = vunpack.c.l.b16 %v5211
  %v5522 = vunpack.c.h.b16 %v5211
  %v5523 = vunpack.c.l.b16 %v5212
  %v5524 = vunpack.c.h.b16 %v5212
  %v5525 = vunpack.c.l.b16 %v5213
  %v5526 = vunpack.c.h.b16 %v5213
  %v5527 = vunpack.c.l.b16 %v5214
  %v5528 = vunpack.c.h.b16 %v5214
  %v5529 = vunpack.c.l.b16 %v5215
  %v5530 = vunpack.c.h.b16 %v5215
  %v5531 = vunpack.c.l.b16 %v5216
  %v5532 = vunpack.c.h.b16 %v5216
  %v5533 = vunpack.c.l.b16 %v5217
  %v5534 = vunpack.c.h.b16 %v5217
  %v5535 = vunpack.c.l.b16 %v5218
  %v5536 = vunpack.c.h.b16 %v5218
  %v5537 = vunpack.c.l.b16 %v5219
  %v5538 = vunpack.c.h.b16 %v5219
  %v5539 = vunpack.c.l.b16 %v5220
  %v5540 = vunpack.c.h.b16 %v5220
  %v5541 = vunpack.c.l.b16 %v5221
  %v5542 = vunpack.c.h.b16 %v5221
  %v5543 = vunpack.c.l.b16 %v5222
  %v5544 = vunpack.c.h.b16 %v5222
  %v5545 = vunpack.c.l.b16 %v5223
  %v5546 = vunpack.c.h.b16 %v5223
  %v5547 = vunpack.c.l.b16 %v5224
  %v5548 = vunpack.c.h.b16 %v5224
  %v5549 = vunpack.c.l.b16 %v5225
  %v5550 = vunpack.c.h.b16 %v5225
  %v5551 = vunpack.c.l.b16 %v5226
  %v5552 = vunpack.c.h.b16 %v5226
  %v5553 = vunpack.c.l.b16 %v5227
  %v5554 = vunpack.c.h.b16 %v5227
  %v5555 = vunpack.c.l.b16 %v5228
  %v5556 = vunpack.c.h.b16 %v5228
  %v5557 = vunpack.c.l.b16 %v5229
  %v5558 = vunpack.c.h.b16 %v5229
  %v5559 = vunpack.c.l.b16 %v5230
  %v5560 = vunpack.c.h.b16 %v5230
  %v5561 = vunpack.c.l.b16 %v5231
  %v5562 = vunpack.c.h.b16 %v5231
  %v5563 = vunpack.c.l.b16 %v5232
  %v5564 = vunpack.c.h.b16 %v5232
  %v5565 = vunpack.c.l.b16 %v5233
  %v5566 = vunpack.c.h.b16 %v5233
  %v5567 = vunpack.c.l.b16 %v5234
  %v5568 = vunpack.c.h.b16 %v5234
  %v5569 = vunpack.c.l.b16 %v5235
  %v5570 = vunpack.c.h.b16 %v5235
  %v5571 = vunpack.c.l.b16 %v5236
  %v5572 = vunpack.c.h.b16 %v5236
  %v5573 = vunpack.c.l.b16 %v5237
  %v5574 = vunpack.c.h.b16 %v5237
  %v5575 = vunpack.c.l.b16 %v5238
  %v5576 = vunpack.c.h.b16 %v5238
  %v5577 = vunpack.c.l.b16 %v5239
  %v5578 = vunpack.c.h.b16 %v5239
  %v5579 = vunpack.c.l.b16 %v5240
  %v5580 = vunpack.c.h.b16 %v5240
  %v5581 = vunpack.c.l.b16 %v5241
  %v5582 = vunpack.c.h.b16 %v5241
  %v5583 = vunpack.c.l.b16 %v5242
  %v5584 = vunpack.c.h.b16 %v5242
  %v5585 = vunpack.c.l.b16 %v5243
  %v5586 = vunpack.c.h.b16 %v5243
  %v5587 = vunpack.c.l.b16 %v5244
  %v5588 = vunpack.c.h.b16 %v5244
  %v5589 = vunpack.c.l.b16 %v5245
  %v5590 = vunpack.c.h.b16 %v5245
  %v5591 = vunpack.c.l.b16 %v5246
  %v5592 = vunpack.c.h.b16 %v5246
  %v5593 = vunpack.c.l.b16 %v5247
  %v5594 = vunpack.c.h.b16 %v5247
  %v5595 = vunpack.c.l.b16 %v5248
  %v5596 = vunpack.c.h.b16 %v5248
  %v5597 = vunpack.c.l.b16 %v5249
  %v5598 = vunpack.c.h.b16 %v5249
  %v5599 = vunpack.c.l.b16 %v5250
  %v5600 = vunpack.c.h.b16 %v5250
  %v5601 = vunpack.c.l.b16 %v5251
  %v5602 = vunpack.c.h.b16 %v5251
  %v5603 = vunpack.c.l.b16 %v5252
  %v5604 = vunpack.c.h.b16 %v5252
  %v5605 = vunpack.c.l.b16 %v5253
  %v5606 = vunpack.c.h.b16 %v5253
  %v5607 = vunpack.c.l.b16 %v5254
  %v5608 = vunpack.c.h.b16 %v5254
  %v5609 = vunpack.c.l.b16 %v5255
  %v5610 = vunpack.c.h.b16 %v5255
  %v5611 = vunpack.c.l.b16 %v5256
  %v5612 = vunpack.c.h.b16 %v5256
  %v5613 = vunpack.c.l.b16 %v5257
  %v5614 = vunpack.c.h.b16 %v5257
  %v5615 = vunpack.c.l.b16 %v5258
  %v5616 = vunpack.c.h.b16 %v5258
  %v5617 = vpack.c.b16 %v5431, %v5425
  %v5618 = vpack.c.b16 %v5432, %v5426
  %v5619 = vpack.c.b16 %v5433, %v5427
  %v5620 = vpack.c.b16 %v5434, %v5428
  %v5621 = vpack.c.b16 %v5435, %v5429
  %v5622 = vpack.c.b16 %v5436, %v5430
  %v5623 = vpack.c.b16 %v5443, %v5437
  %v5624 = vpack.c.b16 %v5444, %v5438
  %v5625 = vpack.c.b16 %v5445, %v5439
  %v5626 = vpack.c.b16 %v5446, %v5440
  %v5627 = vpack.c.b16 %v5447, %v5441
  %v5628 = vpack.c.b16 %v5448, %v5442
  %v5629 = vpack.c.b16 %v5455, %v5449
  %v5630 = vpack.c.b16 %v5456, %v5450
  %v5631 = vpack.c.b16 %v5457, %v5451
  %v5632 = vpack.c.b16 %v5458, %v5452
  %v5633 = vpack.c.b16 %v5459, %v5453
  %v5634 = vpack.c.b16 %v5460, %v5454
  %v5635 = vpack.c.b16 %v5467, %v5461
  %v5636 = vpack.c.b16 %v5468, %v5462
  %v5637 = vpack.c.b16 %v5469, %v5463
  %v5638 = vpack.c.b16 %v5470, %v5464
  %v5639 = vpack.c.b16 %v5471, %v5465
  %v5640 = vpack.c.b16 %v5472, %v5466
  %v5641 = vpack.c.b16 %v5479, %v5473
  %v5642 = vpack.c.b16 %v5480, %v5474
  %v5643 = vpack.c.b16 %v5481, %v5475
  %v5644 = vpack.c.b16 %v5482, %v5476
  %v5645 = vpack.c.b16 %v5483, %v5477
  %v5646 = vpack.c.b16 %v5484, %v5478
  %v5647 = vpack.c.b16 %v5491, %v5485
  %v5648 = vpack.c.b16 %v5492, %v5486
  %v5649 = vpack.c.b16 %v5493, %v5487
  %v5650 = vpack.c.b16 %v5494, %v5488
  %v5651 = vpack.c.b16 %v5495, %v5489
  %v5652 = vpack.c.b16 %v5496, %v5490
  %v5653 = vpack.c.b16 %v5503, %v5497
  %v5654 = vpack.c.b16 %v5504, %v5498
  %v5655 = vpack.c.b16 %v5505, %v5499
  %v5656 = vpack.c.b16 %v5506, %v5500
  %v5657 = vpack.c.b16 %v5507, %v5501
  %v5658 = vpack.c.b16 %v5508, %v5502
  %v5659 = vpack.c.b16 %v5515, %v5509
  %v5660 = vpack.c.b16 %v5516, %v5510
  %v5661 = vpack.c.b16 %v5517, %v5511
  %v5662 = vpack.c.b16 %v5518, %v5512
  %v5663 = vpack.c.b16 %v5519, %v5513
  %v5664 = vpack.c.b16 %v5520, %v5514
  %v5665 = vpack.c.b16 %v5527, %v5521
  %v5666 = vpack.c.b16 %v5528, %v5522
  %v5667 = vpack.c.b16 %v5529, %v5523
  %v5668 = vpack.c.b16 %v5530, %v5524
  %v5669 = vpack.c.b16 %v5531, %v5525
  %v5670 = vpack.c.b16 %v5532, %v5526
  %v5671 = vpack.c.b16 %v5539, %v5533
  %v5672 = vpack.c.b16 %v5540, %v5534
  %v5673 = vpack.c.b16 %v5541, %v5535
  %v5674 = vpack.c.b16 %v5542, %v5536
  %v5675 = vpack.c.b16 %v5543, %v5537
  %v5676 = vpack.c.b16 %v5544, %v5538
  %v5677 = vpack.c.b16 %v5551, %v5545
  %v5678 = vpack.c.b16 %v5552, %v5546
  %v5679 = vpack.c.b16 %v5553, %v5547
  %v5680 = vpack.c.b16 %v5554, %v5548
  %v5681 = vpack.c.b16 %v5555, %v5549
  %v5682 = vpack.c.b16 %v5556, %v5550
  %v5683 = vpack.c.b16 %v5563, %v5557
  %v5684 = vpack.c.b16 %v5564, %v5558
  %v5685 = vpack.c.b16 %v5565, %v5559
  %v5686 = vpack.c.b16 %v5566, %v5560
  %v5687 = vpack.c.b16 %v5567, %v5561
  %v5688 = vpack.c.b16 %v5568, %v5562
  %v5689 = vpack.c.b16 %v5575, %v5569
  %v5690 = vpack.c.b16 %v5576, %v5570
  %v5691 = vpack.c.b16 %v5577, %v5571
  %v5692 = vpack.c.b16 %v5578, %v5572
  %v5693 = vpack.c.b16 %v5579, %v5573
  %v5694 = vpack.c.b16 %v5580, %v5574
  %v5695 = vpack.c.b16 %v5587, %v5581
  %v5696 = vpack.c.b16 %v5588, %v5582
  %v5697 = vpack.c.b16 %v5589, %v5583
  %v5698 = vpack.c.b16 %v5590, %v5584
  %v5699 = vpack.c.b16 %v5591, %v5585
  %v5700 = vpack.c.b16 %v5592, %v5586
  %v5701 = vpack.c.b16 %v5599, %v5593
  %v5702 = vpack.c.b16 %v5600, %v5594
  %v5703 = vpack.c.b16 %v5601, %v5595
  %v5704 = vpack.c.b16 %v5602, %v5596
  %v5705 = vpack.c.b16 %v5603, %v5597
  %v5706 = vpack.c.b16 %v5604, %v5598
  %v5707 = vpack.c.b16 %v5611, %v5605
  %v5708 = vpack.c.b16 %v5612, %v5606
  %v5709 = vpack.c.b16 %v5613, %v5607
  %v5710 = vpack.c.b16 %v5614, %v5608
  %v5711 = vpack.c.b16 %v5615, %v5609
  %v5712 = vpack.c.b16 %v5616, %v5610
  %5809 = vmatprep.subr.bf16.mxu0 %v5618
  %5810 = vmatpush1.bf16.msra.mxu0 %v5617
  %5811 = vmatprep.subr.bf16.mxu0 %v5624
  %5812 = vmatpush1.bf16.msra.mxu0 %v5623
  %5813 = vmatprep.subr.bf16.mxu0 %v5630
  %5814 = vmatpush1.bf16.msra.mxu0 %v5629
  %5815 = vmatprep.subr.bf16.mxu0 %v5636
  %5816 = vmatpush1.bf16.msra.mxu0 %v5635
  %5817 = vmatprep.subr.bf16.mxu0 %v5642
  %5818 = vmatpush1.bf16.msra.mxu0 %v5641
  %5819 = vmatprep.subr.bf16.mxu0 %v5648
  %5820 = vmatpush1.bf16.msra.mxu0 %v5647
  %5821 = vmatprep.subr.bf16.mxu0 %v5654
  %5822 = vmatpush1.bf16.msra.mxu0 %v5653
  %5823 = vmatprep.subr.bf16.mxu0 %v5660
  %5824 = vmatpush1.bf16.msra.mxu0 %v5659
  %5825 = vmatprep.subr.bf16.mxu0 %v5666
  %5826 = vmatpush1.bf16.msra.mxu0 %v5665
  %5827 = vmatprep.subr.bf16.mxu0 %v5672
  %5828 = vmatpush1.bf16.msra.mxu0 %v5671
  %5829 = vmatprep.subr.bf16.mxu0 %v5678
  %5830 = vmatpush1.bf16.msra.mxu0 %v5677
  %5831 = vmatprep.subr.bf16.mxu0 %v5684
  %5832 = vmatpush1.bf16.msra.mxu0 %v5683
  %5833 = vmatprep.subr.bf16.mxu0 %v5690
  %5834 = vmatpush1.bf16.msra.mxu0 %v5689
  %5835 = vmatprep.subr.bf16.mxu0 %v5696
  %5836 = vmatpush1.bf16.msra.mxu0 %v5695
  %5837 = vmatprep.subr.bf16.mxu0 %v5702
  %5838 = vmatpush1.bf16.msra.mxu0 %v5701
  %5839 = vmatprep.subr.bf16.mxu0 %v5708
  %5840 = vmatpush1.bf16.msra.mxu0 %v5707
  %5841 = vmatprep.mubr.bf16.mxu0 %v5293
  %5842 = vmatmul.mubr.bf16.gmra.mrb[0].mxu0 %v5292
  %v5843 = vpop.f32.mrb[0].mxu0
  %v5844 = vadd.f32 %v5302, %v5843
  %v5845 = vpop.f32.mrb[0].mxu0
  %v5846 = vadd.f32 %v5306, %v5845
  %v5847 = vpop.f32.mrb[0].mxu0
  %v5848 = vadd.f32 %v5302, %v5847
  %v5849 = vpop.f32.mrb[0].mxu0
  %v5850 = vadd.f32 %v5306, %v5849
  %5851 = vmatprep.mubr.bf16.mxu0 %v5295
  %5852 = vmatmul.mubr.bf16.gmra.mrb[0].mxu0 %v5294
  %v5853 = vpop.f32.mrb[0].mxu0
  %v5854 = vadd.f32 %v5302, %v5853
  %v5855 = vpop.f32.mrb[0].mxu0
  %v5856 = vadd.f32 %v5306, %v5855
  %v5857 = vpop.f32.mrb[0].mxu0
  %v5858 = vadd.f32 %v5302, %v5857
  %v5859 = vpop.f32.mrb[0].mxu0
  %v5860 = vadd.f32 %v5306, %v5859
  %5861 = vdwg.mxu0
  %5862 = vmatprep.subr.bf16.mxu0 %v5620
  %5863 = vmatpush1.bf16.msra.mxu0 %v5619
  %5864 = vmatprep.subr.bf16.mxu0 %v5626
  %5865 = vmatpush1.bf16.msra.mxu0 %v5625
  %5866 = vmatprep.subr.bf16.mxu0 %v5632
  %5867 = vmatpush1.bf16.msra.mxu0 %v5631
  %5868 = vmatprep.subr.bf16.mxu0 %v5638
  %5869 = vmatpush1.bf16.msra.mxu0 %v5637
  %5870 = vmatprep.subr.bf16.mxu0 %v5644
  %5871 = vmatpush1.bf16.msra.mxu0 %v5643
  %5872 = vmatprep.subr.bf16.mxu0 %v5650
  %5873 = vmatpush1.bf16.msra.mxu0 %v5649
  %5874 = vmatprep.subr.bf16.mxu0 %v5656
  %5875 = vmatpush1.bf16.msra.mxu0 %v5655
  %5876 = vmatprep.subr.bf16.mxu0 %v5662
  %5877 = vmatpush1.bf16.msra.mxu0 %v5661
  %5878 = vmatprep.subr.bf16.mxu0 %v5668
  %5879 = vmatpush1.bf16.msra.mxu0 %v5667
  %5880 = vmatprep.subr.bf16.mxu0 %v5674
  %5881 = vmatpush1.bf16.msra.mxu0 %v5673
  %5882 = vmatprep.subr.bf16.mxu0 %v5680
  %5883 = vmatpush1.bf16.msra.mxu0 %v5679
  %5884 = vmatprep.subr.bf16.mxu0 %v5686
  %5885 = vmatpush1.bf16.msra.mxu0 %v5685
  %5886 = vmatprep.subr.bf16.mxu0 %v5692
  %5887 = vmatpush1.bf16.msra.mxu0 %v5691
  %5888 = vmatprep.subr.bf16.mxu0 %v5698
  %5889 = vmatpush1.bf16.msra.mxu0 %v5697
  %5890 = vmatprep.subr.bf16.mxu0 %v5704
  %5891 = vmatpush1.bf16.msra.mxu0 %v5703
  %5892 = vmatprep.subr.bf16.mxu0 %v5710
  %5893 = vmatpush1.bf16.msra.mxu0 %v5709
  %5894 = vmatprep.mubr.bf16.mxu0 %v5293
  %5895 = vmatmul.mubr.bf16.gmra.mrb[0].mxu0 %v5292
  %v5896 = vpop.f32.mrb[0].mxu0
  %v5897 = vadd.f32 %v5310, %v5896
  %v5898 = vpop.f32.mrb[0].mxu0
  %v5899 = vadd.f32 %v5314, %v5898
  %v5900 = vpop.f32.mrb[0].mxu0
  %v5901 = vadd.f32 %v5310, %v5900
  %v5902 = vpop.f32.mrb[0].mxu0
  %v5903 = vadd.f32 %v5314, %v5902
  %5904 = vmatprep.mubr.bf16.mxu0 %v5295
  %5905 = vmatmul.mubr.bf16.gmra.mrb[0].mxu0 %v5294
  %v5906 = vpop.f32.mrb[0].mxu0
  %v5907 = vadd.f32 %v5310, %v5906
  %v5908 = vpop.f32.mrb[0].mxu0
  %v5909 = vadd.f32 %v5314, %v5908
  %v5910 = vpop.f32.mrb[0].mxu0
  %v5911 = vadd.f32 %v5310, %v5910
  %v5912 = vpop.f32.mrb[0].mxu0
  %v5913 = vadd.f32 %v5314, %v5912
  %5914 = vdwg.mxu0
  %5915 = vmatprep.subr.bf16.mxu0 %v5622
  %5916 = vmatpush1.bf16.msra.mxu0 %v5621
  %5917 = vmatprep.subr.bf16.mxu0 %v5628
  %5918 = vmatpush1.bf16.msra.mxu0 %v5627
  %5919 = vmatprep.subr.bf16.mxu0 %v5634
  %5920 = vmatpush1.bf16.msra.mxu0 %v5633
  %5921 = vmatprep.subr.bf16.mxu0 %v5640
  %5922 = vmatpush1.bf16.msra.mxu0 %v5639
  %5923 = vmatprep.subr.bf16.mxu0 %v5646
  %5924 = vmatpush1.bf16.msra.mxu0 %v5645
  %5925 = vmatprep.subr.bf16.mxu0 %v5652
  %5926 = vmatpush1.bf16.msra.mxu0 %v5651
  %5927 = vmatprep.subr.bf16.mxu0 %v5658
  %5928 = vmatpush1.bf16.msra.mxu0 %v5657
  %5929 = vmatprep.subr.bf16.mxu0 %v5664
  %5930 = vmatpush1.bf16.msra.mxu0 %v5663
  %5931 = vmatprep.subr.bf16.mxu0 %v5670
  %5932 = vmatpush1.bf16.msra.mxu0 %v5669
  %5933 = vmatprep.subr.bf16.mxu0 %v5676
  %5934 = vmatpush1.bf16.msra.mxu0 %v5675
  %5935 = vmatprep.subr.bf16.mxu0 %v5682
  %5936 = vmatpush1.bf16.msra.mxu0 %v5681
  %5937 = vmatprep.subr.bf16.mxu0 %v5688
  %5938 = vmatpush1.bf16.msra.mxu0 %v5687
  %5939 = vmatprep.subr.bf16.mxu0 %v5694
  %5940 = vmatpush1.bf16.msra.mxu0 %v5693
  %5941 = vmatprep.subr.bf16.mxu0 %v5700
  %5942 = vmatpush1.bf16.msra.mxu0 %v5699
  %5943 = vmatprep.subr.bf16.mxu0 %v5706
  %5944 = vmatpush1.bf16.msra.mxu0 %v5705
  %5945 = vmatprep.subr.bf16.mxu0 %v5712
  %5946 = vmatpush1.bf16.msra.mxu0 %v5711
  %5947 = vmatprep.mubr.bf16.mxu0 %v5293
  %5948 = vmatmul.mubr.bf16.gmra.mrb[0].mxu0 %v5292
  %v5949 = vpop.f32.mrb[0].mxu0
  %v5950 = vadd.f32 %v5318, %v5949
  %v5951 = vpop.f32.mrb[0].mxu0
  %v5952 = vadd.f32 %v5322, %v5951
  %v5953 = vpop.f32.mrb[0].mxu0
  %v5954 = vadd.f32 %v5318, %v5953
  %v5955 = vpop.f32.mrb[0].mxu0
  %v5956 = vadd.f32 %v5322, %v5955
  %5957 = vmatprep.mubr.bf16.mxu0 %v5295
  %5958 = vmatmul.mubr.bf16.gmra.mrb[0].mxu0 %v5294
  %v5959 = vpop.f32.mrb[0].mxu0
  %v5960 = vadd.f32 %v5318, %v5959
  %v5961 = vpop.f32.mrb[0].mxu0
  %v5962 = vadd.f32 %v5322, %v5961
  %v5963 = vpop.f32.mrb[0].mxu0
  %v5964 = vadd.f32 %v5318, %v5963
  %v5965 = vpop.f32.mrb[0].mxu0
  %v5966 = vadd.f32 %v5322, %v5965
  %5967 = vdwg.mxu0
  %v5968 = vpack.c.bf16 %v5848, %v5844
  %v5969 = vpack.c.bf16 %v5850, %v5846
  %v5970 = vpack.c.bf16 %v5858, %v5854
  %v5971 = vpack.c.bf16 %v5860, %v5856
  %v5972 = vpack.c.bf16 %v5901, %v5897
  %v5973 = vpack.c.bf16 %v5903, %v5899
  %v5974 = vpack.c.bf16 %v5911, %v5907
  %v5975 = vpack.c.bf16 %v5913, %v5909
  %v5976 = vpack.c.bf16 %v5954, %v5950
  %v5977 = vpack.c.bf16 %v5956, %v5952
  %v5978 = vpack.c.bf16 %v5964, %v5960
  %v5979 = vpack.c.bf16 %v5966, %v5962
  %v5981 = vsel %vm2353, %v5968, 0
  %v5984 = vsel %vm2353, %v5972, 0
  %5986 = vmatprep.subr.bf16.mxu0 0
  %5987 = vmatpush1.bf16.xpose.msra.mxu0 %v5984
  %5988 = vmatprep.subr.bf16.mxu0 0
  %5989 = vmatpush1.bf16.xpose.msra.mxu0 0
  %5990 = vmatprep.subr.bf16.mxu0 0
  %5991 = vmatpush1.bf16.xpose.msra.mxu0 0
  %5992 = vmatprep.subr.bf16.mxu0 0
  %5993 = vmatpush1.bf16.xpose.msra.mxu0 0
  %5994 = vmatprep.subr.bf16.mxu0 0
  %5995 = vmatpush1.bf16.xpose.msra.mxu0 0
  %5996 = vmatprep.subr.bf16.mxu0 0
  %5997 = vmatpush1.bf16.xpose.msra.mxu0 0
  %5998 = vmatprep.subr.bf16.mxu0 0
  %5999 = vmatpush1.bf16.xpose.msra.mxu0 0
  %6000 = vmatprep.subr.bf16.mxu0 0
  %6001 = vmatpush1.bf16.xpose.msra.mxu0 0
  %6002 = vmatprep.subr.bf16.mxu0 0
  %6003 = vmatpush1.bf16.xpose.msra.mxu0 0
  %6004 = vmatprep.subr.bf16.mxu0 0
  %6005 = vmatpush1.bf16.xpose.msra.mxu0 0
  %6006 = vmatprep.subr.bf16.mxu0 0
  %6007 = vmatpush1.bf16.xpose.msra.mxu0 0
  %6008 = vmatprep.subr.bf16.mxu0 0
  %6009 = vmatpush1.bf16.xpose.msra.mxu0 0
  %6010 = vmatprep.subr.bf16.mxu0 0
  %6011 = vmatpush1.bf16.xpose.msra.mxu0 0
  %6012 = vmatprep.subr.bf16.mxu0 0
  %6013 = vmatpush1.bf16.xpose.msra.mxu0 0
  %6014 = vmatprep.subr.bf16.mxu0 0
  %6015 = vmatpush1.bf16.xpose.msra.mxu0 0
  %6016 = vmatprep.subr.bf16.mxu0 0
  %6017 = vmatpush1.bf16.xpose.msra.mxu0 0
  %6018 = vmatprep.mubr.bf16.mxu0 0
  %6019 = vmatmul.mubr.bf16.gmra.mrb[0].mxu0 %v5981
  %v6020 = vpop.f32.mrb[0].mxu0
  %v6021 = vadd.f32 0.0, %v6020
  %v6022 = vpop.f32.mrb[0].mxu0
  %v6023 = vpop.f32.mrb[0].mxu0
  %v6024 = vadd.f32 0.0, %v6023
  %v6025 = vpop.f32.mrb[0].mxu0
  %6026 = vdwg.mxu0
  %v6027 = vmul.f32 %v6021, 0.125
  %v6028 = vmul.f32 %v6024, 0.125
  %v6029 = vsel %vm2403, %v6027, -inf
  %6030 = vmax.xlane.f32.xlu0 %v6029
  %v6031 = vpop.xlane.xlu0 %6030
  %v6032 = vsel %vm2403, %v6028, -inf
  %6033 = vmax.xlane.f32.xlu0 %v6032
  %v6034 = vpop.xlane.xlu0 %6033
  %v6035 = vsub.f32 %v6027, %v6031
  %v6036 = vsub.f32 %v6028, %v6034
  %v6037 = vmul.f32 %v6035, 1.442695
  %v6038 = vpow.pop %v6037
  %v6039 = vmul.f32 %v6036, 1.442695
  %v6040 = vpow.pop %v6039
  %v6041 = vsel %vm2403, %v6038, 0.0
  %6042 = vadd.xlane.f32.xlu0 %v6041
  %v6043 = vpop.xlane.xlu0 %6042
  %v6044 = vsel %vm2403, %v6040, 0.0
  %6045 = vadd.xlane.f32.xlu0 %v6044
  %v6046 = vpop.xlane.xlu0 %6045
  %v6047 = vrcp.pop %v6043
  %v6048 = vrcp.pop %v6046
  %v6049 = vmul.f32 %v6038, %v6047
  %v6050 = vmul.f32 %v6040, %v6048
  %v6051 = vpack.c.bf16 %v6050, %v6049
  %v6053 = vsel %vm2403, %v6051, 0
  %6055 = vmatprep.subr.bf16.mxu0 0
  %6056 = vmatpush1.bf16.msra.mxu0 %v5976
  %6057 = vmatprep.subr.bf16.mxu0 0
  %6058 = vmatpush1.bf16.msra.mxu0 0
  %6059 = vmatprep.subr.bf16.mxu0 0
  %6060 = vmatpush1.bf16.msra.mxu0 0
  %6061 = vmatprep.subr.bf16.mxu0 0
  %6062 = vmatpush1.bf16.msra.mxu0 0
  %6063 = vmatprep.subr.bf16.mxu0 0
  %6064 = vmatpush1.bf16.msra.mxu0 0
  %6065 = vmatprep.subr.bf16.mxu0 0
  %6066 = vmatpush1.bf16.msra.mxu0 0
  %6067 = vmatprep.subr.bf16.mxu0 0
  %6068 = vmatpush1.bf16.msra.mxu0 0
  %6069 = vmatprep.subr.bf16.mxu0 0
  %6070 = vmatpush1.bf16.msra.mxu0 0
  %6071 = vmatprep.subr.bf16.mxu0 0
  %6072 = vmatpush1.bf16.msra.mxu0 0
  %6073 = vmatprep.subr.bf16.mxu0 0
  %6074 = vmatpush1.bf16.msra.mxu0 0
  %6075 = vmatprep.subr.bf16.mxu0 0
  %6076 = vmatpush1.bf16.msra.mxu0 0
  %6077 = vmatprep.subr.bf16.mxu0 0
  %6078 = vmatpush1.bf16.msra.mxu0 0
  %6079 = vmatprep.subr.bf16.mxu0 0
  %6080 = vmatpush1.bf16.msra.mxu0 0
  %6081 = vmatprep.subr.bf16.mxu0 0
  %6082 = vmatpush1.bf16.msra.mxu0 0
  %6083 = vmatprep.subr.bf16.mxu0 0
  %6084 = vmatpush1.bf16.msra.mxu0 0
  %6085 = vmatprep.subr.bf16.mxu0 0
  %6086 = vmatpush1.bf16.msra.mxu0 0
  %6087 = vmatprep.mubr.bf16.mxu0 0
  %6088 = vmatmul.mubr.bf16.gmra.mrb[0].mxu0 %v6053
  %v6089 = vpop.f32.mrb[0].mxu0
  %v6090 = vadd.f32 0.0, %v6089
  %v6091 = vpop.f32.mrb[0].mxu0
  %v6092 = vpop.f32.mrb[0].mxu0
  %v6093 = vadd.f32 0.0, %v6092
  %v6094 = vpop.f32.mrb[0].mxu0
  %6095 = vdwg.mxu0
  %v6096 = vpack.c.bf16 %v6093, %v6090
  %6098 = vrot.lane.b32.xlu0 %v5968, 64
  %v6099 = vpop.permute.xlu0 %6098
  %6101 = vrot.lane.b32.xlu0 %v5972, 64
  %v6102 = vpop.permute.xlu0 %6101
  %v6104 = vsel %vm2353, %v6099, 0
  %v6107 = vsel %vm2353, %v6102, 0
  %6109 = vmatprep.subr.bf16.mxu0 0
  %6110 = vmatpush1.bf16.xpose.msra.mxu0 %v6107
  %6111 = vmatprep.subr.bf16.mxu0 0
  %6112 = vmatpush1.bf16.xpose.msra.mxu0 0
  %6113 = vmatprep.subr.bf16.mxu0 0
  %6114 = vmatpush1.bf16.xpose.msra.mxu0 0
  %6115 = vmatprep.subr.bf16.mxu0 0
  %6116 = vmatpush1.bf16.xpose.msra.mxu0 0
  %6117 = vmatprep.subr.bf16.mxu0 0
  %6118 = vmatpush1.bf16.xpose.msra.mxu0 0
  %6119 = vmatprep.subr.bf16.mxu0 0
  %6120 = vmatpush1.bf16.xpose.msra.mxu0 0
  %6121 = vmatprep.subr.bf16.mxu0 0
  %6122 = vmatpush1.bf16.xpose.msra.mxu0 0
  %6123 = vmatprep.subr.bf16.mxu0 0
  %6124 = vmatpush1.bf16.xpose.msra.mxu0 0
  %6125 = vmatprep.subr.bf16.mxu0 0
  %6126 = vmatpush1.bf16.xpose.msra.mxu0 0
  %6127 = vmatprep.subr.bf16.mxu0 0
  %6128 = vmatpush1.bf16.xpose.msra.mxu0 0
  %6129 = vmatprep.subr.bf16.mxu0 0
  %6130 = vmatpush1.bf16.xpose.msra.mxu0 0
  %6131 = vmatprep.subr.bf16.mxu0 0
  %6132 = vmatpush1.bf16.xpose.msra.mxu0 0
  %6133 = vmatprep.subr.bf16.mxu0 0
  %6134 = vmatpush1.bf16.xpose.msra.mxu0 0
  %6135 = vmatprep.subr.bf16.mxu0 0
  %6136 = vmatpush1.bf16.xpose.msra.mxu0 0
  %6137 = vmatprep.subr.bf16.mxu0 0
  %6138 = vmatpush1.bf16.xpose.msra.mxu0 0
  %6139 = vmatprep.subr.bf16.mxu0 0
  %6140 = vmatpush1.bf16.xpose.msra.mxu0 0
  %6141 = vmatprep.mubr.bf16.mxu0 0
  %6142 = vmatmul.mubr.bf16.gmra.mrb[0].mxu0 %v6104
  %v6143 = vpop.f32.mrb[0].mxu0
  %v6144 = vadd.f32 0.0, %v6143
  %v6145 = vpop.f32.mrb[0].mxu0
  %v6146 = vpop.f32.mrb[0].mxu0
  %v6147 = vadd.f32 0.0, %v6146
  %v6148 = vpop.f32.mrb[0].mxu0
  %6149 = vdwg.mxu0
  %v6150 = vmul.f32 %v6144, 0.125
  %v6151 = vmul.f32 %v6147, 0.125
  %v6152 = vsel %vm2403, %v6150, -inf
  %6153 = vmax.xlane.f32.xlu0 %v6152
  %v6154 = vpop.xlane.xlu0 %6153
  %v6155 = vsel %vm2403, %v6151, -inf
  %6156 = vmax.xlane.f32.xlu0 %v6155
  %v6157 = vpop.xlane.xlu0 %6156
  %v6158 = vsub.f32 %v6150, %v6154
  %v6159 = vsub.f32 %v6151, %v6157
  %v6160 = vmul.f32 %v6158, 1.442695
  %v6161 = vpow.pop %v6160
  %v6162 = vmul.f32 %v6159, 1.442695
  %v6163 = vpow.pop %v6162
  %v6164 = vsel %vm2403, %v6161, 0.0
  %6165 = vadd.xlane.f32.xlu0 %v6164
  %v6166 = vpop.xlane.xlu0 %6165
  %v6167 = vsel %vm2403, %v6163, 0.0
  %6168 = vadd.xlane.f32.xlu0 %v6167
  %v6169 = vpop.xlane.xlu0 %6168
  %v6170 = vrcp.pop %v6166
  %v6171 = vrcp.pop %v6169
  %v6172 = vmul.f32 %v6161, %v6170
  %v6173 = vmul.f32 %v6163, %v6171
  %v6174 = vpack.c.bf16 %v6173, %v6172
  %6176 = vrot.lane.b32.xlu0 %v5976, 64
  %v6177 = vpop.permute.xlu0 %6176
  %v6180 = vsel %vm2403, %v6174, 0
  %6182 = vmatprep.subr.bf16.mxu0 0
  %6183 = vmatpush1.bf16.msra.mxu0 %v6177
  %6184 = vmatprep.subr.bf16.mxu0 0
  %6185 = vmatpush1.bf16.msra.mxu0 0
  %6186 = vmatprep.subr.bf16.mxu0 0
  %6187 = vmatpush1.bf16.msra.mxu0 0
  %6188 = vmatprep.subr.bf16.mxu0 0
  %6189 = vmatpush1.bf16.msra.mxu0 0
  %6190 = vmatprep.subr.bf16.mxu0 0
  %6191 = vmatpush1.bf16.msra.mxu0 0
  %6192 = vmatprep.subr.bf16.mxu0 0
  %6193 = vmatpush1.bf16.msra.mxu0 0
  %6194 = vmatprep.subr.bf16.mxu0 0
  %6195 = vmatpush1.bf16.msra.mxu0 0
  %6196 = vmatprep.subr.bf16.mxu0 0
  %6197 = vmatpush1.bf16.msra.mxu0 0
  %6198 = vmatprep.subr.bf16.mxu0 0
  %6199 = vmatpush1.bf16.msra.mxu0 0
  %6200 = vmatprep.subr.bf16.mxu0 0
  %6201 = vmatpush1.bf16.msra.mxu0 0
  %6202 = vmatprep.subr.bf16.mxu0 0
  %6203 = vmatpush1.bf16.msra.mxu0 0
  %6204 = vmatprep.subr.bf16.mxu0 0
  %6205 = vmatpush1.bf16.msra.mxu0 0
  %6206 = vmatprep.subr.bf16.mxu0 0
  %6207 = vmatpush1.bf16.msra.mxu0 0
  %6208 = vmatprep.subr.bf16.mxu0 0
  %6209 = vmatpush1.bf16.msra.mxu0 0
  %6210 = vmatprep.subr.bf16.mxu0 0
  %6211 = vmatpush1.bf16.msra.mxu0 0
  %6212 = vmatprep.subr.bf16.mxu0 0
  %6213 = vmatpush1.bf16.msra.mxu0 0
  %6214 = vmatprep.mubr.bf16.mxu0 0
  %6215 = vmatmul.mubr.bf16.gmra.mrb[0].mxu0 %v6180
  %v6216 = vpop.f32.mrb[0].mxu0
  %v6217 = vadd.f32 0.0, %v6216
  %v6218 = vpop.f32.mrb[0].mxu0
  %v6219 = vpop.f32.mrb[0].mxu0
  %v6220 = vadd.f32 0.0, %v6219
  %v6221 = vpop.f32.mrb[0].mxu0
  %6222 = vdwg.mxu0
  %v6223 = vpack.c.bf16 %v6220, %v6217
  %v6232 = vunpack.c.l.b16 %v5268
  %v6233 = vunpack.c.h.b16 %v5268
  %v6234 = vunpack.c.l.b16 %v5269
  %v6235 = vunpack.c.h.b16 %v5269
  %v6236 = vunpack.c.l.b16 %v5270
  %v6237 = vunpack.c.h.b16 %v5270
  %v6238 = vunpack.c.l.b16 %v5271
  %v6239 = vunpack.c.h.b16 %v5271
  %v6240 = vunpack.c.l.b16 %v5272
  %v6241 = vunpack.c.h.b16 %v5272
  %v6242 = vunpack.c.l.b16 %v5273
  %v6243 = vunpack.c.h.b16 %v5273
  %v6244 = vunpack.c.l.b16 %v5274
  %v6245 = vunpack.c.h.b16 %v5274
  %v6246 = vunpack.c.l.b16 %v5275
  %v6247 = vunpack.c.h.b16 %v5275
  %v6248 = vpack.c.b16 %v6234, %v6232
  %v6249 = vpack.c.b16 %v6235, %v6233
  %v6250 = vpack.c.b16 %v6238, %v6236
  %v6251 = vpack.c.b16 %v6239, %v6237
  %v6252 = vpack.c.b16 %v6242, %v6240
  %v6253 = vpack.c.b16 %v6243, %v6241
  %v6254 = vpack.c.b16 %v6246, %v6244
  %v6255 = vpack.c.b16 %v6247, %v6245
  %v6265 = vsel %vm2353, %v6223, 0
  %6267 = vmatprep.subr.bf16.mxu0 %v6249
  %6268 = vmatpush1.bf16.msra.mxu0 %v6248
  %6269 = vmatprep.subr.bf16.mxu0 %v6251
  %6270 = vmatpush1.bf16.msra.mxu0 %v6250
  %6271 = vmatprep.subr.bf16.mxu0 %v6253
  %6272 = vmatpush1.bf16.msra.mxu0 %v6252
  %6273 = vmatprep.subr.bf16.mxu0 %v6255
  %6274 = vmatpush1.bf16.msra.mxu0 %v6254
  %6275 = vmatprep.subr.bf16.mxu0 0
  %6276 = vmatpush1.bf16.msra.mxu0 0
  %6277 = vmatprep.subr.bf16.mxu0 0
  %6278 = vmatpush1.bf16.msra.mxu0 0
  %6279 = vmatprep.subr.bf16.mxu0 0
  %6280 = vmatpush1.bf16.msra.mxu0 0
  %6281 = vmatprep.subr.bf16.mxu0 0
  %6282 = vmatpush1.bf16.msra.mxu0 0
  %6283 = vmatprep.subr.bf16.mxu0 0
  %6284 = vmatpush1.bf16.msra.mxu0 0
  %6285 = vmatprep.subr.bf16.mxu0 0
  %6286 = vmatpush1.bf16.msra.mxu0 0
  %6287 = vmatprep.subr.bf16.mxu0 0
  %6288 = vmatpush1.bf16.msra.mxu0 0
  %6289 = vmatprep.subr.bf16.mxu0 0
  %6290 = vmatpush1.bf16.msra.mxu0 0
  %6291 = vmatprep.subr.bf16.mxu0 0
  %6292 = vmatpush1.bf16.msra.mxu0 0
  %6293 = vmatprep.subr.bf16.mxu0 0
  %6294 = vmatpush1.bf16.msra.mxu0 0
  %6295 = vmatprep.subr.bf16.mxu0 0
  %6296 = vmatpush1.bf16.msra.mxu0 0
  %6297 = vmatprep.subr.bf16.mxu0 0
  %6298 = vmatpush1.bf16.msra.mxu0 0
  %6299 = vmatprep.mubr.bf16.mxu0 0
  %6300 = vmatmul.mubr.bf16.gmra.mrb[0].mxu0 %v6265
  %v6301 = vpop.f32.mrb[0].mxu0
  %v6302 = vadd.f32 0.0, %v6301
  %v6303 = vpop.f32.mrb[0].mxu0
  %v6304 = vadd.f32 0.0, %v6303
  %v6305 = vpop.f32.mrb[0].mxu0
  %v6306 = vadd.f32 0.0, %v6305
  %v6307 = vpop.f32.mrb[0].mxu0
  %v6308 = vadd.f32 0.0, %v6307
  %6309 = vdwg.mxu0
  %v6318 = vunpack.c.l.b16 %v5260
  %v6319 = vunpack.c.h.b16 %v5260
  %v6320 = vunpack.c.l.b16 %v5261
  %v6321 = vunpack.c.h.b16 %v5261
  %v6322 = vunpack.c.l.b16 %v5262
  %v6323 = vunpack.c.h.b16 %v5262
  %v6324 = vunpack.c.l.b16 %v5263
  %v6325 = vunpack.c.h.b16 %v5263
  %v6326 = vunpack.c.l.b16 %v5264
  %v6327 = vunpack.c.h.b16 %v5264
  %v6328 = vunpack.c.l.b16 %v5265
  %v6329 = vunpack.c.h.b16 %v5265
  %v6330 = vunpack.c.l.b16 %v5266
  %v6331 = vunpack.c.h.b16 %v5266
  %v6332 = vunpack.c.l.b16 %v5267
  %v6333 = vunpack.c.h.b16 %v5267
  %v6334 = vpack.c.b16 %v6320, %v6318
  %v6335 = vpack.c.b16 %v6321, %v6319
  %v6336 = vpack.c.b16 %v6324, %v6322
  %v6337 = vpack.c.b16 %v6325, %v6323
  %v6338 = vpack.c.b16 %v6328, %v6326
  %v6339 = vpack.c.b16 %v6329, %v6327
  %v6340 = vpack.c.b16 %v6332, %v6330
  %v6341 = vpack.c.b16 %v6333, %v6331
  %v6351 = vsel %vm2353, %v6096, 0
  %6353 = vmatprep.subr.bf16.mxu0 %v6335
  %6354 = vmatpush1.bf16.msra.mxu0 %v6334
  %6355 = vmatprep.subr.bf16.mxu0 %v6337
  %6356 = vmatpush1.bf16.msra.mxu0 %v6336
  %6357 = vmatprep.subr.bf16.mxu0 %v6339
  %6358 = vmatpush1.bf16.msra.mxu0 %v6338
  %6359 = vmatprep.subr.bf16.mxu0 %v6341
  %6360 = vmatpush1.bf16.msra.mxu0 %v6340
  %6361 = vmatprep.subr.bf16.mxu0 0
  %6362 = vmatpush1.bf16.msra.mxu0 0
  %6363 = vmatprep.subr.bf16.mxu0 0
  %6364 = vmatpush1.bf16.msra.mxu0 0
  %6365 = vmatprep.subr.bf16.mxu0 0
  %6366 = vmatpush1.bf16.msra.mxu0 0
  %6367 = vmatprep.subr.bf16.mxu0 0
  %6368 = vmatpush1.bf16.msra.mxu0 0
  %6369 = vmatprep.subr.bf16.mxu0 0
  %6370 = vmatpush1.bf16.msra.mxu0 0
  %6371 = vmatprep.subr.bf16.mxu0 0
  %6372 = vmatpush1.bf16.msra.mxu0 0
  %6373 = vmatprep.subr.bf16.mxu0 0
  %6374 = vmatpush1.bf16.msra.mxu0 0
  %6375 = vmatprep.subr.bf16.mxu0 0
  %6376 = vmatpush1.bf16.msra.mxu0 0
  %6377 = vmatprep.subr.bf16.mxu0 0
  %6378 = vmatpush1.bf16.msra.mxu0 0
  %6379 = vmatprep.subr.bf16.mxu0 0
  %6380 = vmatpush1.bf16.msra.mxu0 0
  %6381 = vmatprep.subr.bf16.mxu0 0
  %6382 = vmatpush1.bf16.msra.mxu0 0
  %6383 = vmatprep.subr.bf16.mxu0 0
  %6384 = vmatpush1.bf16.msra.mxu0 0
  %6385 = vmatprep.mubr.bf16.mxu0 0
  %6386 = vmatmul.mubr.bf16.gmra.mrb[0].mxu0 %v6351
  %v6387 = vpop.f32.mrb[0].mxu0
  %v6388 = vadd.f32 %v6302, %v6387
  %v6389 = vpop.f32.mrb[0].mxu0
  %v6390 = vadd.f32 %v6304, %v6389
  %v6391 = vpop.f32.mrb[0].mxu0
  %v6392 = vadd.f32 %v6306, %v6391
  %v6393 = vpop.f32.mrb[0].mxu0
  %v6394 = vadd.f32 %v6308, %v6393
  %6395 = vdwg.mxu0
  %v6397 = vsel %vm2353, %v5969, 0
  %v6400 = vsel %vm2353, %v5973, 0
  %6402 = vmatprep.subr.bf16.mxu0 0
  %6403 = vmatpush1.bf16.xpose.msra.mxu0 %v6400
  %6404 = vmatprep.subr.bf16.mxu0 0
  %6405 = vmatpush1.bf16.xpose.msra.mxu0 0
  %6406 = vmatprep.subr.bf16.mxu0 0
  %6407 = vmatpush1.bf16.xpose.msra.mxu0 0
  %6408 = vmatprep.subr.bf16.mxu0 0
  %6409 = vmatpush1.bf16.xpose.msra.mxu0 0
  %6410 = vmatprep.subr.bf16.mxu0 0
  %6411 = vmatpush1.bf16.xpose.msra.mxu0 0
  %6412 = vmatprep.subr.bf16.mxu0 0
  %6413 = vmatpush1.bf16.xpose.msra.mxu0 0
  %6414 = vmatprep.subr.bf16.mxu0 0
  %6415 = vmatpush1.bf16.xpose.msra.mxu0 0
  %6416 = vmatprep.subr.bf16.mxu0 0
  %6417 = vmatpush1.bf16.xpose.msra.mxu0 0
  %6418 = vmatprep.subr.bf16.mxu0 0
  %6419 = vmatpush1.bf16.xpose.msra.mxu0 0
  %6420 = vmatprep.subr.bf16.mxu0 0
  %6421 = vmatpush1.bf16.xpose.msra.mxu0 0
  %6422 = vmatprep.subr.bf16.mxu0 0
  %6423 = vmatpush1.bf16.xpose.msra.mxu0 0
  %6424 = vmatprep.subr.bf16.mxu0 0
  %6425 = vmatpush1.bf16.xpose.msra.mxu0 0
  %6426 = vmatprep.subr.bf16.mxu0 0
  %6427 = vmatpush1.bf16.xpose.msra.mxu0 0
  %6428 = vmatprep.subr.bf16.mxu0 0
  %6429 = vmatpush1.bf16.xpose.msra.mxu0 0
  %6430 = vmatprep.subr.bf16.mxu0 0
  %6431 = vmatpush1.bf16.xpose.msra.mxu0 0
  %6432 = vmatprep.subr.bf16.mxu0 0
  %6433 = vmatpush1.bf16.xpose.msra.mxu0 0
  %6434 = vmatprep.mubr.bf16.mxu0 0
  %6435 = vmatmul.mubr.bf16.gmra.mrb[0].mxu0 %v6397
  %v6436 = vpop.f32.mrb[0].mxu0
  %v6437 = vadd.f32 0.0, %v6436
  %v6438 = vpop.f32.mrb[0].mxu0
  %v6439 = vpop.f32.mrb[0].mxu0
  %v6440 = vadd.f32 0.0, %v6439
  %v6441 = vpop.f32.mrb[0].mxu0
  %6442 = vdwg.mxu0
  %v6443 = vmul.f32 %v6437, 0.125
  %v6444 = vmul.f32 %v6440, 0.125
  %v6445 = vsel %vm2403, %v6443, -inf
  %6446 = vmax.xlane.f32.xlu0 %v6445
  %v6447 = vpop.xlane.xlu0 %6446
  %v6448 = vsel %vm2403, %v6444, -inf
  %6449 = vmax.xlane.f32.xlu0 %v6448
  %v6450 = vpop.xlane.xlu0 %6449
  %v6451 = vsub.f32 %v6443, %v6447
  %v6452 = vsub.f32 %v6444, %v6450
  %v6453 = vmul.f32 %v6451, 1.442695
  %v6454 = vpow.pop %v6453
  %v6455 = vmul.f32 %v6452, 1.442695
  %v6456 = vpow.pop %v6455
  %v6457 = vsel %vm2403, %v6454, 0.0
  %6458 = vadd.xlane.f32.xlu0 %v6457
  %v6459 = vpop.xlane.xlu0 %6458
  %v6460 = vsel %vm2403, %v6456, 0.0
  %6461 = vadd.xlane.f32.xlu0 %v6460
  %v6462 = vpop.xlane.xlu0 %6461
  %v6463 = vrcp.pop %v6459
  %v6464 = vrcp.pop %v6462
  %v6465 = vmul.f32 %v6454, %v6463
  %v6466 = vmul.f32 %v6456, %v6464
  %v6467 = vpack.c.bf16 %v6466, %v6465
  %v6469 = vsel %vm2403, %v6467, 0
  %6471 = vmatprep.subr.bf16.mxu0 0
  %6472 = vmatpush1.bf16.msra.mxu0 %v5977
  %6473 = vmatprep.subr.bf16.mxu0 0
  %6474 = vmatpush1.bf16.msra.mxu0 0
  %6475 = vmatprep.subr.bf16.mxu0 0
  %6476 = vmatpush1.bf16.msra.mxu0 0
  %6477 = vmatprep.subr.bf16.mxu0 0
  %6478 = vmatpush1.bf16.msra.mxu0 0
  %6479 = vmatprep.subr.bf16.mxu0 0
  %6480 = vmatpush1.bf16.msra.mxu0 0
  %6481 = vmatprep.subr.bf16.mxu0 0
  %6482 = vmatpush1.bf16.msra.mxu0 0
  %6483 = vmatprep.subr.bf16.mxu0 0
  %6484 = vmatpush1.bf16.msra.mxu0 0
  %6485 = vmatprep.subr.bf16.mxu0 0
  %6486 = vmatpush1.bf16.msra.mxu0 0
  %6487 = vmatprep.subr.bf16.mxu0 0
  %6488 = vmatpush1.bf16.msra.mxu0 0
  %6489 = vmatprep.subr.bf16.mxu0 0
  %6490 = vmatpush1.bf16.msra.mxu0 0
  %6491 = vmatprep.subr.bf16.mxu0 0
  %6492 = vmatpush1.bf16.msra.mxu0 0
  %6493 = vmatprep.subr.bf16.mxu0 0
  %6494 = vmatpush1.bf16.msra.mxu0 0
  %6495 = vmatprep.subr.bf16.mxu0 0
  %6496 = vmatpush1.bf16.msra.mxu0 0
  %6497 = vmatprep.subr.bf16.mxu0 0
  %6498 = vmatpush1.bf16.msra.mxu0 0
  %6499 = vmatprep.subr.bf16.mxu0 0
  %6500 = vmatpush1.bf16.msra.mxu0 0
  %6501 = vmatprep.subr.bf16.mxu0 0
  %6502 = vmatpush1.bf16.msra.mxu0 0
  %6503 = vmatprep.mubr.bf16.mxu0 0
  %6504 = vmatmul.mubr.bf16.gmra.mrb[0].mxu0 %v6469
  %v6505 = vpop.f32.mrb[0].mxu0
  %v6506 = vadd.f32 0.0, %v6505
  %v6507 = vpop.f32.mrb[0].mxu0
  %v6508 = vpop.f32.mrb[0].mxu0
  %v6509 = vadd.f32 0.0, %v6508
  %v6510 = vpop.f32.mrb[0].mxu0
  %6511 = vdwg.mxu0
  %v6512 = vpack.c.bf16 %v6509, %v6506
  %v6521 = vunpack.c.l.b16 %v5276
  %v6522 = vunpack.c.h.b16 %v5276
  %v6523 = vunpack.c.l.b16 %v5277
  %v6524 = vunpack.c.h.b16 %v5277
  %v6525 = vunpack.c.l.b16 %v5278
  %v6526 = vunpack.c.h.b16 %v5278
  %v6527 = vunpack.c.l.b16 %v5279
  %v6528 = vunpack.c.h.b16 %v5279
  %v6529 = vunpack.c.l.b16 %v5280
  %v6530 = vunpack.c.h.b16 %v5280
  %v6531 = vunpack.c.l.b16 %v5281
  %v6532 = vunpack.c.h.b16 %v5281
  %v6533 = vunpack.c.l.b16 %v5282
  %v6534 = vunpack.c.h.b16 %v5282
  %v6535 = vunpack.c.l.b16 %v5283
  %v6536 = vunpack.c.h.b16 %v5283
  %v6537 = vpack.c.b16 %v6523, %v6521
  %v6538 = vpack.c.b16 %v6524, %v6522
  %v6539 = vpack.c.b16 %v6527, %v6525
  %v6540 = vpack.c.b16 %v6528, %v6526
  %v6541 = vpack.c.b16 %v6531, %v6529
  %v6542 = vpack.c.b16 %v6532, %v6530
  %v6543 = vpack.c.b16 %v6535, %v6533
  %v6544 = vpack.c.b16 %v6536, %v6534
  %v6554 = vsel %vm2353, %v6512, 0
  %6556 = vmatprep.subr.bf16.mxu0 %v6538
  %6557 = vmatpush1.bf16.msra.mxu0 %v6537
  %6558 = vmatprep.subr.bf16.mxu0 %v6540
  %6559 = vmatpush1.bf16.msra.mxu0 %v6539
  %6560 = vmatprep.subr.bf16.mxu0 %v6542
  %6561 = vmatpush1.bf16.msra.mxu0 %v6541
  %6562 = vmatprep.subr.bf16.mxu0 %v6544
  %6563 = vmatpush1.bf16.msra.mxu0 %v6543
  %6564 = vmatprep.subr.bf16.mxu0 0
  %6565 = vmatpush1.bf16.msra.mxu0 0
  %6566 = vmatprep.subr.bf16.mxu0 0
  %6567 = vmatpush1.bf16.msra.mxu0 0
  %6568 = vmatprep.subr.bf16.mxu0 0
  %6569 = vmatpush1.bf16.msra.mxu0 0
  %6570 = vmatprep.subr.bf16.mxu0 0
  %6571 = vmatpush1.bf16.msra.mxu0 0
  %6572 = vmatprep.subr.bf16.mxu0 0
  %6573 = vmatpush1.bf16.msra.mxu0 0
  %6574 = vmatprep.subr.bf16.mxu0 0
  %6575 = vmatpush1.bf16.msra.mxu0 0
  %6576 = vmatprep.subr.bf16.mxu0 0
  %6577 = vmatpush1.bf16.msra.mxu0 0
  %6578 = vmatprep.subr.bf16.mxu0 0
  %6579 = vmatpush1.bf16.msra.mxu0 0
  %6580 = vmatprep.subr.bf16.mxu0 0
  %6581 = vmatpush1.bf16.msra.mxu0 0
  %6582 = vmatprep.subr.bf16.mxu0 0
  %6583 = vmatpush1.bf16.msra.mxu0 0
  %6584 = vmatprep.subr.bf16.mxu0 0
  %6585 = vmatpush1.bf16.msra.mxu0 0
  %6586 = vmatprep.subr.bf16.mxu0 0
  %6587 = vmatpush1.bf16.msra.mxu0 0
  %6588 = vmatprep.mubr.bf16.mxu0 0
  %6589 = vmatmul.mubr.bf16.gmra.mrb[0].mxu0 %v6554
  %v6590 = vpop.f32.mrb[0].mxu0
  %v6591 = vadd.f32 0.0, %v6590
  %v6592 = vpop.f32.mrb[0].mxu0
  %v6593 = vadd.f32 0.0, %v6592
  %v6594 = vpop.f32.mrb[0].mxu0
  %v6595 = vadd.f32 0.0, %v6594
  %v6596 = vpop.f32.mrb[0].mxu0
  %v6597 = vadd.f32 0.0, %v6596
  %6598 = vdwg.mxu0
  %v6599 = vadd.f32 %v6388, %v6591
  %v6600 = vadd.f32 %v6390, %v6593
  %v6601 = vadd.f32 %v6392, %v6595
  %v6602 = vadd.f32 %v6394, %v6597
  %6604 = vrot.lane.b32.xlu0 %v5969, 64
  %v6605 = vpop.permute.xlu0 %6604
  %6607 = vrot.lane.b32.xlu0 %v5973, 64
  %v6608 = vpop.permute.xlu0 %6607
  %v6610 = vsel %vm2353, %v6605, 0
  %v6613 = vsel %vm2353, %v6608, 0
  %6615 = vmatprep.subr.bf16.mxu0 0
  %6616 = vmatpush1.bf16.xpose.msra.mxu0 %v6613
  %6617 = vmatprep.subr.bf16.mxu0 0
  %6618 = vmatpush1.bf16.xpose.msra.mxu0 0
  %6619 = vmatprep.subr.bf16.mxu0 0
  %6620 = vmatpush1.bf16.xpose.msra.mxu0 0
  %6621 = vmatprep.subr.bf16.mxu0 0
  %6622 = vmatpush1.bf16.xpose.msra.mxu0 0
  %6623 = vmatprep.subr.bf16.mxu0 0
  %6624 = vmatpush1.bf16.xpose.msra.mxu0 0
  %6625 = vmatprep.subr.bf16.mxu0 0
  %6626 = vmatpush1.bf16.xpose.msra.mxu0 0
  %6627 = vmatprep.subr.bf16.mxu0 0
  %6628 = vmatpush1.bf16.xpose.msra.mxu0 0
  %6629 = vmatprep.subr.bf16.mxu0 0
  %6630 = vmatpush1.bf16.xpose.msra.mxu0 0
  %6631 = vmatprep.subr.bf16.mxu0 0
  %6632 = vmatpush1.bf16.xpose.msra.mxu0 0
  %6633 = vmatprep.subr.bf16.mxu0 0
  %6634 = vmatpush1.bf16.xpose.msra.mxu0 0
  %6635 = vmatprep.subr.bf16.mxu0 0
  %6636 = vmatpush1.bf16.xpose.msra.mxu0 0
  %6637 = vmatprep.subr.bf16.mxu0 0
  %6638 = vmatpush1.bf16.xpose.msra.mxu0 0
  %6639 = vmatprep.subr.bf16.mxu0 0
  %6640 = vmatpush1.bf16.xpose.msra.mxu0 0
  %6641 = vmatprep.subr.bf16.mxu0 0
  %6642 = vmatpush1.bf16.xpose.msra.mxu0 0
  %6643 = vmatprep.subr.bf16.mxu0 0
  %6644 = vmatpush1.bf16.xpose.msra.mxu0 0
  %6645 = vmatprep.subr.bf16.mxu0 0
  %6646 = vmatpush1.bf16.xpose.msra.mxu0 0
  %6647 = vmatprep.mubr.bf16.mxu0 0
  %6648 = vmatmul.mubr.bf16.gmra.mrb[0].mxu0 %v6610
  %v6649 = vpop.f32.mrb[0].mxu0
  %v6650 = vadd.f32 0.0, %v6649
  %v6651 = vpop.f32.mrb[0].mxu0
  %v6652 = vpop.f32.mrb[0].mxu0
  %v6653 = vadd.f32 0.0, %v6652
  %v6654 = vpop.f32.mrb[0].mxu0
  %6655 = vdwg.mxu0
  %v6656 = vmul.f32 %v6650, 0.125
  %v6657 = vmul.f32 %v6653, 0.125
  %v6658 = vsel %vm2403, %v6656, -inf
  %6659 = vmax.xlane.f32.xlu0 %v6658
  %v6660 = vpop.xlane.xlu0 %6659
  %v6661 = vsel %vm2403, %v6657, -inf
  %6662 = vmax.xlane.f32.xlu0 %v6661
  %v6663 = vpop.xlane.xlu0 %6662
  %v6664 = vsub.f32 %v6656, %v6660
  %v6665 = vsub.f32 %v6657, %v6663
  %v6666 = vmul.f32 %v6664, 1.442695
  %v6667 = vpow.pop %v6666
  %v6668 = vmul.f32 %v6665, 1.442695
  %v6669 = vpow.pop %v6668
  %v6670 = vsel %vm2403, %v6667, 0.0
  %6671 = vadd.xlane.f32.xlu0 %v6670
  %v6672 = vpop.xlane.xlu0 %6671
  %v6673 = vsel %vm2403, %v6669, 0.0
  %6674 = vadd.xlane.f32.xlu0 %v6673
  %v6675 = vpop.xlane.xlu0 %6674
  %v6676 = vrcp.pop %v6672
  %v6677 = vrcp.pop %v6675
  %v6678 = vmul.f32 %v6667, %v6676
  %v6679 = vmul.f32 %v6669, %v6677
  %v6680 = vpack.c.bf16 %v6679, %v6678
  %6682 = vrot.lane.b32.xlu0 %v5977, 64
  %v6683 = vpop.permute.xlu0 %6682
  %v6686 = vsel %vm2403, %v6680, 0
  %6688 = vmatprep.subr.bf16.mxu0 0
  %6689 = vmatpush1.bf16.msra.mxu0 %v6683
  %6690 = vmatprep.subr.bf16.mxu0 0
  %6691 = vmatpush1.bf16.msra.mxu0 0
  %6692 = vmatprep.subr.bf16.mxu0 0
  %6693 = vmatpush1.bf16.msra.mxu0 0
  %6694 = vmatprep.subr.bf16.mxu0 0
  %6695 = vmatpush1.bf16.msra.mxu0 0
  %6696 = vmatprep.subr.bf16.mxu0 0
  %6697 = vmatpush1.bf16.msra.mxu0 0
  %6698 = vmatprep.subr.bf16.mxu0 0
  %6699 = vmatpush1.bf16.msra.mxu0 0
  %6700 = vmatprep.subr.bf16.mxu0 0
  %6701 = vmatpush1.bf16.msra.mxu0 0
  %6702 = vmatprep.subr.bf16.mxu0 0
  %6703 = vmatpush1.bf16.msra.mxu0 0
  %6704 = vmatprep.subr.bf16.mxu0 0
  %6705 = vmatpush1.bf16.msra.mxu0 0
  %6706 = vmatprep.subr.bf16.mxu0 0
  %6707 = vmatpush1.bf16.msra.mxu0 0
  %6708 = vmatprep.subr.bf16.mxu0 0
  %6709 = vmatpush1.bf16.msra.mxu0 0
  %6710 = vmatprep.subr.bf16.mxu0 0
  %6711 = vmatpush1.bf16.msra.mxu0 0
  %6712 = vmatprep.subr.bf16.mxu0 0
  %6713 = vmatpush1.bf16.msra.mxu0 0
  %6714 = vmatprep.subr.bf16.mxu0 0
  %6715 = vmatpush1.bf16.msra.mxu0 0
  %6716 = vmatprep.subr.bf16.mxu0 0
  %6717 = vmatpush1.bf16.msra.mxu0 0
  %6718 = vmatprep.subr.bf16.mxu0 0
  %6719 = vmatpush1.bf16.msra.mxu0 0
  %6720 = vmatprep.mubr.bf16.mxu0 0
  %6721 = vmatmul.mubr.bf16.gmra.mrb[0].mxu0 %v6686
  %v6722 = vpop.f32.mrb[0].mxu0
  %v6723 = vadd.f32 0.0, %v6722
  %v6724 = vpop.f32.mrb[0].mxu0
  %v6725 = vpop.f32.mrb[0].mxu0
  %v6726 = vadd.f32 0.0, %v6725
  %v6727 = vpop.f32.mrb[0].mxu0
  %6728 = vdwg.mxu0
  %v6729 = vpack.c.bf16 %v6726, %v6723
  %v6738 = vunpack.c.l.b16 %v5284
  %v6739 = vunpack.c.h.b16 %v5284
  %v6740 = vunpack.c.l.b16 %v5285
  %v6741 = vunpack.c.h.b16 %v5285
  %v6742 = vunpack.c.l.b16 %v5286
  %v6743 = vunpack.c.h.b16 %v5286
  %v6744 = vunpack.c.l.b16 %v5287
  %v6745 = vunpack.c.h.b16 %v5287
  %v6746 = vunpack.c.l.b16 %v5288
  %v6747 = vunpack.c.h.b16 %v5288
  %v6748 = vunpack.c.l.b16 %v5289
  %v6749 = vunpack.c.h.b16 %v5289
  %v6750 = vunpack.c.l.b16 %v5290
  %v6751 = vunpack.c.h.b16 %v5290
  %v6752 = vunpack.c.l.b16 %v5291
  %v6753 = vunpack.c.h.b16 %v5291
  %v6754 = vpack.c.b16 %v6740, %v6738
  %v6755 = vpack.c.b16 %v6741, %v6739
  %v6756 = vpack.c.b16 %v6744, %v6742
  %v6757 = vpack.c.b16 %v6745, %v6743
  %v6758 = vpack.c.b16 %v6748, %v6746
  %v6759 = vpack.c.b16 %v6749, %v6747
  %v6760 = vpack.c.b16 %v6752, %v6750
  %v6761 = vpack.c.b16 %v6753, %v6751
  %v6771 = vsel %vm2353, %v6729, 0
  %6773 = vmatprep.subr.bf16.mxu0 %v6755
  %6774 = vmatpush1.bf16.msra.mxu0 %v6754
  %6775 = vmatprep.subr.bf16.mxu0 %v6757
  %6776 = vmatpush1.bf16.msra.mxu0 %v6756
  %6777 = vmatprep.subr.bf16.mxu0 %v6759
  %6778 = vmatpush1.bf16.msra.mxu0 %v6758
  %6779 = vmatprep.subr.bf16.mxu0 %v6761
  %6780 = vmatpush1.bf16.msra.mxu0 %v6760
  %6781 = vmatprep.subr.bf16.mxu0 0
  %6782 = vmatpush1.bf16.msra.mxu0 0
  %6783 = vmatprep.subr.bf16.mxu0 0
  %6784 = vmatpush1.bf16.msra.mxu0 0
  %6785 = vmatprep.subr.bf16.mxu0 0
  %6786 = vmatpush1.bf16.msra.mxu0 0
  %6787 = vmatprep.subr.bf16.mxu0 0
  %6788 = vmatpush1.bf16.msra.mxu0 0
  %6789 = vmatprep.subr.bf16.mxu0 0
  %6790 = vmatpush1.bf16.msra.mxu0 0
  %6791 = vmatprep.subr.bf16.mxu0 0
  %6792 = vmatpush1.bf16.msra.mxu0 0
  %6793 = vmatprep.subr.bf16.mxu0 0
  %6794 = vmatpush1.bf16.msra.mxu0 0
  %6795 = vmatprep.subr.bf16.mxu0 0
  %6796 = vmatpush1.bf16.msra.mxu0 0
  %6797 = vmatprep.subr.bf16.mxu0 0
  %6798 = vmatpush1.bf16.msra.mxu0 0
  %6799 = vmatprep.subr.bf16.mxu0 0
  %6800 = vmatpush1.bf16.msra.mxu0 0
  %6801 = vmatprep.subr.bf16.mxu0 0
  %6802 = vmatpush1.bf16.msra.mxu0 0
  %6803 = vmatprep.subr.bf16.mxu0 0
  %6804 = vmatpush1.bf16.msra.mxu0 0
  %6805 = vmatprep.mubr.bf16.mxu0 0
  %6806 = vmatmul.mubr.bf16.gmra.mrb[0].mxu0 %v6771
  %v6807 = vpop.f32.mrb[0].mxu0
  %v6808 = vadd.f32 0.0, %v6807
  %v6809 = vpop.f32.mrb[0].mxu0
  %v6810 = vadd.f32 0.0, %v6809
  %v6811 = vpop.f32.mrb[0].mxu0
  %v6812 = vadd.f32 0.0, %v6811
  %v6813 = vpop.f32.mrb[0].mxu0
  %v6814 = vadd.f32 0.0, %v6813
  %6815 = vdwg.mxu0
  %v6816 = vadd.f32 %v6599, %v6808
  %v6817 = vadd.f32 %v6600, %v6810
  %v6818 = vadd.f32 %v6601, %v6812
  %v6819 = vadd.f32 %v6602, %v6814
  %v6821 = vsel %vm2353, %v5970, 0
  %v6824 = vsel %vm2353, %v5974, 0
  %6826 = vmatprep.subr.bf16.mxu0 0
  %6827 = vmatpush1.bf16.xpose.msra.mxu0 %v6824
  %6828 = vmatprep.subr.bf16.mxu0 0
  %6829 = vmatpush1.bf16.xpose.msra.mxu0 0
  %6830 = vmatprep.subr.bf16.mxu0 0
  %6831 = vmatpush1.bf16.xpose.msra.mxu0 0
  %6832 = vmatprep.subr.bf16.mxu0 0
  %6833 = vmatpush1.bf16.xpose.msra.mxu0 0
  %6834 = vmatprep.subr.bf16.mxu0 0
  %6835 = vmatpush1.bf16.xpose.msra.mxu0 0
  %6836 = vmatprep.subr.bf16.mxu0 0
  %6837 = vmatpush1.bf16.xpose.msra.mxu0 0
  %6838 = vmatprep.subr.bf16.mxu0 0
  %6839 = vmatpush1.bf16.xpose.msra.mxu0 0
  %6840 = vmatprep.subr.bf16.mxu0 0
  %6841 = vmatpush1.bf16.xpose.msra.mxu0 0
  %6842 = vmatprep.subr.bf16.mxu0 0
  %6843 = vmatpush1.bf16.xpose.msra.mxu0 0
  %6844 = vmatprep.subr.bf16.mxu0 0
  %6845 = vmatpush1.bf16.xpose.msra.mxu0 0
  %6846 = vmatprep.subr.bf16.mxu0 0
  %6847 = vmatpush1.bf16.xpose.msra.mxu0 0
  %6848 = vmatprep.subr.bf16.mxu0 0
  %6849 = vmatpush1.bf16.xpose.msra.mxu0 0
  %6850 = vmatprep.subr.bf16.mxu0 0
  %6851 = vmatpush1.bf16.xpose.msra.mxu0 0
  %6852 = vmatprep.subr.bf16.mxu0 0
  %6853 = vmatpush1.bf16.xpose.msra.mxu0 0
  %6854 = vmatprep.subr.bf16.mxu0 0
  %6855 = vmatpush1.bf16.xpose.msra.mxu0 0
  %6856 = vmatprep.subr.bf16.mxu0 0
  %6857 = vmatpush1.bf16.xpose.msra.mxu0 0
  %6858 = vmatprep.mubr.bf16.mxu0 0
  %6859 = vmatmul.mubr.bf16.gmra.mrb[0].mxu0 %v6821
  %v6860 = vpop.f32.mrb[0].mxu0
  %v6861 = vadd.f32 0.0, %v6860
  %v6862 = vpop.f32.mrb[0].mxu0
  %v6863 = vpop.f32.mrb[0].mxu0
  %v6864 = vadd.f32 0.0, %v6863
  %v6865 = vpop.f32.mrb[0].mxu0
  %6866 = vdwg.mxu0
  %v6867 = vmul.f32 %v6861, 0.125
  %v6868 = vmul.f32 %v6864, 0.125
  %v6869 = vsel %vm2403, %v6867, -inf
  %6870 = vmax.xlane.f32.xlu0 %v6869
  %v6871 = vpop.xlane.xlu0 %6870
  %v6872 = vsel %vm2403, %v6868, -inf
  %6873 = vmax.xlane.f32.xlu0 %v6872
  %v6874 = vpop.xlane.xlu0 %6873
  %v6875 = vsub.f32 %v6867, %v6871
  %v6876 = vsub.f32 %v6868, %v6874
  %v6877 = vmul.f32 %v6875, 1.442695
  %v6878 = vpow.pop %v6877
  %v6879 = vmul.f32 %v6876, 1.442695
  %v6880 = vpow.pop %v6879
  %v6881 = vsel %vm2403, %v6878, 0.0
  %6882 = vadd.xlane.f32.xlu0 %v6881
  %v6883 = vpop.xlane.xlu0 %6882
  %v6884 = vsel %vm2403, %v6880, 0.0
  %6885 = vadd.xlane.f32.xlu0 %v6884
  %v6886 = vpop.xlane.xlu0 %6885
  %v6887 = vrcp.pop %v6883
  %v6888 = vrcp.pop %v6886
  %v6889 = vmul.f32 %v6878, %v6887
  %v6890 = vmul.f32 %v6880, %v6888
  %v6891 = vpack.c.bf16 %v6890, %v6889
  %v6893 = vsel %vm2403, %v6891, 0
  %6895 = vmatprep.subr.bf16.mxu0 0
  %6896 = vmatpush1.bf16.msra.mxu0 %v5978
  %6897 = vmatprep.subr.bf16.mxu0 0
  %6898 = vmatpush1.bf16.msra.mxu0 0
  %6899 = vmatprep.subr.bf16.mxu0 0
  %6900 = vmatpush1.bf16.msra.mxu0 0
  %6901 = vmatprep.subr.bf16.mxu0 0
  %6902 = vmatpush1.bf16.msra.mxu0 0
  %6903 = vmatprep.subr.bf16.mxu0 0
  %6904 = vmatpush1.bf16.msra.mxu0 0
  %6905 = vmatprep.subr.bf16.mxu0 0
  %6906 = vmatpush1.bf16.msra.mxu0 0
  %6907 = vmatprep.subr.bf16.mxu0 0
  %6908 = vmatpush1.bf16.msra.mxu0 0
  %6909 = vmatprep.subr.bf16.mxu0 0
  %6910 = vmatpush1.bf16.msra.mxu0 0
  %6911 = vmatprep.subr.bf16.mxu0 0
  %6912 = vmatpush1.bf16.msra.mxu0 0
  %6913 = vmatprep.subr.bf16.mxu0 0
  %6914 = vmatpush1.bf16.msra.mxu0 0
  %6915 = vmatprep.subr.bf16.mxu0 0
  %6916 = vmatpush1.bf16.msra.mxu0 0
  %6917 = vmatprep.subr.bf16.mxu0 0
  %6918 = vmatpush1.bf16.msra.mxu0 0
  %6919 = vmatprep.subr.bf16.mxu0 0
  %6920 = vmatpush1.bf16.msra.mxu0 0
  %6921 = vmatprep.subr.bf16.mxu0 0
  %6922 = vmatpush1.bf16.msra.mxu0 0
  %6923 = vmatprep.subr.bf16.mxu0 0
  %6924 = vmatpush1.bf16.msra.mxu0 0
  %6925 = vmatprep.subr.bf16.mxu0 0
  %6926 = vmatpush1.bf16.msra.mxu0 0
  %6927 = vmatprep.mubr.bf16.mxu0 0
  %6928 = vmatmul.mubr.bf16.gmra.mrb[0].mxu0 %v6893
  %v6929 = vpop.f32.mrb[0].mxu0
  %v6930 = vadd.f32 0.0, %v6929
  %v6931 = vpop.f32.mrb[0].mxu0
  %v6932 = vpop.f32.mrb[0].mxu0
  %v6933 = vadd.f32 0.0, %v6932
  %v6934 = vpop.f32.mrb[0].mxu0
  %6935 = vdwg.mxu0
  %v6936 = vpack.c.bf16 %v6933, %v6930
  %6938 = vrot.lane.b32.xlu0 %v5970, 64
  %v6939 = vpop.permute.xlu0 %6938
  %6941 = vrot.lane.b32.xlu0 %v5974, 64
  %v6942 = vpop.permute.xlu0 %6941
  %v6944 = vsel %vm2353, %v6939, 0
  %v6947 = vsel %vm2353, %v6942, 0
  %6949 = vmatprep.subr.bf16.mxu0 0
  %6950 = vmatpush1.bf16.xpose.msra.mxu0 %v6947
  %6951 = vmatprep.subr.bf16.mxu0 0
  %6952 = vmatpush1.bf16.xpose.msra.mxu0 0
  %6953 = vmatprep.subr.bf16.mxu0 0
  %6954 = vmatpush1.bf16.xpose.msra.mxu0 0
  %6955 = vmatprep.subr.bf16.mxu0 0
  %6956 = vmatpush1.bf16.xpose.msra.mxu0 0
  %6957 = vmatprep.subr.bf16.mxu0 0
  %6958 = vmatpush1.bf16.xpose.msra.mxu0 0
  %6959 = vmatprep.subr.bf16.mxu0 0
  %6960 = vmatpush1.bf16.xpose.msra.mxu0 0
  %6961 = vmatprep.subr.bf16.mxu0 0
  %6962 = vmatpush1.bf16.xpose.msra.mxu0 0
  %6963 = vmatprep.subr.bf16.mxu0 0
  %6964 = vmatpush1.bf16.xpose.msra.mxu0 0
  %6965 = vmatprep.subr.bf16.mxu0 0
  %6966 = vmatpush1.bf16.xpose.msra.mxu0 0
  %6967 = vmatprep.subr.bf16.mxu0 0
  %6968 = vmatpush1.bf16.xpose.msra.mxu0 0
  %6969 = vmatprep.subr.bf16.mxu0 0
  %6970 = vmatpush1.bf16.xpose.msra.mxu0 0
  %6971 = vmatprep.subr.bf16.mxu0 0
  %6972 = vmatpush1.bf16.xpose.msra.mxu0 0
  %6973 = vmatprep.subr.bf16.mxu0 0
  %6974 = vmatpush1.bf16.xpose.msra.mxu0 0
  %6975 = vmatprep.subr.bf16.mxu0 0
  %6976 = vmatpush1.bf16.xpose.msra.mxu0 0
  %6977 = vmatprep.subr.bf16.mxu0 0
  %6978 = vmatpush1.bf16.xpose.msra.mxu0 0
  %6979 = vmatprep.subr.bf16.mxu0 0
  %6980 = vmatpush1.bf16.xpose.msra.mxu0 0
  %6981 = vmatprep.mubr.bf16.mxu0 0
  %6982 = vmatmul.mubr.bf16.gmra.mrb[0].mxu0 %v6944
  %v6983 = vpop.f32.mrb[0].mxu0
  %v6984 = vadd.f32 0.0, %v6983
  %v6985 = vpop.f32.mrb[0].mxu0
  %v6986 = vpop.f32.mrb[0].mxu0
  %v6987 = vadd.f32 0.0, %v6986
  %v6988 = vpop.f32.mrb[0].mxu0
  %6989 = vdwg.mxu0
  %v6990 = vmul.f32 %v6984, 0.125
  %v6991 = vmul.f32 %v6987, 0.125
  %v6992 = vsel %vm2403, %v6990, -inf
  %6993 = vmax.xlane.f32.xlu0 %v6992
  %v6994 = vpop.xlane.xlu0 %6993
  %v6995 = vsel %vm2403, %v6991, -inf
  %6996 = vmax.xlane.f32.xlu0 %v6995
  %v6997 = vpop.xlane.xlu0 %6996
  %v6998 = vsub.f32 %v6990, %v6994
  %v6999 = vsub.f32 %v6991, %v6997
  %v7000 = vmul.f32 %v6998, 1.442695
  %v7001 = vpow.pop %v7000
  %v7002 = vmul.f32 %v6999, 1.442695
  %v7003 = vpow.pop %v7002
  %v7004 = vsel %vm2403, %v7001, 0.0
  %7005 = vadd.xlane.f32.xlu0 %v7004
  %v7006 = vpop.xlane.xlu0 %7005
  %v7007 = vsel %vm2403, %v7003, 0.0
  %7008 = vadd.xlane.f32.xlu0 %v7007
  %v7009 = vpop.xlane.xlu0 %7008
  %v7010 = vrcp.pop %v7006
  %v7011 = vrcp.pop %v7009
  %v7012 = vmul.f32 %v7001, %v7010
  %v7013 = vmul.f32 %v7003, %v7011
  %v7014 = vpack.c.bf16 %v7013, %v7012
  %7016 = vrot.lane.b32.xlu0 %v5978, 64
  %v7017 = vpop.permute.xlu0 %7016
  %v7020 = vsel %vm2403, %v7014, 0
  %7022 = vmatprep.subr.bf16.mxu0 0
  %7023 = vmatpush1.bf16.msra.mxu0 %v7017
  %7024 = vmatprep.subr.bf16.mxu0 0
  %7025 = vmatpush1.bf16.msra.mxu0 0
  %7026 = vmatprep.subr.bf16.mxu0 0
  %7027 = vmatpush1.bf16.msra.mxu0 0
  %7028 = vmatprep.subr.bf16.mxu0 0
  %7029 = vmatpush1.bf16.msra.mxu0 0
  %7030 = vmatprep.subr.bf16.mxu0 0
  %7031 = vmatpush1.bf16.msra.mxu0 0
  %7032 = vmatprep.subr.bf16.mxu0 0
  %7033 = vmatpush1.bf16.msra.mxu0 0
  %7034 = vmatprep.subr.bf16.mxu0 0
  %7035 = vmatpush1.bf16.msra.mxu0 0
  %7036 = vmatprep.subr.bf16.mxu0 0
  %7037 = vmatpush1.bf16.msra.mxu0 0
  %7038 = vmatprep.subr.bf16.mxu0 0
  %7039 = vmatpush1.bf16.msra.mxu0 0
  %7040 = vmatprep.subr.bf16.mxu0 0
  %7041 = vmatpush1.bf16.msra.mxu0 0
  %7042 = vmatprep.subr.bf16.mxu0 0
  %7043 = vmatpush1.bf16.msra.mxu0 0
  %7044 = vmatprep.subr.bf16.mxu0 0
  %7045 = vmatpush1.bf16.msra.mxu0 0
  %7046 = vmatprep.subr.bf16.mxu0 0
  %7047 = vmatpush1.bf16.msra.mxu0 0
  %7048 = vmatprep.subr.bf16.mxu0 0
  %7049 = vmatpush1.bf16.msra.mxu0 0
  %7050 = vmatprep.subr.bf16.mxu0 0
  %7051 = vmatpush1.bf16.msra.mxu0 0
  %7052 = vmatprep.subr.bf16.mxu0 0
  %7053 = vmatpush1.bf16.msra.mxu0 0
  %7054 = vmatprep.mubr.bf16.mxu0 0
  %7055 = vmatmul.mubr.bf16.gmra.mrb[0].mxu0 %v7020
  %v7056 = vpop.f32.mrb[0].mxu0
  %v7057 = vadd.f32 0.0, %v7056
  %v7058 = vpop.f32.mrb[0].mxu0
  %v7059 = vpop.f32.mrb[0].mxu0
  %v7060 = vadd.f32 0.0, %v7059
  %v7061 = vpop.f32.mrb[0].mxu0
  %7062 = vdwg.mxu0
  %v7063 = vpack.c.bf16 %v7060, %v7057
  %v7065 = vsel %vm2353, %v7063, 0
  %7067 = vmatprep.subr.bf16.mxu0 %v6249
  %7068 = vmatpush1.bf16.msra.mxu0 %v6248
  %7069 = vmatprep.subr.bf16.mxu0 %v6251
  %7070 = vmatpush1.bf16.msra.mxu0 %v6250
  %7071 = vmatprep.subr.bf16.mxu0 %v6253
  %7072 = vmatpush1.bf16.msra.mxu0 %v6252
  %7073 = vmatprep.subr.bf16.mxu0 %v6255
  %7074 = vmatpush1.bf16.msra.mxu0 %v6254
  %7075 = vmatprep.subr.bf16.mxu0 0
  %7076 = vmatpush1.bf16.msra.mxu0 0
  %7077 = vmatprep.subr.bf16.mxu0 0
  %7078 = vmatpush1.bf16.msra.mxu0 0
  %7079 = vmatprep.subr.bf16.mxu0 0
  %7080 = vmatpush1.bf16.msra.mxu0 0
  %7081 = vmatprep.subr.bf16.mxu0 0
  %7082 = vmatpush1.bf16.msra.mxu0 0
  %7083 = vmatprep.subr.bf16.mxu0 0
  %7084 = vmatpush1.bf16.msra.mxu0 0
  %7085 = vmatprep.subr.bf16.mxu0 0
  %7086 = vmatpush1.bf16.msra.mxu0 0
  %7087 = vmatprep.subr.bf16.mxu0 0
  %7088 = vmatpush1.bf16.msra.mxu0 0
  %7089 = vmatprep.subr.bf16.mxu0 0
  %7090 = vmatpush1.bf16.msra.mxu0 0
  %7091 = vmatprep.subr.bf16.mxu0 0
  %7092 = vmatpush1.bf16.msra.mxu0 0
  %7093 = vmatprep.subr.bf16.mxu0 0
  %7094 = vmatpush1.bf16.msra.mxu0 0
  %7095 = vmatprep.subr.bf16.mxu0 0
  %7096 = vmatpush1.bf16.msra.mxu0 0
  %7097 = vmatprep.subr.bf16.mxu0 0
  %7098 = vmatpush1.bf16.msra.mxu0 0
  %7099 = vmatprep.mubr.bf16.mxu0 0
  %7100 = vmatmul.mubr.bf16.gmra.mrb[0].mxu0 %v7065
  %v7101 = vpop.f32.mrb[0].mxu0
  %v7102 = vadd.f32 0.0, %v7101
  %v7103 = vpop.f32.mrb[0].mxu0
  %v7104 = vadd.f32 0.0, %v7103
  %v7105 = vpop.f32.mrb[0].mxu0
  %v7106 = vadd.f32 0.0, %v7105
  %v7107 = vpop.f32.mrb[0].mxu0
  %v7108 = vadd.f32 0.0, %v7107
  %7109 = vdwg.mxu0
  %v7111 = vsel %vm2353, %v6936, 0
  %7113 = vmatprep.subr.bf16.mxu0 %v6335
  %7114 = vmatpush1.bf16.msra.mxu0 %v6334
  %7115 = vmatprep.subr.bf16.mxu0 %v6337
  %7116 = vmatpush1.bf16.msra.mxu0 %v6336
  %7117 = vmatprep.subr.bf16.mxu0 %v6339
  %7118 = vmatpush1.bf16.msra.mxu0 %v6338
  %7119 = vmatprep.subr.bf16.mxu0 %v6341
  %7120 = vmatpush1.bf16.msra.mxu0 %v6340
  %7121 = vmatprep.subr.bf16.mxu0 0
  %7122 = vmatpush1.bf16.msra.mxu0 0
  %7123 = vmatprep.subr.bf16.mxu0 0
  %7124 = vmatpush1.bf16.msra.mxu0 0
  %7125 = vmatprep.subr.bf16.mxu0 0
  %7126 = vmatpush1.bf16.msra.mxu0 0
  %7127 = vmatprep.subr.bf16.mxu0 0
  %7128 = vmatpush1.bf16.msra.mxu0 0
  %7129 = vmatprep.subr.bf16.mxu0 0
  %7130 = vmatpush1.bf16.msra.mxu0 0
  %7131 = vmatprep.subr.bf16.mxu0 0
  %7132 = vmatpush1.bf16.msra.mxu0 0
  %7133 = vmatprep.subr.bf16.mxu0 0
  %7134 = vmatpush1.bf16.msra.mxu0 0
  %7135 = vmatprep.subr.bf16.mxu0 0
  %7136 = vmatpush1.bf16.msra.mxu0 0
  %7137 = vmatprep.subr.bf16.mxu0 0
  %7138 = vmatpush1.bf16.msra.mxu0 0
  %7139 = vmatprep.subr.bf16.mxu0 0
  %7140 = vmatpush1.bf16.msra.mxu0 0
  %7141 = vmatprep.subr.bf16.mxu0 0
  %7142 = vmatpush1.bf16.msra.mxu0 0
  %7143 = vmatprep.subr.bf16.mxu0 0
  %7144 = vmatpush1.bf16.msra.mxu0 0
  %7145 = vmatprep.mubr.bf16.mxu0 0
  %7146 = vmatmul.mubr.bf16.gmra.mrb[0].mxu0 %v7111
  %v7147 = vpop.f32.mrb[0].mxu0
  %v7148 = vadd.f32 %v7102, %v7147
  %v7149 = vpop.f32.mrb[0].mxu0
  %v7150 = vadd.f32 %v7104, %v7149
  %v7151 = vpop.f32.mrb[0].mxu0
  %v7152 = vadd.f32 %v7106, %v7151
  %v7153 = vpop.f32.mrb[0].mxu0
  %v7154 = vadd.f32 %v7108, %v7153
  %7155 = vdwg.mxu0
  %v7157 = vsel %vm2353, %v5971, 0
  %v7160 = vsel %vm2353, %v5975, 0
  %7162 = vmatprep.subr.bf16.mxu0 0
  %7163 = vmatpush1.bf16.xpose.msra.mxu0 %v7160
  %7164 = vmatprep.subr.bf16.mxu0 0
  %7165 = vmatpush1.bf16.xpose.msra.mxu0 0
  %7166 = vmatprep.subr.bf16.mxu0 0
  %7167 = vmatpush1.bf16.xpose.msra.mxu0 0
  %7168 = vmatprep.subr.bf16.mxu0 0
  %7169 = vmatpush1.bf16.xpose.msra.mxu0 0
  %7170 = vmatprep.subr.bf16.mxu0 0
  %7171 = vmatpush1.bf16.xpose.msra.mxu0 0
  %7172 = vmatprep.subr.bf16.mxu0 0
  %7173 = vmatpush1.bf16.xpose.msra.mxu0 0
  %7174 = vmatprep.subr.bf16.mxu0 0
  %7175 = vmatpush1.bf16.xpose.msra.mxu0 0
  %7176 = vmatprep.subr.bf16.mxu0 0
  %7177 = vmatpush1.bf16.xpose.msra.mxu0 0
  %7178 = vmatprep.subr.bf16.mxu0 0
  %7179 = vmatpush1.bf16.xpose.msra.mxu0 0
  %7180 = vmatprep.subr.bf16.mxu0 0
  %7181 = vmatpush1.bf16.xpose.msra.mxu0 0
  %7182 = vmatprep.subr.bf16.mxu0 0
  %7183 = vmatpush1.bf16.xpose.msra.mxu0 0
  %7184 = vmatprep.subr.bf16.mxu0 0
  %7185 = vmatpush1.bf16.xpose.msra.mxu0 0
  %7186 = vmatprep.subr.bf16.mxu0 0
  %7187 = vmatpush1.bf16.xpose.msra.mxu0 0
  %7188 = vmatprep.subr.bf16.mxu0 0
  %7189 = vmatpush1.bf16.xpose.msra.mxu0 0
  %7190 = vmatprep.subr.bf16.mxu0 0
  %7191 = vmatpush1.bf16.xpose.msra.mxu0 0
  %7192 = vmatprep.subr.bf16.mxu0 0
  %7193 = vmatpush1.bf16.xpose.msra.mxu0 0
  %7194 = vmatprep.mubr.bf16.mxu0 0
  %7195 = vmatmul.mubr.bf16.gmra.mrb[0].mxu0 %v7157
  %v7196 = vpop.f32.mrb[0].mxu0
  %v7197 = vadd.f32 0.0, %v7196
  %v7198 = vpop.f32.mrb[0].mxu0
  %v7199 = vpop.f32.mrb[0].mxu0
  %v7200 = vadd.f32 0.0, %v7199
  %v7201 = vpop.f32.mrb[0].mxu0
  %7202 = vdwg.mxu0
  %v7203 = vmul.f32 %v7197, 0.125
  %v7204 = vmul.f32 %v7200, 0.125
  %v7205 = vsel %vm2403, %v7203, -inf
  %7206 = vmax.xlane.f32.xlu0 %v7205
  %v7207 = vpop.xlane.xlu0 %7206
  %v7208 = vsel %vm2403, %v7204, -inf
  %7209 = vmax.xlane.f32.xlu0 %v7208
  %v7210 = vpop.xlane.xlu0 %7209
  %v7211 = vsub.f32 %v7203, %v7207
  %v7212 = vsub.f32 %v7204, %v7210
  %v7213 = vmul.f32 %v7211, 1.442695
  %v7214 = vpow.pop %v7213
  %v7215 = vmul.f32 %v7212, 1.442695
  %v7216 = vpow.pop %v7215
  %v7217 = vsel %vm2403, %v7214, 0.0
  %7218 = vadd.xlane.f32.xlu0 %v7217
  %v7219 = vpop.xlane.xlu0 %7218
  %v7220 = vsel %vm2403, %v7216, 0.0
  %7221 = vadd.xlane.f32.xlu0 %v7220
  %v7222 = vpop.xlane.xlu0 %7221
  %v7223 = vrcp.pop %v7219
  %v7224 = vrcp.pop %v7222
  %v7225 = vmul.f32 %v7214, %v7223
  %v7226 = vmul.f32 %v7216, %v7224
  %v7227 = vpack.c.bf16 %v7226, %v7225
  %v7229 = vsel %vm2403, %v7227, 0
  %7231 = vmatprep.subr.bf16.mxu0 0
  %7232 = vmatpush1.bf16.msra.mxu0 %v5979
  %7233 = vmatprep.subr.bf16.mxu0 0
  %7234 = vmatpush1.bf16.msra.mxu0 0
  %7235 = vmatprep.subr.bf16.mxu0 0
  %7236 = vmatpush1.bf16.msra.mxu0 0
  %7237 = vmatprep.subr.bf16.mxu0 0
  %7238 = vmatpush1.bf16.msra.mxu0 0
  %7239 = vmatprep.subr.bf16.mxu0 0
  %7240 = vmatpush1.bf16.msra.mxu0 0
  %7241 = vmatprep.subr.bf16.mxu0 0
  %7242 = vmatpush1.bf16.msra.mxu0 0
  %7243 = vmatprep.subr.bf16.mxu0 0
  %7244 = vmatpush1.bf16.msra.mxu0 0
  %7245 = vmatprep.subr.bf16.mxu0 0
  %7246 = vmatpush1.bf16.msra.mxu0 0
  %7247 = vmatprep.subr.bf16.mxu0 0
  %7248 = vmatpush1.bf16.msra.mxu0 0
  %7249 = vmatprep.subr.bf16.mxu0 0
  %7250 = vmatpush1.bf16.msra.mxu0 0
  %7251 = vmatprep.subr.bf16.mxu0 0
  %7252 = vmatpush1.bf16.msra.mxu0 0
  %7253 = vmatprep.subr.bf16.mxu0 0
  %7254 = vmatpush1.bf16.msra.mxu0 0
  %7255 = vmatprep.subr.bf16.mxu0 0
  %7256 = vmatpush1.bf16.msra.mxu0 0
  %7257 = vmatprep.subr.bf16.mxu0 0
  %7258 = vmatpush1.bf16.msra.mxu0 0
  %7259 = vmatprep.subr.bf16.mxu0 0
  %7260 = vmatpush1.bf16.msra.mxu0 0
  %7261 = vmatprep.subr.bf16.mxu0 0
  %7262 = vmatpush1.bf16.msra.mxu0 0
  %7263 = vmatprep.mubr.bf16.mxu0 0
  %7264 = vmatmul.mubr.bf16.gmra.mrb[0].mxu0 %v7229
  %v7265 = vpop.f32.mrb[0].mxu0
  %v7266 = vadd.f32 0.0, %v7265
  %v7267 = vpop.f32.mrb[0].mxu0
  %v7268 = vpop.f32.mrb[0].mxu0
  %v7269 = vadd.f32 0.0, %v7268
  %v7270 = vpop.f32.mrb[0].mxu0
  %7271 = vdwg.mxu0
  %v7272 = vpack.c.bf16 %v7269, %v7266
  %v7274 = vsel %vm2353, %v7272, 0
  %7276 = vmatprep.subr.bf16.mxu0 %v6538
  %7277 = vmatpush1.bf16.msra.mxu0 %v6537
  %7278 = vmatprep.subr.bf16.mxu0 %v6540
  %7279 = vmatpush1.bf16.msra.mxu0 %v6539
  %7280 = vmatprep.subr.bf16.mxu0 %v6542
  %7281 = vmatpush1.bf16.msra.mxu0 %v6541
  %7282 = vmatprep.subr.bf16.mxu0 %v6544
  %7283 = vmatpush1.bf16.msra.mxu0 %v6543
  %7284 = vmatprep.subr.bf16.mxu0 0
  %7285 = vmatpush1.bf16.msra.mxu0 0
  %7286 = vmatprep.subr.bf16.mxu0 0
  %7287 = vmatpush1.bf16.msra.mxu0 0
  %7288 = vmatprep.subr.bf16.mxu0 0
  %7289 = vmatpush1.bf16.msra.mxu0 0
  %7290 = vmatprep.subr.bf16.mxu0 0
  %7291 = vmatpush1.bf16.msra.mxu0 0
  %7292 = vmatprep.subr.bf16.mxu0 0
  %7293 = vmatpush1.bf16.msra.mxu0 0
  %7294 = vmatprep.subr.bf16.mxu0 0
  %7295 = vmatpush1.bf16.msra.mxu0 0
  %7296 = vmatprep.subr.bf16.mxu0 0
  %7297 = vmatpush1.bf16.msra.mxu0 0
  %7298 = vmatprep.subr.bf16.mxu0 0
  %7299 = vmatpush1.bf16.msra.mxu0 0
  %7300 = vmatprep.subr.bf16.mxu0 0
  %7301 = vmatpush1.bf16.msra.mxu0 0
  %7302 = vmatprep.subr.bf16.mxu0 0
  %7303 = vmatpush1.bf16.msra.mxu0 0
  %7304 = vmatprep.subr.bf16.mxu0 0
  %7305 = vmatpush1.bf16.msra.mxu0 0
  %7306 = vmatprep.subr.bf16.mxu0 0
  %7307 = vmatpush1.bf16.msra.mxu0 0
  %7308 = vmatprep.mubr.bf16.mxu0 0
  %7309 = vmatmul.mubr.bf16.gmra.mrb[0].mxu0 %v7274
  %v7310 = vpop.f32.mrb[0].mxu0
  %v7311 = vadd.f32 0.0, %v7310
  %v7312 = vpop.f32.mrb[0].mxu0
  %v7313 = vadd.f32 0.0, %v7312
  %v7314 = vpop.f32.mrb[0].mxu0
  %v7315 = vadd.f32 0.0, %v7314
  %v7316 = vpop.f32.mrb[0].mxu0
  %v7317 = vadd.f32 0.0, %v7316
  %7318 = vdwg.mxu0
  %v7319 = vadd.f32 %v7148, %v7311
  %v7320 = vadd.f32 %v7150, %v7313
  %v7321 = vadd.f32 %v7152, %v7315
  %v7322 = vadd.f32 %v7154, %v7317
  %7324 = vrot.lane.b32.xlu0 %v5971, 64
  %v7325 = vpop.permute.xlu0 %7324
  %7327 = vrot.lane.b32.xlu0 %v5975, 64
  %v7328 = vpop.permute.xlu0 %7327
  %v7330 = vsel %vm2353, %v7325, 0
  %v7333 = vsel %vm2353, %v7328, 0
  %7335 = vmatprep.subr.bf16.mxu0 0
  %7336 = vmatpush1.bf16.xpose.msra.mxu0 %v7333
  %7337 = vmatprep.subr.bf16.mxu0 0
  %7338 = vmatpush1.bf16.xpose.msra.mxu0 0
  %7339 = vmatprep.subr.bf16.mxu0 0
  %7340 = vmatpush1.bf16.xpose.msra.mxu0 0
  %7341 = vmatprep.subr.bf16.mxu0 0
  %7342 = vmatpush1.bf16.xpose.msra.mxu0 0
  %7343 = vmatprep.subr.bf16.mxu0 0
  %7344 = vmatpush1.bf16.xpose.msra.mxu0 0
  %7345 = vmatprep.subr.bf16.mxu0 0
  %7346 = vmatpush1.bf16.xpose.msra.mxu0 0
  %7347 = vmatprep.subr.bf16.mxu0 0
  %7348 = vmatpush1.bf16.xpose.msra.mxu0 0
  %7349 = vmatprep.subr.bf16.mxu0 0
  %7350 = vmatpush1.bf16.xpose.msra.mxu0 0
  %7351 = vmatprep.subr.bf16.mxu0 0
  %7352 = vmatpush1.bf16.xpose.msra.mxu0 0
  %7353 = vmatprep.subr.bf16.mxu0 0
  %7354 = vmatpush1.bf16.xpose.msra.mxu0 0
  %7355 = vmatprep.subr.bf16.mxu0 0
  %7356 = vmatpush1.bf16.xpose.msra.mxu0 0
  %7357 = vmatprep.subr.bf16.mxu0 0
  %7358 = vmatpush1.bf16.xpose.msra.mxu0 0
  %7359 = vmatprep.subr.bf16.mxu0 0
  %7360 = vmatpush1.bf16.xpose.msra.mxu0 0
  %7361 = vmatprep.subr.bf16.mxu0 0
  %7362 = vmatpush1.bf16.xpose.msra.mxu0 0
  %7363 = vmatprep.subr.bf16.mxu0 0
  %7364 = vmatpush1.bf16.xpose.msra.mxu0 0
  %7365 = vmatprep.subr.bf16.mxu0 0
  %7366 = vmatpush1.bf16.xpose.msra.mxu0 0
  %7367 = vmatprep.mubr.bf16.mxu0 0
  %7368 = vmatmul.mubr.bf16.gmra.mrb[0].mxu0 %v7330
  %v7369 = vpop.f32.mrb[0].mxu0
  %v7370 = vadd.f32 0.0, %v7369
  %v7371 = vpop.f32.mrb[0].mxu0
  %v7372 = vpop.f32.mrb[0].mxu0
  %v7373 = vadd.f32 0.0, %v7372
  %v7374 = vpop.f32.mrb[0].mxu0
  %7375 = vdwg.mxu0
  %v7376 = vmul.f32 %v7370, 0.125
  %v7377 = vmul.f32 %v7373, 0.125
  %v7378 = vsel %vm2403, %v7376, -inf
  %7379 = vmax.xlane.f32.xlu0 %v7378
  %v7380 = vpop.xlane.xlu0 %7379
  %v7381 = vsel %vm2403, %v7377, -inf
  %7382 = vmax.xlane.f32.xlu0 %v7381
  %v7383 = vpop.xlane.xlu0 %7382
  %v7384 = vsub.f32 %v7376, %v7380
  %v7385 = vsub.f32 %v7377, %v7383
  %v7386 = vmul.f32 %v7384, 1.442695
  %v7387 = vpow.pop %v7386
  %v7388 = vmul.f32 %v7385, 1.442695
  %v7389 = vpow.pop %v7388
  %v7390 = vsel %vm2403, %v7387, 0.0
  %7391 = vadd.xlane.f32.xlu0 %v7390
  %v7392 = vpop.xlane.xlu0 %7391
  %v7393 = vsel %vm2403, %v7389, 0.0
  %7394 = vadd.xlane.f32.xlu0 %v7393
  %v7395 = vpop.xlane.xlu0 %7394
  %v7396 = vrcp.pop %v7392
  %v7397 = vrcp.pop %v7395
  %v7398 = vmul.f32 %v7387, %v7396
  %v7399 = vmul.f32 %v7389, %v7397
  %v7400 = vpack.c.bf16 %v7399, %v7398
  %7402 = vrot.lane.b32.xlu0 %v5979, 64
  %v7403 = vpop.permute.xlu0 %7402
  %v7406 = vsel %vm2403, %v7400, 0
  %7408 = vmatprep.subr.bf16.mxu0 0
  %7409 = vmatpush1.bf16.msra.mxu0 %v7403
  %7410 = vmatprep.subr.bf16.mxu0 0
  %7411 = vmatpush1.bf16.msra.mxu0 0
  %7412 = vmatprep.subr.bf16.mxu0 0
  %7413 = vmatpush1.bf16.msra.mxu0 0
  %7414 = vmatprep.subr.bf16.mxu0 0
  %7415 = vmatpush1.bf16.msra.mxu0 0
  %7416 = vmatprep.subr.bf16.mxu0 0
  %7417 = vmatpush1.bf16.msra.mxu0 0
  %7418 = vmatprep.subr.bf16.mxu0 0
  %7419 = vmatpush1.bf16.msra.mxu0 0
  %7420 = vmatprep.subr.bf16.mxu0 0
  %7421 = vmatpush1.bf16.msra.mxu0 0
  %7422 = vmatprep.subr.bf16.mxu0 0
  %7423 = vmatpush1.bf16.msra.mxu0 0
  %7424 = vmatprep.subr.bf16.mxu0 0
  %7425 = vmatpush1.bf16.msra.mxu0 0
  %7426 = vmatprep.subr.bf16.mxu0 0
  %7427 = vmatpush1.bf16.msra.mxu0 0
  %7428 = vmatprep.subr.bf16.mxu0 0
  %7429 = vmatpush1.bf16.msra.mxu0 0
  %7430 = vmatprep.subr.bf16.mxu0 0
  %7431 = vmatpush1.bf16.msra.mxu0 0
  %7432 = vmatprep.subr.bf16.mxu0 0
  %7433 = vmatpush1.bf16.msra.mxu0 0
  %7434 = vmatprep.subr.bf16.mxu0 0
  %7435 = vmatpush1.bf16.msra.mxu0 0
  %7436 = vmatprep.subr.bf16.mxu0 0
  %7437 = vmatpush1.bf16.msra.mxu0 0
  %7438 = vmatprep.subr.bf16.mxu0 0
  %7439 = vmatpush1.bf16.msra.mxu0 0
  %7440 = vmatprep.mubr.bf16.mxu0 0
  %7441 = vmatmul.mubr.bf16.gmra.mrb[0].mxu0 %v7406
  %v7442 = vpop.f32.mrb[0].mxu0
  %v7443 = vadd.f32 0.0, %v7442
  %v7444 = vpop.f32.mrb[0].mxu0
  %v7445 = vpop.f32.mrb[0].mxu0
  %v7446 = vadd.f32 0.0, %v7445
  %v7447 = vpop.f32.mrb[0].mxu0
  %7448 = vdwg.mxu0
  %v7449 = vpack.c.bf16 %v7446, %v7443
  %v7451 = vsel %vm2353, %v7449, 0
  %7453 = vmatprep.subr.bf16.mxu0 %v6755
  %7454 = vmatpush1.bf16.msra.mxu0 %v6754
  %7455 = vmatprep.subr.bf16.mxu0 %v6757
  %7456 = vmatpush1.bf16.msra.mxu0 %v6756
  %7457 = vmatprep.subr.bf16.mxu0 %v6759
  %7458 = vmatpush1.bf16.msra.mxu0 %v6758
  %7459 = vmatprep.subr.bf16.mxu0 %v6761
  %7460 = vmatpush1.bf16.msra.mxu0 %v6760
  %7461 = vmatprep.subr.bf16.mxu0 0
  %7462 = vmatpush1.bf16.msra.mxu0 0
  %7463 = vmatprep.subr.bf16.mxu0 0
  %7464 = vmatpush1.bf16.msra.mxu0 0
  %7465 = vmatprep.subr.bf16.mxu0 0
  %7466 = vmatpush1.bf16.msra.mxu0 0
  %7467 = vmatprep.subr.bf16.mxu0 0
  %7468 = vmatpush1.bf16.msra.mxu0 0
  %7469 = vmatprep.subr.bf16.mxu0 0
  %7470 = vmatpush1.bf16.msra.mxu0 0
  %7471 = vmatprep.subr.bf16.mxu0 0
  %7472 = vmatpush1.bf16.msra.mxu0 0
  %7473 = vmatprep.subr.bf16.mxu0 0
  %7474 = vmatpush1.bf16.msra.mxu0 0
  %7475 = vmatprep.subr.bf16.mxu0 0
  %7476 = vmatpush1.bf16.msra.mxu0 0
  %7477 = vmatprep.subr.bf16.mxu0 0
  %7478 = vmatpush1.bf16.msra.mxu0 0
  %7479 = vmatprep.subr.bf16.mxu0 0
  %7480 = vmatpush1.bf16.msra.mxu0 0
  %7481 = vmatprep.subr.bf16.mxu0 0
  %7482 = vmatpush1.bf16.msra.mxu0 0
  %7483 = vmatprep.subr.bf16.mxu0 0
  %7484 = vmatpush1.bf16.msra.mxu0 0
  %7485 = vmatprep.mubr.bf16.mxu0 0
  %7486 = vmatmul.mubr.bf16.gmra.mrb[0].mxu0 %v7451
  %v7487 = vpop.f32.mrb[0].mxu0
  %v7488 = vadd.f32 0.0, %v7487
  %v7489 = vpop.f32.mrb[0].mxu0
  %v7490 = vadd.f32 0.0, %v7489
  %v7491 = vpop.f32.mrb[0].mxu0
  %v7492 = vadd.f32 0.0, %v7491
  %v7493 = vpop.f32.mrb[0].mxu0
  %v7494 = vadd.f32 0.0, %v7493
  %7495 = vdwg.mxu0
  %v7496 = vadd.f32 %v7319, %v7488
  %v7497 = vadd.f32 %v7320, %v7490
  %v7498 = vadd.f32 %v7321, %v7492
  %v7499 = vadd.f32 %v7322, %v7494
  %s7500 = scalar_lea.vmem %s8, 2
  %v7501 = vld [vmem:[%s7500] sm:$0x3]
  %v7503 = vlaneseq
  %v7504 = vshrl.u32 %v7503, 7
  %v7505 = vsub.s32 0, %v7504
  %v7506 = vrot.slane %v7501, %v7505
  %v7507 = vlaneseq
  %v7508 = vshrl.u32 %v7507, 7
  %v7509 = vsub.s32 1, %v7508
  %v7510 = vrot.slane %v7501, %v7509
  %v7513 = vadd.f32 %v6816, %v7506
  %v7514 = vadd.f32 %v6817, %v7510
  %v7515 = vadd.f32 %v6818, %v7506
  %v7516 = vadd.f32 %v6819, %v7510
  %v7517 = vadd.f32 %v7496, %v7506
  %v7518 = vadd.f32 %v7497, %v7510
  %v7519 = vadd.f32 %v7498, %v7506
  %v7520 = vadd.f32 %v7499, %v7510
  %v7521 = vadd.f32 %v5154, %v7513
  %v7522 = vadd.f32 %v5155, %v7514
  %v7523 = vadd.f32 %v5156, %v7515
  %v7524 = vadd.f32 %v5157, %v7516
  %v7525 = vadd.f32 %v5158, %v7517
  %v7526 = vadd.f32 %v5159, %v7518
  %v7527 = vadd.f32 %v5160, %v7519
  %v7528 = vadd.f32 %v5161, %v7520
  %v7529 = vadd.f32 %v7521, %v7522
  %7530 = vadd.xlane.f32.xlu0 %v7529
  %v7531 = vpop.xlane.xlu0 %7530
  %v7532 = vadd.f32 %v7523, %v7524
  %7533 = vadd.xlane.f32.xlu0 %v7532
  %v7534 = vpop.xlane.xlu0 %7533
  %v7535 = vadd.f32 %v7525, %v7526
  %7536 = vadd.xlane.f32.xlu0 %v7535
  %v7537 = vpop.xlane.xlu0 %7536
  %v7538 = vadd.f32 %v7527, %v7528
  %7539 = vadd.xlane.f32.xlu0 %v7538
  %v7540 = vpop.xlane.xlu0 %7539
  %v7541 = vmul.f32 %v7531, %v3915
  %v7542 = vmul.f32 %v7534, %v3915
  %v7543 = vmul.f32 %v7537, %v3915
  %v7544 = vmul.f32 %v7540, %v3915
  %v7545 = vsub.f32 %v7521, %v7541
  %v7546 = vsub.f32 %v7522, %v7541
  %v7547 = vsub.f32 %v7523, %v7542
  %v7548 = vsub.f32 %v7524, %v7542
  %v7549 = vsub.f32 %v7525, %v7543
  %v7550 = vsub.f32 %v7526, %v7543
  %v7551 = vsub.f32 %v7527, %v7544
  %v7552 = vsub.f32 %v7528, %v7544
  %v7553 = vmul.f32 %v7545, %v7545
  %v7554 = vmul.f32 %v7546, %v7546
  %v7555 = vmul.f32 %v7547, %v7547
  %v7556 = vmul.f32 %v7548, %v7548
  %v7557 = vmul.f32 %v7549, %v7549
  %v7558 = vmul.f32 %v7550, %v7550
  %v7559 = vmul.f32 %v7551, %v7551
  %v7560 = vmul.f32 %v7552, %v7552
  %v7561 = vadd.f32 %v7553, %v7554
  %7562 = vadd.xlane.f32.xlu0 %v7561
  %v7563 = vpop.xlane.xlu0 %7562
  %v7564 = vadd.f32 %v7555, %v7556
  %7565 = vadd.xlane.f32.xlu0 %v7564
  %v7566 = vpop.xlane.xlu0 %7565
  %v7567 = vadd.f32 %v7557, %v7558
  %7568 = vadd.xlane.f32.xlu0 %v7567
  %v7569 = vpop.xlane.xlu0 %7568
  %v7570 = vadd.f32 %v7559, %v7560
  %7571 = vadd.xlane.f32.xlu0 %v7570
  %v7572 = vpop.xlane.xlu0 %7571
  %v7573 = vmul.f32 %v7563, %v3915
  %v7574 = vmul.f32 %v7566, %v3915
  %v7575 = vmul.f32 %v7569, %v3915
  %v7576 = vmul.f32 %v7572, %v3915
  %v7577 = vadd.f32 %v7573, 1e-05
  %v7578 = vadd.f32 %v7574, 1e-05
  %v7579 = vadd.f32 %v7575, 1e-05
  %v7580 = vadd.f32 %v7576, 1e-05
  %v7581 = vrsqrt.pop %v7577
  %v7582 = vrsqrt.pop %v7578
  %v7583 = vrsqrt.pop %v7579
  %v7584 = vrsqrt.pop %v7580
  %v7585 = vmul.f32 %v7545, %v7581
  %v7586 = vmul.f32 %v7546, %v7581
  %v7587 = vmul.f32 %v7547, %v7582
  %v7588 = vmul.f32 %v7548, %v7582
  %v7589 = vmul.f32 %v7549, %v7583
  %v7590 = vmul.f32 %v7550, %v7583
  %v7591 = vmul.f32 %v7551, %v7584
  %v7592 = vmul.f32 %v7552, %v7584
  %s7593 = scalar_lea.vmem %s9, 2
  %v7594 = vld [vmem:[%s7593] sm:$0x3]
  %v7596 = vlaneseq
  %v7597 = vshrl.u32 %v7596, 7
  %v7598 = vsub.s32 0, %v7597
  %v7599 = vrot.slane %v7594, %v7598
  %v7600 = vlaneseq
  %v7601 = vshrl.u32 %v7600, 7
  %v7602 = vsub.s32 1, %v7601
  %v7603 = vrot.slane %v7594, %v7602
  %v7606 = vmul.f32 %v7585, %v7599
  %v7607 = vmul.f32 %v7586, %v7603
  %v7608 = vmul.f32 %v7587, %v7599
  %v7609 = vmul.f32 %v7588, %v7603
  %v7610 = vmul.f32 %v7589, %v7599
  %v7611 = vmul.f32 %v7590, %v7603
  %v7612 = vmul.f32 %v7591, %v7599
  %v7613 = vmul.f32 %v7592, %v7603
  %s7614 = scalar_lea.vmem %s10, 2
  %v7615 = vld [vmem:[%s7614] sm:$0x3]
  %v7617 = vlaneseq
  %v7618 = vshrl.u32 %v7617, 7
  %v7619 = vsub.s32 0, %v7618
  %v7620 = vrot.slane %v7615, %v7619
  %v7621 = vlaneseq
  %v7622 = vshrl.u32 %v7621, 7
  %v7623 = vsub.s32 1, %v7622
  %v7624 = vrot.slane %v7615, %v7623
  %v7627 = vadd.f32 %v7606, %v7620
  %v7628 = vadd.f32 %v7607, %v7624
  %v7629 = vadd.f32 %v7608, %v7620
  %v7630 = vadd.f32 %v7609, %v7624
  %v7631 = vadd.f32 %v7610, %v7620
  %v7632 = vadd.f32 %v7611, %v7624
  %v7633 = vadd.f32 %v7612, %v7620
  %v7634 = vadd.f32 %v7613, %v7624
  %v7635 = vpack.c.bf16 %v7629, %v7627
  %v7636 = vpack.c.bf16 %v7630, %v7628
  %v7637 = vpack.c.bf16 %v7633, %v7631
  %v7638 = vpack.c.bf16 %v7634, %v7632
  %s7639 = scalar_lea.vmem %s11, 512
  %v7640 = vld [vmem:[%s7639] sm:$0xff]
  %v7641 = vld [vmem:[%s7639 + $0x8] sm:$0xff]
  %v7642 = vld [vmem:[%s7639 + $0x10] sm:$0xff]
  %v7643 = vld [vmem:[%s7639 + $0x18] sm:$0xff]
  %v7644 = vld [vmem:[%s7639 + $0x20] sm:$0xff]
  %v7645 = vld [vmem:[%s7639 + $0x28] sm:$0xff]
  %v7646 = vld [vmem:[%s7639 + $0x30] sm:$0xff]
  %v7647 = vld [vmem:[%s7639 + $0x38] sm:$0xff]
  %v7648 = vld [vmem:[%s7639 + $0x40] sm:$0xff]
  %v7649 = vld [vmem:[%s7639 + $0x48] sm:$0xff]
  %v7650 = vld [vmem:[%s7639 + $0x50] sm:$0xff]
  %v7651 = vld [vmem:[%s7639 + $0x58] sm:$0xff]
  %v7652 = vld [vmem:[%s7639 + $0x60] sm:$0xff]
  %v7653 = vld [vmem:[%s7639 + $0x68] sm:$0xff]
  %v7654 = vld [vmem:[%s7639 + $0x70] sm:$0xff]
  %v7655 = vld [vmem:[%s7639 + $0x78] sm:$0xff]
  %v7656 = vld [vmem:[%s7639 + $0x80] sm:$0xff]
  %v7657 = vld [vmem:[%s7639 + $0x88] sm:$0xff]
  %v7658 = vld [vmem:[%s7639 + $0x90] sm:$0xff]
  %v7659 = vld [vmem:[%s7639 + $0x98] sm:$0xff]
  %v7660 = vld [vmem:[%s7639 + $0xa0] sm:$0xff]
  %v7661 = vld [vmem:[%s7639 + $0xa8] sm:$0xff]
  %v7662 = vld [vmem:[%s7639 + $0xb0] sm:$0xff]
  %v7663 = vld [vmem:[%s7639 + $0xb8] sm:$0xff]
  %v7664 = vld [vmem:[%s7639 + $0xc0] sm:$0xff]
  %v7665 = vld [vmem:[%s7639 + $0xc8] sm:$0xff]
  %v7666 = vld [vmem:[%s7639 + $0xd0] sm:$0xff]
  %v7667 = vld [vmem:[%s7639 + $0xd8] sm:$0xff]
  %v7668 = vld [vmem:[%s7639 + $0xe0] sm:$0xff]
  %v7669 = vld [vmem:[%s7639 + $0xe8] sm:$0xff]
  %v7670 = vld [vmem:[%s7639 + $0xf0] sm:$0xff]
  %v7671 = vld [vmem:[%s7639 + $0xf8] sm:$0xff]
  %v7672 = vld [vmem:[%s7639 + $0x100] sm:$0xff]
  %v7673 = vld [vmem:[%s7639 + $0x108] sm:$0xff]
  %v7674 = vld [vmem:[%s7639 + $0x110] sm:$0xff]
  %v7675 = vld [vmem:[%s7639 + $0x118] sm:$0xff]
  %v7676 = vld [vmem:[%s7639 + $0x120] sm:$0xff]
  %v7677 = vld [vmem:[%s7639 + $0x128] sm:$0xff]
  %v7678 = vld [vmem:[%s7639 + $0x130] sm:$0xff]
  %v7679 = vld [vmem:[%s7639 + $0x138] sm:$0xff]
  %v7680 = vld [vmem:[%s7639 + $0x140] sm:$0xff]
  %v7681 = vld [vmem:[%s7639 + $0x148] sm:$0xff]
  %v7682 = vld [vmem:[%s7639 + $0x150] sm:$0xff]
  %v7683 = vld [vmem:[%s7639 + $0x158] sm:$0xff]
  %v7684 = vld [vmem:[%s7639 + $0x160] sm:$0xff]
  %v7685 = vld [vmem:[%s7639 + $0x168] sm:$0xff]
  %v7686 = vld [vmem:[%s7639 + $0x170] sm:$0xff]
  %v7687 = vld [vmem:[%s7639 + $0x178] sm:$0xff]
  %v7688 = vld [vmem:[%s7639 + $0x180] sm:$0xff]
  %v7689 = vld [vmem:[%s7639 + $0x188] sm:$0xff]
  %v7690 = vld [vmem:[%s7639 + $0x190] sm:$0xff]
  %v7691 = vld [vmem:[%s7639 + $0x198] sm:$0xff]
  %v7692 = vld [vmem:[%s7639 + $0x1a0] sm:$0xff]
  %v7693 = vld [vmem:[%s7639 + $0x1a8] sm:$0xff]
  %v7694 = vld [vmem:[%s7639 + $0x1b0] sm:$0xff]
  %v7695 = vld [vmem:[%s7639 + $0x1b8] sm:$0xff]
  %v7696 = vld [vmem:[%s7639 + $0x1c0] sm:$0xff]
  %v7697 = vld [vmem:[%s7639 + $0x1c8] sm:$0xff]
  %v7698 = vld [vmem:[%s7639 + $0x1d0] sm:$0xff]
  %v7699 = vld [vmem:[%s7639 + $0x1d8] sm:$0xff]
  %v7700 = vld [vmem:[%s7639 + $0x1e0] sm:$0xff]
  %v7701 = vld [vmem:[%s7639 + $0x1e8] sm:$0xff]
  %v7702 = vld [vmem:[%s7639 + $0x1f0] sm:$0xff]
  %v7703 = vld [vmem:[%s7639 + $0x1f8] sm:$0xff]
  %s7704 = scalar_lea.vmem %s12, 4
  %v7705 = vld [vmem:[%s7704] sm:$0xf]
  %v7707 = vlaneseq
  %v7708 = vshrl.u32 %v7707, 7
  %v7709 = vsub.s32 0, %v7708
  %v7710 = vrot.slane %v7705, %v7709
  %v7711 = vlaneseq
  %v7712 = vshrl.u32 %v7711, 7
  %v7713 = vsub.s32 1, %v7712
  %v7714 = vrot.slane %v7705, %v7713
  %v7715 = vlaneseq
  %v7716 = vshrl.u32 %v7715, 7
  %v7717 = vsub.s32 2, %v7716
  %v7718 = vrot.slane %v7705, %v7717
  %v7719 = vlaneseq
  %v7720 = vshrl.u32 %v7719, 7
  %v7721 = vsub.s32 3, %v7720
  %v7722 = vrot.slane %v7705, %v7721
  %v7791 = vunpack.c.l.b16 %v7640
  %v7792 = vunpack.c.h.b16 %v7640
  %v7793 = vunpack.c.l.b16 %v7641
  %v7794 = vunpack.c.h.b16 %v7641
  %v7795 = vunpack.c.l.b16 %v7642
  %v7796 = vunpack.c.h.b16 %v7642
  %v7797 = vunpack.c.l.b16 %v7643
  %v7798 = vunpack.c.h.b16 %v7643
  %v7799 = vunpack.c.l.b16 %v7644
  %v7800 = vunpack.c.h.b16 %v7644
  %v7801 = vunpack.c.l.b16 %v7645
  %v7802 = vunpack.c.h.b16 %v7645
  %v7803 = vunpack.c.l.b16 %v7646
  %v7804 = vunpack.c.h.b16 %v7646
  %v7805 = vunpack.c.l.b16 %v7647
  %v7806 = vunpack.c.h.b16 %v7647
  %v7807 = vunpack.c.l.b16 %v7648
  %v7808 = vunpack.c.h.b16 %v7648
  %v7809 = vunpack.c.l.b16 %v7649
  %v7810 = vunpack.c.h.b16 %v7649
  %v7811 = vunpack.c.l.b16 %v7650
  %v7812 = vunpack.c.h.b16 %v7650
  %v7813 = vunpack.c.l.b16 %v7651
  %v7814 = vunpack.c.h.b16 %v7651
  %v7815 = vunpack.c.l.b16 %v7652
  %v7816 = vunpack.c.h.b16 %v7652
  %v7817 = vunpack.c.l.b16 %v7653
  %v7818 = vunpack.c.h.b16 %v7653
  %v7819 = vunpack.c.l.b16 %v7654
  %v7820 = vunpack.c.h.b16 %v7654
  %v7821 = vunpack.c.l.b16 %v7655
  %v7822 = vunpack.c.h.b16 %v7655
  %v7823 = vunpack.c.l.b16 %v7656
  %v7824 = vunpack.c.h.b16 %v7656
  %v7825 = vunpack.c.l.b16 %v7657
  %v7826 = vunpack.c.h.b16 %v7657
  %v7827 = vunpack.c.l.b16 %v7658
  %v7828 = vunpack.c.h.b16 %v7658
  %v7829 = vunpack.c.l.b16 %v7659
  %v7830 = vunpack.c.h.b16 %v7659
  %v7831 = vunpack.c.l.b16 %v7660
  %v7832 = vunpack.c.h.b16 %v7660
  %v7833 = vunpack.c.l.b16 %v7661
  %v7834 = vunpack.c.h.b16 %v7661
  %v7835 = vunpack.c.l.b16 %v7662
  %v7836 = vunpack.c.h.b16 %v7662
  %v7837 = vunpack.c.l.b16 %v7663
  %v7838 = vunpack.c.h.b16 %v7663
  %v7839 = vunpack.c.l.b16 %v7664
  %v7840 = vunpack.c.h.b16 %v7664
  %v7841 = vunpack.c.l.b16 %v7665
  %v7842 = vunpack.c.h.b16 %v7665
  %v7843 = vunpack.c.l.b16 %v7666
  %v7844 = vunpack.c.h.b16 %v7666
  %v7845 = vunpack.c.l.b16 %v7667
  %v7846 = vunpack.c.h.b16 %v7667
  %v7847 = vunpack.c.l.b16 %v7668
  %v7848 = vunpack.c.h.b16 %v7668
  %v7849 = vunpack.c.l.b16 %v7669
  %v7850 = vunpack.c.h.b16 %v7669
  %v7851 = vunpack.c.l.b16 %v7670
  %v7852 = vunpack.c.h.b16 %v7670
  %v7853 = vunpack.c.l.b16 %v7671
  %v7854 = vunpack.c.h.b16 %v7671
  %v7855 = vunpack.c.l.b16 %v7672
  %v7856 = vunpack.c.h.b16 %v7672
  %v7857 = vunpack.c.l.b16 %v7673
  %v7858 = vunpack.c.h.b16 %v7673
  %v7859 = vunpack.c.l.b16 %v7674
  %v7860 = vunpack.c.h.b16 %v7674
  %v7861 = vunpack.c.l.b16 %v7675
  %v7862 = vunpack.c.h.b16 %v7675
  %v7863 = vunpack.c.l.b16 %v7676
  %v7864 = vunpack.c.h.b16 %v7676
  %v7865 = vunpack.c.l.b16 %v7677
  %v7866 = vunpack.c.h.b16 %v7677
  %v7867 = vunpack.c.l.b16 %v7678
  %v7868 = vunpack.c.h.b16 %v7678
  %v7869 = vunpack.c.l.b16 %v7679
  %v7870 = vunpack.c.h.b16 %v7679
  %v7871 = vunpack.c.l.b16 %v7680
  %v7872 = vunpack.c.h.b16 %v7680
  %v7873 = vunpack.c.l.b16 %v7681
  %v7874 = vunpack.c.h.b16 %v7681
  %v7875 = vunpack.c.l.b16 %v7682
  %v7876 = vunpack.c.h.b16 %v7682
  %v7877 = vunpack.c.l.b16 %v7683
  %v7878 = vunpack.c.h.b16 %v7683
  %v7879 = vunpack.c.l.b16 %v7684
  %v7880 = vunpack.c.h.b16 %v7684
  %v7881 = vunpack.c.l.b16 %v7685
  %v7882 = vunpack.c.h.b16 %v7685
  %v7883 = vunpack.c.l.b16 %v7686
  %v7884 = vunpack.c.h.b16 %v7686
  %v7885 = vunpack.c.l.b16 %v7687
  %v7886 = vunpack.c.h.b16 %v7687
  %v7887 = vunpack.c.l.b16 %v7688
  %v7888 = vunpack.c.h.b16 %v7688
  %v7889 = vunpack.c.l.b16 %v7689
  %v7890 = vunpack.c.h.b16 %v7689
  %v7891 = vunpack.c.l.b16 %v7690
  %v7892 = vunpack.c.h.b16 %v7690
  %v7893 = vunpack.c.l.b16 %v7691
  %v7894 = vunpack.c.h.b16 %v7691
  %v7895 = vunpack.c.l.b16 %v7692
  %v7896 = vunpack.c.h.b16 %v7692
  %v7897 = vunpack.c.l.b16 %v7693
  %v7898 = vunpack.c.h.b16 %v7693
  %v7899 = vunpack.c.l.b16 %v7694
  %v7900 = vunpack.c.h.b16 %v7694
  %v7901 = vunpack.c.l.b16 %v7695
  %v7902 = vunpack.c.h.b16 %v7695
  %v7903 = vunpack.c.l.b16 %v7696
  %v7904 = vunpack.c.h.b16 %v7696
  %v7905 = vunpack.c.l.b16 %v7697
  %v7906 = vunpack.c.h.b16 %v7697
  %v7907 = vunpack.c.l.b16 %v7698
  %v7908 = vunpack.c.h.b16 %v7698
  %v7909 = vunpack.c.l.b16 %v7699
  %v7910 = vunpack.c.h.b16 %v7699
  %v7911 = vunpack.c.l.b16 %v7700
  %v7912 = vunpack.c.h.b16 %v7700
  %v7913 = vunpack.c.l.b16 %v7701
  %v7914 = vunpack.c.h.b16 %v7701
  %v7915 = vunpack.c.l.b16 %v7702
  %v7916 = vunpack.c.h.b16 %v7702
  %v7917 = vunpack.c.l.b16 %v7703
  %v7918 = vunpack.c.h.b16 %v7703
  %v7919 = vpack.c.b16 %v7795, %v7791
  %v7920 = vpack.c.b16 %v7796, %v7792
  %v7921 = vpack.c.b16 %v7797, %v7793
  %v7922 = vpack.c.b16 %v7798, %v7794
  %v7923 = vpack.c.b16 %v7803, %v7799
  %v7924 = vpack.c.b16 %v7804, %v7800
  %v7925 = vpack.c.b16 %v7805, %v7801
  %v7926 = vpack.c.b16 %v7806, %v7802
  %v7927 = vpack.c.b16 %v7811, %v7807
  %v7928 = vpack.c.b16 %v7812, %v7808
  %v7929 = vpack.c.b16 %v7813, %v7809
  %v7930 = vpack.c.b16 %v7814, %v7810
  %v7931 = vpack.c.b16 %v7819, %v7815
  %v7932 = vpack.c.b16 %v7820, %v7816
  %v7933 = vpack.c.b16 %v7821, %v7817
  %v7934 = vpack.c.b16 %v7822, %v7818
  %v7935 = vpack.c.b16 %v7827, %v7823
  %v7936 = vpack.c.b16 %v7828, %v7824
  %v7937 = vpack.c.b16 %v7829, %v7825
  %v7938 = vpack.c.b16 %v7830, %v7826
  %v7939 = vpack.c.b16 %v7835, %v7831
  %v7940 = vpack.c.b16 %v7836, %v7832
  %v7941 = vpack.c.b16 %v7837, %v7833
  %v7942 = vpack.c.b16 %v7838, %v7834
  %v7943 = vpack.c.b16 %v7843, %v7839
  %v7944 = vpack.c.b16 %v7844, %v7840
  %v7945 = vpack.c.b16 %v7845, %v7841
  %v7946 = vpack.c.b16 %v7846, %v7842
  %v7947 = vpack.c.b16 %v7851, %v7847
  %v7948 = vpack.c.b16 %v7852, %v7848
  %v7949 = vpack.c.b16 %v7853, %v7849
  %v7950 = vpack.c.b16 %v7854, %v7850
  %v7951 = vpack.c.b16 %v7859, %v7855
  %v7952 = vpack.c.b16 %v7860, %v7856
  %v7953 = vpack.c.b16 %v7861, %v7857
  %v7954 = vpack.c.b16 %v7862, %v7858
  %v7955 = vpack.c.b16 %v7867, %v7863
  %v7956 = vpack.c.b16 %v7868, %v7864
  %v7957 = vpack.c.b16 %v7869, %v7865
  %v7958 = vpack.c.b16 %v7870, %v7866
  %v7959 = vpack.c.b16 %v7875, %v7871
  %v7960 = vpack.c.b16 %v7876, %v7872
  %v7961 = vpack.c.b16 %v7877, %v7873
  %v7962 = vpack.c.b16 %v7878, %v7874
  %v7963 = vpack.c.b16 %v7883, %v7879
  %v7964 = vpack.c.b16 %v7884, %v7880
  %v7965 = vpack.c.b16 %v7885, %v7881
  %v7966 = vpack.c.b16 %v7886, %v7882
  %v7967 = vpack.c.b16 %v7891, %v7887
  %v7968 = vpack.c.b16 %v7892, %v7888
  %v7969 = vpack.c.b16 %v7893, %v7889
  %v7970 = vpack.c.b16 %v7894, %v7890
  %v7971 = vpack.c.b16 %v7899, %v7895
  %v7972 = vpack.c.b16 %v7900, %v7896
  %v7973 = vpack.c.b16 %v7901, %v7897
  %v7974 = vpack.c.b16 %v7902, %v7898
  %v7975 = vpack.c.b16 %v7907, %v7903
  %v7976 = vpack.c.b16 %v7908, %v7904
  %v7977 = vpack.c.b16 %v7909, %v7905
  %v7978 = vpack.c.b16 %v7910, %v7906
  %v7979 = vpack.c.b16 %v7915, %v7911
  %v7980 = vpack.c.b16 %v7916, %v7912
  %v7981 = vpack.c.b16 %v7917, %v7913
  %v7982 = vpack.c.b16 %v7918, %v7914
  %8047 = vmatprep.subr.bf16.mxu0 %v7920
  %8048 = vmatpush1.bf16.msra.mxu0 %v7919
  %8049 = vmatprep.subr.bf16.mxu0 %v7924
  %8050 = vmatpush1.bf16.msra.mxu0 %v7923
  %8051 = vmatprep.subr.bf16.mxu0 %v7928
  %8052 = vmatpush1.bf16.msra.mxu0 %v7927
  %8053 = vmatprep.subr.bf16.mxu0 %v7932
  %8054 = vmatpush1.bf16.msra.mxu0 %v7931
  %8055 = vmatprep.subr.bf16.mxu0 %v7936
  %8056 = vmatpush1.bf16.msra.mxu0 %v7935
  %8057 = vmatprep.subr.bf16.mxu0 %v7940
  %8058 = vmatpush1.bf16.msra.mxu0 %v7939
  %8059 = vmatprep.subr.bf16.mxu0 %v7944
  %8060 = vmatpush1.bf16.msra.mxu0 %v7943
  %8061 = vmatprep.subr.bf16.mxu0 %v7948
  %8062 = vmatpush1.bf16.msra.mxu0 %v7947
  %8063 = vmatprep.subr.bf16.mxu0 %v7952
  %8064 = vmatpush1.bf16.msra.mxu0 %v7951
  %8065 = vmatprep.subr.bf16.mxu0 %v7956
  %8066 = vmatpush1.bf16.msra.mxu0 %v7955
  %8067 = vmatprep.subr.bf16.mxu0 %v7960
  %8068 = vmatpush1.bf16.msra.mxu0 %v7959
  %8069 = vmatprep.subr.bf16.mxu0 %v7964
  %8070 = vmatpush1.bf16.msra.mxu0 %v7963
  %8071 = vmatprep.subr.bf16.mxu0 %v7968
  %8072 = vmatpush1.bf16.msra.mxu0 %v7967
  %8073 = vmatprep.subr.bf16.mxu0 %v7972
  %8074 = vmatpush1.bf16.msra.mxu0 %v7971
  %8075 = vmatprep.subr.bf16.mxu0 %v7976
  %8076 = vmatpush1.bf16.msra.mxu0 %v7975
  %8077 = vmatprep.subr.bf16.mxu0 %v7980
  %8078 = vmatpush1.bf16.msra.mxu0 %v7979
  %8079 = vmatprep.mubr.bf16.mxu0 %v7636
  %8080 = vmatmul.mubr.bf16.gmra.mrb[0].mxu0 %v7635
  %v8081 = vpop.f32.mrb[0].mxu0
  %v8082 = vadd.f32 %v7710, %v8081
  %v8083 = vpop.f32.mrb[0].mxu0
  %v8084 = vadd.f32 %v7714, %v8083
  %v8085 = vpop.f32.mrb[0].mxu0
  %v8086 = vadd.f32 %v7710, %v8085
  %v8087 = vpop.f32.mrb[0].mxu0
  %v8088 = vadd.f32 %v7714, %v8087
  %8089 = vmatprep.mubr.bf16.mxu0 %v7638
  %8090 = vmatmul.mubr.bf16.gmra.mrb[0].mxu0 %v7637
  %v8091 = vpop.f32.mrb[0].mxu0
  %v8092 = vadd.f32 %v7710, %v8091
  %v8093 = vpop.f32.mrb[0].mxu0
  %v8094 = vadd.f32 %v7714, %v8093
  %v8095 = vpop.f32.mrb[0].mxu0
  %v8096 = vadd.f32 %v7710, %v8095
  %v8097 = vpop.f32.mrb[0].mxu0
  %v8098 = vadd.f32 %v7714, %v8097
  %8099 = vdwg.mxu0
  %8100 = vmatprep.subr.bf16.mxu0 %v7922
  %8101 = vmatpush1.bf16.msra.mxu0 %v7921
  %8102 = vmatprep.subr.bf16.mxu0 %v7926
  %8103 = vmatpush1.bf16.msra.mxu0 %v7925
  %8104 = vmatprep.subr.bf16.mxu0 %v7930
  %8105 = vmatpush1.bf16.msra.mxu0 %v7929
  %8106 = vmatprep.subr.bf16.mxu0 %v7934
  %8107 = vmatpush1.bf16.msra.mxu0 %v7933
  %8108 = vmatprep.subr.bf16.mxu0 %v7938
  %8109 = vmatpush1.bf16.msra.mxu0 %v7937
  %8110 = vmatprep.subr.bf16.mxu0 %v7942
  %8111 = vmatpush1.bf16.msra.mxu0 %v7941
  %8112 = vmatprep.subr.bf16.mxu0 %v7946
  %8113 = vmatpush1.bf16.msra.mxu0 %v7945
  %8114 = vmatprep.subr.bf16.mxu0 %v7950
  %8115 = vmatpush1.bf16.msra.mxu0 %v7949
  %8116 = vmatprep.subr.bf16.mxu0 %v7954
  %8117 = vmatpush1.bf16.msra.mxu0 %v7953
  %8118 = vmatprep.subr.bf16.mxu0 %v7958
  %8119 = vmatpush1.bf16.msra.mxu0 %v7957
  %8120 = vmatprep.subr.bf16.mxu0 %v7962
  %8121 = vmatpush1.bf16.msra.mxu0 %v7961
  %8122 = vmatprep.subr.bf16.mxu0 %v7966
  %8123 = vmatpush1.bf16.msra.mxu0 %v7965
  %8124 = vmatprep.subr.bf16.mxu0 %v7970
  %8125 = vmatpush1.bf16.msra.mxu0 %v7969
  %8126 = vmatprep.subr.bf16.mxu0 %v7974
  %8127 = vmatpush1.bf16.msra.mxu0 %v7973
  %8128 = vmatprep.subr.bf16.mxu0 %v7978
  %8129 = vmatpush1.bf16.msra.mxu0 %v7977
  %8130 = vmatprep.subr.bf16.mxu0 %v7982
  %8131 = vmatpush1.bf16.msra.mxu0 %v7981
  %8132 = vmatprep.mubr.bf16.mxu0 %v7636
  %8133 = vmatmul.mubr.bf16.gmra.mrb[0].mxu0 %v7635
  %v8134 = vpop.f32.mrb[0].mxu0
  %v8135 = vadd.f32 %v7718, %v8134
  %v8136 = vpop.f32.mrb[0].mxu0
  %v8137 = vadd.f32 %v7722, %v8136
  %v8138 = vpop.f32.mrb[0].mxu0
  %v8139 = vadd.f32 %v7718, %v8138
  %v8140 = vpop.f32.mrb[0].mxu0
  %v8141 = vadd.f32 %v7722, %v8140
  %8142 = vmatprep.mubr.bf16.mxu0 %v7638
  %8143 = vmatmul.mubr.bf16.gmra.mrb[0].mxu0 %v7637
  %v8144 = vpop.f32.mrb[0].mxu0
  %v8145 = vadd.f32 %v7718, %v8144
  %v8146 = vpop.f32.mrb[0].mxu0
  %v8147 = vadd.f32 %v7722, %v8146
  %v8148 = vpop.f32.mrb[0].mxu0
  %v8149 = vadd.f32 %v7718, %v8148
  %v8150 = vpop.f32.mrb[0].mxu0
  %v8151 = vadd.f32 %v7722, %v8150
  %8152 = vdwg.mxu0
  %v8153 = vmax.f32 %v8082, 0.0
  %v8154 = vmax.f32 %v8084, 0.0
  %v8155 = vmax.f32 %v8135, 0.0
  %v8156 = vmax.f32 %v8137, 0.0
  %v8157 = vmax.f32 %v8086, 0.0
  %v8158 = vmax.f32 %v8088, 0.0
  %v8159 = vmax.f32 %v8139, 0.0
  %v8160 = vmax.f32 %v8141, 0.0
  %v8161 = vmax.f32 %v8092, 0.0
  %v8162 = vmax.f32 %v8094, 0.0
  %v8163 = vmax.f32 %v8145, 0.0
  %v8164 = vmax.f32 %v8147, 0.0
  %v8165 = vmax.f32 %v8096, 0.0
  %v8166 = vmax.f32 %v8098, 0.0
  %v8167 = vmax.f32 %v8149, 0.0
  %v8168 = vmax.f32 %v8151, 0.0
  %v8169 = vpack.c.bf16 %v8157, %v8153
  %v8170 = vpack.c.bf16 %v8158, %v8154
  %v8171 = vpack.c.bf16 %v8159, %v8155
  %v8172 = vpack.c.bf16 %v8160, %v8156
  %v8173 = vpack.c.bf16 %v8165, %v8161
  %v8174 = vpack.c.bf16 %v8166, %v8162
  %v8175 = vpack.c.bf16 %v8167, %v8163
  %v8176 = vpack.c.bf16 %v8168, %v8164
  %s8177 = scalar_lea.vmem %s13, 512
  %v8178 = vld [vmem:[%s8177] sm:$0xff]
  %v8179 = vld [vmem:[%s8177 + $0x8] sm:$0xff]
  %v8180 = vld [vmem:[%s8177 + $0x10] sm:$0xff]
  %v8181 = vld [vmem:[%s8177 + $0x18] sm:$0xff]
  %v8182 = vld [vmem:[%s8177 + $0x20] sm:$0xff]
  %v8183 = vld [vmem:[%s8177 + $0x28] sm:$0xff]
  %v8184 = vld [vmem:[%s8177 + $0x30] sm:$0xff]
  %v8185 = vld [vmem:[%s8177 + $0x38] sm:$0xff]
  %v8186 = vld [vmem:[%s8177 + $0x40] sm:$0xff]
  %v8187 = vld [vmem:[%s8177 + $0x48] sm:$0xff]
  %v8188 = vld [vmem:[%s8177 + $0x50] sm:$0xff]
  %v8189 = vld [vmem:[%s8177 + $0x58] sm:$0xff]
  %v8190 = vld [vmem:[%s8177 + $0x60] sm:$0xff]
  %v8191 = vld [vmem:[%s8177 + $0x68] sm:$0xff]
  %v8192 = vld [vmem:[%s8177 + $0x70] sm:$0xff]
  %v8193 = vld [vmem:[%s8177 + $0x78] sm:$0xff]
  %v8194 = vld [vmem:[%s8177 + $0x80] sm:$0xff]
  %v8195 = vld [vmem:[%s8177 + $0x88] sm:$0xff]
  %v8196 = vld [vmem:[%s8177 + $0x90] sm:$0xff]
  %v8197 = vld [vmem:[%s8177 + $0x98] sm:$0xff]
  %v8198 = vld [vmem:[%s8177 + $0xa0] sm:$0xff]
  %v8199 = vld [vmem:[%s8177 + $0xa8] sm:$0xff]
  %v8200 = vld [vmem:[%s8177 + $0xb0] sm:$0xff]
  %v8201 = vld [vmem:[%s8177 + $0xb8] sm:$0xff]
  %v8202 = vld [vmem:[%s8177 + $0xc0] sm:$0xff]
  %v8203 = vld [vmem:[%s8177 + $0xc8] sm:$0xff]
  %v8204 = vld [vmem:[%s8177 + $0xd0] sm:$0xff]
  %v8205 = vld [vmem:[%s8177 + $0xd8] sm:$0xff]
  %v8206 = vld [vmem:[%s8177 + $0xe0] sm:$0xff]
  %v8207 = vld [vmem:[%s8177 + $0xe8] sm:$0xff]
  %v8208 = vld [vmem:[%s8177 + $0xf0] sm:$0xff]
  %v8209 = vld [vmem:[%s8177 + $0xf8] sm:$0xff]
  %v8210 = vld [vmem:[%s8177 + $0x100] sm:$0xff]
  %v8211 = vld [vmem:[%s8177 + $0x108] sm:$0xff]
  %v8212 = vld [vmem:[%s8177 + $0x110] sm:$0xff]
  %v8213 = vld [vmem:[%s8177 + $0x118] sm:$0xff]
  %v8214 = vld [vmem:[%s8177 + $0x120] sm:$0xff]
  %v8215 = vld [vmem:[%s8177 + $0x128] sm:$0xff]
  %v8216 = vld [vmem:[%s8177 + $0x130] sm:$0xff]
  %v8217 = vld [vmem:[%s8177 + $0x138] sm:$0xff]
  %v8218 = vld [vmem:[%s8177 + $0x140] sm:$0xff]
  %v8219 = vld [vmem:[%s8177 + $0x148] sm:$0xff]
  %v8220 = vld [vmem:[%s8177 + $0x150] sm:$0xff]
  %v8221 = vld [vmem:[%s8177 + $0x158] sm:$0xff]
  %v8222 = vld [vmem:[%s8177 + $0x160] sm:$0xff]
  %v8223 = vld [vmem:[%s8177 + $0x168] sm:$0xff]
  %v8224 = vld [vmem:[%s8177 + $0x170] sm:$0xff]
  %v8225 = vld [vmem:[%s8177 + $0x178] sm:$0xff]
  %v8226 = vld [vmem:[%s8177 + $0x180] sm:$0xff]
  %v8227 = vld [vmem:[%s8177 + $0x188] sm:$0xff]
  %v8228 = vld [vmem:[%s8177 + $0x190] sm:$0xff]
  %v8229 = vld [vmem:[%s8177 + $0x198] sm:$0xff]
  %v8230 = vld [vmem:[%s8177 + $0x1a0] sm:$0xff]
  %v8231 = vld [vmem:[%s8177 + $0x1a8] sm:$0xff]
  %v8232 = vld [vmem:[%s8177 + $0x1b0] sm:$0xff]
  %v8233 = vld [vmem:[%s8177 + $0x1b8] sm:$0xff]
  %v8234 = vld [vmem:[%s8177 + $0x1c0] sm:$0xff]
  %v8235 = vld [vmem:[%s8177 + $0x1c8] sm:$0xff]
  %v8236 = vld [vmem:[%s8177 + $0x1d0] sm:$0xff]
  %v8237 = vld [vmem:[%s8177 + $0x1d8] sm:$0xff]
  %v8238 = vld [vmem:[%s8177 + $0x1e0] sm:$0xff]
  %v8239 = vld [vmem:[%s8177 + $0x1e8] sm:$0xff]
  %v8240 = vld [vmem:[%s8177 + $0x1f0] sm:$0xff]
  %v8241 = vld [vmem:[%s8177 + $0x1f8] sm:$0xff]
  %s8242 = scalar_lea.vmem %s14, 2
  %v8243 = vld [vmem:[%s8242] sm:$0x3]
  %v8245 = vlaneseq
  %v8246 = vshrl.u32 %v8245, 7
  %v8247 = vsub.s32 0, %v8246
  %v8248 = vrot.slane %v8243, %v8247
  %v8249 = vlaneseq
  %v8250 = vshrl.u32 %v8249, 7
  %v8251 = vsub.s32 1, %v8250
  %v8252 = vrot.slane %v8243, %v8251
  %v8319 = vunpack.c.l.b16 %v8178
  %v8320 = vunpack.c.h.b16 %v8178
  %v8321 = vunpack.c.l.b16 %v8179
  %v8322 = vunpack.c.h.b16 %v8179
  %v8323 = vunpack.c.l.b16 %v8180
  %v8324 = vunpack.c.h.b16 %v8180
  %v8325 = vunpack.c.l.b16 %v8181
  %v8326 = vunpack.c.h.b16 %v8181
  %v8327 = vunpack.c.l.b16 %v8182
  %v8328 = vunpack.c.h.b16 %v8182
  %v8329 = vunpack.c.l.b16 %v8183
  %v8330 = vunpack.c.h.b16 %v8183
  %v8331 = vunpack.c.l.b16 %v8184
  %v8332 = vunpack.c.h.b16 %v8184
  %v8333 = vunpack.c.l.b16 %v8185
  %v8334 = vunpack.c.h.b16 %v8185
  %v8335 = vunpack.c.l.b16 %v8186
  %v8336 = vunpack.c.h.b16 %v8186
  %v8337 = vunpack.c.l.b16 %v8187
  %v8338 = vunpack.c.h.b16 %v8187
  %v8339 = vunpack.c.l.b16 %v8188
  %v8340 = vunpack.c.h.b16 %v8188
  %v8341 = vunpack.c.l.b16 %v8189
  %v8342 = vunpack.c.h.b16 %v8189
  %v8343 = vunpack.c.l.b16 %v8190
  %v8344 = vunpack.c.h.b16 %v8190
  %v8345 = vunpack.c.l.b16 %v8191
  %v8346 = vunpack.c.h.b16 %v8191
  %v8347 = vunpack.c.l.b16 %v8192
  %v8348 = vunpack.c.h.b16 %v8192
  %v8349 = vunpack.c.l.b16 %v8193
  %v8350 = vunpack.c.h.b16 %v8193
  %v8351 = vunpack.c.l.b16 %v8194
  %v8352 = vunpack.c.h.b16 %v8194
  %v8353 = vunpack.c.l.b16 %v8195
  %v8354 = vunpack.c.h.b16 %v8195
  %v8355 = vunpack.c.l.b16 %v8196
  %v8356 = vunpack.c.h.b16 %v8196
  %v8357 = vunpack.c.l.b16 %v8197
  %v8358 = vunpack.c.h.b16 %v8197
  %v8359 = vunpack.c.l.b16 %v8198
  %v8360 = vunpack.c.h.b16 %v8198
  %v8361 = vunpack.c.l.b16 %v8199
  %v8362 = vunpack.c.h.b16 %v8199
  %v8363 = vunpack.c.l.b16 %v8200
  %v8364 = vunpack.c.h.b16 %v8200
  %v8365 = vunpack.c.l.b16 %v8201
  %v8366 = vunpack.c.h.b16 %v8201
  %v8367 = vunpack.c.l.b16 %v8202
  %v8368 = vunpack.c.h.b16 %v8202
  %v8369 = vunpack.c.l.b16 %v8203
  %v8370 = vunpack.c.h.b16 %v8203
  %v8371 = vunpack.c.l.b16 %v8204
  %v8372 = vunpack.c.h.b16 %v8204
  %v8373 = vunpack.c.l.b16 %v8205
  %v8374 = vunpack.c.h.b16 %v8205
  %v8375 = vunpack.c.l.b16 %v8206
  %v8376 = vunpack.c.h.b16 %v8206
  %v8377 = vunpack.c.l.b16 %v8207
  %v8378 = vunpack.c.h.b16 %v8207
  %v8379 = vunpack.c.l.b16 %v8208
  %v8380 = vunpack.c.h.b16 %v8208
  %v8381 = vunpack.c.l.b16 %v8209
  %v8382 = vunpack.c.h.b16 %v8209
  %v8383 = vunpack.c.l.b16 %v8210
  %v8384 = vunpack.c.h.b16 %v8210
  %v8385 = vunpack.c.l.b16 %v8211
  %v8386 = vunpack.c.h.b16 %v8211
  %v8387 = vunpack.c.l.b16 %v8212
  %v8388 = vunpack.c.h.b16 %v8212
  %v8389 = vunpack.c.l.b16 %v8213
  %v8390 = vunpack.c.h.b16 %v8213
  %v8391 = vunpack.c.l.b16 %v8214
  %v8392 = vunpack.c.h.b16 %v8214
  %v8393 = vunpack.c.l.b16 %v8215
  %v8394 = vunpack.c.h.b16 %v8215
  %v8395 = vunpack.c.l.b16 %v8216
  %v8396 = vunpack.c.h.b16 %v8216
  %v8397 = vunpack.c.l.b16 %v8217
  %v8398 = vunpack.c.h.b16 %v8217
  %v8399 = vunpack.c.l.b16 %v8218
  %v8400 = vunpack.c.h.b16 %v8218
  %v8401 = vunpack.c.l.b16 %v8219
  %v8402 = vunpack.c.h.b16 %v8219
  %v8403 = vunpack.c.l.b16 %v8220
  %v8404 = vunpack.c.h.b16 %v8220
  %v8405 = vunpack.c.l.b16 %v8221
  %v8406 = vunpack.c.h.b16 %v8221
  %v8407 = vunpack.c.l.b16 %v8222
  %v8408 = vunpack.c.h.b16 %v8222
  %v8409 = vunpack.c.l.b16 %v8223
  %v8410 = vunpack.c.h.b16 %v8223
  %v8411 = vunpack.c.l.b16 %v8224
  %v8412 = vunpack.c.h.b16 %v8224
  %v8413 = vunpack.c.l.b16 %v8225
  %v8414 = vunpack.c.h.b16 %v8225
  %v8415 = vunpack.c.l.b16 %v8226
  %v8416 = vunpack.c.h.b16 %v8226
  %v8417 = vunpack.c.l.b16 %v8227
  %v8418 = vunpack.c.h.b16 %v8227
  %v8419 = vunpack.c.l.b16 %v8228
  %v8420 = vunpack.c.h.b16 %v8228
  %v8421 = vunpack.c.l.b16 %v8229
  %v8422 = vunpack.c.h.b16 %v8229
  %v8423 = vunpack.c.l.b16 %v8230
  %v8424 = vunpack.c.h.b16 %v8230
  %v8425 = vunpack.c.l.b16 %v8231
  %v8426 = vunpack.c.h.b16 %v8231
  %v8427 = vunpack.c.l.b16 %v8232
  %v8428 = vunpack.c.h.b16 %v8232
  %v8429 = vunpack.c.l.b16 %v8233
  %v8430 = vunpack.c.h.b16 %v8233
  %v8431 = vunpack.c.l.b16 %v8234
  %v8432 = vunpack.c.h.b16 %v8234
  %v8433 = vunpack.c.l.b16 %v8235
  %v8434 = vunpack.c.h.b16 %v8235
  %v8435 = vunpack.c.l.b16 %v8236
  %v8436 = vunpack.c.h.b16 %v8236
  %v8437 = vunpack.c.l.b16 %v8237
  %v8438 = vunpack.c.h.b16 %v8237
  %v8439 = vunpack.c.l.b16 %v8238
  %v8440 = vunpack.c.h.b16 %v8238
  %v8441 = vunpack.c.l.b16 %v8239
  %v8442 = vunpack.c.h.b16 %v8239
  %v8443 = vunpack.c.l.b16 %v8240
  %v8444 = vunpack.c.h.b16 %v8240
  %v8445 = vunpack.c.l.b16 %v8241
  %v8446 = vunpack.c.h.b16 %v8241
  %v8447 = vpack.c.b16 %v8321, %v8319
  %v8448 = vpack.c.b16 %v8322, %v8320
  %v8449 = vpack.c.b16 %v8325, %v8323
  %v8450 = vpack.c.b16 %v8326, %v8324
  %v8451 = vpack.c.b16 %v8329, %v8327
  %v8452 = vpack.c.b16 %v8330, %v8328
  %v8453 = vpack.c.b16 %v8333, %v8331
  %v8454 = vpack.c.b16 %v8334, %v8332
  %v8455 = vpack.c.b16 %v8337, %v8335
  %v8456 = vpack.c.b16 %v8338, %v8336
  %v8457 = vpack.c.b16 %v8341, %v8339
  %v8458 = vpack.c.b16 %v8342, %v8340
  %v8459 = vpack.c.b16 %v8345, %v8343
  %v8460 = vpack.c.b16 %v8346, %v8344
  %v8461 = vpack.c.b16 %v8349, %v8347
  %v8462 = vpack.c.b16 %v8350, %v8348
  %v8463 = vpack.c.b16 %v8353, %v8351
  %v8464 = vpack.c.b16 %v8354, %v8352
  %v8465 = vpack.c.b16 %v8357, %v8355
  %v8466 = vpack.c.b16 %v8358, %v8356
  %v8467 = vpack.c.b16 %v8361, %v8359
  %v8468 = vpack.c.b16 %v8362, %v8360
  %v8469 = vpack.c.b16 %v8365, %v8363
  %v8470 = vpack.c.b16 %v8366, %v8364
  %v8471 = vpack.c.b16 %v8369, %v8367
  %v8472 = vpack.c.b16 %v8370, %v8368
  %v8473 = vpack.c.b16 %v8373, %v8371
  %v8474 = vpack.c.b16 %v8374, %v8372
  %v8475 = vpack.c.b16 %v8377, %v8375
  %v8476 = vpack.c.b16 %v8378, %v8376
  %v8477 = vpack.c.b16 %v8381, %v8379
  %v8478 = vpack.c.b16 %v8382, %v8380
  %v8479 = vpack.c.b16 %v8385, %v8383
  %v8480 = vpack.c.b16 %v8386, %v8384
  %v8481 = vpack.c.b16 %v8389, %v8387
  %v8482 = vpack.c.b16 %v8390, %v8388
  %v8483 = vpack.c.b16 %v8393, %v8391
  %v8484 = vpack.c.b16 %v8394, %v8392
  %v8485 = vpack.c.b16 %v8397, %v8395
  %v8486 = vpack.c.b16 %v8398, %v8396
  %v8487 = vpack.c.b16 %v8401, %v8399
  %v8488 = vpack.c.b16 %v8402, %v8400
  %v8489 = vpack.c.b16 %v8405, %v8403
  %v8490 = vpack.c.b16 %v8406, %v8404
  %v8491 = vpack.c.b16 %v8409, %v8407
  %v8492 = vpack.c.b16 %v8410, %v8408
  %v8493 = vpack.c.b16 %v8413, %v8411
  %v8494 = vpack.c.b16 %v8414, %v8412
  %v8495 = vpack.c.b16 %v8417, %v8415
  %v8496 = vpack.c.b16 %v8418, %v8416
  %v8497 = vpack.c.b16 %v8421, %v8419
  %v8498 = vpack.c.b16 %v8422, %v8420
  %v8499 = vpack.c.b16 %v8425, %v8423
  %v8500 = vpack.c.b16 %v8426, %v8424
  %v8501 = vpack.c.b16 %v8429, %v8427
  %v8502 = vpack.c.b16 %v8430, %v8428
  %v8503 = vpack.c.b16 %v8433, %v8431
  %v8504 = vpack.c.b16 %v8434, %v8432
  %v8505 = vpack.c.b16 %v8437, %v8435
  %v8506 = vpack.c.b16 %v8438, %v8436
  %v8507 = vpack.c.b16 %v8441, %v8439
  %v8508 = vpack.c.b16 %v8442, %v8440
  %v8509 = vpack.c.b16 %v8445, %v8443
  %v8510 = vpack.c.b16 %v8446, %v8444
  %8575 = vmatprep.subr.bf16.mxu0 %v8448
  %8576 = vmatpush1.bf16.msra.mxu0 %v8447
  %8577 = vmatprep.subr.bf16.mxu0 %v8450
  %8578 = vmatpush1.bf16.msra.mxu0 %v8449
  %8579 = vmatprep.subr.bf16.mxu0 %v8452
  %8580 = vmatpush1.bf16.msra.mxu0 %v8451
  %8581 = vmatprep.subr.bf16.mxu0 %v8454
  %8582 = vmatpush1.bf16.msra.mxu0 %v8453
  %8583 = vmatprep.subr.bf16.mxu0 %v8456
  %8584 = vmatpush1.bf16.msra.mxu0 %v8455
  %8585 = vmatprep.subr.bf16.mxu0 %v8458
  %8586 = vmatpush1.bf16.msra.mxu0 %v8457
  %8587 = vmatprep.subr.bf16.mxu0 %v8460
  %8588 = vmatpush1.bf16.msra.mxu0 %v8459
  %8589 = vmatprep.subr.bf16.mxu0 %v8462
  %8590 = vmatpush1.bf16.msra.mxu0 %v8461
  %8591 = vmatprep.subr.bf16.mxu0 %v8464
  %8592 = vmatpush1.bf16.msra.mxu0 %v8463
  %8593 = vmatprep.subr.bf16.mxu0 %v8466
  %8594 = vmatpush1.bf16.msra.mxu0 %v8465
  %8595 = vmatprep.subr.bf16.mxu0 %v8468
  %8596 = vmatpush1.bf16.msra.mxu0 %v8467
  %8597 = vmatprep.subr.bf16.mxu0 %v8470
  %8598 = vmatpush1.bf16.msra.mxu0 %v8469
  %8599 = vmatprep.subr.bf16.mxu0 %v8472
  %8600 = vmatpush1.bf16.msra.mxu0 %v8471
  %8601 = vmatprep.subr.bf16.mxu0 %v8474
  %8602 = vmatpush1.bf16.msra.mxu0 %v8473
  %8603 = vmatprep.subr.bf16.mxu0 %v8476
  %8604 = vmatpush1.bf16.msra.mxu0 %v8475
  %8605 = vmatprep.subr.bf16.mxu0 %v8478
  %8606 = vmatpush1.bf16.msra.mxu0 %v8477
  %8607 = vmatprep.mubr.bf16.mxu0 %v8170
  %8608 = vmatmul.mubr.bf16.gmra.mrb[0].mxu0 %v8169
  %v8609 = vpop.f32.mrb[0].mxu0
  %v8610 = vadd.f32 %v8248, %v8609
  %v8611 = vpop.f32.mrb[0].mxu0
  %v8612 = vadd.f32 %v8252, %v8611
  %v8613 = vpop.f32.mrb[0].mxu0
  %v8614 = vpop.f32.mrb[0].mxu0
  %8615 = vmatprep.mubr.bf16.mxu0 %v8174
  %8616 = vmatmul.mubr.bf16.gmra.mrb[0].mxu0 %v8173
  %v8617 = vpop.f32.mrb[0].mxu0
  %v8618 = vadd.f32 %v8248, %v8617
  %v8619 = vpop.f32.mrb[0].mxu0
  %v8620 = vadd.f32 %v8252, %v8619
  %v8621 = vpop.f32.mrb[0].mxu0
  %v8622 = vpop.f32.mrb[0].mxu0
  %8623 = vdwg.mxu0
  %8624 = vmatprep.subr.bf16.mxu0 %v8480
  %8625 = vmatpush1.bf16.msra.mxu0 %v8479
  %8626 = vmatprep.subr.bf16.mxu0 %v8482
  %8627 = vmatpush1.bf16.msra.mxu0 %v8481
  %8628 = vmatprep.subr.bf16.mxu0 %v8484
  %8629 = vmatpush1.bf16.msra.mxu0 %v8483
  %8630 = vmatprep.subr.bf16.mxu0 %v8486
  %8631 = vmatpush1.bf16.msra.mxu0 %v8485
  %8632 = vmatprep.subr.bf16.mxu0 %v8488
  %8633 = vmatpush1.bf16.msra.mxu0 %v8487
  %8634 = vmatprep.subr.bf16.mxu0 %v8490
  %8635 = vmatpush1.bf16.msra.mxu0 %v8489
  %8636 = vmatprep.subr.bf16.mxu0 %v8492
  %8637 = vmatpush1.bf16.msra.mxu0 %v8491
  %8638 = vmatprep.subr.bf16.mxu0 %v8494
  %8639 = vmatpush1.bf16.msra.mxu0 %v8493
  %8640 = vmatprep.subr.bf16.mxu0 %v8496
  %8641 = vmatpush1.bf16.msra.mxu0 %v8495
  %8642 = vmatprep.subr.bf16.mxu0 %v8498
  %8643 = vmatpush1.bf16.msra.mxu0 %v8497
  %8644 = vmatprep.subr.bf16.mxu0 %v8500
  %8645 = vmatpush1.bf16.msra.mxu0 %v8499
  %8646 = vmatprep.subr.bf16.mxu0 %v8502
  %8647 = vmatpush1.bf16.msra.mxu0 %v8501
  %8648 = vmatprep.subr.bf16.mxu0 %v8504
  %8649 = vmatpush1.bf16.msra.mxu0 %v8503
  %8650 = vmatprep.subr.bf16.mxu0 %v8506
  %8651 = vmatpush1.bf16.msra.mxu0 %v8505
  %8652 = vmatprep.subr.bf16.mxu0 %v8508
  %8653 = vmatpush1.bf16.msra.mxu0 %v8507
  %8654 = vmatprep.subr.bf16.mxu0 %v8510
  %8655 = vmatpush1.bf16.msra.mxu0 %v8509
  %8656 = vmatprep.mubr.bf16.mxu0 %v8172
  %8657 = vmatmul.mubr.bf16.gmra.mrb[0].mxu0 %v8171
  %v8658 = vpop.f32.mrb[0].mxu0
  %v8659 = vadd.f32 %v8610, %v8658
  %v8660 = vpop.f32.mrb[0].mxu0
  %v8661 = vadd.f32 %v8612, %v8660
  %v8662 = vpop.f32.mrb[0].mxu0
  %v8663 = vpop.f32.mrb[0].mxu0
  %8664 = vmatprep.mubr.bf16.mxu0 %v8176
  %8665 = vmatmul.mubr.bf16.gmra.mrb[0].mxu0 %v8175
  %v8666 = vpop.f32.mrb[0].mxu0
  %v8667 = vadd.f32 %v8618, %v8666
  %v8668 = vpop.f32.mrb[0].mxu0
  %v8669 = vadd.f32 %v8620, %v8668
  %v8670 = vpop.f32.mrb[0].mxu0
  %v8671 = vpop.f32.mrb[0].mxu0
  %8672 = vdwg.mxu0
  %v8673 = vadd.f32 %v7627, %v8659
  %v8674 = vadd.f32 %v7628, %v8661
  %v8675 = vadd.f32 %v7631, %v8667
  %v8676 = vadd.f32 %v7632, %v8669
  %v8677 = vadd.f32 %v8673, %v8674
  %8678 = vadd.xlane.f32.xlu0 %v8677
  %v8679 = vpop.xlane.xlu0 %8678
  %v8680 = vadd.f32 %v8675, %v8676
  %8681 = vadd.xlane.f32.xlu0 %v8680
  %v8682 = vpop.xlane.xlu0 %8681
  %v8683 = vmul.f32 %v8679, %v3915
  %v8684 = vmul.f32 %v8682, %v3915
  %v8685 = vsub.f32 %v8673, %v8683
  %v8686 = vsub.f32 %v8674, %v8683
  %v8687 = vsub.f32 %v8675, %v8684
  %v8688 = vsub.f32 %v8676, %v8684
  %v8689 = vmul.f32 %v8685, %v8685
  %v8690 = vmul.f32 %v8686, %v8686
  %v8691 = vmul.f32 %v8687, %v8687
  %v8692 = vmul.f32 %v8688, %v8688
  %v8693 = vadd.f32 %v8689, %v8690
  %8694 = vadd.xlane.f32.xlu0 %v8693
  %v8695 = vpop.xlane.xlu0 %8694
  %v8696 = vadd.f32 %v8691, %v8692
  %8697 = vadd.xlane.f32.xlu0 %v8696
  %v8698 = vpop.xlane.xlu0 %8697
  %v8699 = vmul.f32 %v8695, %v3915
  %v8700 = vmul.f32 %v8698, %v3915
  %v8701 = vadd.f32 %v8699, 1e-05
  %v8702 = vadd.f32 %v8700, 1e-05
  %v8703 = vrsqrt.pop %v8701
  %v8704 = vrsqrt.pop %v8702
  %v8705 = vmul.f32 %v8685, %v8703
  %v8706 = vmul.f32 %v8686, %v8703
  %v8707 = vmul.f32 %v8687, %v8704
  %v8708 = vmul.f32 %v8688, %v8704
  %s8709 = scalar_lea.vmem %s15, 2
  %v8710 = vld [vmem:[%s8709] sm:$0x3]
  %v8712 = vlaneseq
  %v8713 = vshrl.u32 %v8712, 7
  %v8714 = vsub.s32 0, %v8713
  %v8715 = vrot.slane %v8710, %v8714
  %v8716 = vlaneseq
  %v8717 = vshrl.u32 %v8716, 7
  %v8718 = vsub.s32 1, %v8717
  %v8719 = vrot.slane %v8710, %v8718
  %v8722 = vmul.f32 %v8705, %v8715
  %v8723 = vmul.f32 %v8706, %v8719
  %v8724 = vmul.f32 %v8707, %v8715
  %v8725 = vmul.f32 %v8708, %v8719
  %s8726 = scalar_lea.vmem %s16, 2
  %v8727 = vld [vmem:[%s8726] sm:$0x3]
  %v8729 = vlaneseq
  %v8730 = vshrl.u32 %v8729, 7
  %v8731 = vsub.s32 0, %v8730
  %v8732 = vrot.slane %v8727, %v8731
  %v8733 = vlaneseq
  %v8734 = vshrl.u32 %v8733, 7
  %v8735 = vsub.s32 1, %v8734
  %v8736 = vrot.slane %v8727, %v8735
  %v8739 = vadd.f32 %v8722, %v8732
  %v8740 = vadd.f32 %v8723, %v8736
  %v8741 = vadd.f32 %v8724, %v8732
  %v8742 = vadd.f32 %v8725, %v8736
  %v8743 = vld [vmem:[%s17] sm:$0x3]
  %v8745 = vlaneseq
  %v8746 = vshrl.u32 %v8745, 7
  %v8747 = vsub.s32 0, %v8746
  %v8748 = vrot.slane %v8743, %v8747
  %v8749 = vlaneseq
  %v8750 = vshrl.u32 %v8749, 7
  %v8751 = vsub.s32 1, %v8750
  %v8752 = vrot.slane %v8743, %v8751
  %v8755 = vmul.f32 %v8739, %v8748
  %v8756 = vmul.f32 %v8740, %v8752
  %v8757 = vmul.f32 %v8741, %v8748
  %v8758 = vmul.f32 %v8742, %v8752
  %v8759 = vadd.f32 %v8755, %v8756
  %8760 = vadd.xlane.f32.xlu0 %v8759
  %v8761 = vpop.xlane.xlu0 %8760
  %v8762 = vadd.f32 %v8757, %v8758
  %8763 = vadd.xlane.f32.xlu0 %v8762
  %v8764 = vpop.xlane.xlu0 %8763
  %v8765 = vld [vmem:[#allocation2] sm:$0x1]
  %v8767 = vlaneseq
  %v8768 = vshrl.u32 %v8767, 7
  %v8769 = vsub.s32 0, %v8768
  %v8770 = vrot.slane %v8765, %v8769
  %v8772 = vadd.f32 %v8761, %v8770
  %v8773 = vadd.f32 %v8764, %v8770
  %v8774 = vlaneseq
  %v8775 = vshrl.u32 %v8774, 7
  %v8777 = vrot.slane %v8772, 1
  %v8779 = vmax.f32 %v8772, %v8777
  %v8780 = vsub.f32 %v8772, %v8779
  %v8781 = vmul.f32 %v8780, 1.442695
  %v8782 = vpow.pop %v8781
  %v8784 = vrot.slane %v8779, 7
  %v8786 = vsub.f32 %v8772, %v8784
  %v8787 = vmul.f32 %v8786, 1.442695
  %v8788 = vpow.pop %v8787
  %v8790 = vrot.slane %v8788, 1
  %v8792 = vadd.f32 %v8782, %v8790
  %vm8793 = vcmp.eq.s32.totalorder %v8775, 0
  %v8794 = vrcp.pop %v8792
  %v8795 = vmul.f32 %v8782, %v8794
  %s8797 = vtos %v8795
  %v8798 = vstv %s8797
  %v8800 = vsel %vm8793, %v8798, 0.0
  %vm8801 = vcmp.eq.s32.totalorder %v8775, 1
  %v8803 = vrot.slane %v8792, 7
  %v8805 = vrcp.pop %v8803
  %v8806 = vmul.f32 %v8788, %v8805
  %v8808 = vrot.slane %v8806, 1
  %s8809 = vtos %v8808
  %v8810 = vstv %s8809
  %v8812 = vsel %vm8801, %v8810, %v8800
  %v8814 = vrot.slane %v8773, 1
  %v8816 = vmax.f32 %v8773, %v8814
  %v8817 = vsub.f32 %v8773, %v8816
  %v8818 = vmul.f32 %v8817, 1.442695
  %v8819 = vpow.pop %v8818
  %v8821 = vrot.slane %v8816, 7
  %v8823 = vsub.f32 %v8773, %v8821
  %v8824 = vmul.f32 %v8823, 1.442695
  %v8825 = vpow.pop %v8824
  %v8827 = vrot.slane %v8825, 1
  %v8829 = vadd.f32 %v8819, %v8827
  %vm8830 = vcmp.eq.s32.totalorder %v8775, 2
  %v8831 = vrcp.pop %v8829
  %v8832 = vmul.f32 %v8819, %v8831
  %s8834 = vtos %v8832
  %v8835 = vstv %s8834
  %v8837 = vsel %vm8830, %v8835, %v8812
  %vm8838 = vcmp.eq.s32.totalorder %v8775, 3
  %v8840 = vrot.slane %v8829, 7
  %v8842 = vrcp.pop %v8840
  %v8843 = vmul.f32 %v8825, %v8842
  %v8845 = vrot.slane %v8843, 1
  %s8846 = vtos %v8845
  %v8847 = vstv %s8846
  %v8849 = vsel %vm8838, %v8847, %v8837
  %8850 = vst [vmem:[%s19] sm:$0xf] %v8849
  // Predicated region
  $region78: #{koikoi_forward.1} parent=0 // pred_check
    _
  $region79: #{koikoi_forward.1} parent=0 // pred_check_branch
    %8852 = sbr.rel (0) target = $region81
  $region80: #{koikoi_forward.1} parent=0 // pred_region
    _
  $region81: #{koikoi_forward.1} parent=0 // pred_fallthru
    _
  // Predicated region
  $region82: #{koikoi_forward.1} parent=0 // pred_check
    _
  $region83: #{koikoi_forward.1} parent=0 // pred_check_branch
    %8854 = sbr.rel (0) target = $region85
  $region84: #{koikoi_forward.1} parent=0 // pred_region
    _
  $region85: #{koikoi_forward.1} parent=0 // pred_fallthru
    _

</llo_original>
